<compile_context>
chip_gen: v7x
topology: tpu7x:2x2x1
jax: 0.10.0
libtpu: 0.0.40
codegen_flags: <defaults>
</compile_context>

<pallas_src>
import jax
import jax.numpy as jnp
from jax import lax
from jax.experimental import pallas as pl
from jax.experimental.pallas import tpu as pltpu

EPS = 1e-5


def _identity_residual_kernel(x_ref, s1_ref, b1_ref, b2_ref, w1_ref, w2_ref,
                              wp_ref, out_ref, pad1_ref, pad2_ref,
                              acc1_ref, acc2_ref):
    _, H, W, Cin = x_ref.shape
    Hp, Wp, _ = pad1_ref.shape          # Hp = H + 3, Wp = round_up(W + 2, 8)
    C0 = w1_ref.shape[3]
    C1 = out_ref.shape[3]
    HWp = H * Wp                        # flat accumulator rows

    def store_padded(pad_ref, interior):
        """Write `interior` (f32, (H,W,c)) into the bf16 padded scratch.

        Interior lands at [1:H+1, 1:W+1]; the zero borders (top row, bottom
        rows, left column, right columns) are rewritten every grid step since
        scratch persists across steps / cores.  No concatenate temporaries.
        """
        c = pad_ref.shape[2]
        dt = pad_ref.dtype
        pad_ref[0:1, :, :] = jnp.zeros((1, Wp, c), dt)                   # top
        pad_ref[H + 1:Hp, :, :] = jnp.zeros((Hp - H - 1, Wp, c), dt)     # bottom
        pad_ref[1:H + 1, 0:1, :] = jnp.zeros((H, 1, c), dt)              # left
        pad_ref[1:H + 1, W + 1:Wp, :] = jnp.zeros((H, Wp - W - 1, c), dt)  # right
        pad_ref[1:H + 1, 1:W + 1, :] = interior.astype(dt)               # interior

    def accumulate_taps(flat_in, w_ref, acc_ref, *, init):
        """9 tap matmuls on row-offset windows of the flat padded buffer.

        acc_ref is a W-padded (H*Wp, Cout) f32 VMEM accumulator; the zero
        border columns of the pad buffer make the row-wrap reads of the
        discarded columns contribute nothing to the retained interior.
        """
        idx = 0
        for ky in range(3):
            for kx in range(3):
                off = ky * Wp + kx
                prod = jnp.dot(flat_in[off:off + HWp], w_ref[ky, kx],
                               preferred_element_type=jnp.float32)
                if init and idx == 0:
                    acc_ref[...] = prod
                else:
                    acc_ref[...] += prod
                idx += 1

    # ---- bn1 + ReLU (eval-mode BN folded to per-channel scale/shift) ----
    bn1 = jnp.maximum(x_ref[0] * s1_ref[...] + b1_ref[...], 0.0)   # (H, W, Cin) f32
    store_padded(pad1_ref, bn1)
    # Wp % 8 == 0 -> this reshape is layout-preserving (free).
    flat1 = pad1_ref[...].reshape(Hp * Wp, Cin)                    # bf16

    # ---- conv1 (bn2 scale pre-folded into w1) + shift + ReLU ----
    accumulate_taps(flat1, w1_ref, acc1_ref, init=True)
    t = acc1_ref[...].reshape(H, Wp, C0)[:, 0:W, :] + b2_ref[...]
    t = jnp.maximum(t, 0.0)                                        # (H, W, C0) f32
    store_padded(pad2_ref, t)
    flat2 = pad2_ref[...].reshape(Hp * Wp, C0)                     # bf16

    # ---- conv2 + 1x1 projection shortcut ----
    # Shortcut = 1x1 conv on bn1 == "center tap" (ky=1, kx=1) of pad1;
    # use it to initialize the conv2 accumulator, then add the 9 conv2 taps.
    acc2_ref[...] = jnp.dot(flat1[Wp + 1:Wp + 1 + HWp], wp_ref[...],
                            preferred_element_type=jnp.float32)
    accumulate_taps(flat2, w2_ref, acc2_ref, init=False)

    out = acc2_ref[...].reshape(H, Wp, C1)[:, 0:W, :]
    out_ref[0] = out.astype(out_ref.dtype)


def identity_residual_block(x_nhwc, params):
    N, H, W, Cin = x_nhwc.shape
    w1, w2, wp = params["w1"], params["w2"], params["wp"]
    C0, C1 = w1.shape[3], w2.shape[3]

    Wp = ((W + 2 + 7) // 8) * 8   # padded width, multiple of 8 (free flatten)
    Hp = H + 3                    # 1 top border + 2 bottom zero rows (window slack)

    def fold_bn(gamma, beta, mean, var):
        scale = (gamma / jnp.sqrt(var + EPS)).astype(jnp.float32)
        shift = (beta - mean * scale).astype(jnp.float32)
        return scale, shift

    s1, b1 = fold_bn(params["bn1_gamma"], params["bn1_beta"],
                     params["bn1_mean"], params["bn1_var"])
    s2, b2 = fold_bn(params["bn2_gamma"], params["bn2_beta"],
                     params["bn2_mean"], params["bn2_var"])

    # Fold the bn2 per-output-channel scale into conv1's output channels, then
    # cast all matmul weights to bf16 (f32 accumulation happens in-kernel).
    w1s = (w1.astype(jnp.float32) * s2.reshape(1, 1, 1, C0)).astype(jnp.bfloat16)
    w2b = w2.astype(jnp.bfloat16)
    wpb = wp.astype(jnp.bfloat16)

    out = pl.pallas_call(
        _identity_residual_kernel,
        out_shape=jax.ShapeDtypeStruct((N, H, W, C1), jnp.float32),
        grid_spec=pltpu.PrefetchScalarGridSpec(
            num_scalar_prefetch=0,
            grid=(N,),
            in_specs=[
                pl.BlockSpec((1, H, W, Cin), lambda n: (n, 0, 0, 0)),   # x
                pl.BlockSpec((1, Cin), lambda n: (0, 0)),               # s1
                pl.BlockSpec((1, Cin), lambda n: (0, 0)),               # b1
                pl.BlockSpec((1, C0), lambda n: (0, 0)),                # b2 (shift)
                pl.BlockSpec((3, 3, Cin, C0), lambda n: (0, 0, 0, 0)),  # w1 * s2 (bf16)
                pl.BlockSpec((3, 3, C0, C1), lambda n: (0, 0, 0, 0)),   # w2 (bf16)
                pl.BlockSpec((Cin, C1), lambda n: (0, 0)),              # wp 1x1 (bf16)
            ],
            out_specs=pl.BlockSpec((1, H, W, C1), lambda n: (n, 0, 0, 0)),
            scratch_shapes=[
                pltpu.VMEM((Hp, Wp, Cin), jnp.bfloat16),   # padded relu(bn1(x))
                pltpu.VMEM((Hp, Wp, C0), jnp.bfloat16),    # padded relu(bn2(conv1))
                pltpu.VMEM((H * Wp, C0), jnp.float32),     # conv1 f32 accumulator
                pltpu.VMEM((H * Wp, C1), jnp.float32),     # conv2+shortcut f32 accumulator
            ],
        ),
        compiler_params=pltpu.CompilerParams(
            dimension_semantics=("parallel",),
            vmem_limit_bytes=32 * 1024 * 1024),
    )(x_nhwc, s1.reshape(1, Cin), b1.reshape(1, Cin), b2.reshape(1, C0),
      w1s, w2b, wpb)
    return out


def reference(x_nhwc, params):
    """Pure-JAX reference (same eval-mode BN semantics, unfolded f32 params)."""
    dn = ("NHWC", "HWIO", "NHWC")

    def bnrelu(v, g, b, m, var):
        return jnp.maximum((v - m) / jnp.sqrt(var + EPS) * g + b, 0.0)

    bn1 = bnrelu(x_nhwc, params["bn1_gamma"], params["bn1_beta"],
                 params["bn1_mean"], params["bn1_var"])
    wp4 = params["wp"].reshape(1, 1, *params["wp"].shape)
    shortcut = lax.conv_general_dilated(bn1, wp4, (1, 1), "VALID",
                                        dimension_numbers=dn,
                                        precision=lax.Precision.HIGHEST)
    t = lax.conv_general_dilated(bn1, params["w1"], (1, 1), "SAME",
                                 dimension_numbers=dn,
                                 precision=lax.Precision.HIGHEST)
    t = bnrelu(t, params["bn2_gamma"], params["bn2_beta"],
               params["bn2_mean"], params["bn2_var"])
    out = lax.conv_general_dilated(t, params["w2"], (1, 1), "SAME",
                                   dimension_numbers=dn,
                                   precision=lax.Precision.HIGHEST)
    return out + shortcut


if __name__ == "__main__":
    # Small config: in_channels=4, channels=(8, 8), stride=1 -> proj_conv present.
    N, Cin, H, W = 2, 4, 16, 16
    C0, C1 = 8, 8

    key = jax.random.PRNGKey(0)
    ks = jax.random.split(key, 12)
    params = dict(
        bn1_gamma=jax.random.uniform(ks[0], (Cin,), jnp.float32, 0.5, 1.5),
        bn1_beta=0.1 * jax.random.normal(ks[1], (Cin,), jnp.float32),
        bn1_mean=0.1 * jax.random.normal(ks[2], (Cin,), jnp.float32),
        bn1_var=jax.random.uniform(ks[3], (Cin,), jnp.float32, 0.5, 1.5),
        w1=0.1 * jax.random.normal(ks[4], (3, 3, Cin, C0), jnp.float32),
        bn2_gamma=jax.random.uniform(ks[5], (C0,), jnp.float32, 0.5, 1.5),
        bn2_beta=0.1 * jax.random.normal(ks[6], (C0,), jnp.float32),
        bn2_mean=0.1 * jax.random.normal(ks[7], (C0,), jnp.float32),
        bn2_var=jax.random.uniform(ks[8], (C0,), jnp.float32, 0.5, 1.5),
        w2=0.1 * jax.random.normal(ks[9], (3, 3, C0, C1), jnp.float32),
        wp=0.1 * jax.random.normal(ks[10], (Cin, C1), jnp.float32),
    )

    # PyTorch-style NCHW input, transposed to the kernel's NHWC layout (glue).
    x_nchw = jax.random.normal(ks[11], (N, Cin, H, W), jnp.float32)
    x_nhwc = jnp.transpose(x_nchw, (0, 2, 3, 1))

    out = identity_residual_block(x_nhwc, params)
    out = jax.block_until_ready(out)

    ref = reference(x_nhwc, params)
    err = float(jnp.max(jnp.abs(out - ref)))
    # bf16 matmul operands (activation scratch + weights) vs f32 HIGHEST reference.
    tol = 2e-2 * (1.0 + float(jnp.max(jnp.abs(ref))))
    assert out.shape == (N, H, W, C1)
    if err < tol:
        print("KERNEL_OK")
    else:
        print(f"MISMATCH max_abs_err={err}")
</pallas_src>

<mosaic_0001>
module attributes {stable_mosaic.version = 11 : i64} {
  func.func @_identity_residual_kernel(%arg0: i32, %arg1: memref<1x16x16x4xf32, #tpu.memory_space<vmem>>, %arg2: memref<1x4xf32, #tpu.memory_space<vmem>>, %arg3: memref<1x4xf32, #tpu.memory_space<vmem>>, %arg4: memref<1x8xf32, #tpu.memory_space<vmem>>, %arg5: memref<3x3x4x8xbf16, #tpu.memory_space<vmem>>, %arg6: memref<3x3x8x8xbf16, #tpu.memory_space<vmem>>, %arg7: memref<4x8xbf16, #tpu.memory_space<vmem>>, %arg8: memref<1x16x16x8xf32, #tpu.memory_space<vmem>>, %arg9: memref<19x24x4xbf16, #tpu.memory_space<vmem>>, %arg10: memref<19x24x8xbf16, #tpu.memory_space<vmem>>, %arg11: memref<384x8xf32, #tpu.memory_space<vmem>>, %arg12: memref<384x8xf32, #tpu.memory_space<vmem>>) attributes {dimension_semantics = [#tpu.dimension_semantics<parallel>], iteration_bounds = array<i64: 2>, scalar_prefetch = 0 : i64, scratch_operands = 4 : i64, tpu.core_type = #tpu.core_type<tc>, window_params = [{transform_indices = @transform_0, window_bounds = array<i64: 1, 16, 16, 4>}, {pipeline_mode = #tpu.pipeline_mode<synchronous>, transform_indices = @transform_1, window_bounds = array<i64: 1, 4>}, {pipeline_mode = #tpu.pipeline_mode<synchronous>, transform_indices = @transform_2, window_bounds = array<i64: 1, 4>}, {pipeline_mode = #tpu.pipeline_mode<synchronous>, transform_indices = @transform_3, window_bounds = array<i64: 1, 8>}, {pipeline_mode = #tpu.pipeline_mode<synchronous>, transform_indices = @transform_4, window_bounds = array<i64: 3, 3, 4, 8>}, {pipeline_mode = #tpu.pipeline_mode<synchronous>, transform_indices = @transform_5, window_bounds = array<i64: 3, 3, 8, 8>}, {pipeline_mode = #tpu.pipeline_mode<synchronous>, transform_indices = @transform_6, window_bounds = array<i64: 4, 8>}, {transform_indices = @transform_7, window_bounds = array<i64: 1, 16, 16, 8>}]} {
    %c0 = arith.constant 0 : index
    %c0_0 = arith.constant 0 : index
    %c0_1 = arith.constant 0 : index
    %c0_2 = arith.constant 0 : index
    %0 = vector.load %arg1[%c0, %c0_0, %c0_1, %c0_2] : memref<1x16x16x4xf32, #tpu.memory_space<vmem>>, vector<1x16x16x4xf32>
    %1 = vector.shape_cast %0 : vector<1x16x16x4xf32> to vector<16x16x4xf32>
    %c0_3 = arith.constant 0 : index
    %c0_4 = arith.constant 0 : index
    %2 = vector.load %arg2[%c0_3, %c0_4] : memref<1x4xf32, #tpu.memory_space<vmem>>, vector<1x4xf32>
    %3 = vector.shape_cast %2 : vector<1x4xf32> to vector<1x1x4xf32>
    %4 = vector.broadcast %3 : vector<1x1x4xf32> to vector<16x16x4xf32>
    %5 = arith.mulf %1, %4 : vector<16x16x4xf32>
    %c0_5 = arith.constant 0 : index
    %c0_6 = arith.constant 0 : index
    %6 = vector.load %arg3[%c0_5, %c0_6] : memref<1x4xf32, #tpu.memory_space<vmem>>, vector<1x4xf32>
    %7 = vector.shape_cast %6 : vector<1x4xf32> to vector<1x1x4xf32>
    %8 = vector.broadcast %7 : vector<1x1x4xf32> to vector<16x16x4xf32>
    %9 = arith.addf %5, %8 : vector<16x16x4xf32>
    %cst = arith.constant 0.000000e+00 : f32
    %10 = vector.broadcast %cst : f32 to vector<16x16x4xf32>
    %11 = arith.maximumf %9, %10 : vector<16x16x4xf32>
    %cst_7 = arith.constant 0.000000e+00 : bf16
    %12 = vector.broadcast %cst_7 : bf16 to vector<1x24x4xbf16>
    %c0_8 = arith.constant 0 : index
    %c0_9 = arith.constant 0 : index
    %c0_10 = arith.constant 0 : index
    %13 = vector.load %arg9[%c0_8, %c0_9, %c0_10] : memref<19x24x4xbf16, #tpu.memory_space<vmem>>, vector<1x24x4xbf16>
    tpu.vector_store %arg9[%c0_8, %c0_9, %c0_10], %12 {strides = array<i32>} : memref<19x24x4xbf16, #tpu.memory_space<vmem>>, vector<1x24x4xbf16>,
    %cst_11 = arith.constant 0.000000e+00 : bf16
    %14 = vector.broadcast %cst_11 : bf16 to vector<2x24x4xbf16>
    %c17 = arith.constant 17 : index
    %c0_12 = arith.constant 0 : index
    %c0_13 = arith.constant 0 : index
    %15 = vector.load %arg9[%c17, %c0_12, %c0_13] : memref<19x24x4xbf16, #tpu.memory_space<vmem>>, vector<2x24x4xbf16>
    tpu.vector_store %arg9[%c17, %c0_12, %c0_13], %14 {strides = array<i32>} : memref<19x24x4xbf16, #tpu.memory_space<vmem>>, vector<2x24x4xbf16>,
    %cst_14 = arith.constant 0.000000e+00 : bf16
    %16 = vector.broadcast %cst_14 : bf16 to vector<16x1x4xbf16>
    %c1 = arith.constant 1 : index
    %c0_15 = arith.constant 0 : index
    %c0_16 = arith.constant 0 : index
    %17 = vector.load %arg9[%c1, %c0_15, %c0_16] : memref<19x24x4xbf16, #tpu.memory_space<vmem>>, vector<16x1x4xbf16>
    tpu.vector_store %arg9[%c1, %c0_15, %c0_16], %16 {strides = array<i32>} : memref<19x24x4xbf16, #tpu.memory_space<vmem>>, vector<16x1x4xbf16>,
    %cst_17 = arith.constant 0.000000e+00 : bf16
    %18 = vector.broadcast %cst_17 : bf16 to vector<16x7x4xbf16>
    %c1_18 = arith.constant 1 : index
    %c17_19 = arith.constant 17 : index
    %c0_20 = arith.constant 0 : index
    %19 = vector.load %arg9[%c1_18, %c17_19, %c0_20] : memref<19x24x4xbf16, #tpu.memory_space<vmem>>, vector<16x7x4xbf16>
    tpu.vector_store %arg9[%c1_18, %c17_19, %c0_20], %18 {strides = array<i32>} : memref<19x24x4xbf16, #tpu.memory_space<vmem>>, vector<16x7x4xbf16>,
    %20 = arith.truncf %11 : vector<16x16x4xf32> to vector<16x16x4xbf16>
    %c1_21 = arith.constant 1 : index
    %c1_22 = arith.constant 1 : index
    %c0_23 = arith.constant 0 : index
    %21 = vector.load %arg9[%c1_21, %c1_22, %c0_23] : memref<19x24x4xbf16, #tpu.memory_space<vmem>>, vector<16x16x4xbf16>
    tpu.vector_store %arg9[%c1_21, %c1_22, %c0_23], %20 {strides = array<i32>} : memref<19x24x4xbf16, #tpu.memory_space<vmem>>, vector<16x16x4xbf16>,
    %c0_24 = arith.constant 0 : index
    %c0_25 = arith.constant 0 : index
    %c0_26 = arith.constant 0 : index
    %22 = vector.load %arg9[%c0_24, %c0_25, %c0_26] : memref<19x24x4xbf16, #tpu.memory_space<vmem>>, vector<19x24x4xbf16>
    %23 = vector.shape_cast %22 : vector<19x24x4xbf16> to vector<456x4xbf16>
    %24 = vector.extract_strided_slice %23 {offsets = [0, 0], sizes = [384, 4], strides = [1, 1]} : vector<456x4xbf16> to vector<384x4xbf16>
    %c0_27 = arith.constant 0 : index
    %c0_28 = arith.constant 0 : index
    %c0_29 = arith.constant 0 : index
    %c0_30 = arith.constant 0 : index
    %25 = vector.load %arg5[%c0_27, %c0_28, %c0_29, %c0_30] : memref<3x3x4x8xbf16, #tpu.memory_space<vmem>>, vector<1x1x4x8xbf16>
    %26 = vector.shape_cast %25 : vector<1x1x4x8xbf16> to vector<4x8xbf16>
    %cst_31 = arith.constant dense<0.000000e+00> : vector<384x8xf32>
    %27 = tpu.matmul %24, %26, %cst_31 {dimension_numbers = #tpu.dot_dimension_numbers<[1], [0], [0], [1], [0, 0, 1, 1], [], []>} : vector<384x4xbf16>, vector<4x8xbf16>, vector<384x8xf32> -> vector<384x8xf32>
    %c0_32 = arith.constant 0 : index
    %c0_33 = arith.constant 0 : index
    %28 = vector.load %arg11[%c0_32, %c0_33] : memref<384x8xf32, #tpu.memory_space<vmem>>, vector<384x8xf32>
    tpu.vector_store %arg11[%c0_32, %c0_33], %27 {strides = array<i32>} : memref<384x8xf32, #tpu.memory_space<vmem>>, vector<384x8xf32>,
    %29 = vector.extract_strided_slice %23 {offsets = [1, 0], sizes = [384, 4], strides = [1, 1]} : vector<456x4xbf16> to vector<384x4xbf16>
    %c0_34 = arith.constant 0 : index
    %c1_35 = arith.constant 1 : index
    %c0_36 = arith.constant 0 : index
    %c0_37 = arith.constant 0 : index
    %30 = vector.load %arg5[%c0_34, %c1_35, %c0_36, %c0_37] : memref<3x3x4x8xbf16, #tpu.memory_space<vmem>>, vector<1x1x4x8xbf16>
    %31 = vector.shape_cast %30 : vector<1x1x4x8xbf16> to vector<4x8xbf16>
    %cst_38 = arith.constant dense<0.000000e+00> : vector<384x8xf32>
    %32 = tpu.matmul %29, %31, %cst_38 {dimension_numbers = #tpu.dot_dimension_numbers<[1], [0], [0], [1], [0, 0, 1, 1], [], []>} : vector<384x4xbf16>, vector<4x8xbf16>, vector<384x8xf32> -> vector<384x8xf32>
    %c0_39 = arith.constant 0 : index
    %c0_40 = arith.constant 0 : index
    %33 = vector.load %arg11[%c0_39, %c0_40] : memref<384x8xf32, #tpu.memory_space<vmem>>, vector<384x8xf32>
    %34 = arith.addf %33, %32 : vector<384x8xf32>
    %c0_41 = arith.constant 0 : index
    %c0_42 = arith.constant 0 : index
    %35 = vector.load %arg11[%c0_41, %c0_42] : memref<384x8xf32, #tpu.memory_space<vmem>>, vector<384x8xf32>
    tpu.vector_store %arg11[%c0_41, %c0_42], %34 {strides = array<i32>} : memref<384x8xf32, #tpu.memory_space<vmem>>, vector<384x8xf32>,
    %36 = vector.extract_strided_slice %23 {offsets = [2, 0], sizes = [384, 4], strides = [1, 1]} : vector<456x4xbf16> to vector<384x4xbf16>
    %c0_43 = arith.constant 0 : index
    %c2 = arith.constant 2 : index
    %c0_44 = arith.constant 0 : index
    %c0_45 = arith.constant 0 : index
    %37 = vector.load %arg5[%c0_43, %c2, %c0_44, %c0_45] : memref<3x3x4x8xbf16, #tpu.memory_space<vmem>>, vector<1x1x4x8xbf16>
    %38 = vector.shape_cast %37 : vector<1x1x4x8xbf16> to vector<4x8xbf16>
    %cst_46 = arith.constant dense<0.000000e+00> : vector<384x8xf32>
    %39 = tpu.matmul %36, %38, %cst_46 {dimension_numbers = #tpu.dot_dimension_numbers<[1], [0], [0], [1], [0, 0, 1, 1], [], []>} : vector<384x4xbf16>, vector<4x8xbf16>, vector<384x8xf32> -> vector<384x8xf32>
    %c0_47 = arith.constant 0 : index
    %c0_48 = arith.constant 0 : index
    %40 = vector.load %arg11[%c0_47, %c0_48] : memref<384x8xf32, #tpu.memory_space<vmem>>, vector<384x8xf32>
    %41 = arith.addf %40, %39 : vector<384x8xf32>
    %c0_49 = arith.constant 0 : index
    %c0_50 = arith.constant 0 : index
    %42 = vector.load %arg11[%c0_49, %c0_50] : memref<384x8xf32, #tpu.memory_space<vmem>>, vector<384x8xf32>
    tpu.vector_store %arg11[%c0_49, %c0_50], %41 {strides = array<i32>} : memref<384x8xf32, #tpu.memory_space<vmem>>, vector<384x8xf32>,
    %43 = vector.extract_strided_slice %23 {offsets = [24, 0], sizes = [384, 4], strides = [1, 1]} : vector<456x4xbf16> to vector<384x4xbf16>
    %c1_51 = arith.constant 1 : index
    %c0_52 = arith.constant 0 : index
    %c0_53 = arith.constant 0 : index
    %c0_54 = arith.constant 0 : index
    %44 = vector.load %arg5[%c1_51, %c0_52, %c0_53, %c0_54] : memref<3x3x4x8xbf16, #tpu.memory_space<vmem>>, vector<1x1x4x8xbf16>
    %45 = vector.shape_cast %44 : vector<1x1x4x8xbf16> to vector<4x8xbf16>
    %cst_55 = arith.constant dense<0.000000e+00> : vector<384x8xf32>
    %46 = tpu.matmul %43, %45, %cst_55 {dimension_numbers = #tpu.dot_dimension_numbers<[1], [0], [0], [1], [0, 0, 1, 1], [], []>} : vector<384x4xbf16>, vector<4x8xbf16>, vector<384x8xf32> -> vector<384x8xf32>
    %c0_56 = arith.constant 0 : index
    %c0_57 = arith.constant 0 : index
    %47 = vector.load %arg11[%c0_56, %c0_57] : memref<384x8xf32, #tpu.memory_space<vmem>>, vector<384x8xf32>
    %48 = arith.addf %47, %46 : vector<384x8xf32>
    %c0_58 = arith.constant 0 : index
    %c0_59 = arith.constant 0 : index
    %49 = vector.load %arg11[%c0_58, %c0_59] : memref<384x8xf32, #tpu.memory_space<vmem>>, vector<384x8xf32>
    tpu.vector_store %arg11[%c0_58, %c0_59], %48 {strides = array<i32>} : memref<384x8xf32, #tpu.memory_space<vmem>>, vector<384x8xf32>,
    %50 = vector.extract_strided_slice %23 {offsets = [25, 0], sizes = [384, 4], strides = [1, 1]} : vector<456x4xbf16> to vector<384x4xbf16>
    %c1_60 = arith.constant 1 : index
    %c1_61 = arith.constant 1 : index
    %c0_62 = arith.constant 0 : index
    %c0_63 = arith.constant 0 : index
    %51 = vector.load %arg5[%c1_60, %c1_61, %c0_62, %c0_63] : memref<3x3x4x8xbf16, #tpu.memory_space<vmem>>, vector<1x1x4x8xbf16>
    %52 = vector.shape_cast %51 : vector<1x1x4x8xbf16> to vector<4x8xbf16>
    %cst_64 = arith.constant dense<0.000000e+00> : vector<384x8xf32>
    %53 = tpu.matmul %50, %52, %cst_64 {dimension_numbers = #tpu.dot_dimension_numbers<[1], [0], [0], [1], [0, 0, 1, 1], [], []>} : vector<384x4xbf16>, vector<4x8xbf16>, vector<384x8xf32> -> vector<384x8xf32>
    %c0_65 = arith.constant 0 : index
    %c0_66 = arith.constant 0 : index
    %54 = vector.load %arg11[%c0_65, %c0_66] : memref<384x8xf32, #tpu.memory_space<vmem>>, vector<384x8xf32>
    %55 = arith.addf %54, %53 : vector<384x8xf32>
    %c0_67 = arith.constant 0 : index
    %c0_68 = arith.constant 0 : index
    %56 = vector.load %arg11[%c0_67, %c0_68] : memref<384x8xf32, #tpu.memory_space<vmem>>, vector<384x8xf32>
    tpu.vector_store %arg11[%c0_67, %c0_68], %55 {strides = array<i32>} : memref<384x8xf32, #tpu.memory_space<vmem>>, vector<384x8xf32>,
    %57 = vector.extract_strided_slice %23 {offsets = [26, 0], sizes = [384, 4], strides = [1, 1]} : vector<456x4xbf16> to vector<384x4xbf16>
    %c1_69 = arith.constant 1 : index
    %c2_70 = arith.constant 2 : index
    %c0_71 = arith.constant 0 : index
    %c0_72 = arith.constant 0 : index
    %58 = vector.load %arg5[%c1_69, %c2_70, %c0_71, %c0_72] : memref<3x3x4x8xbf16, #tpu.memory_space<vmem>>, vector<1x1x4x8xbf16>
    %59 = vector.shape_cast %58 : vector<1x1x4x8xbf16> to vector<4x8xbf16>
    %cst_73 = arith.constant dense<0.000000e+00> : vector<384x8xf32>
    %60 = tpu.matmul %57, %59, %cst_73 {dimension_numbers = #tpu.dot_dimension_numbers<[1], [0], [0], [1], [0, 0, 1, 1], [], []>} : vector<384x4xbf16>, vector<4x8xbf16>, vector<384x8xf32> -> vector<384x8xf32>
    %c0_74 = arith.constant 0 : index
    %c0_75 = arith.constant 0 : index
    %61 = vector.load %arg11[%c0_74, %c0_75] : memref<384x8xf32, #tpu.memory_space<vmem>>, vector<384x8xf32>
    %62 = arith.addf %61, %60 : vector<384x8xf32>
    %c0_76 = arith.constant 0 : index
    %c0_77 = arith.constant 0 : index
    %63 = vector.load %arg11[%c0_76, %c0_77] : memref<384x8xf32, #tpu.memory_space<vmem>>, vector<384x8xf32>
    tpu.vector_store %arg11[%c0_76, %c0_77], %62 {strides = array<i32>} : memref<384x8xf32, #tpu.memory_space<vmem>>, vector<384x8xf32>,
    %64 = vector.extract_strided_slice %23 {offsets = [48, 0], sizes = [384, 4], strides = [1, 1]} : vector<456x4xbf16> to vector<384x4xbf16>
    %c2_78 = arith.constant 2 : index
    %c0_79 = arith.constant 0 : index
    %c0_80 = arith.constant 0 : index
    %c0_81 = arith.constant 0 : index
    %65 = vector.load %arg5[%c2_78, %c0_79, %c0_80, %c0_81] : memref<3x3x4x8xbf16, #tpu.memory_space<vmem>>, vector<1x1x4x8xbf16>
    %66 = vector.shape_cast %65 : vector<1x1x4x8xbf16> to vector<4x8xbf16>
    %cst_82 = arith.constant dense<0.000000e+00> : vector<384x8xf32>
    %67 = tpu.matmul %64, %66, %cst_82 {dimension_numbers = #tpu.dot_dimension_numbers<[1], [0], [0], [1], [0, 0, 1, 1], [], []>} : vector<384x4xbf16>, vector<4x8xbf16>, vector<384x8xf32> -> vector<384x8xf32>
    %c0_83 = arith.constant 0 : index
    %c0_84 = arith.constant 0 : index
    %68 = vector.load %arg11[%c0_83, %c0_84] : memref<384x8xf32, #tpu.memory_space<vmem>>, vector<384x8xf32>
    %69 = arith.addf %68, %67 : vector<384x8xf32>
    %c0_85 = arith.constant 0 : index
    %c0_86 = arith.constant 0 : index
    %70 = vector.load %arg11[%c0_85, %c0_86] : memref<384x8xf32, #tpu.memory_space<vmem>>, vector<384x8xf32>
    tpu.vector_store %arg11[%c0_85, %c0_86], %69 {strides = array<i32>} : memref<384x8xf32, #tpu.memory_space<vmem>>, vector<384x8xf32>,
    %71 = vector.extract_strided_slice %23 {offsets = [49, 0], sizes = [384, 4], strides = [1, 1]} : vector<456x4xbf16> to vector<384x4xbf16>
    %c2_87 = arith.constant 2 : index
    %c1_88 = arith.constant 1 : index
    %c0_89 = arith.constant 0 : index
    %c0_90 = arith.constant 0 : index
    %72 = vector.load %arg5[%c2_87, %c1_88, %c0_89, %c0_90] : memref<3x3x4x8xbf16, #tpu.memory_space<vmem>>, vector<1x1x4x8xbf16>
    %73 = vector.shape_cast %72 : vector<1x1x4x8xbf16> to vector<4x8xbf16>
    %cst_91 = arith.constant dense<0.000000e+00> : vector<384x8xf32>
    %74 = tpu.matmul %71, %73, %cst_91 {dimension_numbers = #tpu.dot_dimension_numbers<[1], [0], [0], [1], [0, 0, 1, 1], [], []>} : vector<384x4xbf16>, vector<4x8xbf16>, vector<384x8xf32> -> vector<384x8xf32>
    %c0_92 = arith.constant 0 : index
    %c0_93 = arith.constant 0 : index
    %75 = vector.load %arg11[%c0_92, %c0_93] : memref<384x8xf32, #tpu.memory_space<vmem>>, vector<384x8xf32>
    %76 = arith.addf %75, %74 : vector<384x8xf32>
    %c0_94 = arith.constant 0 : index
    %c0_95 = arith.constant 0 : index
    %77 = vector.load %arg11[%c0_94, %c0_95] : memref<384x8xf32, #tpu.memory_space<vmem>>, vector<384x8xf32>
    tpu.vector_store %arg11[%c0_94, %c0_95], %76 {strides = array<i32>} : memref<384x8xf32, #tpu.memory_space<vmem>>, vector<384x8xf32>,
    %78 = vector.extract_strided_slice %23 {offsets = [50, 0], sizes = [384, 4], strides = [1, 1]} : vector<456x4xbf16> to vector<384x4xbf16>
    %c2_96 = arith.constant 2 : index
    %c2_97 = arith.constant 2 : index
    %c0_98 = arith.constant 0 : index
    %c0_99 = arith.constant 0 : index
    %79 = vector.load %arg5[%c2_96, %c2_97, %c0_98, %c0_99] : memref<3x3x4x8xbf16, #tpu.memory_space<vmem>>, vector<1x1x4x8xbf16>
    %80 = vector.shape_cast %79 : vector<1x1x4x8xbf16> to vector<4x8xbf16>
    %cst_100 = arith.constant dense<0.000000e+00> : vector<384x8xf32>
    %81 = tpu.matmul %78, %80, %cst_100 {dimension_numbers = #tpu.dot_dimension_numbers<[1], [0], [0], [1], [0, 0, 1, 1], [], []>} : vector<384x4xbf16>, vector<4x8xbf16>, vector<384x8xf32> -> vector<384x8xf32>
    %c0_101 = arith.constant 0 : index
    %c0_102 = arith.constant 0 : index
    %82 = vector.load %arg11[%c0_101, %c0_102] : memref<384x8xf32, #tpu.memory_space<vmem>>, vector<384x8xf32>
    %83 = arith.addf %82, %81 : vector<384x8xf32>
    %c0_103 = arith.constant 0 : index
    %c0_104 = arith.constant 0 : index
    %84 = vector.load %arg11[%c0_103, %c0_104] : memref<384x8xf32, #tpu.memory_space<vmem>>, vector<384x8xf32>
    tpu.vector_store %arg11[%c0_103, %c0_104], %83 {strides = array<i32>} : memref<384x8xf32, #tpu.memory_space<vmem>>, vector<384x8xf32>,
    %c0_105 = arith.constant 0 : index
    %c0_106 = arith.constant 0 : index
    %85 = vector.load %arg11[%c0_105, %c0_106] : memref<384x8xf32, #tpu.memory_space<vmem>>, vector<384x8xf32>
    %86 = vector.shape_cast %85 : vector<384x8xf32> to vector<16x24x8xf32>
    %87 = vector.extract_strided_slice %86 {offsets = [0, 0, 0], sizes = [16, 16, 8], strides = [1, 1, 1]} : vector<16x24x8xf32> to vector<16x16x8xf32>
    %c0_107 = arith.constant 0 : index
    %c0_108 = arith.constant 0 : index
    %88 = vector.load %arg4[%c0_107, %c0_108] : memref<1x8xf32, #tpu.memory_space<vmem>>, vector<1x8xf32>
    %89 = vector.shape_cast %88 : vector<1x8xf32> to vector<1x1x8xf32>
    %90 = vector.broadcast %89 : vector<1x1x8xf32> to vector<16x16x8xf32>
    %91 = arith.addf %87, %90 : vector<16x16x8xf32>
    %cst_109 = arith.constant 0.000000e+00 : f32
    %92 = vector.broadcast %cst_109 : f32 to vector<16x16x8xf32>
    %93 = arith.maximumf %91, %92 : vector<16x16x8xf32>
    %cst_110 = arith.constant 0.000000e+00 : bf16
    %94 = vector.broadcast %cst_110 : bf16 to vector<1x24x8xbf16>
    %c0_111 = arith.constant 0 : index
    %c0_112 = arith.constant 0 : index
    %c0_113 = arith.constant 0 : index
    %95 = vector.load %arg10[%c0_111, %c0_112, %c0_113] : memref<19x24x8xbf16, #tpu.memory_space<vmem>>, vector<1x24x8xbf16>
    tpu.vector_store %arg10[%c0_111, %c0_112, %c0_113], %94 {strides = array<i32>} : memref<19x24x8xbf16, #tpu.memory_space<vmem>>, vector<1x24x8xbf16>,
    %cst_114 = arith.constant 0.000000e+00 : bf16
    %96 = vector.broadcast %cst_114 : bf16 to vector<2x24x8xbf16>
    %c17_115 = arith.constant 17 : index
    %c0_116 = arith.constant 0 : index
    %c0_117 = arith.constant 0 : index
    %97 = vector.load %arg10[%c17_115, %c0_116, %c0_117] : memref<19x24x8xbf16, #tpu.memory_space<vmem>>, vector<2x24x8xbf16>
    tpu.vector_store %arg10[%c17_115, %c0_116, %c0_117], %96 {strides = array<i32>} : memref<19x24x8xbf16, #tpu.memory_space<vmem>>, vector<2x24x8xbf16>,
    %cst_118 = arith.constant 0.000000e+00 : bf16
    %98 = vector.broadcast %cst_118 : bf16 to vector<16x1x8xbf16>
    %c1_119 = arith.constant 1 : index
    %c0_120 = arith.constant 0 : index
    %c0_121 = arith.constant 0 : index
    %99 = vector.load %arg10[%c1_119, %c0_120, %c0_121] : memref<19x24x8xbf16, #tpu.memory_space<vmem>>, vector<16x1x8xbf16>
    tpu.vector_store %arg10[%c1_119, %c0_120, %c0_121], %98 {strides = array<i32>} : memref<19x24x8xbf16, #tpu.memory_space<vmem>>, vector<16x1x8xbf16>,
    %cst_122 = arith.constant 0.000000e+00 : bf16
    %100 = vector.broadcast %cst_122 : bf16 to vector<16x7x8xbf16>
    %c1_123 = arith.constant 1 : index
    %c17_124 = arith.constant 17 : index
    %c0_125 = arith.constant 0 : index
    %101 = vector.load %arg10[%c1_123, %c17_124, %c0_125] : memref<19x24x8xbf16, #tpu.memory_space<vmem>>, vector<16x7x8xbf16>
    tpu.vector_store %arg10[%c1_123, %c17_124, %c0_125], %100 {strides = array<i32>} : memref<19x24x8xbf16, #tpu.memory_space<vmem>>, vector<16x7x8xbf16>,
    %102 = arith.truncf %93 : vector<16x16x8xf32> to vector<16x16x8xbf16>
    %c1_126 = arith.constant 1 : index
    %c1_127 = arith.constant 1 : index
    %c0_128 = arith.constant 0 : index
    %103 = vector.load %arg10[%c1_126, %c1_127, %c0_128] : memref<19x24x8xbf16, #tpu.memory_space<vmem>>, vector<16x16x8xbf16>
    tpu.vector_store %arg10[%c1_126, %c1_127, %c0_128], %102 {strides = array<i32>} : memref<19x24x8xbf16, #tpu.memory_space<vmem>>, vector<16x16x8xbf16>,
    %c0_129 = arith.constant 0 : index
    %c0_130 = arith.constant 0 : index
    %c0_131 = arith.constant 0 : index
    %104 = vector.load %arg10[%c0_129, %c0_130, %c0_131] : memref<19x24x8xbf16, #tpu.memory_space<vmem>>, vector<19x24x8xbf16>
    %105 = vector.shape_cast %104 : vector<19x24x8xbf16> to vector<456x8xbf16>
    %106 = vector.extract_strided_slice %23 {offsets = [25, 0], sizes = [384, 4], strides = [1, 1]} : vector<456x4xbf16> to vector<384x4xbf16>
    %c0_132 = arith.constant 0 : index
    %c0_133 = arith.constant 0 : index
    %107 = vector.load %arg7[%c0_132, %c0_133] : memref<4x8xbf16, #tpu.memory_space<vmem>>, vector<4x8xbf16>
    %cst_134 = arith.constant dense<0.000000e+00> : vector<384x8xf32>
    %108 = tpu.matmul %106, %107, %cst_134 {dimension_numbers = #tpu.dot_dimension_numbers<[1], [0], [0], [1], [0, 0, 1, 1], [], []>} : vector<384x4xbf16>, vector<4x8xbf16>, vector<384x8xf32> -> vector<384x8xf32>
    %c0_135 = arith.constant 0 : index
    %c0_136 = arith.constant 0 : index
    %109 = vector.load %arg12[%c0_135, %c0_136] : memref<384x8xf32, #tpu.memory_space<vmem>>, vector<384x8xf32>
    tpu.vector_store %arg12[%c0_135, %c0_136], %108 {strides = array<i32>} : memref<384x8xf32, #tpu.memory_space<vmem>>, vector<384x8xf32>,
    %110 = vector.extract_strided_slice %105 {offsets = [0, 0], sizes = [384, 8], strides = [1, 1]} : vector<456x8xbf16> to vector<384x8xbf16>
    %c0_137 = arith.constant 0 : index
    %c0_138 = arith.constant 0 : index
    %c0_139 = arith.constant 0 : index
    %c0_140 = arith.constant 0 : index
    %111 = vector.load %arg6[%c0_137, %c0_138, %c0_139, %c0_140] : memref<3x3x8x8xbf16, #tpu.memory_space<vmem>>, vector<1x1x8x8xbf16>
    %112 = vector.shape_cast %111 : vector<1x1x8x8xbf16> to vector<8x8xbf16>
    %cst_141 = arith.constant dense<0.000000e+00> : vector<384x8xf32>
    %113 = tpu.matmul %110, %112, %cst_141 {dimension_numbers = #tpu.dot_dimension_numbers<[1], [0], [0], [1], [0, 0, 1, 1], [], []>} : vector<384x8xbf16>, vector<8x8xbf16>, vector<384x8xf32> -> vector<384x8xf32>
    %c0_142 = arith.constant 0 : index
    %c0_143 = arith.constant 0 : index
    %114 = vector.load %arg12[%c0_142, %c0_143] : memref<384x8xf32, #tpu.memory_space<vmem>>, vector<384x8xf32>
    %115 = arith.addf %114, %113 : vector<384x8xf32>
    %c0_144 = arith.constant 0 : index
    %c0_145 = arith.constant 0 : index
    %116 = vector.load %arg12[%c0_144, %c0_145] : memref<384x8xf32, #tpu.memory_space<vmem>>, vector<384x8xf32>
    tpu.vector_store %arg12[%c0_144, %c0_145], %115 {strides = array<i32>} : memref<384x8xf32, #tpu.memory_space<vmem>>, vector<384x8xf32>,
    %117 = vector.extract_strided_slice %105 {offsets = [1, 0], sizes = [384, 8], strides = [1, 1]} : vector<456x8xbf16> to vector<384x8xbf16>
    %c0_146 = arith.constant 0 : index
    %c1_147 = arith.constant 1 : index
    %c0_148 = arith.constant 0 : index
    %c0_149 = arith.constant 0 : index
    %118 = vector.load %arg6[%c0_146, %c1_147, %c0_148, %c0_149] : memref<3x3x8x8xbf16, #tpu.memory_space<vmem>>, vector<1x1x8x8xbf16>
    %119 = vector.shape_cast %118 : vector<1x1x8x8xbf16> to vector<8x8xbf16>
    %cst_150 = arith.constant dense<0.000000e+00> : vector<384x8xf32>
    %120 = tpu.matmul %117, %119, %cst_150 {dimension_numbers = #tpu.dot_dimension_numbers<[1], [0], [0], [1], [0, 0, 1, 1], [], []>} : vector<384x8xbf16>, vector<8x8xbf16>, vector<384x8xf32> -> vector<384x8xf32>
    %c0_151 = arith.constant 0 : index
    %c0_152 = arith.constant 0 : index
    %121 = vector.load %arg12[%c0_151, %c0_152] : memref<384x8xf32, #tpu.memory_space<vmem>>, vector<384x8xf32>
    %122 = arith.addf %121, %120 : vector<384x8xf32>
    %c0_153 = arith.constant 0 : index
    %c0_154 = arith.constant 0 : index
    %123 = vector.load %arg12[%c0_153, %c0_154] : memref<384x8xf32, #tpu.memory_space<vmem>>, vector<384x8xf32>
    tpu.vector_store %arg12[%c0_153, %c0_154], %122 {strides = array<i32>} : memref<384x8xf32, #tpu.memory_space<vmem>>, vector<384x8xf32>,
    %124 = vector.extract_strided_slice %105 {offsets = [2, 0], sizes = [384, 8], strides = [1, 1]} : vector<456x8xbf16> to vector<384x8xbf16>
    %c0_155 = arith.constant 0 : index
    %c2_156 = arith.constant 2 : index
    %c0_157 = arith.constant 0 : index
    %c0_158 = arith.constant 0 : index
    %125 = vector.load %arg6[%c0_155, %c2_156, %c0_157, %c0_158] : memref<3x3x8x8xbf16, #tpu.memory_space<vmem>>, vector<1x1x8x8xbf16>
    %126 = vector.shape_cast %125 : vector<1x1x8x8xbf16> to vector<8x8xbf16>
    %cst_159 = arith.constant dense<0.000000e+00> : vector<384x8xf32>
    %127 = tpu.matmul %124, %126, %cst_159 {dimension_numbers = #tpu.dot_dimension_numbers<[1], [0], [0], [1], [0, 0, 1, 1], [], []>} : vector<384x8xbf16>, vector<8x8xbf16>, vector<384x8xf32> -> vector<384x8xf32>
    %c0_160 = arith.constant 0 : index
    %c0_161 = arith.constant 0 : index
    %128 = vector.load %arg12[%c0_160, %c0_161] : memref<384x8xf32, #tpu.memory_space<vmem>>, vector<384x8xf32>
    %129 = arith.addf %128, %127 : vector<384x8xf32>
    %c0_162 = arith.constant 0 : index
    %c0_163 = arith.constant 0 : index
    %130 = vector.load %arg12[%c0_162, %c0_163] : memref<384x8xf32, #tpu.memory_space<vmem>>, vector<384x8xf32>
    tpu.vector_store %arg12[%c0_162, %c0_163], %129 {strides = array<i32>} : memref<384x8xf32, #tpu.memory_space<vmem>>, vector<384x8xf32>,
    %131 = vector.extract_strided_slice %105 {offsets = [24, 0], sizes = [384, 8], strides = [1, 1]} : vector<456x8xbf16> to vector<384x8xbf16>
    %c1_164 = arith.constant 1 : index
    %c0_165 = arith.constant 0 : index
    %c0_166 = arith.constant 0 : index
    %c0_167 = arith.constant 0 : index
    %132 = vector.load %arg6[%c1_164, %c0_165, %c0_166, %c0_167] : memref<3x3x8x8xbf16, #tpu.memory_space<vmem>>, vector<1x1x8x8xbf16>
    %133 = vector.shape_cast %132 : vector<1x1x8x8xbf16> to vector<8x8xbf16>
    %cst_168 = arith.constant dense<0.000000e+00> : vector<384x8xf32>
    %134 = tpu.matmul %131, %133, %cst_168 {dimension_numbers = #tpu.dot_dimension_numbers<[1], [0], [0], [1], [0, 0, 1, 1], [], []>} : vector<384x8xbf16>, vector<8x8xbf16>, vector<384x8xf32> -> vector<384x8xf32>
    %c0_169 = arith.constant 0 : index
    %c0_170 = arith.constant 0 : index
    %135 = vector.load %arg12[%c0_169, %c0_170] : memref<384x8xf32, #tpu.memory_space<vmem>>, vector<384x8xf32>
    %136 = arith.addf %135, %134 : vector<384x8xf32>
    %c0_171 = arith.constant 0 : index
    %c0_172 = arith.constant 0 : index
    %137 = vector.load %arg12[%c0_171, %c0_172] : memref<384x8xf32, #tpu.memory_space<vmem>>, vector<384x8xf32>
    tpu.vector_store %arg12[%c0_171, %c0_172], %136 {strides = array<i32>} : memref<384x8xf32, #tpu.memory_space<vmem>>, vector<384x8xf32>,
    %138 = vector.extract_strided_slice %105 {offsets = [25, 0], sizes = [384, 8], strides = [1, 1]} : vector<456x8xbf16> to vector<384x8xbf16>
    %c1_173 = arith.constant 1 : index
    %c1_174 = arith.constant 1 : index
    %c0_175 = arith.constant 0 : index
    %c0_176 = arith.constant 0 : index
    %139 = vector.load %arg6[%c1_173, %c1_174, %c0_175, %c0_176] : memref<3x3x8x8xbf16, #tpu.memory_space<vmem>>, vector<1x1x8x8xbf16>
    %140 = vector.shape_cast %139 : vector<1x1x8x8xbf16> to vector<8x8xbf16>
    %cst_177 = arith.constant dense<0.000000e+00> : vector<384x8xf32>
    %141 = tpu.matmul %138, %140, %cst_177 {dimension_numbers = #tpu.dot_dimension_numbers<[1], [0], [0], [1], [0, 0, 1, 1], [], []>} : vector<384x8xbf16>, vector<8x8xbf16>, vector<384x8xf32> -> vector<384x8xf32>
    %c0_178 = arith.constant 0 : index
    %c0_179 = arith.constant 0 : index
    %142 = vector.load %arg12[%c0_178, %c0_179] : memref<384x8xf32, #tpu.memory_space<vmem>>, vector<384x8xf32>
    %143 = arith.addf %142, %141 : vector<384x8xf32>
    %c0_180 = arith.constant 0 : index
    %c0_181 = arith.constant 0 : index
    %144 = vector.load %arg12[%c0_180, %c0_181] : memref<384x8xf32, #tpu.memory_space<vmem>>, vector<384x8xf32>
    tpu.vector_store %arg12[%c0_180, %c0_181], %143 {strides = array<i32>} : memref<384x8xf32, #tpu.memory_space<vmem>>, vector<384x8xf32>,
    %145 = vector.extract_strided_slice %105 {offsets = [26, 0], sizes = [384, 8], strides = [1, 1]} : vector<456x8xbf16> to vector<384x8xbf16>
    %c1_182 = arith.constant 1 : index
    %c2_183 = arith.constant 2 : index
    %c0_184 = arith.constant 0 : index
    %c0_185 = arith.constant 0 : index
    %146 = vector.load %arg6[%c1_182, %c2_183, %c0_184, %c0_185] : memref<3x3x8x8xbf16, #tpu.memory_space<vmem>>, vector<1x1x8x8xbf16>
    %147 = vector.shape_cast %146 : vector<1x1x8x8xbf16> to vector<8x8xbf16>
    %cst_186 = arith.constant dense<0.000000e+00> : vector<384x8xf32>
    %148 = tpu.matmul %145, %147, %cst_186 {dimension_numbers = #tpu.dot_dimension_numbers<[1], [0], [0], [1], [0, 0, 1, 1], [], []>} : vector<384x8xbf16>, vector<8x8xbf16>, vector<384x8xf32> -> vector<384x8xf32>
    %c0_187 = arith.constant 0 : index
    %c0_188 = arith.constant 0 : index
    %149 = vector.load %arg12[%c0_187, %c0_188] : memref<384x8xf32, #tpu.memory_space<vmem>>, vector<384x8xf32>
    %150 = arith.addf %149, %148 : vector<384x8xf32>
    %c0_189 = arith.constant 0 : index
    %c0_190 = arith.constant 0 : index
    %151 = vector.load %arg12[%c0_189, %c0_190] : memref<384x8xf32, #tpu.memory_space<vmem>>, vector<384x8xf32>
    tpu.vector_store %arg12[%c0_189, %c0_190], %150 {strides = array<i32>} : memref<384x8xf32, #tpu.memory_space<vmem>>, vector<384x8xf32>,
    %152 = vector.extract_strided_slice %105 {offsets = [48, 0], sizes = [384, 8], strides = [1, 1]} : vector<456x8xbf16> to vector<384x8xbf16>
    %c2_191 = arith.constant 2 : index
    %c0_192 = arith.constant 0 : index
    %c0_193 = arith.constant 0 : index
    %c0_194 = arith.constant 0 : index
    %153 = vector.load %arg6[%c2_191, %c0_192, %c0_193, %c0_194] : memref<3x3x8x8xbf16, #tpu.memory_space<vmem>>, vector<1x1x8x8xbf16>
    %154 = vector.shape_cast %153 : vector<1x1x8x8xbf16> to vector<8x8xbf16>
    %cst_195 = arith.constant dense<0.000000e+00> : vector<384x8xf32>
    %155 = tpu.matmul %152, %154, %cst_195 {dimension_numbers = #tpu.dot_dimension_numbers<[1], [0], [0], [1], [0, 0, 1, 1], [], []>} : vector<384x8xbf16>, vector<8x8xbf16>, vector<384x8xf32> -> vector<384x8xf32>
    %c0_196 = arith.constant 0 : index
    %c0_197 = arith.constant 0 : index
    %156 = vector.load %arg12[%c0_196, %c0_197] : memref<384x8xf32, #tpu.memory_space<vmem>>, vector<384x8xf32>
    %157 = arith.addf %156, %155 : vector<384x8xf32>
    %c0_198 = arith.constant 0 : index
    %c0_199 = arith.constant 0 : index
    %158 = vector.load %arg12[%c0_198, %c0_199] : memref<384x8xf32, #tpu.memory_space<vmem>>, vector<384x8xf32>
    tpu.vector_store %arg12[%c0_198, %c0_199], %157 {strides = array<i32>} : memref<384x8xf32, #tpu.memory_space<vmem>>, vector<384x8xf32>,
    %159 = vector.extract_strided_slice %105 {offsets = [49, 0], sizes = [384, 8], strides = [1, 1]} : vector<456x8xbf16> to vector<384x8xbf16>
    %c2_200 = arith.constant 2 : index
    %c1_201 = arith.constant 1 : index
    %c0_202 = arith.constant 0 : index
    %c0_203 = arith.constant 0 : index
    %160 = vector.load %arg6[%c2_200, %c1_201, %c0_202, %c0_203] : memref<3x3x8x8xbf16, #tpu.memory_space<vmem>>, vector<1x1x8x8xbf16>
    %161 = vector.shape_cast %160 : vector<1x1x8x8xbf16> to vector<8x8xbf16>
    %cst_204 = arith.constant dense<0.000000e+00> : vector<384x8xf32>
    %162 = tpu.matmul %159, %161, %cst_204 {dimension_numbers = #tpu.dot_dimension_numbers<[1], [0], [0], [1], [0, 0, 1, 1], [], []>} : vector<384x8xbf16>, vector<8x8xbf16>, vector<384x8xf32> -> vector<384x8xf32>
    %c0_205 = arith.constant 0 : index
    %c0_206 = arith.constant 0 : index
    %163 = vector.load %arg12[%c0_205, %c0_206] : memref<384x8xf32, #tpu.memory_space<vmem>>, vector<384x8xf32>
    %164 = arith.addf %163, %162 : vector<384x8xf32>
    %c0_207 = arith.constant 0 : index
    %c0_208 = arith.constant 0 : index
    %165 = vector.load %arg12[%c0_207, %c0_208] : memref<384x8xf32, #tpu.memory_space<vmem>>, vector<384x8xf32>
    tpu.vector_store %arg12[%c0_207, %c0_208], %164 {strides = array<i32>} : memref<384x8xf32, #tpu.memory_space<vmem>>, vector<384x8xf32>,
    %166 = vector.extract_strided_slice %105 {offsets = [50, 0], sizes = [384, 8], strides = [1, 1]} : vector<456x8xbf16> to vector<384x8xbf16>
    %c2_209 = arith.constant 2 : index
    %c2_210 = arith.constant 2 : index
    %c0_211 = arith.constant 0 : index
    %c0_212 = arith.constant 0 : index
    %167 = vector.load %arg6[%c2_209, %c2_210, %c0_211, %c0_212] : memref<3x3x8x8xbf16, #tpu.memory_space<vmem>>, vector<1x1x8x8xbf16>
    %168 = vector.shape_cast %167 : vector<1x1x8x8xbf16> to vector<8x8xbf16>
    %cst_213 = arith.constant dense<0.000000e+00> : vector<384x8xf32>
    %169 = tpu.matmul %166, %168, %cst_213 {dimension_numbers = #tpu.dot_dimension_numbers<[1], [0], [0], [1], [0, 0, 1, 1], [], []>} : vector<384x8xbf16>, vector<8x8xbf16>, vector<384x8xf32> -> vector<384x8xf32>
    %c0_214 = arith.constant 0 : index
    %c0_215 = arith.constant 0 : index
    %170 = vector.load %arg12[%c0_214, %c0_215] : memref<384x8xf32, #tpu.memory_space<vmem>>, vector<384x8xf32>
    %171 = arith.addf %170, %169 : vector<384x8xf32>
    %c0_216 = arith.constant 0 : index
    %c0_217 = arith.constant 0 : index
    %172 = vector.load %arg12[%c0_216, %c0_217] : memref<384x8xf32, #tpu.memory_space<vmem>>, vector<384x8xf32>
    tpu.vector_store %arg12[%c0_216, %c0_217], %171 {strides = array<i32>} : memref<384x8xf32, #tpu.memory_space<vmem>>, vector<384x8xf32>,
    %c0_218 = arith.constant 0 : index
    %c0_219 = arith.constant 0 : index
    %173 = vector.load %arg12[%c0_218, %c0_219] : memref<384x8xf32, #tpu.memory_space<vmem>>, vector<384x8xf32>
    %174 = vector.shape_cast %173 : vector<384x8xf32> to vector<16x24x8xf32>
    %175 = vector.extract_strided_slice %174 {offsets = [0, 0, 0], sizes = [16, 16, 8], strides = [1, 1, 1]} : vector<16x24x8xf32> to vector<16x16x8xf32>
    %c0_220 = arith.constant 0 : index
    %c0_221 = arith.constant 0 : index
    %c0_222 = arith.constant 0 : index
    %c0_223 = arith.constant 0 : index
    %176 = vector.load %arg8[%c0_220, %c0_221, %c0_222, %c0_223] : memref<1x16x16x8xf32, #tpu.memory_space<vmem>>, vector<1x16x16x8xf32>
    %177 = vector.shape_cast %176 : vector<1x16x16x8xf32> to vector<16x16x8xf32>
    %178 = vector.shape_cast %175 : vector<16x16x8xf32> to vector<1x16x16x8xf32>
    tpu.vector_store %arg8[%c0_220, %c0_221, %c0_222, %c0_223], %178 {strides = array<i32>} : memref<1x16x16x8xf32, #tpu.memory_space<vmem>>, vector<1x16x16x8xf32>,
    return
  }
  func.func @transform_0(%arg0: i32) -> (i32, i32, i32, i32) {
    %c0_i32 = arith.constant 0 : i32
    %c0_i32_0 = arith.constant 0 : i32
    %c0_i32_1 = arith.constant 0 : i32
    %c0_i32_2 = arith.constant 0 : i32
    return %arg0, %c0_i32, %c0_i32_0, %c0_i32_1 : i32, i32, i32, i32
  }
  func.func @transform_1(%arg0: i32) -> (i32, i32) {
    %c0_i32 = arith.constant 0 : i32
    %c0_i32_0 = arith.constant 0 : i32
    %c0_i32_1 = arith.constant 0 : i32
    return %c0_i32, %c0_i32_0 : i32, i32
  }
  func.func @transform_2(%arg0: i32) -> (i32, i32) {
    %c0_i32 = arith.constant 0 : i32
    %c0_i32_0 = arith.constant 0 : i32
    %c0_i32_1 = arith.constant 0 : i32
    return %c0_i32, %c0_i32_0 : i32, i32
  }
  func.func @transform_3(%arg0: i32) -> (i32, i32) {
    %c0_i32 = arith.constant 0 : i32
    %c0_i32_0 = arith.constant 0 : i32
    %c0_i32_1 = arith.constant 0 : i32
    return %c0_i32, %c0_i32_0 : i32, i32
  }
  func.func @transform_4(%arg0: i32) -> (i32, i32, i32, i32) {
    %c0_i32 = arith.constant 0 : i32
    %c0_i32_0 = arith.constant 0 : i32
    %c0_i32_1 = arith.constant 0 : i32
    %c0_i32_2 = arith.constant 0 : i32
    %c0_i32_3 = arith.constant 0 : i32
    return %c0_i32, %c0_i32_0, %c0_i32_1, %c0_i32_2 : i32, i32, i32, i32
  }
  func.func @transform_5(%arg0: i32) -> (i32, i32, i32, i32) {
    %c0_i32 = arith.constant 0 : i32
    %c0_i32_0 = arith.constant 0 : i32
    %c0_i32_1 = arith.constant 0 : i32
    %c0_i32_2 = arith.constant 0 : i32
    %c0_i32_3 = arith.constant 0 : i32
    return %c0_i32, %c0_i32_0, %c0_i32_1, %c0_i32_2 : i32, i32, i32, i32
  }
  func.func @transform_6(%arg0: i32) -> (i32, i32) {
    %c0_i32 = arith.constant 0 : i32
    %c0_i32_0 = arith.constant 0 : i32
    %c0_i32_1 = arith.constant 0 : i32
    return %c0_i32, %c0_i32_0 : i32, i32
  }
  func.func @transform_7(%arg0: i32) -> (i32, i32, i32, i32) {
    %c0_i32 = arith.constant 0 : i32
    %c0_i32_0 = arith.constant 0 : i32
    %c0_i32_1 = arith.constant 0 : i32
    %c0_i32_2 = arith.constant 0 : i32
    return %arg0, %c0_i32, %c0_i32_0, %c0_i32_1 : i32, i32, i32, i32
  }
}

</mosaic_0001>

<llo_original>
// kernel: tpu_custom_call.1
$region0: #{tpu_custom_call.1}
  #allocation0 [shape = 'u32[]', space=smem, size = 0x4, offset = 0x4, fixed_abs, tag = 'smem constant byte address 0x4 - core index']
  #allocation1 [shape = 'u32[144,128]{1,0:T(1,128)}', space=vmem, size = 0x12000, scoped, tag = 'internal scratch']
  #allocation2 [shape = 'bf16[19,24,4]{2,1,0:T(8,128)(2,1)}', space=vmem, size = 0x1c800, scoped, tag = 'scratch operand']
  #allocation3 [shape = 'bf16[19,24,8]{2,1,0:T(8,128)(2,1)}', space=vmem, size = 0x1c800, scoped, tag = 'scratch operand']
  #allocation4 [shape = 'f32[384,8]{1,0:T(8,128)}', space=vmem, size = 0x30000, scoped, tag = 'scratch operand']
  #allocation5 [shape = 'f32[384,8]{1,0:T(8,128)}', space=vmem, size = 0x30000, scoped, tag = 'scratch operand']
  %s0 = inlined_call_operand.vmem [shape: f32[2,16,16,4], index: 0, kind: input, shape index: {}]
  %s1 = inlined_call_operand.vmem [shape: f32[1,4], index: 1, kind: input, shape index: {}]
  %s2 = inlined_call_operand.vmem [shape: f32[1,4], index: 2, kind: input, shape index: {}]
  %s3 = inlined_call_operand.vmem [shape: f32[1,8], index: 3, kind: input, shape index: {}]
  %s4 = inlined_call_operand.vmem [shape: bf16[3,3,4,8], index: 4, kind: input, shape index: {}]
  %s5 = inlined_call_operand.vmem [shape: bf16[3,3,8,8], index: 5, kind: input, shape index: {}]
  %s6 = inlined_call_operand.vmem [shape: bf16[4,8], index: 6, kind: input, shape index: {}]
  %s7 = inlined_call_operand.vmem [shape: f32[2,16,16,8], index: 7, kind: output, shape index: {}]
  %s8 = sld [smem:[#allocation0]]
  $region61: #{tpu_custom_call.1} parent=0
    _
  %s10 = ssub.s32 1, %s8
  %s11 = scalar_select 0, %s10, %s8
  loop: start=0, step=1, limit=4
  $region2: #{tpu_custom_call.1} parent=0 // loop_pre_header
    _
  $region3: #{tpu_custom_call.1} parent=0 // loop_header
    %s13 = sphi 0, %s17
    %p14 = scmp.ge.s32.totalorder %s13, 4
    %s23 = sphi 0, %s25
    %s26 = sphi 0, %s23
    %s27 = sphi 0, %s26
    %s43 = sphi 0, %s27
    %s47 = sphi 0, %s47
    %s49 = sphi 0, %s47
    %s50 = sphi 0, %s49
    %s64 = sphi 0, %s50
    %s68 = sphi 0, %s68
    %s70 = sphi 0, %s68
    %s71 = sphi 0, %s70
    %s85 = sphi 0, %s71
    %s89 = sphi 0, %s89
    %s91 = sphi 0, %s89
    %s92 = sphi 0, %s91
    %s106 = sphi 0, %s92
    %s110 = sphi 0, %s110
    %s112 = sphi 0, %s110
    %s113 = sphi 0, %s112
    %s127 = sphi 0, %s113
    %s131 = sphi 0, %s131
    %s133 = sphi 0, %s131
    %s134 = sphi 0, %s133
    %s148 = sphi 0, %s134
    %s152 = sphi 0, %s152
    %s154 = sphi 0, %s152
    %s155 = sphi 0, %s154
    %s169 = sphi 0, %s155
    %s175 = sphi 0, %s177
    %s178 = sphi 0, %s175
    %s179 = sphi 0, %s178
    %s195 = sphi 0, %s179
  $region4: #{tpu_custom_call.1} parent=0 // loop_header_branch
    %16 = sbr.rel (%p14) target = $region8
  $region5: #{tpu_custom_call.1} parent=0 // loop_body
    %s18 = ssub.s32 %s13, 1
    %s19 = ssub.s32 %s13, 2
    %s20 = sadd.s32 %s13, 1
    %s21 = ssub.s32 %s13, %s20
    %p22 = scmp.eq.s32.totalorder %s21, 0
    %s24 = sadd.s32 %s23, 1
    %s25 = scalar_select %p22, %s23, %s24
    %p28 = pneg %p22
    %p29 = scmp.eq.s32.totalorder %s13, 1
    %p30 = por %p28, %p29
    %p31 = scmp.ne.s32.totalorder %s23, %s26
    %p32 = scmp.eq.s32.totalorder %s13, 0
    %p33 = por %p31, %p32
    %p34 = scmp.ne.s32.totalorder %s23, %s26
    %p35 = scmp.eq.s32.totalorder %s18, 1
    %p36 = por %p34, %p35
    %p37 = scmp.ne.s32.totalorder %s26, %s27
    %p38 = scmp.eq.s32.totalorder %s18, 0
    %p39 = por %p37, %p38
    %p40 = scmp.ne.s32.totalorder %s26, %s27
    %p41 = scmp.eq.s32.totalorder %s19, 1
    %p42 = por %p40, %p41
    %p44 = scmp.ne.s32.totalorder %s27, %s43
    %p45 = scmp.eq.s32.totalorder %s19, 0
    %p46 = por %p44, %p45
    %s48 = sadd.s32 %s47, 1
    %p51 = scmp.eq.s32.totalorder %s13, 1
    %p52 = scmp.ne.s32.totalorder %s47, %s49
    %p53 = scmp.eq.s32.totalorder %s13, 0
    %p54 = por %p52, %p53
    %p55 = scmp.ne.s32.totalorder %s47, %s49
    %p56 = scmp.eq.s32.totalorder %s18, 1
    %p57 = por %p55, %p56
    %p58 = scmp.ne.s32.totalorder %s49, %s50
    %p59 = scmp.eq.s32.totalorder %s18, 0
    %p60 = por %p58, %p59
    %p61 = scmp.ne.s32.totalorder %s49, %s50
    %p62 = scmp.eq.s32.totalorder %s19, 1
    %p63 = por %p61, %p62
    %p65 = scmp.ne.s32.totalorder %s50, %s64
    %p66 = scmp.eq.s32.totalorder %s19, 0
    %p67 = por %p65, %p66
    %s69 = sadd.s32 %s68, 1
    %p72 = scmp.eq.s32.totalorder %s13, 1
    %p73 = scmp.ne.s32.totalorder %s68, %s70
    %p74 = scmp.eq.s32.totalorder %s13, 0
    %p75 = por %p73, %p74
    %p76 = scmp.ne.s32.totalorder %s68, %s70
    %p77 = scmp.eq.s32.totalorder %s18, 1
    %p78 = por %p76, %p77
    %p79 = scmp.ne.s32.totalorder %s70, %s71
    %p80 = scmp.eq.s32.totalorder %s18, 0
    %p81 = por %p79, %p80
    %p82 = scmp.ne.s32.totalorder %s70, %s71
    %p83 = scmp.eq.s32.totalorder %s19, 1
    %p84 = por %p82, %p83
    %p86 = scmp.ne.s32.totalorder %s71, %s85
    %p87 = scmp.eq.s32.totalorder %s19, 0
    %p88 = por %p86, %p87
    %s90 = sadd.s32 %s89, 1
    %p93 = scmp.eq.s32.totalorder %s13, 1
    %p94 = scmp.ne.s32.totalorder %s89, %s91
    %p95 = scmp.eq.s32.totalorder %s13, 0
    %p96 = por %p94, %p95
    %p97 = scmp.ne.s32.totalorder %s89, %s91
    %p98 = scmp.eq.s32.totalorder %s18, 1
    %p99 = por %p97, %p98
    %p100 = scmp.ne.s32.totalorder %s91, %s92
    %p101 = scmp.eq.s32.totalorder %s18, 0
    %p102 = por %p100, %p101
    %p103 = scmp.ne.s32.totalorder %s91, %s92
    %p104 = scmp.eq.s32.totalorder %s19, 1
    %p105 = por %p103, %p104
    %p107 = scmp.ne.s32.totalorder %s92, %s106
    %p108 = scmp.eq.s32.totalorder %s19, 0
    %p109 = por %p107, %p108
    %s111 = sadd.s32 %s110, 1
    %p114 = scmp.eq.s32.totalorder %s13, 1
    %p115 = scmp.ne.s32.totalorder %s110, %s112
    %p116 = scmp.eq.s32.totalorder %s13, 0
    %p117 = por %p115, %p116
    %p118 = scmp.ne.s32.totalorder %s110, %s112
    %p119 = scmp.eq.s32.totalorder %s18, 1
    %p120 = por %p118, %p119
    %p121 = scmp.ne.s32.totalorder %s112, %s113
    %p122 = scmp.eq.s32.totalorder %s18, 0
    %p123 = por %p121, %p122
    %p124 = scmp.ne.s32.totalorder %s112, %s113
    %p125 = scmp.eq.s32.totalorder %s19, 1
    %p126 = por %p124, %p125
    %p128 = scmp.ne.s32.totalorder %s113, %s127
    %p129 = scmp.eq.s32.totalorder %s19, 0
    %p130 = por %p128, %p129
    %s132 = sadd.s32 %s131, 1
    %p135 = scmp.eq.s32.totalorder %s13, 1
    %p136 = scmp.ne.s32.totalorder %s131, %s133
    %p137 = scmp.eq.s32.totalorder %s13, 0
    %p138 = por %p136, %p137
    %p139 = scmp.ne.s32.totalorder %s131, %s133
    %p140 = scmp.eq.s32.totalorder %s18, 1
    %p141 = por %p139, %p140
    %p142 = scmp.ne.s32.totalorder %s133, %s134
    %p143 = scmp.eq.s32.totalorder %s18, 0
    %p144 = por %p142, %p143
    %p145 = scmp.ne.s32.totalorder %s133, %s134
    %p146 = scmp.eq.s32.totalorder %s19, 1
    %p147 = por %p145, %p146
    %p149 = scmp.ne.s32.totalorder %s134, %s148
    %p150 = scmp.eq.s32.totalorder %s19, 0
    %p151 = por %p149, %p150
    %s153 = sadd.s32 %s152, 1
    %p156 = scmp.eq.s32.totalorder %s13, 1
    %p157 = scmp.ne.s32.totalorder %s152, %s154
    %p158 = scmp.eq.s32.totalorder %s13, 0
    %p159 = por %p157, %p158
    %p160 = scmp.ne.s32.totalorder %s152, %s154
    %p161 = scmp.eq.s32.totalorder %s18, 1
    %p162 = por %p160, %p161
    %p163 = scmp.ne.s32.totalorder %s154, %s155
    %p164 = scmp.eq.s32.totalorder %s18, 0
    %p165 = por %p163, %p164
    %p166 = scmp.ne.s32.totalorder %s154, %s155
    %p167 = scmp.eq.s32.totalorder %s19, 1
    %p168 = por %p166, %p167
    %p170 = scmp.ne.s32.totalorder %s155, %s169
    %p171 = scmp.eq.s32.totalorder %s19, 0
    %p172 = por %p170, %p171
    %s173 = ssub.s32 %s13, %s20
    %p174 = scmp.eq.s32.totalorder %s173, 0
    %s176 = sadd.s32 %s175, 1
    %s177 = scalar_select %p174, %s175, %s176
    %p180 = pneg %p174
    %p181 = scmp.eq.s32.totalorder %s13, 1
    %p182 = por %p180, %p181
    %p183 = scmp.ne.s32.totalorder %s175, %s178
    %p184 = scmp.eq.s32.totalorder %s13, 0
    %p185 = por %p183, %p184
    %p186 = scmp.ne.s32.totalorder %s175, %s178
    %p187 = scmp.eq.s32.totalorder %s18, 1
    %p188 = por %p186, %p187
    %p189 = scmp.ne.s32.totalorder %s178, %s179
    %p190 = scmp.eq.s32.totalorder %s18, 0
    %p191 = por %p189, %p190
    %p192 = scmp.ne.s32.totalorder %s178, %s179
    %p193 = scmp.eq.s32.totalorder %s19, 1
    %p194 = por %p192, %p193
    %p196 = scmp.ne.s32.totalorder %s179, %s195
    %p197 = scmp.eq.s32.totalorder %s19, 0
    %p198 = por %p196, %p197
    %p199 = scmp.le.s32.totalorder 1, %s13
    %p200 = scmp.lt.s32.totalorder %s13, 3
    %p201 = pnand %p199, %p200
    %p202 = pneg %p201
    // Predicated region
    $region9: #{tpu_custom_call.1} parent=5 // pred_check
      _
    $region10: #{tpu_custom_call.1} parent=5 // pred_check_branch
      %204 = sbr.rel (%p201) target = $region12
    $region11: #{tpu_custom_call.1} parent=5 // pred_region
      %s205 = ssub.s32 %s13, 1
      // Predicated region
      $region13: #{tpu_custom_call.1} parent=11 // pred_check
        %p206 = pneg %p60
      $region14: #{tpu_custom_call.1} parent=11 // pred_check_branch
        %208 = sbr.rel (%p206) target = $region16
      $region15: #{tpu_custom_call.1} parent=11 // pred_region
        _
      $region16: #{tpu_custom_call.1} parent=11 // pred_fallthru
        _
      // Predicated region
      $region17: #{tpu_custom_call.1} parent=11 // pred_check
        %p209 = pneg %p81
      $region18: #{tpu_custom_call.1} parent=11 // pred_check_branch
        %211 = sbr.rel (%p209) target = $region20
      $region19: #{tpu_custom_call.1} parent=11 // pred_region
        _
      $region20: #{tpu_custom_call.1} parent=11 // pred_fallthru
        _
      // Predicated region
      $region21: #{tpu_custom_call.1} parent=11 // pred_check
        %p212 = pneg %p102
      $region22: #{tpu_custom_call.1} parent=11 // pred_check_branch
        %214 = sbr.rel (%p212) target = $region24
      $region23: #{tpu_custom_call.1} parent=11 // pred_region
        _
      $region24: #{tpu_custom_call.1} parent=11 // pred_fallthru
        _
      // Predicated region
      $region25: #{tpu_custom_call.1} parent=11 // pred_check
        %p215 = pneg %p123
      $region26: #{tpu_custom_call.1} parent=11 // pred_check_branch
        %217 = sbr.rel (%p215) target = $region28
      $region27: #{tpu_custom_call.1} parent=11 // pred_region
        _
      $region28: #{tpu_custom_call.1} parent=11 // pred_fallthru
        _
      // Predicated region
      $region29: #{tpu_custom_call.1} parent=11 // pred_check
        %p218 = pneg %p144
      $region30: #{tpu_custom_call.1} parent=11 // pred_check_branch
        %220 = sbr.rel (%p218) target = $region32
      $region31: #{tpu_custom_call.1} parent=11 // pred_region
        _
      $region32: #{tpu_custom_call.1} parent=11 // pred_fallthru
        _
      // Predicated region
      $region33: #{tpu_custom_call.1} parent=11 // pred_check
        %p221 = pneg %p165
      $region34: #{tpu_custom_call.1} parent=11 // pred_check_branch
        %223 = sbr.rel (%p221) target = $region36
      $region35: #{tpu_custom_call.1} parent=11 // pred_region
        _
      $region36: #{tpu_custom_call.1} parent=11 // pred_fallthru
        _
    $region12: #{tpu_custom_call.1} parent=5 // pred_fallthru
      _
    %p224 = scmp.lt.s32.totalorder %s13, 2
    // Predicated region
    $region37: #{tpu_custom_call.1} parent=5 // pred_check
      %p225 = pneg %p224
    $region38: #{tpu_custom_call.1} parent=5 // pred_check_branch
      %227 = sbr.rel (%p225) target = $region40
    $region39: #{tpu_custom_call.1} parent=5 // pred_region
      // Predicated region
      $region41: #{tpu_custom_call.1} parent=39 // pred_check
        %p228 = pneg %p33
      $region42: #{tpu_custom_call.1} parent=39 // pred_check_branch
        %230 = sbr.rel (%p228) target = $region44
      $region43: #{tpu_custom_call.1} parent=39 // pred_region
        %p231 = scmp.lt.s32.totalorder %s13, 1
        %s232 = scalar_select %p231, %s13, 1
        %s233 = smul.addr %s232, 32
        %s234 = smul.addr %s233, 8
        %s235 = scalar_lea.vmem %s0, %s234
      $region44: #{tpu_custom_call.1} parent=39 // pred_fallthru
        _
    $region40: #{tpu_custom_call.1} parent=5 // pred_fallthru
      _
    %p236 = scmp.le.s32.totalorder 1, %s13
    %p237 = scmp.lt.s32.totalorder %s13, 3
    %p238 = pnand %p236, %p237
    %p239 = pneg %p238
    // Predicated region
    $region45: #{tpu_custom_call.1} parent=5 // pred_check
      _
    $region46: #{tpu_custom_call.1} parent=5 // pred_check_branch
      %241 = sbr.rel (%p238) target = $region48
    $region47: #{tpu_custom_call.1} parent=5 // pred_region
      %s242 = ssub.s32 %s13, 1
      %p243 = scmp.lt.s32.totalorder %s18, 1
      %s244 = scalar_select %p243, %s18, 1
      %s245 = smul.addr %s244, 32
      %s246 = smul.addr %s245, 8
      %s247 = scalar_lea.vmem %s0, %s246
      %p248 = pneg %p39
      %p249 = pneg %p36
      %p250 = pneg %p60
      %p251 = pneg %p57
      %p252 = pneg %p81
      %p253 = pneg %p78
      %p254 = pneg %p102
      %p255 = pneg %p99
      %p256 = pneg %p123
      %p257 = pneg %p120
      %p258 = pneg %p144
      %p259 = pneg %p141
      %p260 = pneg %p165
      %p261 = pneg %p162
      %p262 = pneg %p191
      %p263 = pneg %p188
      %p264 = scmp.lt.s32.totalorder %s18, 1
      %s265 = scalar_select %p264, %s18, 1
      %s266 = smul.addr %s265, 32
      %s267 = smul.addr %s266, 8
      %s268 = scalar_lea.vmem %s7, %s267
      %p269 = scmp.lt.s32.totalorder %s18, 1
      %s270 = scalar_select %p269, %s18, 1
      %s271 = smul.addr %s270, 32
      %s272 = smul.addr %s271, 8
      %s273 = scalar_lea.vmem %s0, %s272
      %p274 = scmp.lt.s32.totalorder %s18, 1
      %s275 = scalar_select %p274, %s18, 1
      %s276 = smul.addr %s275, 32
      %s277 = smul.addr %s276, 8
      %s278 = scalar_lea.vmem %s7, %s277
      %v280 = vld [vmem:[%s273] sm:$0xff]
      %v281 = vld [vmem:[%s273 + $0x8] sm:$0xff]
      %v282 = vld [vmem:[%s273 + $0x10] sm:$0xff]
      %v283 = vld [vmem:[%s273 + $0x18] sm:$0xff]
      %v284 = vld [vmem:[%s273 + $0x20] sm:$0xff]
      %v285 = vld [vmem:[%s273 + $0x28] sm:$0xff]
      %v286 = vld [vmem:[%s273 + $0x30] sm:$0xff]
      %v287 = vld [vmem:[%s273 + $0x38] sm:$0xff]
      %v288 = vld [vmem:[%s273 + $0x40] sm:$0xff]
      %v289 = vld [vmem:[%s273 + $0x48] sm:$0xff]
      %v290 = vld [vmem:[%s273 + $0x50] sm:$0xff]
      %v291 = vld [vmem:[%s273 + $0x58] sm:$0xff]
      %v292 = vld [vmem:[%s273 + $0x60] sm:$0xff]
      %v293 = vld [vmem:[%s273 + $0x68] sm:$0xff]
      %v294 = vld [vmem:[%s273 + $0x70] sm:$0xff]
      %v295 = vld [vmem:[%s273 + $0x78] sm:$0xff]
      %v296 = vld [vmem:[%s273 + $0x80] sm:$0xff]
      %v297 = vld [vmem:[%s273 + $0x88] sm:$0xff]
      %v298 = vld [vmem:[%s273 + $0x90] sm:$0xff]
      %v299 = vld [vmem:[%s273 + $0x98] sm:$0xff]
      %v300 = vld [vmem:[%s273 + $0xa0] sm:$0xff]
      %v301 = vld [vmem:[%s273 + $0xa8] sm:$0xff]
      %v302 = vld [vmem:[%s273 + $0xb0] sm:$0xff]
      %v303 = vld [vmem:[%s273 + $0xb8] sm:$0xff]
      %v304 = vld [vmem:[%s273 + $0xc0] sm:$0xff]
      %v305 = vld [vmem:[%s273 + $0xc8] sm:$0xff]
      %v306 = vld [vmem:[%s273 + $0xd0] sm:$0xff]
      %v307 = vld [vmem:[%s273 + $0xd8] sm:$0xff]
      %v308 = vld [vmem:[%s273 + $0xe0] sm:$0xff]
      %v309 = vld [vmem:[%s273 + $0xe8] sm:$0xff]
      %v310 = vld [vmem:[%s273 + $0xf0] sm:$0xff]
      %v311 = vld [vmem:[%s273 + $0xf8] sm:$0xff]
      %v312 = vld [vmem:[%s1] sm:$0x1]
      %v314 = vlaneseq
      %v315 = vshrl.u32 %v314, 7
      %v316 = vsub.s32 0, %v315
      %v317 = vrot.slane %v312, %v316
      %v319 = vmul.f32 %v280, %v317
      %v320 = vmul.f32 %v281, %v317
      %v321 = vmul.f32 %v282, %v317
      %v322 = vmul.f32 %v283, %v317
      %v323 = vmul.f32 %v284, %v317
      %v324 = vmul.f32 %v285, %v317
      %v325 = vmul.f32 %v286, %v317
      %v326 = vmul.f32 %v287, %v317
      %v327 = vmul.f32 %v288, %v317
      %v328 = vmul.f32 %v289, %v317
      %v329 = vmul.f32 %v290, %v317
      %v330 = vmul.f32 %v291, %v317
      %v331 = vmul.f32 %v292, %v317
      %v332 = vmul.f32 %v293, %v317
      %v333 = vmul.f32 %v294, %v317
      %v334 = vmul.f32 %v295, %v317
      %v335 = vmul.f32 %v296, %v317
      %v336 = vmul.f32 %v297, %v317
      %v337 = vmul.f32 %v298, %v317
      %v338 = vmul.f32 %v299, %v317
      %v339 = vmul.f32 %v300, %v317
      %v340 = vmul.f32 %v301, %v317
      %v341 = vmul.f32 %v302, %v317
      %v342 = vmul.f32 %v303, %v317
      %v343 = vmul.f32 %v304, %v317
      %v344 = vmul.f32 %v305, %v317
      %v345 = vmul.f32 %v306, %v317
      %v346 = vmul.f32 %v307, %v317
      %v347 = vmul.f32 %v308, %v317
      %v348 = vmul.f32 %v309, %v317
      %v349 = vmul.f32 %v310, %v317
      %v350 = vmul.f32 %v311, %v317
      %v351 = vld [vmem:[%s2] sm:$0x1]
      %v353 = vlaneseq
      %v354 = vshrl.u32 %v353, 7
      %v355 = vsub.s32 0, %v354
      %v356 = vrot.slane %v351, %v355
      %v358 = vadd.f32 %v319, %v356
      %v359 = vadd.f32 %v320, %v356
      %v360 = vadd.f32 %v321, %v356
      %v361 = vadd.f32 %v322, %v356
      %v362 = vadd.f32 %v323, %v356
      %v363 = vadd.f32 %v324, %v356
      %v364 = vadd.f32 %v325, %v356
      %v365 = vadd.f32 %v326, %v356
      %v366 = vadd.f32 %v327, %v356
      %v367 = vadd.f32 %v328, %v356
      %v368 = vadd.f32 %v329, %v356
      %v369 = vadd.f32 %v330, %v356
      %v370 = vadd.f32 %v331, %v356
      %v371 = vadd.f32 %v332, %v356
      %v372 = vadd.f32 %v333, %v356
      %v373 = vadd.f32 %v334, %v356
      %v374 = vadd.f32 %v335, %v356
      %v375 = vadd.f32 %v336, %v356
      %v376 = vadd.f32 %v337, %v356
      %v377 = vadd.f32 %v338, %v356
      %v378 = vadd.f32 %v339, %v356
      %v379 = vadd.f32 %v340, %v356
      %v380 = vadd.f32 %v341, %v356
      %v381 = vadd.f32 %v342, %v356
      %v382 = vadd.f32 %v343, %v356
      %v383 = vadd.f32 %v344, %v356
      %v384 = vadd.f32 %v345, %v356
      %v385 = vadd.f32 %v346, %v356
      %v386 = vadd.f32 %v347, %v356
      %v387 = vadd.f32 %v348, %v356
      %v388 = vadd.f32 %v349, %v356
      %v389 = vadd.f32 %v350, %v356
      %v390 = vmax.f32 %v358, 0.0
      %v391 = vmax.f32 %v359, 0.0
      %v392 = vmax.f32 %v360, 0.0
      %v393 = vmax.f32 %v361, 0.0
      %v394 = vmax.f32 %v362, 0.0
      %v395 = vmax.f32 %v363, 0.0
      %v396 = vmax.f32 %v364, 0.0
      %v397 = vmax.f32 %v365, 0.0
      %v398 = vmax.f32 %v366, 0.0
      %v399 = vmax.f32 %v367, 0.0
      %v400 = vmax.f32 %v368, 0.0
      %v401 = vmax.f32 %v369, 0.0
      %v402 = vmax.f32 %v370, 0.0
      %v403 = vmax.f32 %v371, 0.0
      %v404 = vmax.f32 %v372, 0.0
      %v405 = vmax.f32 %v373, 0.0
      %v406 = vmax.f32 %v374, 0.0
      %v407 = vmax.f32 %v375, 0.0
      %v408 = vmax.f32 %v376, 0.0
      %v409 = vmax.f32 %v377, 0.0
      %v410 = vmax.f32 %v378, 0.0
      %v411 = vmax.f32 %v379, 0.0
      %v412 = vmax.f32 %v380, 0.0
      %v413 = vmax.f32 %v381, 0.0
      %v414 = vmax.f32 %v382, 0.0
      %v415 = vmax.f32 %v383, 0.0
      %v416 = vmax.f32 %v384, 0.0
      %v417 = vmax.f32 %v385, 0.0
      %v418 = vmax.f32 %v386, 0.0
      %v419 = vmax.f32 %v387, 0.0
      %v420 = vmax.f32 %v388, 0.0
      %v421 = vmax.f32 %v389, 0.0
      %vm422 = vcmask 27648
      %423 = vst.msk [vmem:[#allocation2] sm:$0xf] %vm422, 0
      %424 = vst.msk [vmem:[#allocation2 + $0x4] sm:$0xf] %vm422, 0
      %425 = vst.msk [vmem:[#allocation2 + $0x8] sm:$0xf] %vm422, 0
      %s426 = scalar_lea.vmem [#allocation2], 204
      %427 = vst.msk [vmem:[%s426] sm:$0xf] %vm422, 0
      %428 = vst.msk [vmem:[%s426 + $0x4] sm:$0xf] %vm422, 0
      %429 = vst.msk [vmem:[%s426 + $0x8] sm:$0xf] %vm422, 0
      %430 = vst.msk [vmem:[%s426 + $0xc] sm:$0xf] %vm422, 0
      %431 = vst.msk [vmem:[%s426 + $0x10] sm:$0xf] %vm422, 0
      %432 = vst.msk [vmem:[%s426 + $0x14] sm:$0xf] %vm422, 0
      %s433 = scalar_lea.vmem [#allocation2], 12
      %vm434 = vcmask 24576
      %vm435 = vsmask.f32 256
      %vm436 = vmand %vm434, %vm435
      %v437 = vld [vmem:[%s433] sm:$0x1]
      %v438 = vsel %vm436, 0, %v437
      %439 = vst [vmem:[%s433] sm:$0x1] %v438
      %v440 = vld [vmem:[%s433 + $0xc] sm:$0x1]
      %v441 = vsel %vm436, 0, %v440
      %442 = vst [vmem:[%s433 + $0xc] sm:$0x1] %v441
      %v443 = vld [vmem:[%s433 + $0x18] sm:$0x1]
      %v444 = vsel %vm436, 0, %v443
      %445 = vst [vmem:[%s433 + $0x18] sm:$0x1] %v444
      %v446 = vld [vmem:[%s433 + $0x24] sm:$0x1]
      %v447 = vsel %vm436, 0, %v446
      %448 = vst [vmem:[%s433 + $0x24] sm:$0x1] %v447
      %v449 = vld [vmem:[%s433 + $0x30] sm:$0x1]
      %v450 = vsel %vm436, 0, %v449
      %451 = vst [vmem:[%s433 + $0x30] sm:$0x1] %v450
      %v452 = vld [vmem:[%s433 + $0x3c] sm:$0x1]
      %v453 = vsel %vm436, 0, %v452
      %454 = vst [vmem:[%s433 + $0x3c] sm:$0x1] %v453
      %v455 = vld [vmem:[%s433 + $0x48] sm:$0x1]
      %v456 = vsel %vm436, 0, %v455
      %457 = vst [vmem:[%s433 + $0x48] sm:$0x1] %v456
      %v458 = vld [vmem:[%s433 + $0x54] sm:$0x1]
      %v459 = vsel %vm436, 0, %v458
      %460 = vst [vmem:[%s433 + $0x54] sm:$0x1] %v459
      %v461 = vld [vmem:[%s433 + $0x60] sm:$0x1]
      %v462 = vsel %vm436, 0, %v461
      %463 = vst [vmem:[%s433 + $0x60] sm:$0x1] %v462
      %v464 = vld [vmem:[%s433 + $0x6c] sm:$0x1]
      %v465 = vsel %vm436, 0, %v464
      %466 = vst [vmem:[%s433 + $0x6c] sm:$0x1] %v465
      %v467 = vld [vmem:[%s433 + $0x78] sm:$0x1]
      %v468 = vsel %vm436, 0, %v467
      %469 = vst [vmem:[%s433 + $0x78] sm:$0x1] %v468
      %v470 = vld [vmem:[%s433 + $0x84] sm:$0x1]
      %v471 = vsel %vm436, 0, %v470
      %472 = vst [vmem:[%s433 + $0x84] sm:$0x1] %v471
      %v473 = vld [vmem:[%s433 + $0x90] sm:$0x1]
      %v474 = vsel %vm436, 0, %v473
      %475 = vst [vmem:[%s433 + $0x90] sm:$0x1] %v474
      %v476 = vld [vmem:[%s433 + $0x9c] sm:$0x1]
      %v477 = vsel %vm436, 0, %v476
      %478 = vst [vmem:[%s433 + $0x9c] sm:$0x1] %v477
      %v479 = vld [vmem:[%s433 + $0xa8] sm:$0x1]
      %v480 = vsel %vm436, 0, %v479
      %481 = vst [vmem:[%s433 + $0xa8] sm:$0x1] %v480
      %v482 = vld [vmem:[%s433 + $0xb4] sm:$0x1]
      %v483 = vsel %vm436, 0, %v482
      %484 = vst [vmem:[%s433 + $0xb4] sm:$0x1] %v483
      %vm485 = vcmask 27648
      %vm486 = vsmask.f32 7938
      %vm487 = vmand %vm485, %vm486
      %v488 = vld [vmem:[%s433 + $0x8] sm:$0xf]
      %v489 = vsel %vm487, 0, %v488
      %490 = vst [vmem:[%s433 + $0x8] sm:$0xf] %v489
      %v491 = vld [vmem:[%s433 + $0x14] sm:$0xf]
      %v492 = vsel %vm487, 0, %v491
      %493 = vst [vmem:[%s433 + $0x14] sm:$0xf] %v492
      %v494 = vld [vmem:[%s433 + $0x20] sm:$0xf]
      %v495 = vsel %vm487, 0, %v494
      %496 = vst [vmem:[%s433 + $0x20] sm:$0xf] %v495
      %v497 = vld [vmem:[%s433 + $0x2c] sm:$0xf]
      %v498 = vsel %vm487, 0, %v497
      %499 = vst [vmem:[%s433 + $0x2c] sm:$0xf] %v498
      %v500 = vld [vmem:[%s433 + $0x38] sm:$0xf]
      %v501 = vsel %vm487, 0, %v500
      %502 = vst [vmem:[%s433 + $0x38] sm:$0xf] %v501
      %v503 = vld [vmem:[%s433 + $0x44] sm:$0xf]
      %v504 = vsel %vm487, 0, %v503
      %505 = vst [vmem:[%s433 + $0x44] sm:$0xf] %v504
      %v506 = vld [vmem:[%s433 + $0x50] sm:$0xf]
      %v507 = vsel %vm487, 0, %v506
      %508 = vst [vmem:[%s433 + $0x50] sm:$0xf] %v507
      %v509 = vld [vmem:[%s433 + $0x5c] sm:$0xf]
      %v510 = vsel %vm487, 0, %v509
      %511 = vst [vmem:[%s433 + $0x5c] sm:$0xf] %v510
      %v512 = vld [vmem:[%s433 + $0x68] sm:$0xf]
      %v513 = vsel %vm487, 0, %v512
      %514 = vst [vmem:[%s433 + $0x68] sm:$0xf] %v513
      %v515 = vld [vmem:[%s433 + $0x74] sm:$0xf]
      %v516 = vsel %vm487, 0, %v515
      %517 = vst [vmem:[%s433 + $0x74] sm:$0xf] %v516
      %v518 = vld [vmem:[%s433 + $0x80] sm:$0xf]
      %v519 = vsel %vm487, 0, %v518
      %520 = vst [vmem:[%s433 + $0x80] sm:$0xf] %v519
      %v521 = vld [vmem:[%s433 + $0x8c] sm:$0xf]
      %v522 = vsel %vm487, 0, %v521
      %523 = vst [vmem:[%s433 + $0x8c] sm:$0xf] %v522
      %v524 = vld [vmem:[%s433 + $0x98] sm:$0xf]
      %v525 = vsel %vm487, 0, %v524
      %526 = vst [vmem:[%s433 + $0x98] sm:$0xf] %v525
      %v527 = vld [vmem:[%s433 + $0xa4] sm:$0xf]
      %v528 = vsel %vm487, 0, %v527
      %529 = vst [vmem:[%s433 + $0xa4] sm:$0xf] %v528
      %v530 = vld [vmem:[%s433 + $0xb0] sm:$0xf]
      %v531 = vsel %vm487, 0, %v530
      %532 = vst [vmem:[%s433 + $0xb0] sm:$0xf] %v531
      %v533 = vld [vmem:[%s433 + $0xbc] sm:$0xf]
      %v534 = vsel %vm487, 0, %v533
      %535 = vst [vmem:[%s433 + $0xbc] sm:$0xf] %v534
      %v536 = vpack.c.bf16 %v391, %v390
      %v537 = vpack.c.bf16 %v393, %v392
      %v538 = vpack.c.bf16 %v395, %v394
      %v539 = vpack.c.bf16 %v397, %v396
      %v540 = vpack.c.bf16 %v399, %v398
      %v541 = vpack.c.bf16 %v401, %v400
      %v542 = vpack.c.bf16 %v403, %v402
      %v543 = vpack.c.bf16 %v405, %v404
      %v544 = vpack.c.bf16 %v407, %v406
      %v545 = vpack.c.bf16 %v409, %v408
      %v546 = vpack.c.bf16 %v411, %v410
      %v547 = vpack.c.bf16 %v413, %v412
      %v548 = vpack.c.bf16 %v415, %v414
      %v549 = vpack.c.bf16 %v417, %v416
      %v550 = vpack.c.bf16 %v419, %v418
      %v551 = vpack.c.bf16 %v421, %v420
      %v568 = vunpack.c.l.b16 %v536
      %v569 = vunpack.c.h.b16 %v536
      %v570 = vunpack.c.l.b16 %v537
      %v571 = vunpack.c.h.b16 %v537
      %v572 = vunpack.c.l.b16 %v538
      %v573 = vunpack.c.h.b16 %v538
      %v574 = vunpack.c.l.b16 %v539
      %v575 = vunpack.c.h.b16 %v539
      %v576 = vunpack.c.l.b16 %v540
      %v577 = vunpack.c.h.b16 %v540
      %v578 = vunpack.c.l.b16 %v541
      %v579 = vunpack.c.h.b16 %v541
      %v580 = vunpack.c.l.b16 %v542
      %v581 = vunpack.c.h.b16 %v542
      %v582 = vunpack.c.l.b16 %v543
      %v583 = vunpack.c.h.b16 %v543
      %v584 = vunpack.c.l.b16 %v544
      %v585 = vunpack.c.h.b16 %v544
      %v586 = vunpack.c.l.b16 %v545
      %v587 = vunpack.c.h.b16 %v545
      %v588 = vunpack.c.l.b16 %v546
      %v589 = vunpack.c.h.b16 %v546
      %v590 = vunpack.c.l.b16 %v547
      %v591 = vunpack.c.h.b16 %v547
      %v592 = vunpack.c.l.b16 %v548
      %v593 = vunpack.c.h.b16 %v548
      %v594 = vunpack.c.l.b16 %v549
      %v595 = vunpack.c.h.b16 %v549
      %v596 = vunpack.c.l.b16 %v550
      %v597 = vunpack.c.h.b16 %v550
      %v598 = vunpack.c.l.b16 %v551
      %v599 = vunpack.c.h.b16 %v551
      %v600 = vpack.c.b16 %v568, %v568
      %v601 = vpack.c.b16 %v569, %v569
      %v602 = vpack.c.b16 %v570, %v570
      %v603 = vpack.c.b16 %v571, %v571
      %v604 = vpack.c.b16 %v572, %v572
      %v605 = vpack.c.b16 %v573, %v573
      %v606 = vpack.c.b16 %v574, %v574
      %v607 = vpack.c.b16 %v575, %v575
      %v608 = vpack.c.b16 %v576, %v576
      %v609 = vpack.c.b16 %v577, %v577
      %v610 = vpack.c.b16 %v578, %v578
      %v611 = vpack.c.b16 %v579, %v579
      %v612 = vpack.c.b16 %v580, %v580
      %v613 = vpack.c.b16 %v581, %v581
      %v614 = vpack.c.b16 %v582, %v582
      %v615 = vpack.c.b16 %v583, %v583
      %v616 = vpack.c.b16 %v584, %v584
      %v617 = vpack.c.b16 %v585, %v585
      %v618 = vpack.c.b16 %v586, %v586
      %v619 = vpack.c.b16 %v587, %v587
      %v620 = vpack.c.b16 %v588, %v588
      %v621 = vpack.c.b16 %v589, %v589
      %v622 = vpack.c.b16 %v590, %v590
      %v623 = vpack.c.b16 %v591, %v591
      %v624 = vpack.c.b16 %v592, %v592
      %v625 = vpack.c.b16 %v593, %v593
      %v626 = vpack.c.b16 %v594, %v594
      %v627 = vpack.c.b16 %v595, %v595
      %v628 = vpack.c.b16 %v596, %v596
      %v629 = vpack.c.b16 %v597, %v597
      %v630 = vpack.c.b16 %v598, %v598
      %v631 = vpack.c.b16 %v599, %v599
      %vm632 = vsmask.f32 4368
      %vm633 = vmor %vm435, %vm632
      %v635 = vshrl.u32 %v600, 16
      %v637 = vrot.slane %v635, 7
      %v638 = vshll.u32 %v600, 16
      %v640 = vor.u32 %v637, %v638
      %v641 = vrot.slane %v637, 4
      %v643 = vshrl.u32 %v601, 16
      %v645 = vrot.slane %v643, 7
      %v646 = vshll.u32 %v601, 16
      %v648 = vor.u32 %v645, %v646
      %v649 = vsel %vm633, %v641, %v648
      %v650 = vrot.slane %v645, 4
      %v652 = vshrl.u32 %v602, 16
      %v654 = vrot.slane %v652, 7
      %v655 = vshll.u32 %v602, 16
      %v657 = vor.u32 %v654, %v655
      %v658 = vrot.slane %v654, 4
      %v660 = vshrl.u32 %v603, 16
      %v662 = vrot.slane %v660, 7
      %v663 = vshll.u32 %v603, 16
      %v665 = vor.u32 %v662, %v663
      %v666 = vsel %vm633, %v658, %v665
      %v667 = vrot.slane %v662, 4
      %v669 = vshrl.u32 %v604, 16
      %v671 = vrot.slane %v669, 7
      %v672 = vshll.u32 %v604, 16
      %v674 = vor.u32 %v671, %v672
      %v675 = vrot.slane %v671, 4
      %v677 = vshrl.u32 %v605, 16
      %v679 = vrot.slane %v677, 7
      %v680 = vshll.u32 %v605, 16
      %v682 = vor.u32 %v679, %v680
      %v683 = vsel %vm633, %v675, %v682
      %v684 = vrot.slane %v679, 4
      %v686 = vshrl.u32 %v606, 16
      %v688 = vrot.slane %v686, 7
      %v689 = vshll.u32 %v606, 16
      %v691 = vor.u32 %v688, %v689
      %v692 = vrot.slane %v688, 4
      %v694 = vshrl.u32 %v607, 16
      %v696 = vrot.slane %v694, 7
      %v697 = vshll.u32 %v607, 16
      %v699 = vor.u32 %v696, %v697
      %v700 = vsel %vm633, %v692, %v699
      %v701 = vrot.slane %v696, 4
      %v703 = vshrl.u32 %v608, 16
      %v705 = vrot.slane %v703, 7
      %v706 = vshll.u32 %v608, 16
      %v708 = vor.u32 %v705, %v706
      %v709 = vrot.slane %v705, 4
      %v711 = vshrl.u32 %v609, 16
      %v713 = vrot.slane %v711, 7
      %v714 = vshll.u32 %v609, 16
      %v716 = vor.u32 %v713, %v714
      %v717 = vsel %vm633, %v709, %v716
      %v718 = vrot.slane %v713, 4
      %v720 = vshrl.u32 %v610, 16
      %v722 = vrot.slane %v720, 7
      %v723 = vshll.u32 %v610, 16
      %v725 = vor.u32 %v722, %v723
      %v726 = vrot.slane %v722, 4
      %v728 = vshrl.u32 %v611, 16
      %v730 = vrot.slane %v728, 7
      %v731 = vshll.u32 %v611, 16
      %v733 = vor.u32 %v730, %v731
      %v734 = vsel %vm633, %v726, %v733
      %v735 = vrot.slane %v730, 4
      %v737 = vshrl.u32 %v612, 16
      %v739 = vrot.slane %v737, 7
      %v740 = vshll.u32 %v612, 16
      %v742 = vor.u32 %v739, %v740
      %v743 = vrot.slane %v739, 4
      %v745 = vshrl.u32 %v613, 16
      %v747 = vrot.slane %v745, 7
      %v748 = vshll.u32 %v613, 16
      %v750 = vor.u32 %v747, %v748
      %v751 = vsel %vm633, %v743, %v750
      %v752 = vrot.slane %v747, 4
      %v754 = vshrl.u32 %v614, 16
      %v756 = vrot.slane %v754, 7
      %v757 = vshll.u32 %v614, 16
      %v759 = vor.u32 %v756, %v757
      %v760 = vrot.slane %v756, 4
      %v762 = vshrl.u32 %v615, 16
      %v764 = vrot.slane %v762, 7
      %v765 = vshll.u32 %v615, 16
      %v767 = vor.u32 %v764, %v765
      %v768 = vsel %vm633, %v760, %v767
      %v769 = vrot.slane %v764, 4
      %v771 = vshrl.u32 %v616, 16
      %v773 = vrot.slane %v771, 7
      %v774 = vshll.u32 %v616, 16
      %v776 = vor.u32 %v773, %v774
      %v777 = vrot.slane %v773, 4
      %v779 = vshrl.u32 %v617, 16
      %v781 = vrot.slane %v779, 7
      %v782 = vshll.u32 %v617, 16
      %v784 = vor.u32 %v781, %v782
      %v785 = vsel %vm633, %v777, %v784
      %v786 = vrot.slane %v781, 4
      %v788 = vshrl.u32 %v618, 16
      %v790 = vrot.slane %v788, 7
      %v791 = vshll.u32 %v618, 16
      %v793 = vor.u32 %v790, %v791
      %v794 = vrot.slane %v790, 4
      %v796 = vshrl.u32 %v619, 16
      %v798 = vrot.slane %v796, 7
      %v799 = vshll.u32 %v619, 16
      %v801 = vor.u32 %v798, %v799
      %v802 = vsel %vm633, %v794, %v801
      %v803 = vrot.slane %v798, 4
      %v805 = vshrl.u32 %v620, 16
      %v807 = vrot.slane %v805, 7
      %v808 = vshll.u32 %v620, 16
      %v810 = vor.u32 %v807, %v808
      %v811 = vrot.slane %v807, 4
      %v813 = vshrl.u32 %v621, 16
      %v815 = vrot.slane %v813, 7
      %v816 = vshll.u32 %v621, 16
      %v818 = vor.u32 %v815, %v816
      %v819 = vsel %vm633, %v811, %v818
      %v820 = vrot.slane %v815, 4
      %v822 = vshrl.u32 %v622, 16
      %v824 = vrot.slane %v822, 7
      %v825 = vshll.u32 %v622, 16
      %v827 = vor.u32 %v824, %v825
      %v828 = vrot.slane %v824, 4
      %v830 = vshrl.u32 %v623, 16
      %v832 = vrot.slane %v830, 7
      %v833 = vshll.u32 %v623, 16
      %v835 = vor.u32 %v832, %v833
      %v836 = vsel %vm633, %v828, %v835
      %v837 = vrot.slane %v832, 4
      %v839 = vshrl.u32 %v624, 16
      %v841 = vrot.slane %v839, 7
      %v842 = vshll.u32 %v624, 16
      %v844 = vor.u32 %v841, %v842
      %v845 = vrot.slane %v841, 4
      %v847 = vshrl.u32 %v625, 16
      %v849 = vrot.slane %v847, 7
      %v850 = vshll.u32 %v625, 16
      %v852 = vor.u32 %v849, %v850
      %v853 = vsel %vm633, %v845, %v852
      %v854 = vrot.slane %v849, 4
      %v856 = vshrl.u32 %v626, 16
      %v858 = vrot.slane %v856, 7
      %v859 = vshll.u32 %v626, 16
      %v861 = vor.u32 %v858, %v859
      %v862 = vrot.slane %v858, 4
      %v864 = vshrl.u32 %v627, 16
      %v866 = vrot.slane %v864, 7
      %v867 = vshll.u32 %v627, 16
      %v869 = vor.u32 %v866, %v867
      %v870 = vsel %vm633, %v862, %v869
      %v871 = vrot.slane %v866, 4
      %v873 = vshrl.u32 %v628, 16
      %v875 = vrot.slane %v873, 7
      %v876 = vshll.u32 %v628, 16
      %v878 = vor.u32 %v875, %v876
      %v879 = vrot.slane %v875, 4
      %v881 = vshrl.u32 %v629, 16
      %v883 = vrot.slane %v881, 7
      %v884 = vshll.u32 %v629, 16
      %v886 = vor.u32 %v883, %v884
      %v887 = vsel %vm633, %v879, %v886
      %v888 = vrot.slane %v883, 4
      %v890 = vshrl.u32 %v630, 16
      %v892 = vrot.slane %v890, 7
      %v893 = vshll.u32 %v630, 16
      %v895 = vor.u32 %v892, %v893
      %v896 = vrot.slane %v892, 4
      %v898 = vshrl.u32 %v631, 16
      %v900 = vrot.slane %v898, 7
      %v901 = vshll.u32 %v631, 16
      %v903 = vor.u32 %v900, %v901
      %v904 = vsel %vm633, %v896, %v903
      %v905 = vrot.slane %v900, 4
      %v954 = vld [vmem:[%s433] sm:$0xf]
      %v955 = vsel %vm487, %v640, %v954
      %956 = vst [vmem:[%s433] sm:$0xf] %v955
      %957 = vst.msk [vmem:[%s433 + $0x4] sm:$0xf] %vm422, %v649
      %v958 = vld [vmem:[%s433 + $0x8] sm:$0x1]
      %v959 = vsel %vm436, %v650, %v958
      %960 = vst [vmem:[%s433 + $0x8] sm:$0x1] %v959
      %v961 = vld [vmem:[%s433 + $0xc] sm:$0xf]
      %v962 = vsel %vm487, %v657, %v961
      %963 = vst [vmem:[%s433 + $0xc] sm:$0xf] %v962
      %964 = vst.msk [vmem:[%s433 + $0x10] sm:$0xf] %vm422, %v666
      %v965 = vld [vmem:[%s433 + $0x14] sm:$0x1]
      %v966 = vsel %vm436, %v667, %v965
      %967 = vst [vmem:[%s433 + $0x14] sm:$0x1] %v966
      %v968 = vld [vmem:[%s433 + $0x18] sm:$0xf]
      %v969 = vsel %vm487, %v674, %v968
      %970 = vst [vmem:[%s433 + $0x18] sm:$0xf] %v969
      %971 = vst.msk [vmem:[%s433 + $0x1c] sm:$0xf] %vm422, %v683
      %v972 = vld [vmem:[%s433 + $0x20] sm:$0x1]
      %v973 = vsel %vm436, %v684, %v972
      %974 = vst [vmem:[%s433 + $0x20] sm:$0x1] %v973
      %v975 = vld [vmem:[%s433 + $0x24] sm:$0xf]
      %v976 = vsel %vm487, %v691, %v975
      %977 = vst [vmem:[%s433 + $0x24] sm:$0xf] %v976
      %978 = vst.msk [vmem:[%s433 + $0x28] sm:$0xf] %vm422, %v700
      %v979 = vld [vmem:[%s433 + $0x2c] sm:$0x1]
      %v980 = vsel %vm436, %v701, %v979
      %981 = vst [vmem:[%s433 + $0x2c] sm:$0x1] %v980
      %v982 = vld [vmem:[%s433 + $0x30] sm:$0xf]
      %v983 = vsel %vm487, %v708, %v982
      %984 = vst [vmem:[%s433 + $0x30] sm:$0xf] %v983
      %985 = vst.msk [vmem:[%s433 + $0x34] sm:$0xf] %vm422, %v717
      %v986 = vld [vmem:[%s433 + $0x38] sm:$0x1]
      %v987 = vsel %vm436, %v718, %v986
      %988 = vst [vmem:[%s433 + $0x38] sm:$0x1] %v987
      %v989 = vld [vmem:[%s433 + $0x3c] sm:$0xf]
      %v990 = vsel %vm487, %v725, %v989
      %991 = vst [vmem:[%s433 + $0x3c] sm:$0xf] %v990
      %992 = vst.msk [vmem:[%s433 + $0x40] sm:$0xf] %vm422, %v734
      %v993 = vld [vmem:[%s433 + $0x44] sm:$0x1]
      %v994 = vsel %vm436, %v735, %v993
      %995 = vst [vmem:[%s433 + $0x44] sm:$0x1] %v994
      %v996 = vld [vmem:[%s433 + $0x48] sm:$0xf]
      %v997 = vsel %vm487, %v742, %v996
      %998 = vst [vmem:[%s433 + $0x48] sm:$0xf] %v997
      %999 = vst.msk [vmem:[%s433 + $0x4c] sm:$0xf] %vm422, %v751
      %v1000 = vld [vmem:[%s433 + $0x50] sm:$0x1]
      %v1001 = vsel %vm436, %v752, %v1000
      %1002 = vst [vmem:[%s433 + $0x50] sm:$0x1] %v1001
      %v1003 = vld [vmem:[%s433 + $0x54] sm:$0xf]
      %v1004 = vsel %vm487, %v759, %v1003
      %1005 = vst [vmem:[%s433 + $0x54] sm:$0xf] %v1004
      %1006 = vst.msk [vmem:[%s433 + $0x58] sm:$0xf] %vm422, %v768
      %v1007 = vld [vmem:[%s433 + $0x5c] sm:$0x1]
      %v1008 = vsel %vm436, %v769, %v1007
      %1009 = vst [vmem:[%s433 + $0x5c] sm:$0x1] %v1008
      %v1010 = vld [vmem:[%s433 + $0x60] sm:$0xf]
      %v1011 = vsel %vm487, %v776, %v1010
      %1012 = vst [vmem:[%s433 + $0x60] sm:$0xf] %v1011
      %1013 = vst.msk [vmem:[%s433 + $0x64] sm:$0xf] %vm422, %v785
      %v1014 = vld [vmem:[%s433 + $0x68] sm:$0x1]
      %v1015 = vsel %vm436, %v786, %v1014
      %1016 = vst [vmem:[%s433 + $0x68] sm:$0x1] %v1015
      %v1017 = vld [vmem:[%s433 + $0x6c] sm:$0xf]
      %v1018 = vsel %vm487, %v793, %v1017
      %1019 = vst [vmem:[%s433 + $0x6c] sm:$0xf] %v1018
      %1020 = vst.msk [vmem:[%s433 + $0x70] sm:$0xf] %vm422, %v802
      %v1021 = vld [vmem:[%s433 + $0x74] sm:$0x1]
      %v1022 = vsel %vm436, %v803, %v1021
      %1023 = vst [vmem:[%s433 + $0x74] sm:$0x1] %v1022
      %v1024 = vld [vmem:[%s433 + $0x78] sm:$0xf]
      %v1025 = vsel %vm487, %v810, %v1024
      %1026 = vst [vmem:[%s433 + $0x78] sm:$0xf] %v1025
      %1027 = vst.msk [vmem:[%s433 + $0x7c] sm:$0xf] %vm422, %v819
      %v1028 = vld [vmem:[%s433 + $0x80] sm:$0x1]
      %v1029 = vsel %vm436, %v820, %v1028
      %1030 = vst [vmem:[%s433 + $0x80] sm:$0x1] %v1029
      %v1031 = vld [vmem:[%s433 + $0x84] sm:$0xf]
      %v1032 = vsel %vm487, %v827, %v1031
      %1033 = vst [vmem:[%s433 + $0x84] sm:$0xf] %v1032
      %1034 = vst.msk [vmem:[%s433 + $0x88] sm:$0xf] %vm422, %v836
      %v1035 = vld [vmem:[%s433 + $0x8c] sm:$0x1]
      %v1036 = vsel %vm436, %v837, %v1035
      %1037 = vst [vmem:[%s433 + $0x8c] sm:$0x1] %v1036
      %v1038 = vld [vmem:[%s433 + $0x90] sm:$0xf]
      %v1039 = vsel %vm487, %v844, %v1038
      %1040 = vst [vmem:[%s433 + $0x90] sm:$0xf] %v1039
      %1041 = vst.msk [vmem:[%s433 + $0x94] sm:$0xf] %vm422, %v853
      %v1042 = vld [vmem:[%s433 + $0x98] sm:$0x1]
      %v1043 = vsel %vm436, %v854, %v1042
      %1044 = vst [vmem:[%s433 + $0x98] sm:$0x1] %v1043
      %v1045 = vld [vmem:[%s433 + $0x9c] sm:$0xf]
      %v1046 = vsel %vm487, %v861, %v1045
      %1047 = vst [vmem:[%s433 + $0x9c] sm:$0xf] %v1046
      %1048 = vst.msk [vmem:[%s433 + $0xa0] sm:$0xf] %vm422, %v870
      %v1049 = vld [vmem:[%s433 + $0xa4] sm:$0x1]
      %v1050 = vsel %vm436, %v871, %v1049
      %1051 = vst [vmem:[%s433 + $0xa4] sm:$0x1] %v1050
      %v1052 = vld [vmem:[%s433 + $0xa8] sm:$0xf]
      %v1053 = vsel %vm487, %v878, %v1052
      %1054 = vst [vmem:[%s433 + $0xa8] sm:$0xf] %v1053
      %1055 = vst.msk [vmem:[%s433 + $0xac] sm:$0xf] %vm422, %v887
      %v1056 = vld [vmem:[%s433 + $0xb0] sm:$0x1]
      %v1057 = vsel %vm436, %v888, %v1056
      %1058 = vst [vmem:[%s433 + $0xb0] sm:$0x1] %v1057
      %v1059 = vld [vmem:[%s433 + $0xb4] sm:$0xf]
      %v1060 = vsel %vm487, %v895, %v1059
      %1061 = vst [vmem:[%s433 + $0xb4] sm:$0xf] %v1060
      %1062 = vst.msk [vmem:[%s433 + $0xb8] sm:$0xf] %vm422, %v904
      %v1063 = vld [vmem:[%s433 + $0xbc] sm:$0x1]
      %v1064 = vsel %vm436, %v905, %v1063
      %1065 = vst [vmem:[%s433 + $0xbc] sm:$0x1] %v1064
      %v1066 = vld [vmem:[#allocation2] sm:$0xf]
      %v1067 = vld [vmem:[#allocation2 + $0x4] sm:$0xf]
      %v1068 = vld [vmem:[#allocation2 + $0x8] sm:$0xf]
      %v1069 = vld [vmem:[#allocation2 + $0xc] sm:$0xf]
      %v1070 = vld [vmem:[#allocation2 + $0x10] sm:$0xf]
      %v1071 = vld [vmem:[#allocation2 + $0x14] sm:$0xf]
      %v1072 = vld [vmem:[#allocation2 + $0x18] sm:$0xf]
      %v1073 = vld [vmem:[#allocation2 + $0x1c] sm:$0xf]
      %v1074 = vld [vmem:[#allocation2 + $0x20] sm:$0xf]
      %v1075 = vld [vmem:[#allocation2 + $0x24] sm:$0xf]
      %v1076 = vld [vmem:[#allocation2 + $0x28] sm:$0xf]
      %v1077 = vld [vmem:[#allocation2 + $0x2c] sm:$0xf]
      %v1078 = vld [vmem:[#allocation2 + $0x30] sm:$0xf]
      %v1079 = vld [vmem:[#allocation2 + $0x34] sm:$0xf]
      %v1080 = vld [vmem:[#allocation2 + $0x38] sm:$0xf]
      %v1081 = vld [vmem:[#allocation2 + $0x3c] sm:$0xf]
      %v1082 = vld [vmem:[#allocation2 + $0x40] sm:$0xf]
      %v1083 = vld [vmem:[#allocation2 + $0x44] sm:$0xf]
      %v1084 = vld [vmem:[#allocation2 + $0x48] sm:$0xf]
      %v1085 = vld [vmem:[#allocation2 + $0x4c] sm:$0xf]
      %v1086 = vld [vmem:[#allocation2 + $0x50] sm:$0xf]
      %v1087 = vld [vmem:[#allocation2 + $0x54] sm:$0xf]
      %v1088 = vld [vmem:[#allocation2 + $0x58] sm:$0xf]
      %v1089 = vld [vmem:[#allocation2 + $0x5c] sm:$0xf]
      %v1090 = vld [vmem:[#allocation2 + $0x60] sm:$0xf]
      %v1091 = vld [vmem:[#allocation2 + $0x64] sm:$0xf]
      %v1092 = vld [vmem:[#allocation2 + $0x68] sm:$0xf]
      %v1093 = vld [vmem:[#allocation2 + $0x6c] sm:$0xf]
      %v1094 = vld [vmem:[#allocation2 + $0x70] sm:$0xf]
      %v1095 = vld [vmem:[#allocation2 + $0x74] sm:$0xf]
      %v1096 = vld [vmem:[#allocation2 + $0x78] sm:$0xf]
      %v1097 = vld [vmem:[#allocation2 + $0x7c] sm:$0xf]
      %v1098 = vld [vmem:[#allocation2 + $0x80] sm:$0xf]
      %v1099 = vld [vmem:[#allocation2 + $0x84] sm:$0xf]
      %v1100 = vld [vmem:[#allocation2 + $0x88] sm:$0xf]
      %v1101 = vld [vmem:[#allocation2 + $0x8c] sm:$0xf]
      %v1102 = vld [vmem:[#allocation2 + $0x90] sm:$0xf]
      %v1103 = vld [vmem:[#allocation2 + $0x94] sm:$0xf]
      %v1104 = vld [vmem:[#allocation2 + $0x98] sm:$0xf]
      %v1105 = vld [vmem:[#allocation2 + $0x9c] sm:$0xf]
      %v1106 = vld [vmem:[#allocation2 + $0xa0] sm:$0xf]
      %v1107 = vld [vmem:[#allocation2 + $0xa4] sm:$0xf]
      %v1108 = vld [vmem:[#allocation2 + $0xa8] sm:$0xf]
      %v1109 = vld [vmem:[#allocation2 + $0xac] sm:$0xf]
      %v1110 = vld [vmem:[#allocation2 + $0xb0] sm:$0xf]
      %v1111 = vld [vmem:[#allocation2 + $0xb4] sm:$0xf]
      %v1112 = vld [vmem:[#allocation2 + $0xb8] sm:$0xf]
      %v1113 = vld [vmem:[#allocation2 + $0xbc] sm:$0xf]
      %v1114 = vld [vmem:[#allocation2 + $0xc0] sm:$0xf]
      %v1115 = vld [vmem:[#allocation2 + $0xc4] sm:$0xf]
      %v1116 = vld [vmem:[#allocation2 + $0xc8] sm:$0xf]
      %v1117 = vld [vmem:[#allocation2 + $0xcc] sm:$0xf]
      %v1118 = vld [vmem:[#allocation2 + $0xd0] sm:$0xf]
      %v1119 = vld [vmem:[#allocation2 + $0xd4] sm:$0xf]
      %v1120 = vld [vmem:[#allocation2 + $0xd8] sm:$0xf]
      %v1121 = vld [vmem:[%s4] sm:$0x3]
      %v1170 = vunpack.c.l.b16 %v1066
      %v1171 = vunpack.c.l.b16 %v1067
      %v1172 = vunpack.c.l.b16 %v1068
      %v1173 = vunpack.c.l.b16 %v1069
      %v1174 = vunpack.c.l.b16 %v1070
      %v1175 = vunpack.c.l.b16 %v1071
      %v1176 = vunpack.c.l.b16 %v1072
      %v1177 = vunpack.c.l.b16 %v1073
      %v1178 = vunpack.c.l.b16 %v1074
      %v1179 = vunpack.c.l.b16 %v1075
      %v1180 = vunpack.c.l.b16 %v1076
      %v1181 = vunpack.c.l.b16 %v1077
      %v1182 = vunpack.c.l.b16 %v1078
      %v1183 = vunpack.c.l.b16 %v1079
      %v1184 = vunpack.c.l.b16 %v1080
      %v1185 = vunpack.c.l.b16 %v1081
      %v1186 = vunpack.c.l.b16 %v1082
      %v1187 = vunpack.c.l.b16 %v1083
      %v1188 = vunpack.c.l.b16 %v1084
      %v1189 = vunpack.c.l.b16 %v1085
      %v1190 = vunpack.c.l.b16 %v1086
      %v1191 = vunpack.c.l.b16 %v1087
      %v1192 = vunpack.c.l.b16 %v1088
      %v1193 = vunpack.c.l.b16 %v1089
      %v1194 = vunpack.c.l.b16 %v1090
      %v1195 = vunpack.c.l.b16 %v1091
      %v1196 = vunpack.c.l.b16 %v1092
      %v1197 = vunpack.c.l.b16 %v1093
      %v1198 = vunpack.c.l.b16 %v1094
      %v1199 = vunpack.c.l.b16 %v1095
      %v1200 = vunpack.c.l.b16 %v1096
      %v1201 = vunpack.c.l.b16 %v1097
      %v1202 = vunpack.c.l.b16 %v1098
      %v1203 = vunpack.c.l.b16 %v1099
      %v1204 = vunpack.c.l.b16 %v1100
      %v1205 = vunpack.c.l.b16 %v1101
      %v1206 = vunpack.c.l.b16 %v1102
      %v1207 = vunpack.c.l.b16 %v1103
      %v1208 = vunpack.c.l.b16 %v1104
      %v1209 = vunpack.c.l.b16 %v1105
      %v1210 = vunpack.c.l.b16 %v1106
      %v1211 = vunpack.c.l.b16 %v1107
      %v1212 = vunpack.c.l.b16 %v1108
      %v1213 = vunpack.c.l.b16 %v1109
      %v1214 = vunpack.c.l.b16 %v1110
      %v1215 = vunpack.c.l.b16 %v1111
      %v1216 = vunpack.c.l.b16 %v1112
      %v1217 = vunpack.c.l.b16 %v1113
      %v1218 = vpack.c.b16 %v1171, %v1170
      %v1219 = vpack.c.b16 %v1173, %v1172
      %v1220 = vpack.c.b16 %v1175, %v1174
      %v1221 = vpack.c.b16 %v1177, %v1176
      %v1222 = vpack.c.b16 %v1179, %v1178
      %v1223 = vpack.c.b16 %v1181, %v1180
      %v1224 = vpack.c.b16 %v1183, %v1182
      %v1225 = vpack.c.b16 %v1185, %v1184
      %v1226 = vpack.c.b16 %v1187, %v1186
      %v1227 = vpack.c.b16 %v1189, %v1188
      %v1228 = vpack.c.b16 %v1191, %v1190
      %v1229 = vpack.c.b16 %v1193, %v1192
      %v1230 = vpack.c.b16 %v1195, %v1194
      %v1231 = vpack.c.b16 %v1197, %v1196
      %v1232 = vpack.c.b16 %v1199, %v1198
      %v1233 = vpack.c.b16 %v1201, %v1200
      %v1234 = vpack.c.b16 %v1203, %v1202
      %v1235 = vpack.c.b16 %v1205, %v1204
      %v1236 = vpack.c.b16 %v1207, %v1206
      %v1237 = vpack.c.b16 %v1209, %v1208
      %v1238 = vpack.c.b16 %v1211, %v1210
      %v1239 = vpack.c.b16 %v1213, %v1212
      %v1240 = vpack.c.b16 %v1215, %v1214
      %v1241 = vpack.c.b16 %v1217, %v1216
      %vm1242 = vcmask 31744
      %v1244 = vsel %vm1242, %v1218, 0
      %v1247 = vsel %vm1242, %v1219, 0
      %v1250 = vsel %vm1242, %v1220, 0
      %v1253 = vsel %vm1242, %v1221, 0
      %v1256 = vsel %vm1242, %v1222, 0
      %v1259 = vsel %vm1242, %v1223, 0
      %v1262 = vsel %vm1242, %v1224, 0
      %v1265 = vsel %vm1242, %v1225, 0
      %v1268 = vsel %vm1242, %v1226, 0
      %v1271 = vsel %vm1242, %v1227, 0
      %v1274 = vsel %vm1242, %v1228, 0
      %v1277 = vsel %vm1242, %v1229, 0
      %v1280 = vsel %vm1242, %v1230, 0
      %v1283 = vsel %vm1242, %v1231, 0
      %v1286 = vsel %vm1242, %v1232, 0
      %v1289 = vsel %vm1242, %v1233, 0
      %v1292 = vsel %vm1242, %v1234, 0
      %v1295 = vsel %vm1242, %v1235, 0
      %v1298 = vsel %vm1242, %v1236, 0
      %v1301 = vsel %vm1242, %v1237, 0
      %v1304 = vsel %vm1242, %v1238, 0
      %v1307 = vsel %vm1242, %v1239, 0
      %v1310 = vsel %vm1242, %v1240, 0
      %v1313 = vsel %vm1242, %v1241, 0
      %vm1315 = vcmask 1041408
      %v1317 = vsel %vm1315, %v1121, 0
      %1319 = vmatprep.subr.bf16.mxu0 0
      %1320 = vmatpush1.bf16.msra.mxu0 %v1317
      %1321 = vmatprep.subr.bf16.mxu0 0
      %1322 = vmatpush1.bf16.msra.mxu0 0
      %1323 = vmatprep.subr.bf16.mxu0 0
      %1324 = vmatpush1.bf16.msra.mxu0 0
      %1325 = vmatprep.subr.bf16.mxu0 0
      %1326 = vmatpush1.bf16.msra.mxu0 0
      %1327 = vmatprep.subr.bf16.mxu0 0
      %1328 = vmatpush1.bf16.msra.mxu0 0
      %1329 = vmatprep.subr.bf16.mxu0 0
      %1330 = vmatpush1.bf16.msra.mxu0 0
      %1331 = vmatprep.subr.bf16.mxu0 0
      %1332 = vmatpush1.bf16.msra.mxu0 0
      %1333 = vmatprep.subr.bf16.mxu0 0
      %1334 = vmatpush1.bf16.msra.mxu0 0
      %1335 = vmatprep.subr.bf16.mxu0 0
      %1336 = vmatpush1.bf16.msra.mxu0 0
      %1337 = vmatprep.subr.bf16.mxu0 0
      %1338 = vmatpush1.bf16.msra.mxu0 0
      %1339 = vmatprep.subr.bf16.mxu0 0
      %1340 = vmatpush1.bf16.msra.mxu0 0
      %1341 = vmatprep.subr.bf16.mxu0 0
      %1342 = vmatpush1.bf16.msra.mxu0 0
      %1343 = vmatprep.subr.bf16.mxu0 0
      %1344 = vmatpush1.bf16.msra.mxu0 0
      %1345 = vmatprep.subr.bf16.mxu0 0
      %1346 = vmatpush1.bf16.msra.mxu0 0
      %1347 = vmatprep.subr.bf16.mxu0 0
      %1348 = vmatpush1.bf16.msra.mxu0 0
      %1349 = vmatprep.subr.bf16.mxu0 0
      %1350 = vmatpush1.bf16.msra.mxu0 0
      %1351 = vmatprep.mubr.bf16.mxu0 0
      %1352 = vmatmul.mubr.bf16.gmra.mrb[0].mxu0 %v1244
      %v1353 = vpop.f32.mrb[0].mxu0
      %v1354 = vadd.f32 0.0, %v1353
      %v1355 = vpop.f32.mrb[0].mxu0
      %v1356 = vpop.f32.mrb[0].mxu0
      %v1357 = vadd.f32 0.0, %v1356
      %v1358 = vpop.f32.mrb[0].mxu0
      %1359 = vmatprep.mubr.bf16.mxu0 0
      %1360 = vmatmul.mubr.bf16.gmra.mrb[0].mxu0 %v1247
      %v1361 = vpop.f32.mrb[0].mxu0
      %v1362 = vadd.f32 0.0, %v1361
      %v1363 = vpop.f32.mrb[0].mxu0
      %v1364 = vpop.f32.mrb[0].mxu0
      %v1365 = vadd.f32 0.0, %v1364
      %v1366 = vpop.f32.mrb[0].mxu0
      %1367 = vmatprep.mubr.bf16.mxu0 0
      %1368 = vmatmul.mubr.bf16.gmra.mrb[0].mxu0 %v1250
      %v1369 = vpop.f32.mrb[0].mxu0
      %v1370 = vadd.f32 0.0, %v1369
      %v1371 = vpop.f32.mrb[0].mxu0
      %v1372 = vpop.f32.mrb[0].mxu0
      %v1373 = vadd.f32 0.0, %v1372
      %v1374 = vpop.f32.mrb[0].mxu0
      %1375 = vmatprep.mubr.bf16.mxu0 0
      %1376 = vmatmul.mubr.bf16.gmra.mrb[0].mxu0 %v1253
      %v1377 = vpop.f32.mrb[0].mxu0
      %v1378 = vadd.f32 0.0, %v1377
      %v1379 = vpop.f32.mrb[0].mxu0
      %v1380 = vpop.f32.mrb[0].mxu0
      %v1381 = vadd.f32 0.0, %v1380
      %v1382 = vpop.f32.mrb[0].mxu0
      %1383 = vmatprep.mubr.bf16.mxu0 0
      %1384 = vmatmul.mubr.bf16.gmra.mrb[0].mxu0 %v1256
      %v1385 = vpop.f32.mrb[0].mxu0
      %v1386 = vadd.f32 0.0, %v1385
      %v1387 = vpop.f32.mrb[0].mxu0
      %v1388 = vpop.f32.mrb[0].mxu0
      %v1389 = vadd.f32 0.0, %v1388
      %v1390 = vpop.f32.mrb[0].mxu0
      %1391 = vmatprep.mubr.bf16.mxu0 0
      %1392 = vmatmul.mubr.bf16.gmra.mrb[0].mxu0 %v1259
      %v1393 = vpop.f32.mrb[0].mxu0
      %v1394 = vadd.f32 0.0, %v1393
      %v1395 = vpop.f32.mrb[0].mxu0
      %v1396 = vpop.f32.mrb[0].mxu0
      %v1397 = vadd.f32 0.0, %v1396
      %v1398 = vpop.f32.mrb[0].mxu0
      %1399 = vmatprep.mubr.bf16.mxu0 0
      %1400 = vmatmul.mubr.bf16.gmra.mrb[0].mxu0 %v1262
      %v1401 = vpop.f32.mrb[0].mxu0
      %v1402 = vadd.f32 0.0, %v1401
      %v1403 = vpop.f32.mrb[0].mxu0
      %v1404 = vpop.f32.mrb[0].mxu0
      %v1405 = vadd.f32 0.0, %v1404
      %v1406 = vpop.f32.mrb[0].mxu0
      %1407 = vmatprep.mubr.bf16.mxu0 0
      %1408 = vmatmul.mubr.bf16.gmra.mrb[0].mxu0 %v1265
      %v1409 = vpop.f32.mrb[0].mxu0
      %v1410 = vadd.f32 0.0, %v1409
      %v1411 = vpop.f32.mrb[0].mxu0
      %v1412 = vpop.f32.mrb[0].mxu0
      %v1413 = vadd.f32 0.0, %v1412
      %v1414 = vpop.f32.mrb[0].mxu0
      %1415 = vmatprep.mubr.bf16.mxu0 0
      %1416 = vmatmul.mubr.bf16.gmra.mrb[0].mxu0 %v1268
      %v1417 = vpop.f32.mrb[0].mxu0
      %v1418 = vadd.f32 0.0, %v1417
      %v1419 = vpop.f32.mrb[0].mxu0
      %v1420 = vpop.f32.mrb[0].mxu0
      %v1421 = vadd.f32 0.0, %v1420
      %v1422 = vpop.f32.mrb[0].mxu0
      %1423 = vmatprep.mubr.bf16.mxu0 0
      %1424 = vmatmul.mubr.bf16.gmra.mrb[0].mxu0 %v1271
      %v1425 = vpop.f32.mrb[0].mxu0
      %v1426 = vadd.f32 0.0, %v1425
      %v1427 = vpop.f32.mrb[0].mxu0
      %v1428 = vpop.f32.mrb[0].mxu0
      %v1429 = vadd.f32 0.0, %v1428
      %v1430 = vpop.f32.mrb[0].mxu0
      %1431 = vmatprep.mubr.bf16.mxu0 0
      %1432 = vmatmul.mubr.bf16.gmra.mrb[0].mxu0 %v1274
      %v1433 = vpop.f32.mrb[0].mxu0
      %v1434 = vadd.f32 0.0, %v1433
      %v1435 = vpop.f32.mrb[0].mxu0
      %v1436 = vpop.f32.mrb[0].mxu0
      %v1437 = vadd.f32 0.0, %v1436
      %v1438 = vpop.f32.mrb[0].mxu0
      %1439 = vmatprep.mubr.bf16.mxu0 0
      %1440 = vmatmul.mubr.bf16.gmra.mrb[0].mxu0 %v1277
      %v1441 = vpop.f32.mrb[0].mxu0
      %v1442 = vadd.f32 0.0, %v1441
      %v1443 = vpop.f32.mrb[0].mxu0
      %v1444 = vpop.f32.mrb[0].mxu0
      %v1445 = vadd.f32 0.0, %v1444
      %v1446 = vpop.f32.mrb[0].mxu0
      %1447 = vmatprep.mubr.bf16.mxu0 0
      %1448 = vmatmul.mubr.bf16.gmra.mrb[0].mxu0 %v1280
      %v1449 = vpop.f32.mrb[0].mxu0
      %v1450 = vadd.f32 0.0, %v1449
      %v1451 = vpop.f32.mrb[0].mxu0
      %v1452 = vpop.f32.mrb[0].mxu0
      %v1453 = vadd.f32 0.0, %v1452
      %v1454 = vpop.f32.mrb[0].mxu0
      %1455 = vmatprep.mubr.bf16.mxu0 0
      %1456 = vmatmul.mubr.bf16.gmra.mrb[0].mxu0 %v1283
      %v1457 = vpop.f32.mrb[0].mxu0
      %v1458 = vadd.f32 0.0, %v1457
      %v1459 = vpop.f32.mrb[0].mxu0
      %v1460 = vpop.f32.mrb[0].mxu0
      %v1461 = vadd.f32 0.0, %v1460
      %v1462 = vpop.f32.mrb[0].mxu0
      %1463 = vmatprep.mubr.bf16.mxu0 0
      %1464 = vmatmul.mubr.bf16.gmra.mrb[0].mxu0 %v1286
      %v1465 = vpop.f32.mrb[0].mxu0
      %v1466 = vadd.f32 0.0, %v1465
      %v1467 = vpop.f32.mrb[0].mxu0
      %v1468 = vpop.f32.mrb[0].mxu0
      %v1469 = vadd.f32 0.0, %v1468
      %v1470 = vpop.f32.mrb[0].mxu0
      %1471 = vmatprep.mubr.bf16.mxu0 0
      %1472 = vmatmul.mubr.bf16.gmra.mrb[0].mxu0 %v1289
      %v1473 = vpop.f32.mrb[0].mxu0
      %v1474 = vadd.f32 0.0, %v1473
      %v1475 = vpop.f32.mrb[0].mxu0
      %v1476 = vpop.f32.mrb[0].mxu0
      %v1477 = vadd.f32 0.0, %v1476
      %v1478 = vpop.f32.mrb[0].mxu0
      %1479 = vmatprep.mubr.bf16.mxu0 0
      %1480 = vmatmul.mubr.bf16.gmra.mrb[0].mxu0 %v1292
      %v1481 = vpop.f32.mrb[0].mxu0
      %v1482 = vadd.f32 0.0, %v1481
      %v1483 = vpop.f32.mrb[0].mxu0
      %v1484 = vpop.f32.mrb[0].mxu0
      %v1485 = vadd.f32 0.0, %v1484
      %v1486 = vpop.f32.mrb[0].mxu0
      %1487 = vmatprep.mubr.bf16.mxu0 0
      %1488 = vmatmul.mubr.bf16.gmra.mrb[0].mxu0 %v1295
      %v1489 = vpop.f32.mrb[0].mxu0
      %v1490 = vadd.f32 0.0, %v1489
      %v1491 = vpop.f32.mrb[0].mxu0
      %v1492 = vpop.f32.mrb[0].mxu0
      %v1493 = vadd.f32 0.0, %v1492
      %v1494 = vpop.f32.mrb[0].mxu0
      %1495 = vmatprep.mubr.bf16.mxu0 0
      %1496 = vmatmul.mubr.bf16.gmra.mrb[0].mxu0 %v1298
      %v1497 = vpop.f32.mrb[0].mxu0
      %v1498 = vadd.f32 0.0, %v1497
      %v1499 = vpop.f32.mrb[0].mxu0
      %v1500 = vpop.f32.mrb[0].mxu0
      %v1501 = vadd.f32 0.0, %v1500
      %v1502 = vpop.f32.mrb[0].mxu0
      %1503 = vmatprep.mubr.bf16.mxu0 0
      %1504 = vmatmul.mubr.bf16.gmra.mrb[0].mxu0 %v1301
      %v1505 = vpop.f32.mrb[0].mxu0
      %v1506 = vadd.f32 0.0, %v1505
      %v1507 = vpop.f32.mrb[0].mxu0
      %v1508 = vpop.f32.mrb[0].mxu0
      %v1509 = vadd.f32 0.0, %v1508
      %v1510 = vpop.f32.mrb[0].mxu0
      %1511 = vmatprep.mubr.bf16.mxu0 0
      %1512 = vmatmul.mubr.bf16.gmra.mrb[0].mxu0 %v1304
      %v1513 = vpop.f32.mrb[0].mxu0
      %v1514 = vadd.f32 0.0, %v1513
      %v1515 = vpop.f32.mrb[0].mxu0
      %v1516 = vpop.f32.mrb[0].mxu0
      %v1517 = vadd.f32 0.0, %v1516
      %v1518 = vpop.f32.mrb[0].mxu0
      %1519 = vmatprep.mubr.bf16.mxu0 0
      %1520 = vmatmul.mubr.bf16.gmra.mrb[0].mxu0 %v1307
      %v1521 = vpop.f32.mrb[0].mxu0
      %v1522 = vadd.f32 0.0, %v1521
      %v1523 = vpop.f32.mrb[0].mxu0
      %v1524 = vpop.f32.mrb[0].mxu0
      %v1525 = vadd.f32 0.0, %v1524
      %v1526 = vpop.f32.mrb[0].mxu0
      %1527 = vmatprep.mubr.bf16.mxu0 0
      %1528 = vmatmul.mubr.bf16.gmra.mrb[0].mxu0 %v1310
      %v1529 = vpop.f32.mrb[0].mxu0
      %v1530 = vadd.f32 0.0, %v1529
      %v1531 = vpop.f32.mrb[0].mxu0
      %v1532 = vpop.f32.mrb[0].mxu0
      %v1533 = vadd.f32 0.0, %v1532
      %v1534 = vpop.f32.mrb[0].mxu0
      %1535 = vmatprep.mubr.bf16.mxu0 0
      %1536 = vmatmul.mubr.bf16.gmra.mrb[0].mxu0 %v1313
      %v1537 = vpop.f32.mrb[0].mxu0
      %v1538 = vadd.f32 0.0, %v1537
      %v1539 = vpop.f32.mrb[0].mxu0
      %v1540 = vpop.f32.mrb[0].mxu0
      %v1541 = vadd.f32 0.0, %v1540
      %v1542 = vpop.f32.mrb[0].mxu0
      %1543 = vdwg.mxu0
      %vm1544 = vcmask 64512
      %1545 = vst.msk [vmem:[#allocation4] sm:$0xff] %vm1544, %v1354
      %1546 = vst.msk [vmem:[#allocation4 + $0x8] sm:$0xff] %vm1544, %v1357
      %1547 = vst.msk [vmem:[#allocation4 + $0x10] sm:$0xff] %vm1544, %v1362
      %1548 = vst.msk [vmem:[#allocation4 + $0x18] sm:$0xff] %vm1544, %v1365
      %1549 = vst.msk [vmem:[#allocation4 + $0x20] sm:$0xff] %vm1544, %v1370
      %1550 = vst.msk [vmem:[#allocation4 + $0x28] sm:$0xff] %vm1544, %v1373
      %1551 = vst.msk [vmem:[#allocation4 + $0x30] sm:$0xff] %vm1544, %v1378
      %1552 = vst.msk [vmem:[#allocation4 + $0x38] sm:$0xff] %vm1544, %v1381
      %1553 = vst.msk [vmem:[#allocation4 + $0x40] sm:$0xff] %vm1544, %v1386
      %1554 = vst.msk [vmem:[#allocation4 + $0x48] sm:$0xff] %vm1544, %v1389
      %1555 = vst.msk [vmem:[#allocation4 + $0x50] sm:$0xff] %vm1544, %v1394
      %1556 = vst.msk [vmem:[#allocation4 + $0x58] sm:$0xff] %vm1544, %v1397
      %1557 = vst.msk [vmem:[#allocation4 + $0x60] sm:$0xff] %vm1544, %v1402
      %1558 = vst.msk [vmem:[#allocation4 + $0x68] sm:$0xff] %vm1544, %v1405
      %1559 = vst.msk [vmem:[#allocation4 + $0x70] sm:$0xff] %vm1544, %v1410
      %1560 = vst.msk [vmem:[#allocation4 + $0x78] sm:$0xff] %vm1544, %v1413
      %1561 = vst.msk [vmem:[#allocation4 + $0x80] sm:$0xff] %vm1544, %v1418
      %1562 = vst.msk [vmem:[#allocation4 + $0x88] sm:$0xff] %vm1544, %v1421
      %1563 = vst.msk [vmem:[#allocation4 + $0x90] sm:$0xff] %vm1544, %v1426
      %1564 = vst.msk [vmem:[#allocation4 + $0x98] sm:$0xff] %vm1544, %v1429
      %1565 = vst.msk [vmem:[#allocation4 + $0xa0] sm:$0xff] %vm1544, %v1434
      %1566 = vst.msk [vmem:[#allocation4 + $0xa8] sm:$0xff] %vm1544, %v1437
      %1567 = vst.msk [vmem:[#allocation4 + $0xb0] sm:$0xff] %vm1544, %v1442
      %1568 = vst.msk [vmem:[#allocation4 + $0xb8] sm:$0xff] %vm1544, %v1445
      %1569 = vst.msk [vmem:[#allocation4 + $0xc0] sm:$0xff] %vm1544, %v1450
      %1570 = vst.msk [vmem:[#allocation4 + $0xc8] sm:$0xff] %vm1544, %v1453
      %1571 = vst.msk [vmem:[#allocation4 + $0xd0] sm:$0xff] %vm1544, %v1458
      %1572 = vst.msk [vmem:[#allocation4 + $0xd8] sm:$0xff] %vm1544, %v1461
      %1573 = vst.msk [vmem:[#allocation4 + $0xe0] sm:$0xff] %vm1544, %v1466
      %1574 = vst.msk [vmem:[#allocation4 + $0xe8] sm:$0xff] %vm1544, %v1469
      %1575 = vst.msk [vmem:[#allocation4 + $0xf0] sm:$0xff] %vm1544, %v1474
      %1576 = vst.msk [vmem:[#allocation4 + $0xf8] sm:$0xff] %vm1544, %v1477
      %1577 = vst.msk [vmem:[#allocation4 + $0x100] sm:$0xff] %vm1544, %v1482
      %1578 = vst.msk [vmem:[#allocation4 + $0x108] sm:$0xff] %vm1544, %v1485
      %1579 = vst.msk [vmem:[#allocation4 + $0x110] sm:$0xff] %vm1544, %v1490
      %1580 = vst.msk [vmem:[#allocation4 + $0x118] sm:$0xff] %vm1544, %v1493
      %1581 = vst.msk [vmem:[#allocation4 + $0x120] sm:$0xff] %vm1544, %v1498
      %1582 = vst.msk [vmem:[#allocation4 + $0x128] sm:$0xff] %vm1544, %v1501
      %1583 = vst.msk [vmem:[#allocation4 + $0x130] sm:$0xff] %vm1544, %v1506
      %1584 = vst.msk [vmem:[#allocation4 + $0x138] sm:$0xff] %vm1544, %v1509
      %1585 = vst.msk [vmem:[#allocation4 + $0x140] sm:$0xff] %vm1544, %v1514
      %1586 = vst.msk [vmem:[#allocation4 + $0x148] sm:$0xff] %vm1544, %v1517
      %1587 = vst.msk [vmem:[#allocation4 + $0x150] sm:$0xff] %vm1544, %v1522
      %1588 = vst.msk [vmem:[#allocation4 + $0x158] sm:$0xff] %vm1544, %v1525
      %1589 = vst.msk [vmem:[#allocation4 + $0x160] sm:$0xff] %vm1544, %v1530
      %1590 = vst.msk [vmem:[#allocation4 + $0x168] sm:$0xff] %vm1544, %v1533
      %1591 = vst.msk [vmem:[#allocation4 + $0x170] sm:$0xff] %vm1544, %v1538
      %1592 = vst.msk [vmem:[#allocation4 + $0x178] sm:$0xff] %vm1544, %v1541
      %s1593 = scalar_lea.vmem %s4, 2
      %v1594 = vld [vmem:[%s1593] sm:$0x3]
      %v1596 = vunpack.c.l.b16 %v1114
      %v1597 = vpack.c.b16 %v1596, %v1596
      %vm1598 = vsmask.f32 7424
      %v1599 = vshrl.u32 %v1218, 16
      %v1601 = vshll.u32 %v1218, 16
      %v1603 = vrot.slane %v1601, 1
      %v1604 = vor.u32 %v1599, %v1603
      %v1605 = vshll.u32 %v1219, 16
      %v1607 = vrot.slane %v1605, 1
      %v1608 = vsel %vm1598, %v1604, %v1607
      %v1609 = vshrl.u32 %v1219, 16
      %v1611 = vor.u32 %v1609, %v1607
      %v1612 = vshll.u32 %v1220, 16
      %v1614 = vrot.slane %v1612, 1
      %v1615 = vsel %vm1598, %v1611, %v1614
      %v1616 = vshrl.u32 %v1220, 16
      %v1618 = vor.u32 %v1616, %v1614
      %v1619 = vshll.u32 %v1221, 16
      %v1621 = vrot.slane %v1619, 1
      %v1622 = vsel %vm1598, %v1618, %v1621
      %v1623 = vshrl.u32 %v1221, 16
      %v1625 = vor.u32 %v1623, %v1621
      %v1626 = vshll.u32 %v1222, 16
      %v1628 = vrot.slane %v1626, 1
      %v1629 = vsel %vm1598, %v1625, %v1628
      %v1630 = vshrl.u32 %v1222, 16
      %v1632 = vor.u32 %v1630, %v1628
      %v1633 = vshll.u32 %v1223, 16
      %v1635 = vrot.slane %v1633, 1
      %v1636 = vsel %vm1598, %v1632, %v1635
      %v1637 = vshrl.u32 %v1223, 16
      %v1639 = vor.u32 %v1637, %v1635
      %v1640 = vshll.u32 %v1224, 16
      %v1642 = vrot.slane %v1640, 1
      %v1643 = vsel %vm1598, %v1639, %v1642
      %v1644 = vshrl.u32 %v1224, 16
      %v1646 = vor.u32 %v1644, %v1642
      %v1647 = vshll.u32 %v1225, 16
      %v1649 = vrot.slane %v1647, 1
      %v1650 = vsel %vm1598, %v1646, %v1649
      %v1651 = vshrl.u32 %v1225, 16
      %v1653 = vor.u32 %v1651, %v1649
      %v1654 = vshll.u32 %v1226, 16
      %v1656 = vrot.slane %v1654, 1
      %v1657 = vsel %vm1598, %v1653, %v1656
      %v1658 = vshrl.u32 %v1226, 16
      %v1660 = vor.u32 %v1658, %v1656
      %v1661 = vshll.u32 %v1227, 16
      %v1663 = vrot.slane %v1661, 1
      %v1664 = vsel %vm1598, %v1660, %v1663
      %v1665 = vshrl.u32 %v1227, 16
      %v1667 = vor.u32 %v1665, %v1663
      %v1668 = vshll.u32 %v1228, 16
      %v1670 = vrot.slane %v1668, 1
      %v1671 = vsel %vm1598, %v1667, %v1670
      %v1672 = vshrl.u32 %v1228, 16
      %v1674 = vor.u32 %v1672, %v1670
      %v1675 = vshll.u32 %v1229, 16
      %v1677 = vrot.slane %v1675, 1
      %v1678 = vsel %vm1598, %v1674, %v1677
      %v1679 = vshrl.u32 %v1229, 16
      %v1681 = vor.u32 %v1679, %v1677
      %v1682 = vshll.u32 %v1230, 16
      %v1684 = vrot.slane %v1682, 1
      %v1685 = vsel %vm1598, %v1681, %v1684
      %v1686 = vshrl.u32 %v1230, 16
      %v1688 = vor.u32 %v1686, %v1684
      %v1689 = vshll.u32 %v1231, 16
      %v1691 = vrot.slane %v1689, 1
      %v1692 = vsel %vm1598, %v1688, %v1691
      %v1693 = vshrl.u32 %v1231, 16
      %v1695 = vor.u32 %v1693, %v1691
      %v1696 = vshll.u32 %v1232, 16
      %v1698 = vrot.slane %v1696, 1
      %v1699 = vsel %vm1598, %v1695, %v1698
      %v1700 = vshrl.u32 %v1232, 16
      %v1702 = vor.u32 %v1700, %v1698
      %v1703 = vshll.u32 %v1233, 16
      %v1705 = vrot.slane %v1703, 1
      %v1706 = vsel %vm1598, %v1702, %v1705
      %v1707 = vshrl.u32 %v1233, 16
      %v1709 = vor.u32 %v1707, %v1705
      %v1710 = vshll.u32 %v1234, 16
      %v1712 = vrot.slane %v1710, 1
      %v1713 = vsel %vm1598, %v1709, %v1712
      %v1714 = vshrl.u32 %v1234, 16
      %v1716 = vor.u32 %v1714, %v1712
      %v1717 = vshll.u32 %v1235, 16
      %v1719 = vrot.slane %v1717, 1
      %v1720 = vsel %vm1598, %v1716, %v1719
      %v1721 = vshrl.u32 %v1235, 16
      %v1723 = vor.u32 %v1721, %v1719
      %v1724 = vshll.u32 %v1236, 16
      %v1726 = vrot.slane %v1724, 1
      %v1727 = vsel %vm1598, %v1723, %v1726
      %v1728 = vshrl.u32 %v1236, 16
      %v1730 = vor.u32 %v1728, %v1726
      %v1731 = vshll.u32 %v1237, 16
      %v1733 = vrot.slane %v1731, 1
      %v1734 = vsel %vm1598, %v1730, %v1733
      %v1735 = vshrl.u32 %v1237, 16
      %v1737 = vor.u32 %v1735, %v1733
      %v1738 = vshll.u32 %v1238, 16
      %v1740 = vrot.slane %v1738, 1
      %v1741 = vsel %vm1598, %v1737, %v1740
      %v1742 = vshrl.u32 %v1238, 16
      %v1744 = vor.u32 %v1742, %v1740
      %v1745 = vshll.u32 %v1239, 16
      %v1747 = vrot.slane %v1745, 1
      %v1748 = vsel %vm1598, %v1744, %v1747
      %v1749 = vshrl.u32 %v1239, 16
      %v1751 = vor.u32 %v1749, %v1747
      %v1752 = vshll.u32 %v1240, 16
      %v1754 = vrot.slane %v1752, 1
      %v1755 = vsel %vm1598, %v1751, %v1754
      %v1756 = vshrl.u32 %v1240, 16
      %v1758 = vor.u32 %v1756, %v1754
      %v1759 = vshll.u32 %v1241, 16
      %v1761 = vrot.slane %v1759, 1
      %v1762 = vsel %vm1598, %v1758, %v1761
      %v1763 = vshrl.u32 %v1241, 16
      %v1765 = vor.u32 %v1763, %v1761
      %v1767 = vshll.u32 %v1597, 16
      %v1769 = vrot.slane %v1767, 1
      %v1770 = vsel %vm1598, %v1765, %v1769
      %v1772 = vsel %vm1242, %v1608, 0
      %v1775 = vsel %vm1242, %v1615, 0
      %v1778 = vsel %vm1242, %v1622, 0
      %v1781 = vsel %vm1242, %v1629, 0
      %v1784 = vsel %vm1242, %v1636, 0
      %v1787 = vsel %vm1242, %v1643, 0
      %v1790 = vsel %vm1242, %v1650, 0
      %v1793 = vsel %vm1242, %v1657, 0
      %v1796 = vsel %vm1242, %v1664, 0
      %v1799 = vsel %vm1242, %v1671, 0
      %v1802 = vsel %vm1242, %v1678, 0
      %v1805 = vsel %vm1242, %v1685, 0
      %v1808 = vsel %vm1242, %v1692, 0
      %v1811 = vsel %vm1242, %v1699, 0
      %v1814 = vsel %vm1242, %v1706, 0
      %v1817 = vsel %vm1242, %v1713, 0
      %v1820 = vsel %vm1242, %v1720, 0
      %v1823 = vsel %vm1242, %v1727, 0
      %v1826 = vsel %vm1242, %v1734, 0
      %v1829 = vsel %vm1242, %v1741, 0
      %v1832 = vsel %vm1242, %v1748, 0
      %v1835 = vsel %vm1242, %v1755, 0
      %v1838 = vsel %vm1242, %v1762, 0
      %v1841 = vsel %vm1242, %v1770, 0
      %v1844 = vsel %vm1315, %v1594, 0
      %1846 = vmatprep.subr.bf16.mxu0 0
      %1847 = vmatpush1.bf16.msra.mxu0 %v1844
      %1848 = vmatprep.subr.bf16.mxu0 0
      %1849 = vmatpush1.bf16.msra.mxu0 0
      %1850 = vmatprep.subr.bf16.mxu0 0
      %1851 = vmatpush1.bf16.msra.mxu0 0
      %1852 = vmatprep.subr.bf16.mxu0 0
      %1853 = vmatpush1.bf16.msra.mxu0 0
      %1854 = vmatprep.subr.bf16.mxu0 0
      %1855 = vmatpush1.bf16.msra.mxu0 0
      %1856 = vmatprep.subr.bf16.mxu0 0
      %1857 = vmatpush1.bf16.msra.mxu0 0
      %1858 = vmatprep.subr.bf16.mxu0 0
      %1859 = vmatpush1.bf16.msra.mxu0 0
      %1860 = vmatprep.subr.bf16.mxu0 0
      %1861 = vmatpush1.bf16.msra.mxu0 0
      %1862 = vmatprep.subr.bf16.mxu0 0
      %1863 = vmatpush1.bf16.msra.mxu0 0
      %1864 = vmatprep.subr.bf16.mxu0 0
      %1865 = vmatpush1.bf16.msra.mxu0 0
      %1866 = vmatprep.subr.bf16.mxu0 0
      %1867 = vmatpush1.bf16.msra.mxu0 0
      %1868 = vmatprep.subr.bf16.mxu0 0
      %1869 = vmatpush1.bf16.msra.mxu0 0
      %1870 = vmatprep.subr.bf16.mxu0 0
      %1871 = vmatpush1.bf16.msra.mxu0 0
      %1872 = vmatprep.subr.bf16.mxu0 0
      %1873 = vmatpush1.bf16.msra.mxu0 0
      %1874 = vmatprep.subr.bf16.mxu0 0
      %1875 = vmatpush1.bf16.msra.mxu0 0
      %1876 = vmatprep.subr.bf16.mxu0 0
      %1877 = vmatpush1.bf16.msra.mxu0 0
      %1878 = vmatprep.mubr.bf16.mxu0 0
      %1879 = vmatmul.mubr.bf16.gmra.mrb[0].mxu0 %v1772
      %v1880 = vpop.f32.mrb[0].mxu0
      %v1881 = vadd.f32 0.0, %v1880
      %v1882 = vpop.f32.mrb[0].mxu0
      %v1883 = vpop.f32.mrb[0].mxu0
      %v1884 = vadd.f32 0.0, %v1883
      %v1885 = vpop.f32.mrb[0].mxu0
      %1886 = vmatprep.mubr.bf16.mxu0 0
      %1887 = vmatmul.mubr.bf16.gmra.mrb[0].mxu0 %v1775
      %v1888 = vpop.f32.mrb[0].mxu0
      %v1889 = vadd.f32 0.0, %v1888
      %v1890 = vpop.f32.mrb[0].mxu0
      %v1891 = vpop.f32.mrb[0].mxu0
      %v1892 = vadd.f32 0.0, %v1891
      %v1893 = vpop.f32.mrb[0].mxu0
      %1894 = vmatprep.mubr.bf16.mxu0 0
      %1895 = vmatmul.mubr.bf16.gmra.mrb[0].mxu0 %v1778
      %v1896 = vpop.f32.mrb[0].mxu0
      %v1897 = vadd.f32 0.0, %v1896
      %v1898 = vpop.f32.mrb[0].mxu0
      %v1899 = vpop.f32.mrb[0].mxu0
      %v1900 = vadd.f32 0.0, %v1899
      %v1901 = vpop.f32.mrb[0].mxu0
      %1902 = vmatprep.mubr.bf16.mxu0 0
      %1903 = vmatmul.mubr.bf16.gmra.mrb[0].mxu0 %v1781
      %v1904 = vpop.f32.mrb[0].mxu0
      %v1905 = vadd.f32 0.0, %v1904
      %v1906 = vpop.f32.mrb[0].mxu0
      %v1907 = vpop.f32.mrb[0].mxu0
      %v1908 = vadd.f32 0.0, %v1907
      %v1909 = vpop.f32.mrb[0].mxu0
      %1910 = vmatprep.mubr.bf16.mxu0 0
      %1911 = vmatmul.mubr.bf16.gmra.mrb[0].mxu0 %v1784
      %v1912 = vpop.f32.mrb[0].mxu0
      %v1913 = vadd.f32 0.0, %v1912
      %v1914 = vpop.f32.mrb[0].mxu0
      %v1915 = vpop.f32.mrb[0].mxu0
      %v1916 = vadd.f32 0.0, %v1915
      %v1917 = vpop.f32.mrb[0].mxu0
      %1918 = vmatprep.mubr.bf16.mxu0 0
      %1919 = vmatmul.mubr.bf16.gmra.mrb[0].mxu0 %v1787
      %v1920 = vpop.f32.mrb[0].mxu0
      %v1921 = vadd.f32 0.0, %v1920
      %v1922 = vpop.f32.mrb[0].mxu0
      %v1923 = vpop.f32.mrb[0].mxu0
      %v1924 = vadd.f32 0.0, %v1923
      %v1925 = vpop.f32.mrb[0].mxu0
      %1926 = vmatprep.mubr.bf16.mxu0 0
      %1927 = vmatmul.mubr.bf16.gmra.mrb[0].mxu0 %v1790
      %v1928 = vpop.f32.mrb[0].mxu0
      %v1929 = vadd.f32 0.0, %v1928
      %v1930 = vpop.f32.mrb[0].mxu0
      %v1931 = vpop.f32.mrb[0].mxu0
      %v1932 = vadd.f32 0.0, %v1931
      %v1933 = vpop.f32.mrb[0].mxu0
      %1934 = vmatprep.mubr.bf16.mxu0 0
      %1935 = vmatmul.mubr.bf16.gmra.mrb[0].mxu0 %v1793
      %v1936 = vpop.f32.mrb[0].mxu0
      %v1937 = vadd.f32 0.0, %v1936
      %v1938 = vpop.f32.mrb[0].mxu0
      %v1939 = vpop.f32.mrb[0].mxu0
      %v1940 = vadd.f32 0.0, %v1939
      %v1941 = vpop.f32.mrb[0].mxu0
      %1942 = vmatprep.mubr.bf16.mxu0 0
      %1943 = vmatmul.mubr.bf16.gmra.mrb[0].mxu0 %v1796
      %v1944 = vpop.f32.mrb[0].mxu0
      %v1945 = vadd.f32 0.0, %v1944
      %v1946 = vpop.f32.mrb[0].mxu0
      %v1947 = vpop.f32.mrb[0].mxu0
      %v1948 = vadd.f32 0.0, %v1947
      %v1949 = vpop.f32.mrb[0].mxu0
      %1950 = vmatprep.mubr.bf16.mxu0 0
      %1951 = vmatmul.mubr.bf16.gmra.mrb[0].mxu0 %v1799
      %v1952 = vpop.f32.mrb[0].mxu0
      %v1953 = vadd.f32 0.0, %v1952
      %v1954 = vpop.f32.mrb[0].mxu0
      %v1955 = vpop.f32.mrb[0].mxu0
      %v1956 = vadd.f32 0.0, %v1955
      %v1957 = vpop.f32.mrb[0].mxu0
      %1958 = vmatprep.mubr.bf16.mxu0 0
      %1959 = vmatmul.mubr.bf16.gmra.mrb[0].mxu0 %v1802
      %v1960 = vpop.f32.mrb[0].mxu0
      %v1961 = vadd.f32 0.0, %v1960
      %v1962 = vpop.f32.mrb[0].mxu0
      %v1963 = vpop.f32.mrb[0].mxu0
      %v1964 = vadd.f32 0.0, %v1963
      %v1965 = vpop.f32.mrb[0].mxu0
      %1966 = vmatprep.mubr.bf16.mxu0 0
      %1967 = vmatmul.mubr.bf16.gmra.mrb[0].mxu0 %v1805
      %v1968 = vpop.f32.mrb[0].mxu0
      %v1969 = vadd.f32 0.0, %v1968
      %v1970 = vpop.f32.mrb[0].mxu0
      %v1971 = vpop.f32.mrb[0].mxu0
      %v1972 = vadd.f32 0.0, %v1971
      %v1973 = vpop.f32.mrb[0].mxu0
      %1974 = vmatprep.mubr.bf16.mxu0 0
      %1975 = vmatmul.mubr.bf16.gmra.mrb[0].mxu0 %v1808
      %v1976 = vpop.f32.mrb[0].mxu0
      %v1977 = vadd.f32 0.0, %v1976
      %v1978 = vpop.f32.mrb[0].mxu0
      %v1979 = vpop.f32.mrb[0].mxu0
      %v1980 = vadd.f32 0.0, %v1979
      %v1981 = vpop.f32.mrb[0].mxu0
      %1982 = vmatprep.mubr.bf16.mxu0 0
      %1983 = vmatmul.mubr.bf16.gmra.mrb[0].mxu0 %v1811
      %v1984 = vpop.f32.mrb[0].mxu0
      %v1985 = vadd.f32 0.0, %v1984
      %v1986 = vpop.f32.mrb[0].mxu0
      %v1987 = vpop.f32.mrb[0].mxu0
      %v1988 = vadd.f32 0.0, %v1987
      %v1989 = vpop.f32.mrb[0].mxu0
      %1990 = vmatprep.mubr.bf16.mxu0 0
      %1991 = vmatmul.mubr.bf16.gmra.mrb[0].mxu0 %v1814
      %v1992 = vpop.f32.mrb[0].mxu0
      %v1993 = vadd.f32 0.0, %v1992
      %v1994 = vpop.f32.mrb[0].mxu0
      %v1995 = vpop.f32.mrb[0].mxu0
      %v1996 = vadd.f32 0.0, %v1995
      %v1997 = vpop.f32.mrb[0].mxu0
      %1998 = vmatprep.mubr.bf16.mxu0 0
      %1999 = vmatmul.mubr.bf16.gmra.mrb[0].mxu0 %v1817
      %v2000 = vpop.f32.mrb[0].mxu0
      %v2001 = vadd.f32 0.0, %v2000
      %v2002 = vpop.f32.mrb[0].mxu0
      %v2003 = vpop.f32.mrb[0].mxu0
      %v2004 = vadd.f32 0.0, %v2003
      %v2005 = vpop.f32.mrb[0].mxu0
      %2006 = vmatprep.mubr.bf16.mxu0 0
      %2007 = vmatmul.mubr.bf16.gmra.mrb[0].mxu0 %v1820
      %v2008 = vpop.f32.mrb[0].mxu0
      %v2009 = vadd.f32 0.0, %v2008
      %v2010 = vpop.f32.mrb[0].mxu0
      %v2011 = vpop.f32.mrb[0].mxu0
      %v2012 = vadd.f32 0.0, %v2011
      %v2013 = vpop.f32.mrb[0].mxu0
      %2014 = vmatprep.mubr.bf16.mxu0 0
      %2015 = vmatmul.mubr.bf16.gmra.mrb[0].mxu0 %v1823
      %v2016 = vpop.f32.mrb[0].mxu0
      %v2017 = vadd.f32 0.0, %v2016
      %v2018 = vpop.f32.mrb[0].mxu0
      %v2019 = vpop.f32.mrb[0].mxu0
      %v2020 = vadd.f32 0.0, %v2019
      %v2021 = vpop.f32.mrb[0].mxu0
      %2022 = vmatprep.mubr.bf16.mxu0 0
      %2023 = vmatmul.mubr.bf16.gmra.mrb[0].mxu0 %v1826
      %v2024 = vpop.f32.mrb[0].mxu0
      %v2025 = vadd.f32 0.0, %v2024
      %v2026 = vpop.f32.mrb[0].mxu0
      %v2027 = vpop.f32.mrb[0].mxu0
      %v2028 = vadd.f32 0.0, %v2027
      %v2029 = vpop.f32.mrb[0].mxu0
      %2030 = vmatprep.mubr.bf16.mxu0 0
      %2031 = vmatmul.mubr.bf16.gmra.mrb[0].mxu0 %v1829
      %v2032 = vpop.f32.mrb[0].mxu0
      %v2033 = vadd.f32 0.0, %v2032
      %v2034 = vpop.f32.mrb[0].mxu0
      %v2035 = vpop.f32.mrb[0].mxu0
      %v2036 = vadd.f32 0.0, %v2035
      %v2037 = vpop.f32.mrb[0].mxu0
      %2038 = vmatprep.mubr.bf16.mxu0 0
      %2039 = vmatmul.mubr.bf16.gmra.mrb[0].mxu0 %v1832
      %v2040 = vpop.f32.mrb[0].mxu0
      %v2041 = vadd.f32 0.0, %v2040
      %v2042 = vpop.f32.mrb[0].mxu0
      %v2043 = vpop.f32.mrb[0].mxu0
      %v2044 = vadd.f32 0.0, %v2043
      %v2045 = vpop.f32.mrb[0].mxu0
      %2046 = vmatprep.mubr.bf16.mxu0 0
      %2047 = vmatmul.mubr.bf16.gmra.mrb[0].mxu0 %v1835
      %v2048 = vpop.f32.mrb[0].mxu0
      %v2049 = vadd.f32 0.0, %v2048
      %v2050 = vpop.f32.mrb[0].mxu0
      %v2051 = vpop.f32.mrb[0].mxu0
      %v2052 = vadd.f32 0.0, %v2051
      %v2053 = vpop.f32.mrb[0].mxu0
      %2054 = vmatprep.mubr.bf16.mxu0 0
      %2055 = vmatmul.mubr.bf16.gmra.mrb[0].mxu0 %v1838
      %v2056 = vpop.f32.mrb[0].mxu0
      %v2057 = vadd.f32 0.0, %v2056
      %v2058 = vpop.f32.mrb[0].mxu0
      %v2059 = vpop.f32.mrb[0].mxu0
      %v2060 = vadd.f32 0.0, %v2059
      %v2061 = vpop.f32.mrb[0].mxu0
      %2062 = vmatprep.mubr.bf16.mxu0 0
      %2063 = vmatmul.mubr.bf16.gmra.mrb[0].mxu0 %v1841
      %v2064 = vpop.f32.mrb[0].mxu0
      %v2065 = vadd.f32 0.0, %v2064
      %v2066 = vpop.f32.mrb[0].mxu0
      %v2067 = vpop.f32.mrb[0].mxu0
      %v2068 = vadd.f32 0.0, %v2067
      %v2069 = vpop.f32.mrb[0].mxu0
      %2070 = vdwg.mxu0
      %v2071 = vld [vmem:[#allocation4] sm:$0xff]
      %v2072 = vld [vmem:[#allocation4 + $0x8] sm:$0xff]
      %v2073 = vld [vmem:[#allocation4 + $0x10] sm:$0xff]
      %v2074 = vld [vmem:[#allocation4 + $0x18] sm:$0xff]
      %v2075 = vld [vmem:[#allocation4 + $0x20] sm:$0xff]
      %v2076 = vld [vmem:[#allocation4 + $0x28] sm:$0xff]
      %v2077 = vld [vmem:[#allocation4 + $0x30] sm:$0xff]
      %v2078 = vld [vmem:[#allocation4 + $0x38] sm:$0xff]
      %v2079 = vld [vmem:[#allocation4 + $0x40] sm:$0xff]
      %v2080 = vld [vmem:[#allocation4 + $0x48] sm:$0xff]
      %v2081 = vld [vmem:[#allocation4 + $0x50] sm:$0xff]
      %v2082 = vld [vmem:[#allocation4 + $0x58] sm:$0xff]
      %v2083 = vld [vmem:[#allocation4 + $0x60] sm:$0xff]
      %v2084 = vld [vmem:[#allocation4 + $0x68] sm:$0xff]
      %v2085 = vld [vmem:[#allocation4 + $0x70] sm:$0xff]
      %v2086 = vld [vmem:[#allocation4 + $0x78] sm:$0xff]
      %v2087 = vld [vmem:[#allocation4 + $0x80] sm:$0xff]
      %v2088 = vld [vmem:[#allocation4 + $0x88] sm:$0xff]
      %v2089 = vld [vmem:[#allocation4 + $0x90] sm:$0xff]
      %v2090 = vld [vmem:[#allocation4 + $0x98] sm:$0xff]
      %v2091 = vld [vmem:[#allocation4 + $0xa0] sm:$0xff]
      %v2092 = vld [vmem:[#allocation4 + $0xa8] sm:$0xff]
      %v2093 = vld [vmem:[#allocation4 + $0xb0] sm:$0xff]
      %v2094 = vld [vmem:[#allocation4 + $0xb8] sm:$0xff]
      %v2095 = vld [vmem:[#allocation4 + $0xc0] sm:$0xff]
      %v2096 = vld [vmem:[#allocation4 + $0xc8] sm:$0xff]
      %v2097 = vld [vmem:[#allocation4 + $0xd0] sm:$0xff]
      %v2098 = vld [vmem:[#allocation4 + $0xd8] sm:$0xff]
      %v2099 = vld [vmem:[#allocation4 + $0xe0] sm:$0xff]
      %v2100 = vld [vmem:[#allocation4 + $0xe8] sm:$0xff]
      %v2101 = vld [vmem:[#allocation4 + $0xf0] sm:$0xff]
      %v2102 = vld [vmem:[#allocation4 + $0xf8] sm:$0xff]
      %v2103 = vld [vmem:[#allocation4 + $0x100] sm:$0xff]
      %v2104 = vld [vmem:[#allocation4 + $0x108] sm:$0xff]
      %v2105 = vld [vmem:[#allocation4 + $0x110] sm:$0xff]
      %v2106 = vld [vmem:[#allocation4 + $0x118] sm:$0xff]
      %v2107 = vld [vmem:[#allocation4 + $0x120] sm:$0xff]
      %v2108 = vld [vmem:[#allocation4 + $0x128] sm:$0xff]
      %v2109 = vld [vmem:[#allocation4 + $0x130] sm:$0xff]
      %v2110 = vld [vmem:[#allocation4 + $0x138] sm:$0xff]
      %v2111 = vld [vmem:[#allocation4 + $0x140] sm:$0xff]
      %v2112 = vld [vmem:[#allocation4 + $0x148] sm:$0xff]
      %v2113 = vld [vmem:[#allocation4 + $0x150] sm:$0xff]
      %v2114 = vld [vmem:[#allocation4 + $0x158] sm:$0xff]
      %v2115 = vld [vmem:[#allocation4 + $0x160] sm:$0xff]
      %v2116 = vld [vmem:[#allocation4 + $0x168] sm:$0xff]
      %v2117 = vld [vmem:[#allocation4 + $0x170] sm:$0xff]
      %v2118 = vld [vmem:[#allocation4 + $0x178] sm:$0xff]
      %v2119 = vadd.f32 %v2071, %v1881
      %v2120 = vadd.f32 %v2072, %v1884
      %v2121 = vadd.f32 %v2073, %v1889
      %v2122 = vadd.f32 %v2074, %v1892
      %v2123 = vadd.f32 %v2075, %v1897
      %v2124 = vadd.f32 %v2076, %v1900
      %v2125 = vadd.f32 %v2077, %v1905
      %v2126 = vadd.f32 %v2078, %v1908
      %v2127 = vadd.f32 %v2079, %v1913
      %v2128 = vadd.f32 %v2080, %v1916
      %v2129 = vadd.f32 %v2081, %v1921
      %v2130 = vadd.f32 %v2082, %v1924
      %v2131 = vadd.f32 %v2083, %v1929
      %v2132 = vadd.f32 %v2084, %v1932
      %v2133 = vadd.f32 %v2085, %v1937
      %v2134 = vadd.f32 %v2086, %v1940
      %v2135 = vadd.f32 %v2087, %v1945
      %v2136 = vadd.f32 %v2088, %v1948
      %v2137 = vadd.f32 %v2089, %v1953
      %v2138 = vadd.f32 %v2090, %v1956
      %v2139 = vadd.f32 %v2091, %v1961
      %v2140 = vadd.f32 %v2092, %v1964
      %v2141 = vadd.f32 %v2093, %v1969
      %v2142 = vadd.f32 %v2094, %v1972
      %v2143 = vadd.f32 %v2095, %v1977
      %v2144 = vadd.f32 %v2096, %v1980
      %v2145 = vadd.f32 %v2097, %v1985
      %v2146 = vadd.f32 %v2098, %v1988
      %v2147 = vadd.f32 %v2099, %v1993
      %v2148 = vadd.f32 %v2100, %v1996
      %v2149 = vadd.f32 %v2101, %v2001
      %v2150 = vadd.f32 %v2102, %v2004
      %v2151 = vadd.f32 %v2103, %v2009
      %v2152 = vadd.f32 %v2104, %v2012
      %v2153 = vadd.f32 %v2105, %v2017
      %v2154 = vadd.f32 %v2106, %v2020
      %v2155 = vadd.f32 %v2107, %v2025
      %v2156 = vadd.f32 %v2108, %v2028
      %v2157 = vadd.f32 %v2109, %v2033
      %v2158 = vadd.f32 %v2110, %v2036
      %v2159 = vadd.f32 %v2111, %v2041
      %v2160 = vadd.f32 %v2112, %v2044
      %v2161 = vadd.f32 %v2113, %v2049
      %v2162 = vadd.f32 %v2114, %v2052
      %v2163 = vadd.f32 %v2115, %v2057
      %v2164 = vadd.f32 %v2116, %v2060
      %v2165 = vadd.f32 %v2117, %v2065
      %v2166 = vadd.f32 %v2118, %v2068
      %2167 = vst.msk [vmem:[#allocation4] sm:$0xff] %vm1544, %v2119
      %2168 = vst.msk [vmem:[#allocation4 + $0x8] sm:$0xff] %vm1544, %v2120
      %2169 = vst.msk [vmem:[#allocation4 + $0x10] sm:$0xff] %vm1544, %v2121
      %2170 = vst.msk [vmem:[#allocation4 + $0x18] sm:$0xff] %vm1544, %v2122
      %2171 = vst.msk [vmem:[#allocation4 + $0x20] sm:$0xff] %vm1544, %v2123
      %2172 = vst.msk [vmem:[#allocation4 + $0x28] sm:$0xff] %vm1544, %v2124
      %2173 = vst.msk [vmem:[#allocation4 + $0x30] sm:$0xff] %vm1544, %v2125
      %2174 = vst.msk [vmem:[#allocation4 + $0x38] sm:$0xff] %vm1544, %v2126
      %2175 = vst.msk [vmem:[#allocation4 + $0x40] sm:$0xff] %vm1544, %v2127
      %2176 = vst.msk [vmem:[#allocation4 + $0x48] sm:$0xff] %vm1544, %v2128
      %2177 = vst.msk [vmem:[#allocation4 + $0x50] sm:$0xff] %vm1544, %v2129
      %2178 = vst.msk [vmem:[#allocation4 + $0x58] sm:$0xff] %vm1544, %v2130
      %2179 = vst.msk [vmem:[#allocation4 + $0x60] sm:$0xff] %vm1544, %v2131
      %2180 = vst.msk [vmem:[#allocation4 + $0x68] sm:$0xff] %vm1544, %v2132
      %2181 = vst.msk [vmem:[#allocation4 + $0x70] sm:$0xff] %vm1544, %v2133
      %2182 = vst.msk [vmem:[#allocation4 + $0x78] sm:$0xff] %vm1544, %v2134
      %2183 = vst.msk [vmem:[#allocation4 + $0x80] sm:$0xff] %vm1544, %v2135
      %2184 = vst.msk [vmem:[#allocation4 + $0x88] sm:$0xff] %vm1544, %v2136
      %2185 = vst.msk [vmem:[#allocation4 + $0x90] sm:$0xff] %vm1544, %v2137
      %2186 = vst.msk [vmem:[#allocation4 + $0x98] sm:$0xff] %vm1544, %v2138
      %2187 = vst.msk [vmem:[#allocation4 + $0xa0] sm:$0xff] %vm1544, %v2139
      %2188 = vst.msk [vmem:[#allocation4 + $0xa8] sm:$0xff] %vm1544, %v2140
      %2189 = vst.msk [vmem:[#allocation4 + $0xb0] sm:$0xff] %vm1544, %v2141
      %2190 = vst.msk [vmem:[#allocation4 + $0xb8] sm:$0xff] %vm1544, %v2142
      %2191 = vst.msk [vmem:[#allocation4 + $0xc0] sm:$0xff] %vm1544, %v2143
      %2192 = vst.msk [vmem:[#allocation4 + $0xc8] sm:$0xff] %vm1544, %v2144
      %2193 = vst.msk [vmem:[#allocation4 + $0xd0] sm:$0xff] %vm1544, %v2145
      %2194 = vst.msk [vmem:[#allocation4 + $0xd8] sm:$0xff] %vm1544, %v2146
      %2195 = vst.msk [vmem:[#allocation4 + $0xe0] sm:$0xff] %vm1544, %v2147
      %2196 = vst.msk [vmem:[#allocation4 + $0xe8] sm:$0xff] %vm1544, %v2148
      %2197 = vst.msk [vmem:[#allocation4 + $0xf0] sm:$0xff] %vm1544, %v2149
      %2198 = vst.msk [vmem:[#allocation4 + $0xf8] sm:$0xff] %vm1544, %v2150
      %2199 = vst.msk [vmem:[#allocation4 + $0x100] sm:$0xff] %vm1544, %v2151
      %2200 = vst.msk [vmem:[#allocation4 + $0x108] sm:$0xff] %vm1544, %v2152
      %2201 = vst.msk [vmem:[#allocation4 + $0x110] sm:$0xff] %vm1544, %v2153
      %2202 = vst.msk [vmem:[#allocation4 + $0x118] sm:$0xff] %vm1544, %v2154
      %2203 = vst.msk [vmem:[#allocation4 + $0x120] sm:$0xff] %vm1544, %v2155
      %2204 = vst.msk [vmem:[#allocation4 + $0x128] sm:$0xff] %vm1544, %v2156
      %2205 = vst.msk [vmem:[#allocation4 + $0x130] sm:$0xff] %vm1544, %v2157
      %2206 = vst.msk [vmem:[#allocation4 + $0x138] sm:$0xff] %vm1544, %v2158
      %2207 = vst.msk [vmem:[#allocation4 + $0x140] sm:$0xff] %vm1544, %v2159
      %2208 = vst.msk [vmem:[#allocation4 + $0x148] sm:$0xff] %vm1544, %v2160
      %2209 = vst.msk [vmem:[#allocation4 + $0x150] sm:$0xff] %vm1544, %v2161
      %2210 = vst.msk [vmem:[#allocation4 + $0x158] sm:$0xff] %vm1544, %v2162
      %2211 = vst.msk [vmem:[#allocation4 + $0x160] sm:$0xff] %vm1544, %v2163
      %2212 = vst.msk [vmem:[#allocation4 + $0x168] sm:$0xff] %vm1544, %v2164
      %2213 = vst.msk [vmem:[#allocation4 + $0x170] sm:$0xff] %vm1544, %v2165
      %2214 = vst.msk [vmem:[#allocation4 + $0x178] sm:$0xff] %vm1544, %v2166
      %s2215 = scalar_lea.vmem %s4, 4
      %v2216 = vld [vmem:[%s2215] sm:$0x3]
      %vm2217 = vcmask 1046528
      %v2218 = vrot.slane %v1218, 1
      %v2219 = vrot.slane %v1219, 1
      %v2220 = vsel %vm2217, %v2218, %v2219
      %v2221 = vrot.slane %v1220, 1
      %v2222 = vsel %vm2217, %v2219, %v2221
      %v2223 = vrot.slane %v1221, 1
      %v2224 = vsel %vm2217, %v2221, %v2223
      %v2225 = vrot.slane %v1222, 1
      %v2226 = vsel %vm2217, %v2223, %v2225
      %v2227 = vrot.slane %v1223, 1
      %v2228 = vsel %vm2217, %v2225, %v2227
      %v2229 = vrot.slane %v1224, 1
      %v2230 = vsel %vm2217, %v2227, %v2229
      %v2231 = vrot.slane %v1225, 1
      %v2232 = vsel %vm2217, %v2229, %v2231
      %v2233 = vrot.slane %v1226, 1
      %v2234 = vsel %vm2217, %v2231, %v2233
      %v2235 = vrot.slane %v1227, 1
      %v2236 = vsel %vm2217, %v2233, %v2235
      %v2237 = vrot.slane %v1228, 1
      %v2238 = vsel %vm2217, %v2235, %v2237
      %v2239 = vrot.slane %v1229, 1
      %v2240 = vsel %vm2217, %v2237, %v2239
      %v2241 = vrot.slane %v1230, 1
      %v2242 = vsel %vm2217, %v2239, %v2241
      %v2243 = vrot.slane %v1231, 1
      %v2244 = vsel %vm2217, %v2241, %v2243
      %v2245 = vrot.slane %v1232, 1
      %v2246 = vsel %vm2217, %v2243, %v2245
      %v2247 = vrot.slane %v1233, 1
      %v2248 = vsel %vm2217, %v2245, %v2247
      %v2249 = vrot.slane %v1234, 1
      %v2250 = vsel %vm2217, %v2247, %v2249
      %v2251 = vrot.slane %v1235, 1
      %v2252 = vsel %vm2217, %v2249, %v2251
      %v2253 = vrot.slane %v1236, 1
      %v2254 = vsel %vm2217, %v2251, %v2253
      %v2255 = vrot.slane %v1237, 1
      %v2256 = vsel %vm2217, %v2253, %v2255
      %v2257 = vrot.slane %v1238, 1
      %v2258 = vsel %vm2217, %v2255, %v2257
      %v2259 = vrot.slane %v1239, 1
      %v2260 = vsel %vm2217, %v2257, %v2259
      %v2261 = vrot.slane %v1240, 1
      %v2262 = vsel %vm2217, %v2259, %v2261
      %v2263 = vrot.slane %v1241, 1
      %v2264 = vsel %vm2217, %v2261, %v2263
      %v2265 = vrot.slane %v1597, 1
      %v2266 = vsel %vm2217, %v2263, %v2265
      %v2268 = vsel %vm1242, %v2220, 0
      %v2271 = vsel %vm1242, %v2222, 0
      %v2274 = vsel %vm1242, %v2224, 0
      %v2277 = vsel %vm1242, %v2226, 0
      %v2280 = vsel %vm1242, %v2228, 0
      %v2283 = vsel %vm1242, %v2230, 0
      %v2286 = vsel %vm1242, %v2232, 0
      %v2289 = vsel %vm1242, %v2234, 0
      %v2292 = vsel %vm1242, %v2236, 0
      %v2295 = vsel %vm1242, %v2238, 0
      %v2298 = vsel %vm1242, %v2240, 0
      %v2301 = vsel %vm1242, %v2242, 0
      %v2304 = vsel %vm1242, %v2244, 0
      %v2307 = vsel %vm1242, %v2246, 0
      %v2310 = vsel %vm1242, %v2248, 0
      %v2313 = vsel %vm1242, %v2250, 0
      %v2316 = vsel %vm1242, %v2252, 0
      %v2319 = vsel %vm1242, %v2254, 0
      %v2322 = vsel %vm1242, %v2256, 0
      %v2325 = vsel %vm1242, %v2258, 0
      %v2328 = vsel %vm1242, %v2260, 0
      %v2331 = vsel %vm1242, %v2262, 0
      %v2334 = vsel %vm1242, %v2264, 0
      %v2337 = vsel %vm1242, %v2266, 0
      %v2340 = vsel %vm1315, %v2216, 0
      %2342 = vmatprep.subr.bf16.mxu0 0
      %2343 = vmatpush1.bf16.msra.mxu0 %v2340
      %2344 = vmatprep.subr.bf16.mxu0 0
      %2345 = vmatpush1.bf16.msra.mxu0 0
      %2346 = vmatprep.subr.bf16.mxu0 0
      %2347 = vmatpush1.bf16.msra.mxu0 0
      %2348 = vmatprep.subr.bf16.mxu0 0
      %2349 = vmatpush1.bf16.msra.mxu0 0
      %2350 = vmatprep.subr.bf16.mxu0 0
      %2351 = vmatpush1.bf16.msra.mxu0 0
      %2352 = vmatprep.subr.bf16.mxu0 0
      %2353 = vmatpush1.bf16.msra.mxu0 0
      %2354 = vmatprep.subr.bf16.mxu0 0
      %2355 = vmatpush1.bf16.msra.mxu0 0
      %2356 = vmatprep.subr.bf16.mxu0 0
      %2357 = vmatpush1.bf16.msra.mxu0 0
      %2358 = vmatprep.subr.bf16.mxu0 0
      %2359 = vmatpush1.bf16.msra.mxu0 0
      %2360 = vmatprep.subr.bf16.mxu0 0
      %2361 = vmatpush1.bf16.msra.mxu0 0
      %2362 = vmatprep.subr.bf16.mxu0 0
      %2363 = vmatpush1.bf16.msra.mxu0 0
      %2364 = vmatprep.subr.bf16.mxu0 0
      %2365 = vmatpush1.bf16.msra.mxu0 0
      %2366 = vmatprep.subr.bf16.mxu0 0
      %2367 = vmatpush1.bf16.msra.mxu0 0
      %2368 = vmatprep.subr.bf16.mxu0 0
      %2369 = vmatpush1.bf16.msra.mxu0 0
      %2370 = vmatprep.subr.bf16.mxu0 0
      %2371 = vmatpush1.bf16.msra.mxu0 0
      %2372 = vmatprep.subr.bf16.mxu0 0
      %2373 = vmatpush1.bf16.msra.mxu0 0
      %2374 = vmatprep.mubr.bf16.mxu0 0
      %2375 = vmatmul.mubr.bf16.gmra.mrb[0].mxu0 %v2268
      %v2376 = vpop.f32.mrb[0].mxu0
      %v2377 = vadd.f32 0.0, %v2376
      %v2378 = vpop.f32.mrb[0].mxu0
      %v2379 = vpop.f32.mrb[0].mxu0
      %v2380 = vadd.f32 0.0, %v2379
      %v2381 = vpop.f32.mrb[0].mxu0
      %2382 = vmatprep.mubr.bf16.mxu0 0
      %2383 = vmatmul.mubr.bf16.gmra.mrb[0].mxu0 %v2271
      %v2384 = vpop.f32.mrb[0].mxu0
      %v2385 = vadd.f32 0.0, %v2384
      %v2386 = vpop.f32.mrb[0].mxu0
      %v2387 = vpop.f32.mrb[0].mxu0
      %v2388 = vadd.f32 0.0, %v2387
      %v2389 = vpop.f32.mrb[0].mxu0
      %2390 = vmatprep.mubr.bf16.mxu0 0
      %2391 = vmatmul.mubr.bf16.gmra.mrb[0].mxu0 %v2274
      %v2392 = vpop.f32.mrb[0].mxu0
      %v2393 = vadd.f32 0.0, %v2392
      %v2394 = vpop.f32.mrb[0].mxu0
      %v2395 = vpop.f32.mrb[0].mxu0
      %v2396 = vadd.f32 0.0, %v2395
      %v2397 = vpop.f32.mrb[0].mxu0
      %2398 = vmatprep.mubr.bf16.mxu0 0
      %2399 = vmatmul.mubr.bf16.gmra.mrb[0].mxu0 %v2277
      %v2400 = vpop.f32.mrb[0].mxu0
      %v2401 = vadd.f32 0.0, %v2400
      %v2402 = vpop.f32.mrb[0].mxu0
      %v2403 = vpop.f32.mrb[0].mxu0
      %v2404 = vadd.f32 0.0, %v2403
      %v2405 = vpop.f32.mrb[0].mxu0
      %2406 = vmatprep.mubr.bf16.mxu0 0
      %2407 = vmatmul.mubr.bf16.gmra.mrb[0].mxu0 %v2280
      %v2408 = vpop.f32.mrb[0].mxu0
      %v2409 = vadd.f32 0.0, %v2408
      %v2410 = vpop.f32.mrb[0].mxu0
      %v2411 = vpop.f32.mrb[0].mxu0
      %v2412 = vadd.f32 0.0, %v2411
      %v2413 = vpop.f32.mrb[0].mxu0
      %2414 = vmatprep.mubr.bf16.mxu0 0
      %2415 = vmatmul.mubr.bf16.gmra.mrb[0].mxu0 %v2283
      %v2416 = vpop.f32.mrb[0].mxu0
      %v2417 = vadd.f32 0.0, %v2416
      %v2418 = vpop.f32.mrb[0].mxu0
      %v2419 = vpop.f32.mrb[0].mxu0
      %v2420 = vadd.f32 0.0, %v2419
      %v2421 = vpop.f32.mrb[0].mxu0
      %2422 = vmatprep.mubr.bf16.mxu0 0
      %2423 = vmatmul.mubr.bf16.gmra.mrb[0].mxu0 %v2286
      %v2424 = vpop.f32.mrb[0].mxu0
      %v2425 = vadd.f32 0.0, %v2424
      %v2426 = vpop.f32.mrb[0].mxu0
      %v2427 = vpop.f32.mrb[0].mxu0
      %v2428 = vadd.f32 0.0, %v2427
      %v2429 = vpop.f32.mrb[0].mxu0
      %2430 = vmatprep.mubr.bf16.mxu0 0
      %2431 = vmatmul.mubr.bf16.gmra.mrb[0].mxu0 %v2289
      %v2432 = vpop.f32.mrb[0].mxu0
      %v2433 = vadd.f32 0.0, %v2432
      %v2434 = vpop.f32.mrb[0].mxu0
      %v2435 = vpop.f32.mrb[0].mxu0
      %v2436 = vadd.f32 0.0, %v2435
      %v2437 = vpop.f32.mrb[0].mxu0
      %2438 = vmatprep.mubr.bf16.mxu0 0
      %2439 = vmatmul.mubr.bf16.gmra.mrb[0].mxu0 %v2292
      %v2440 = vpop.f32.mrb[0].mxu0
      %v2441 = vadd.f32 0.0, %v2440
      %v2442 = vpop.f32.mrb[0].mxu0
      %v2443 = vpop.f32.mrb[0].mxu0
      %v2444 = vadd.f32 0.0, %v2443
      %v2445 = vpop.f32.mrb[0].mxu0
      %2446 = vmatprep.mubr.bf16.mxu0 0
      %2447 = vmatmul.mubr.bf16.gmra.mrb[0].mxu0 %v2295
      %v2448 = vpop.f32.mrb[0].mxu0
      %v2449 = vadd.f32 0.0, %v2448
      %v2450 = vpop.f32.mrb[0].mxu0
      %v2451 = vpop.f32.mrb[0].mxu0
      %v2452 = vadd.f32 0.0, %v2451
      %v2453 = vpop.f32.mrb[0].mxu0
      %2454 = vmatprep.mubr.bf16.mxu0 0
      %2455 = vmatmul.mubr.bf16.gmra.mrb[0].mxu0 %v2298
      %v2456 = vpop.f32.mrb[0].mxu0
      %v2457 = vadd.f32 0.0, %v2456
      %v2458 = vpop.f32.mrb[0].mxu0
      %v2459 = vpop.f32.mrb[0].mxu0
      %v2460 = vadd.f32 0.0, %v2459
      %v2461 = vpop.f32.mrb[0].mxu0
      %2462 = vmatprep.mubr.bf16.mxu0 0
      %2463 = vmatmul.mubr.bf16.gmra.mrb[0].mxu0 %v2301
      %v2464 = vpop.f32.mrb[0].mxu0
      %v2465 = vadd.f32 0.0, %v2464
      %v2466 = vpop.f32.mrb[0].mxu0
      %v2467 = vpop.f32.mrb[0].mxu0
      %v2468 = vadd.f32 0.0, %v2467
      %v2469 = vpop.f32.mrb[0].mxu0
      %2470 = vmatprep.mubr.bf16.mxu0 0
      %2471 = vmatmul.mubr.bf16.gmra.mrb[0].mxu0 %v2304
      %v2472 = vpop.f32.mrb[0].mxu0
      %v2473 = vadd.f32 0.0, %v2472
      %v2474 = vpop.f32.mrb[0].mxu0
      %v2475 = vpop.f32.mrb[0].mxu0
      %v2476 = vadd.f32 0.0, %v2475
      %v2477 = vpop.f32.mrb[0].mxu0
      %2478 = vmatprep.mubr.bf16.mxu0 0
      %2479 = vmatmul.mubr.bf16.gmra.mrb[0].mxu0 %v2307
      %v2480 = vpop.f32.mrb[0].mxu0
      %v2481 = vadd.f32 0.0, %v2480
      %v2482 = vpop.f32.mrb[0].mxu0
      %v2483 = vpop.f32.mrb[0].mxu0
      %v2484 = vadd.f32 0.0, %v2483
      %v2485 = vpop.f32.mrb[0].mxu0
      %2486 = vmatprep.mubr.bf16.mxu0 0
      %2487 = vmatmul.mubr.bf16.gmra.mrb[0].mxu0 %v2310
      %v2488 = vpop.f32.mrb[0].mxu0
      %v2489 = vadd.f32 0.0, %v2488
      %v2490 = vpop.f32.mrb[0].mxu0
      %v2491 = vpop.f32.mrb[0].mxu0
      %v2492 = vadd.f32 0.0, %v2491
      %v2493 = vpop.f32.mrb[0].mxu0
      %2494 = vmatprep.mubr.bf16.mxu0 0
      %2495 = vmatmul.mubr.bf16.gmra.mrb[0].mxu0 %v2313
      %v2496 = vpop.f32.mrb[0].mxu0
      %v2497 = vadd.f32 0.0, %v2496
      %v2498 = vpop.f32.mrb[0].mxu0
      %v2499 = vpop.f32.mrb[0].mxu0
      %v2500 = vadd.f32 0.0, %v2499
      %v2501 = vpop.f32.mrb[0].mxu0
      %2502 = vmatprep.mubr.bf16.mxu0 0
      %2503 = vmatmul.mubr.bf16.gmra.mrb[0].mxu0 %v2316
      %v2504 = vpop.f32.mrb[0].mxu0
      %v2505 = vadd.f32 0.0, %v2504
      %v2506 = vpop.f32.mrb[0].mxu0
      %v2507 = vpop.f32.mrb[0].mxu0
      %v2508 = vadd.f32 0.0, %v2507
      %v2509 = vpop.f32.mrb[0].mxu0
      %2510 = vmatprep.mubr.bf16.mxu0 0
      %2511 = vmatmul.mubr.bf16.gmra.mrb[0].mxu0 %v2319
      %v2512 = vpop.f32.mrb[0].mxu0
      %v2513 = vadd.f32 0.0, %v2512
      %v2514 = vpop.f32.mrb[0].mxu0
      %v2515 = vpop.f32.mrb[0].mxu0
      %v2516 = vadd.f32 0.0, %v2515
      %v2517 = vpop.f32.mrb[0].mxu0
      %2518 = vmatprep.mubr.bf16.mxu0 0
      %2519 = vmatmul.mubr.bf16.gmra.mrb[0].mxu0 %v2322
      %v2520 = vpop.f32.mrb[0].mxu0
      %v2521 = vadd.f32 0.0, %v2520
      %v2522 = vpop.f32.mrb[0].mxu0
      %v2523 = vpop.f32.mrb[0].mxu0
      %v2524 = vadd.f32 0.0, %v2523
      %v2525 = vpop.f32.mrb[0].mxu0
      %2526 = vmatprep.mubr.bf16.mxu0 0
      %2527 = vmatmul.mubr.bf16.gmra.mrb[0].mxu0 %v2325
      %v2528 = vpop.f32.mrb[0].mxu0
      %v2529 = vadd.f32 0.0, %v2528
      %v2530 = vpop.f32.mrb[0].mxu0
      %v2531 = vpop.f32.mrb[0].mxu0
      %v2532 = vadd.f32 0.0, %v2531
      %v2533 = vpop.f32.mrb[0].mxu0
      %2534 = vmatprep.mubr.bf16.mxu0 0
      %2535 = vmatmul.mubr.bf16.gmra.mrb[0].mxu0 %v2328
      %v2536 = vpop.f32.mrb[0].mxu0
      %v2537 = vadd.f32 0.0, %v2536
      %v2538 = vpop.f32.mrb[0].mxu0
      %v2539 = vpop.f32.mrb[0].mxu0
      %v2540 = vadd.f32 0.0, %v2539
      %v2541 = vpop.f32.mrb[0].mxu0
      %2542 = vmatprep.mubr.bf16.mxu0 0
      %2543 = vmatmul.mubr.bf16.gmra.mrb[0].mxu0 %v2331
      %v2544 = vpop.f32.mrb[0].mxu0
      %v2545 = vadd.f32 0.0, %v2544
      %v2546 = vpop.f32.mrb[0].mxu0
      %v2547 = vpop.f32.mrb[0].mxu0
      %v2548 = vadd.f32 0.0, %v2547
      %v2549 = vpop.f32.mrb[0].mxu0
      %2550 = vmatprep.mubr.bf16.mxu0 0
      %2551 = vmatmul.mubr.bf16.gmra.mrb[0].mxu0 %v2334
      %v2552 = vpop.f32.mrb[0].mxu0
      %v2553 = vadd.f32 0.0, %v2552
      %v2554 = vpop.f32.mrb[0].mxu0
      %v2555 = vpop.f32.mrb[0].mxu0
      %v2556 = vadd.f32 0.0, %v2555
      %v2557 = vpop.f32.mrb[0].mxu0
      %2558 = vmatprep.mubr.bf16.mxu0 0
      %2559 = vmatmul.mubr.bf16.gmra.mrb[0].mxu0 %v2337
      %v2560 = vpop.f32.mrb[0].mxu0
      %v2561 = vadd.f32 0.0, %v2560
      %v2562 = vpop.f32.mrb[0].mxu0
      %v2563 = vpop.f32.mrb[0].mxu0
      %v2564 = vadd.f32 0.0, %v2563
      %v2565 = vpop.f32.mrb[0].mxu0
      %2566 = vdwg.mxu0
      %v2567 = vld [vmem:[#allocation4] sm:$0xff]
      %v2568 = vld [vmem:[#allocation4 + $0x8] sm:$0xff]
      %v2569 = vld [vmem:[#allocation4 + $0x10] sm:$0xff]
      %v2570 = vld [vmem:[#allocation4 + $0x18] sm:$0xff]
      %v2571 = vld [vmem:[#allocation4 + $0x20] sm:$0xff]
      %v2572 = vld [vmem:[#allocation4 + $0x28] sm:$0xff]
      %v2573 = vld [vmem:[#allocation4 + $0x30] sm:$0xff]
      %v2574 = vld [vmem:[#allocation4 + $0x38] sm:$0xff]
      %v2575 = vld [vmem:[#allocation4 + $0x40] sm:$0xff]
      %v2576 = vld [vmem:[#allocation4 + $0x48] sm:$0xff]
      %v2577 = vld [vmem:[#allocation4 + $0x50] sm:$0xff]
      %v2578 = vld [vmem:[#allocation4 + $0x58] sm:$0xff]
      %v2579 = vld [vmem:[#allocation4 + $0x60] sm:$0xff]
      %v2580 = vld [vmem:[#allocation4 + $0x68] sm:$0xff]
      %v2581 = vld [vmem:[#allocation4 + $0x70] sm:$0xff]
      %v2582 = vld [vmem:[#allocation4 + $0x78] sm:$0xff]
      %v2583 = vld [vmem:[#allocation4 + $0x80] sm:$0xff]
      %v2584 = vld [vmem:[#allocation4 + $0x88] sm:$0xff]
      %v2585 = vld [vmem:[#allocation4 + $0x90] sm:$0xff]
      %v2586 = vld [vmem:[#allocation4 + $0x98] sm:$0xff]
      %v2587 = vld [vmem:[#allocation4 + $0xa0] sm:$0xff]
      %v2588 = vld [vmem:[#allocation4 + $0xa8] sm:$0xff]
      %v2589 = vld [vmem:[#allocation4 + $0xb0] sm:$0xff]
      %v2590 = vld [vmem:[#allocation4 + $0xb8] sm:$0xff]
      %v2591 = vld [vmem:[#allocation4 + $0xc0] sm:$0xff]
      %v2592 = vld [vmem:[#allocation4 + $0xc8] sm:$0xff]
      %v2593 = vld [vmem:[#allocation4 + $0xd0] sm:$0xff]
      %v2594 = vld [vmem:[#allocation4 + $0xd8] sm:$0xff]
      %v2595 = vld [vmem:[#allocation4 + $0xe0] sm:$0xff]
      %v2596 = vld [vmem:[#allocation4 + $0xe8] sm:$0xff]
      %v2597 = vld [vmem:[#allocation4 + $0xf0] sm:$0xff]
      %v2598 = vld [vmem:[#allocation4 + $0xf8] sm:$0xff]
      %v2599 = vld [vmem:[#allocation4 + $0x100] sm:$0xff]
      %v2600 = vld [vmem:[#allocation4 + $0x108] sm:$0xff]
      %v2601 = vld [vmem:[#allocation4 + $0x110] sm:$0xff]
      %v2602 = vld [vmem:[#allocation4 + $0x118] sm:$0xff]
      %v2603 = vld [vmem:[#allocation4 + $0x120] sm:$0xff]
      %v2604 = vld [vmem:[#allocation4 + $0x128] sm:$0xff]
      %v2605 = vld [vmem:[#allocation4 + $0x130] sm:$0xff]
      %v2606 = vld [vmem:[#allocation4 + $0x138] sm:$0xff]
      %v2607 = vld [vmem:[#allocation4 + $0x140] sm:$0xff]
      %v2608 = vld [vmem:[#allocation4 + $0x148] sm:$0xff]
      %v2609 = vld [vmem:[#allocation4 + $0x150] sm:$0xff]
      %v2610 = vld [vmem:[#allocation4 + $0x158] sm:$0xff]
      %v2611 = vld [vmem:[#allocation4 + $0x160] sm:$0xff]
      %v2612 = vld [vmem:[#allocation4 + $0x168] sm:$0xff]
      %v2613 = vld [vmem:[#allocation4 + $0x170] sm:$0xff]
      %v2614 = vld [vmem:[#allocation4 + $0x178] sm:$0xff]
      %v2615 = vadd.f32 %v2567, %v2377
      %v2616 = vadd.f32 %v2568, %v2380
      %v2617 = vadd.f32 %v2569, %v2385
      %v2618 = vadd.f32 %v2570, %v2388
      %v2619 = vadd.f32 %v2571, %v2393
      %v2620 = vadd.f32 %v2572, %v2396
      %v2621 = vadd.f32 %v2573, %v2401
      %v2622 = vadd.f32 %v2574, %v2404
      %v2623 = vadd.f32 %v2575, %v2409
      %v2624 = vadd.f32 %v2576, %v2412
      %v2625 = vadd.f32 %v2577, %v2417
      %v2626 = vadd.f32 %v2578, %v2420
      %v2627 = vadd.f32 %v2579, %v2425
      %v2628 = vadd.f32 %v2580, %v2428
      %v2629 = vadd.f32 %v2581, %v2433
      %v2630 = vadd.f32 %v2582, %v2436
      %v2631 = vadd.f32 %v2583, %v2441
      %v2632 = vadd.f32 %v2584, %v2444
      %v2633 = vadd.f32 %v2585, %v2449
      %v2634 = vadd.f32 %v2586, %v2452
      %v2635 = vadd.f32 %v2587, %v2457
      %v2636 = vadd.f32 %v2588, %v2460
      %v2637 = vadd.f32 %v2589, %v2465
      %v2638 = vadd.f32 %v2590, %v2468
      %v2639 = vadd.f32 %v2591, %v2473
      %v2640 = vadd.f32 %v2592, %v2476
      %v2641 = vadd.f32 %v2593, %v2481
      %v2642 = vadd.f32 %v2594, %v2484
      %v2643 = vadd.f32 %v2595, %v2489
      %v2644 = vadd.f32 %v2596, %v2492
      %v2645 = vadd.f32 %v2597, %v2497
      %v2646 = vadd.f32 %v2598, %v2500
      %v2647 = vadd.f32 %v2599, %v2505
      %v2648 = vadd.f32 %v2600, %v2508
      %v2649 = vadd.f32 %v2601, %v2513
      %v2650 = vadd.f32 %v2602, %v2516
      %v2651 = vadd.f32 %v2603, %v2521
      %v2652 = vadd.f32 %v2604, %v2524
      %v2653 = vadd.f32 %v2605, %v2529
      %v2654 = vadd.f32 %v2606, %v2532
      %v2655 = vadd.f32 %v2607, %v2537
      %v2656 = vadd.f32 %v2608, %v2540
      %v2657 = vadd.f32 %v2609, %v2545
      %v2658 = vadd.f32 %v2610, %v2548
      %v2659 = vadd.f32 %v2611, %v2553
      %v2660 = vadd.f32 %v2612, %v2556
      %v2661 = vadd.f32 %v2613, %v2561
      %v2662 = vadd.f32 %v2614, %v2564
      %2663 = vst.msk [vmem:[#allocation4] sm:$0xff] %vm1544, %v2615
      %2664 = vst.msk [vmem:[#allocation4 + $0x8] sm:$0xff] %vm1544, %v2616
      %2665 = vst.msk [vmem:[#allocation4 + $0x10] sm:$0xff] %vm1544, %v2617
      %2666 = vst.msk [vmem:[#allocation4 + $0x18] sm:$0xff] %vm1544, %v2618
      %2667 = vst.msk [vmem:[#allocation4 + $0x20] sm:$0xff] %vm1544, %v2619
      %2668 = vst.msk [vmem:[#allocation4 + $0x28] sm:$0xff] %vm1544, %v2620
      %2669 = vst.msk [vmem:[#allocation4 + $0x30] sm:$0xff] %vm1544, %v2621
      %2670 = vst.msk [vmem:[#allocation4 + $0x38] sm:$0xff] %vm1544, %v2622
      %2671 = vst.msk [vmem:[#allocation4 + $0x40] sm:$0xff] %vm1544, %v2623
      %2672 = vst.msk [vmem:[#allocation4 + $0x48] sm:$0xff] %vm1544, %v2624
      %2673 = vst.msk [vmem:[#allocation4 + $0x50] sm:$0xff] %vm1544, %v2625
      %2674 = vst.msk [vmem:[#allocation4 + $0x58] sm:$0xff] %vm1544, %v2626
      %2675 = vst.msk [vmem:[#allocation4 + $0x60] sm:$0xff] %vm1544, %v2627
      %2676 = vst.msk [vmem:[#allocation4 + $0x68] sm:$0xff] %vm1544, %v2628
      %2677 = vst.msk [vmem:[#allocation4 + $0x70] sm:$0xff] %vm1544, %v2629
      %2678 = vst.msk [vmem:[#allocation4 + $0x78] sm:$0xff] %vm1544, %v2630
      %2679 = vst.msk [vmem:[#allocation4 + $0x80] sm:$0xff] %vm1544, %v2631
      %2680 = vst.msk [vmem:[#allocation4 + $0x88] sm:$0xff] %vm1544, %v2632
      %2681 = vst.msk [vmem:[#allocation4 + $0x90] sm:$0xff] %vm1544, %v2633
      %2682 = vst.msk [vmem:[#allocation4 + $0x98] sm:$0xff] %vm1544, %v2634
      %2683 = vst.msk [vmem:[#allocation4 + $0xa0] sm:$0xff] %vm1544, %v2635
      %2684 = vst.msk [vmem:[#allocation4 + $0xa8] sm:$0xff] %vm1544, %v2636
      %2685 = vst.msk [vmem:[#allocation4 + $0xb0] sm:$0xff] %vm1544, %v2637
      %2686 = vst.msk [vmem:[#allocation4 + $0xb8] sm:$0xff] %vm1544, %v2638
      %2687 = vst.msk [vmem:[#allocation4 + $0xc0] sm:$0xff] %vm1544, %v2639
      %2688 = vst.msk [vmem:[#allocation4 + $0xc8] sm:$0xff] %vm1544, %v2640
      %2689 = vst.msk [vmem:[#allocation4 + $0xd0] sm:$0xff] %vm1544, %v2641
      %2690 = vst.msk [vmem:[#allocation4 + $0xd8] sm:$0xff] %vm1544, %v2642
      %2691 = vst.msk [vmem:[#allocation4 + $0xe0] sm:$0xff] %vm1544, %v2643
      %2692 = vst.msk [vmem:[#allocation4 + $0xe8] sm:$0xff] %vm1544, %v2644
      %2693 = vst.msk [vmem:[#allocation4 + $0xf0] sm:$0xff] %vm1544, %v2645
      %2694 = vst.msk [vmem:[#allocation4 + $0xf8] sm:$0xff] %vm1544, %v2646
      %2695 = vst.msk [vmem:[#allocation4 + $0x100] sm:$0xff] %vm1544, %v2647
      %2696 = vst.msk [vmem:[#allocation4 + $0x108] sm:$0xff] %vm1544, %v2648
      %2697 = vst.msk [vmem:[#allocation4 + $0x110] sm:$0xff] %vm1544, %v2649
      %2698 = vst.msk [vmem:[#allocation4 + $0x118] sm:$0xff] %vm1544, %v2650
      %2699 = vst.msk [vmem:[#allocation4 + $0x120] sm:$0xff] %vm1544, %v2651
      %2700 = vst.msk [vmem:[#allocation4 + $0x128] sm:$0xff] %vm1544, %v2652
      %2701 = vst.msk [vmem:[#allocation4 + $0x130] sm:$0xff] %vm1544, %v2653
      %2702 = vst.msk [vmem:[#allocation4 + $0x138] sm:$0xff] %vm1544, %v2654
      %2703 = vst.msk [vmem:[#allocation4 + $0x140] sm:$0xff] %vm1544, %v2655
      %2704 = vst.msk [vmem:[#allocation4 + $0x148] sm:$0xff] %vm1544, %v2656
      %2705 = vst.msk [vmem:[#allocation4 + $0x150] sm:$0xff] %vm1544, %v2657
      %2706 = vst.msk [vmem:[#allocation4 + $0x158] sm:$0xff] %vm1544, %v2658
      %2707 = vst.msk [vmem:[#allocation4 + $0x160] sm:$0xff] %vm1544, %v2659
      %2708 = vst.msk [vmem:[#allocation4 + $0x168] sm:$0xff] %vm1544, %v2660
      %2709 = vst.msk [vmem:[#allocation4 + $0x170] sm:$0xff] %vm1544, %v2661
      %2710 = vst.msk [vmem:[#allocation4 + $0x178] sm:$0xff] %vm1544, %v2662
      %s2711 = scalar_lea.vmem %s4, 6
      %v2712 = vld [vmem:[%s2711] sm:$0x3]
      %v2715 = vunpack.c.l.b16 %v1115
      %v2716 = vunpack.c.l.b16 %v1116
      %v2717 = vpack.c.b16 %v1174, %v1173
      %v2718 = vpack.c.b16 %v1176, %v1175
      %v2719 = vpack.c.b16 %v1178, %v1177
      %v2720 = vpack.c.b16 %v1180, %v1179
      %v2721 = vpack.c.b16 %v1182, %v1181
      %v2722 = vpack.c.b16 %v1184, %v1183
      %v2723 = vpack.c.b16 %v1186, %v1185
      %v2724 = vpack.c.b16 %v1188, %v1187
      %v2725 = vpack.c.b16 %v1190, %v1189
      %v2726 = vpack.c.b16 %v1192, %v1191
      %v2727 = vpack.c.b16 %v1194, %v1193
      %v2728 = vpack.c.b16 %v1196, %v1195
      %v2729 = vpack.c.b16 %v1198, %v1197
      %v2730 = vpack.c.b16 %v1200, %v1199
      %v2731 = vpack.c.b16 %v1202, %v1201
      %v2732 = vpack.c.b16 %v1204, %v1203
      %v2733 = vpack.c.b16 %v1206, %v1205
      %v2734 = vpack.c.b16 %v1208, %v1207
      %v2735 = vpack.c.b16 %v1210, %v1209
      %v2736 = vpack.c.b16 %v1212, %v1211
      %v2737 = vpack.c.b16 %v1214, %v1213
      %v2738 = vpack.c.b16 %v1216, %v1215
      %v2739 = vpack.c.b16 %v1596, %v1217
      %v2740 = vpack.c.b16 %v2716, %v2715
      %v2742 = vsel %vm1242, %v2717, 0
      %v2745 = vsel %vm1242, %v2718, 0
      %v2748 = vsel %vm1242, %v2719, 0
      %v2751 = vsel %vm1242, %v2720, 0
      %v2754 = vsel %vm1242, %v2721, 0
      %v2757 = vsel %vm1242, %v2722, 0
      %v2760 = vsel %vm1242, %v2723, 0
      %v2763 = vsel %vm1242, %v2724, 0
      %v2766 = vsel %vm1242, %v2725, 0
      %v2769 = vsel %vm1242, %v2726, 0
      %v2772 = vsel %vm1242, %v2727, 0
      %v2775 = vsel %vm1242, %v2728, 0
      %v2778 = vsel %vm1242, %v2729, 0
      %v2781 = vsel %vm1242, %v2730, 0
      %v2784 = vsel %vm1242, %v2731, 0
      %v2787 = vsel %vm1242, %v2732, 0
      %v2790 = vsel %vm1242, %v2733, 0
      %v2793 = vsel %vm1242, %v2734, 0
      %v2796 = vsel %vm1242, %v2735, 0
      %v2799 = vsel %vm1242, %v2736, 0
      %v2802 = vsel %vm1242, %v2737, 0
      %v2805 = vsel %vm1242, %v2738, 0
      %v2808 = vsel %vm1242, %v2739, 0
      %v2811 = vsel %vm1242, %v2740, 0
      %v2814 = vsel %vm1315, %v2712, 0
      %2816 = vmatprep.subr.bf16.mxu0 0
      %2817 = vmatpush1.bf16.msra.mxu0 %v2814
      %2818 = vmatprep.subr.bf16.mxu0 0
      %2819 = vmatpush1.bf16.msra.mxu0 0
      %2820 = vmatprep.subr.bf16.mxu0 0
      %2821 = vmatpush1.bf16.msra.mxu0 0
      %2822 = vmatprep.subr.bf16.mxu0 0
      %2823 = vmatpush1.bf16.msra.mxu0 0
      %2824 = vmatprep.subr.bf16.mxu0 0
      %2825 = vmatpush1.bf16.msra.mxu0 0
      %2826 = vmatprep.subr.bf16.mxu0 0
      %2827 = vmatpush1.bf16.msra.mxu0 0
      %2828 = vmatprep.subr.bf16.mxu0 0
      %2829 = vmatpush1.bf16.msra.mxu0 0
      %2830 = vmatprep.subr.bf16.mxu0 0
      %2831 = vmatpush1.bf16.msra.mxu0 0
      %2832 = vmatprep.subr.bf16.mxu0 0
      %2833 = vmatpush1.bf16.msra.mxu0 0
      %2834 = vmatprep.subr.bf16.mxu0 0
      %2835 = vmatpush1.bf16.msra.mxu0 0
      %2836 = vmatprep.subr.bf16.mxu0 0
      %2837 = vmatpush1.bf16.msra.mxu0 0
      %2838 = vmatprep.subr.bf16.mxu0 0
      %2839 = vmatpush1.bf16.msra.mxu0 0
      %2840 = vmatprep.subr.bf16.mxu0 0
      %2841 = vmatpush1.bf16.msra.mxu0 0
      %2842 = vmatprep.subr.bf16.mxu0 0
      %2843 = vmatpush1.bf16.msra.mxu0 0
      %2844 = vmatprep.subr.bf16.mxu0 0
      %2845 = vmatpush1.bf16.msra.mxu0 0
      %2846 = vmatprep.subr.bf16.mxu0 0
      %2847 = vmatpush1.bf16.msra.mxu0 0
      %2848 = vmatprep.mubr.bf16.mxu0 0
      %2849 = vmatmul.mubr.bf16.gmra.mrb[0].mxu0 %v2742
      %v2850 = vpop.f32.mrb[0].mxu0
      %v2851 = vadd.f32 0.0, %v2850
      %v2852 = vpop.f32.mrb[0].mxu0
      %v2853 = vpop.f32.mrb[0].mxu0
      %v2854 = vadd.f32 0.0, %v2853
      %v2855 = vpop.f32.mrb[0].mxu0
      %2856 = vmatprep.mubr.bf16.mxu0 0
      %2857 = vmatmul.mubr.bf16.gmra.mrb[0].mxu0 %v2745
      %v2858 = vpop.f32.mrb[0].mxu0
      %v2859 = vadd.f32 0.0, %v2858
      %v2860 = vpop.f32.mrb[0].mxu0
      %v2861 = vpop.f32.mrb[0].mxu0
      %v2862 = vadd.f32 0.0, %v2861
      %v2863 = vpop.f32.mrb[0].mxu0
      %2864 = vmatprep.mubr.bf16.mxu0 0
      %2865 = vmatmul.mubr.bf16.gmra.mrb[0].mxu0 %v2748
      %v2866 = vpop.f32.mrb[0].mxu0
      %v2867 = vadd.f32 0.0, %v2866
      %v2868 = vpop.f32.mrb[0].mxu0
      %v2869 = vpop.f32.mrb[0].mxu0
      %v2870 = vadd.f32 0.0, %v2869
      %v2871 = vpop.f32.mrb[0].mxu0
      %2872 = vmatprep.mubr.bf16.mxu0 0
      %2873 = vmatmul.mubr.bf16.gmra.mrb[0].mxu0 %v2751
      %v2874 = vpop.f32.mrb[0].mxu0
      %v2875 = vadd.f32 0.0, %v2874
      %v2876 = vpop.f32.mrb[0].mxu0
      %v2877 = vpop.f32.mrb[0].mxu0
      %v2878 = vadd.f32 0.0, %v2877
      %v2879 = vpop.f32.mrb[0].mxu0
      %2880 = vmatprep.mubr.bf16.mxu0 0
      %2881 = vmatmul.mubr.bf16.gmra.mrb[0].mxu0 %v2754
      %v2882 = vpop.f32.mrb[0].mxu0
      %v2883 = vadd.f32 0.0, %v2882
      %v2884 = vpop.f32.mrb[0].mxu0
      %v2885 = vpop.f32.mrb[0].mxu0
      %v2886 = vadd.f32 0.0, %v2885
      %v2887 = vpop.f32.mrb[0].mxu0
      %2888 = vmatprep.mubr.bf16.mxu0 0
      %2889 = vmatmul.mubr.bf16.gmra.mrb[0].mxu0 %v2757
      %v2890 = vpop.f32.mrb[0].mxu0
      %v2891 = vadd.f32 0.0, %v2890
      %v2892 = vpop.f32.mrb[0].mxu0
      %v2893 = vpop.f32.mrb[0].mxu0
      %v2894 = vadd.f32 0.0, %v2893
      %v2895 = vpop.f32.mrb[0].mxu0
      %2896 = vmatprep.mubr.bf16.mxu0 0
      %2897 = vmatmul.mubr.bf16.gmra.mrb[0].mxu0 %v2760
      %v2898 = vpop.f32.mrb[0].mxu0
      %v2899 = vadd.f32 0.0, %v2898
      %v2900 = vpop.f32.mrb[0].mxu0
      %v2901 = vpop.f32.mrb[0].mxu0
      %v2902 = vadd.f32 0.0, %v2901
      %v2903 = vpop.f32.mrb[0].mxu0
      %2904 = vmatprep.mubr.bf16.mxu0 0
      %2905 = vmatmul.mubr.bf16.gmra.mrb[0].mxu0 %v2763
      %v2906 = vpop.f32.mrb[0].mxu0
      %v2907 = vadd.f32 0.0, %v2906
      %v2908 = vpop.f32.mrb[0].mxu0
      %v2909 = vpop.f32.mrb[0].mxu0
      %v2910 = vadd.f32 0.0, %v2909
      %v2911 = vpop.f32.mrb[0].mxu0
      %2912 = vmatprep.mubr.bf16.mxu0 0
      %2913 = vmatmul.mubr.bf16.gmra.mrb[0].mxu0 %v2766
      %v2914 = vpop.f32.mrb[0].mxu0
      %v2915 = vadd.f32 0.0, %v2914
      %v2916 = vpop.f32.mrb[0].mxu0
      %v2917 = vpop.f32.mrb[0].mxu0
      %v2918 = vadd.f32 0.0, %v2917
      %v2919 = vpop.f32.mrb[0].mxu0
      %2920 = vmatprep.mubr.bf16.mxu0 0
      %2921 = vmatmul.mubr.bf16.gmra.mrb[0].mxu0 %v2769
      %v2922 = vpop.f32.mrb[0].mxu0
      %v2923 = vadd.f32 0.0, %v2922
      %v2924 = vpop.f32.mrb[0].mxu0
      %v2925 = vpop.f32.mrb[0].mxu0
      %v2926 = vadd.f32 0.0, %v2925
      %v2927 = vpop.f32.mrb[0].mxu0
      %2928 = vmatprep.mubr.bf16.mxu0 0
      %2929 = vmatmul.mubr.bf16.gmra.mrb[0].mxu0 %v2772
      %v2930 = vpop.f32.mrb[0].mxu0
      %v2931 = vadd.f32 0.0, %v2930
      %v2932 = vpop.f32.mrb[0].mxu0
      %v2933 = vpop.f32.mrb[0].mxu0
      %v2934 = vadd.f32 0.0, %v2933
      %v2935 = vpop.f32.mrb[0].mxu0
      %2936 = vmatprep.mubr.bf16.mxu0 0
      %2937 = vmatmul.mubr.bf16.gmra.mrb[0].mxu0 %v2775
      %v2938 = vpop.f32.mrb[0].mxu0
      %v2939 = vadd.f32 0.0, %v2938
      %v2940 = vpop.f32.mrb[0].mxu0
      %v2941 = vpop.f32.mrb[0].mxu0
      %v2942 = vadd.f32 0.0, %v2941
      %v2943 = vpop.f32.mrb[0].mxu0
      %2944 = vmatprep.mubr.bf16.mxu0 0
      %2945 = vmatmul.mubr.bf16.gmra.mrb[0].mxu0 %v2778
      %v2946 = vpop.f32.mrb[0].mxu0
      %v2947 = vadd.f32 0.0, %v2946
      %v2948 = vpop.f32.mrb[0].mxu0
      %v2949 = vpop.f32.mrb[0].mxu0
      %v2950 = vadd.f32 0.0, %v2949
      %v2951 = vpop.f32.mrb[0].mxu0
      %2952 = vmatprep.mubr.bf16.mxu0 0
      %2953 = vmatmul.mubr.bf16.gmra.mrb[0].mxu0 %v2781
      %v2954 = vpop.f32.mrb[0].mxu0
      %v2955 = vadd.f32 0.0, %v2954
      %v2956 = vpop.f32.mrb[0].mxu0
      %v2957 = vpop.f32.mrb[0].mxu0
      %v2958 = vadd.f32 0.0, %v2957
      %v2959 = vpop.f32.mrb[0].mxu0
      %2960 = vmatprep.mubr.bf16.mxu0 0
      %2961 = vmatmul.mubr.bf16.gmra.mrb[0].mxu0 %v2784
      %v2962 = vpop.f32.mrb[0].mxu0
      %v2963 = vadd.f32 0.0, %v2962
      %v2964 = vpop.f32.mrb[0].mxu0
      %v2965 = vpop.f32.mrb[0].mxu0
      %v2966 = vadd.f32 0.0, %v2965
      %v2967 = vpop.f32.mrb[0].mxu0
      %2968 = vmatprep.mubr.bf16.mxu0 0
      %2969 = vmatmul.mubr.bf16.gmra.mrb[0].mxu0 %v2787
      %v2970 = vpop.f32.mrb[0].mxu0
      %v2971 = vadd.f32 0.0, %v2970
      %v2972 = vpop.f32.mrb[0].mxu0
      %v2973 = vpop.f32.mrb[0].mxu0
      %v2974 = vadd.f32 0.0, %v2973
      %v2975 = vpop.f32.mrb[0].mxu0
      %2976 = vmatprep.mubr.bf16.mxu0 0
      %2977 = vmatmul.mubr.bf16.gmra.mrb[0].mxu0 %v2790
      %v2978 = vpop.f32.mrb[0].mxu0
      %v2979 = vadd.f32 0.0, %v2978
      %v2980 = vpop.f32.mrb[0].mxu0
      %v2981 = vpop.f32.mrb[0].mxu0
      %v2982 = vadd.f32 0.0, %v2981
      %v2983 = vpop.f32.mrb[0].mxu0
      %2984 = vmatprep.mubr.bf16.mxu0 0
      %2985 = vmatmul.mubr.bf16.gmra.mrb[0].mxu0 %v2793
      %v2986 = vpop.f32.mrb[0].mxu0
      %v2987 = vadd.f32 0.0, %v2986
      %v2988 = vpop.f32.mrb[0].mxu0
      %v2989 = vpop.f32.mrb[0].mxu0
      %v2990 = vadd.f32 0.0, %v2989
      %v2991 = vpop.f32.mrb[0].mxu0
      %2992 = vmatprep.mubr.bf16.mxu0 0
      %2993 = vmatmul.mubr.bf16.gmra.mrb[0].mxu0 %v2796
      %v2994 = vpop.f32.mrb[0].mxu0
      %v2995 = vadd.f32 0.0, %v2994
      %v2996 = vpop.f32.mrb[0].mxu0
      %v2997 = vpop.f32.mrb[0].mxu0
      %v2998 = vadd.f32 0.0, %v2997
      %v2999 = vpop.f32.mrb[0].mxu0
      %3000 = vmatprep.mubr.bf16.mxu0 0
      %3001 = vmatmul.mubr.bf16.gmra.mrb[0].mxu0 %v2799
      %v3002 = vpop.f32.mrb[0].mxu0
      %v3003 = vadd.f32 0.0, %v3002
      %v3004 = vpop.f32.mrb[0].mxu0
      %v3005 = vpop.f32.mrb[0].mxu0
      %v3006 = vadd.f32 0.0, %v3005
      %v3007 = vpop.f32.mrb[0].mxu0
      %3008 = vmatprep.mubr.bf16.mxu0 0
      %3009 = vmatmul.mubr.bf16.gmra.mrb[0].mxu0 %v2802
      %v3010 = vpop.f32.mrb[0].mxu0
      %v3011 = vadd.f32 0.0, %v3010
      %v3012 = vpop.f32.mrb[0].mxu0
      %v3013 = vpop.f32.mrb[0].mxu0
      %v3014 = vadd.f32 0.0, %v3013
      %v3015 = vpop.f32.mrb[0].mxu0
      %3016 = vmatprep.mubr.bf16.mxu0 0
      %3017 = vmatmul.mubr.bf16.gmra.mrb[0].mxu0 %v2805
      %v3018 = vpop.f32.mrb[0].mxu0
      %v3019 = vadd.f32 0.0, %v3018
      %v3020 = vpop.f32.mrb[0].mxu0
      %v3021 = vpop.f32.mrb[0].mxu0
      %v3022 = vadd.f32 0.0, %v3021
      %v3023 = vpop.f32.mrb[0].mxu0
      %3024 = vmatprep.mubr.bf16.mxu0 0
      %3025 = vmatmul.mubr.bf16.gmra.mrb[0].mxu0 %v2808
      %v3026 = vpop.f32.mrb[0].mxu0
      %v3027 = vadd.f32 0.0, %v3026
      %v3028 = vpop.f32.mrb[0].mxu0
      %v3029 = vpop.f32.mrb[0].mxu0
      %v3030 = vadd.f32 0.0, %v3029
      %v3031 = vpop.f32.mrb[0].mxu0
      %3032 = vmatprep.mubr.bf16.mxu0 0
      %3033 = vmatmul.mubr.bf16.gmra.mrb[0].mxu0 %v2811
      %v3034 = vpop.f32.mrb[0].mxu0
      %v3035 = vadd.f32 0.0, %v3034
      %v3036 = vpop.f32.mrb[0].mxu0
      %v3037 = vpop.f32.mrb[0].mxu0
      %v3038 = vadd.f32 0.0, %v3037
      %v3039 = vpop.f32.mrb[0].mxu0
      %3040 = vdwg.mxu0
      %v3041 = vld [vmem:[#allocation4] sm:$0xff]
      %v3042 = vld [vmem:[#allocation4 + $0x8] sm:$0xff]
      %v3043 = vld [vmem:[#allocation4 + $0x10] sm:$0xff]
      %v3044 = vld [vmem:[#allocation4 + $0x18] sm:$0xff]
      %v3045 = vld [vmem:[#allocation4 + $0x20] sm:$0xff]
      %v3046 = vld [vmem:[#allocation4 + $0x28] sm:$0xff]
      %v3047 = vld [vmem:[#allocation4 + $0x30] sm:$0xff]
      %v3048 = vld [vmem:[#allocation4 + $0x38] sm:$0xff]
      %v3049 = vld [vmem:[#allocation4 + $0x40] sm:$0xff]
      %v3050 = vld [vmem:[#allocation4 + $0x48] sm:$0xff]
      %v3051 = vld [vmem:[#allocation4 + $0x50] sm:$0xff]
      %v3052 = vld [vmem:[#allocation4 + $0x58] sm:$0xff]
      %v3053 = vld [vmem:[#allocation4 + $0x60] sm:$0xff]
      %v3054 = vld [vmem:[#allocation4 + $0x68] sm:$0xff]
      %v3055 = vld [vmem:[#allocation4 + $0x70] sm:$0xff]
      %v3056 = vld [vmem:[#allocation4 + $0x78] sm:$0xff]
      %v3057 = vld [vmem:[#allocation4 + $0x80] sm:$0xff]
      %v3058 = vld [vmem:[#allocation4 + $0x88] sm:$0xff]
      %v3059 = vld [vmem:[#allocation4 + $0x90] sm:$0xff]
      %v3060 = vld [vmem:[#allocation4 + $0x98] sm:$0xff]
      %v3061 = vld [vmem:[#allocation4 + $0xa0] sm:$0xff]
      %v3062 = vld [vmem:[#allocation4 + $0xa8] sm:$0xff]
      %v3063 = vld [vmem:[#allocation4 + $0xb0] sm:$0xff]
      %v3064 = vld [vmem:[#allocation4 + $0xb8] sm:$0xff]
      %v3065 = vld [vmem:[#allocation4 + $0xc0] sm:$0xff]
      %v3066 = vld [vmem:[#allocation4 + $0xc8] sm:$0xff]
      %v3067 = vld [vmem:[#allocation4 + $0xd0] sm:$0xff]
      %v3068 = vld [vmem:[#allocation4 + $0xd8] sm:$0xff]
      %v3069 = vld [vmem:[#allocation4 + $0xe0] sm:$0xff]
      %v3070 = vld [vmem:[#allocation4 + $0xe8] sm:$0xff]
      %v3071 = vld [vmem:[#allocation4 + $0xf0] sm:$0xff]
      %v3072 = vld [vmem:[#allocation4 + $0xf8] sm:$0xff]
      %v3073 = vld [vmem:[#allocation4 + $0x100] sm:$0xff]
      %v3074 = vld [vmem:[#allocation4 + $0x108] sm:$0xff]
      %v3075 = vld [vmem:[#allocation4 + $0x110] sm:$0xff]
      %v3076 = vld [vmem:[#allocation4 + $0x118] sm:$0xff]
      %v3077 = vld [vmem:[#allocation4 + $0x120] sm:$0xff]
      %v3078 = vld [vmem:[#allocation4 + $0x128] sm:$0xff]
      %v3079 = vld [vmem:[#allocation4 + $0x130] sm:$0xff]
      %v3080 = vld [vmem:[#allocation4 + $0x138] sm:$0xff]
      %v3081 = vld [vmem:[#allocation4 + $0x140] sm:$0xff]
      %v3082 = vld [vmem:[#allocation4 + $0x148] sm:$0xff]
      %v3083 = vld [vmem:[#allocation4 + $0x150] sm:$0xff]
      %v3084 = vld [vmem:[#allocation4 + $0x158] sm:$0xff]
      %v3085 = vld [vmem:[#allocation4 + $0x160] sm:$0xff]
      %v3086 = vld [vmem:[#allocation4 + $0x168] sm:$0xff]
      %v3087 = vld [vmem:[#allocation4 + $0x170] sm:$0xff]
      %v3088 = vld [vmem:[#allocation4 + $0x178] sm:$0xff]
      %v3089 = vadd.f32 %v3041, %v2851
      %v3090 = vadd.f32 %v3042, %v2854
      %v3091 = vadd.f32 %v3043, %v2859
      %v3092 = vadd.f32 %v3044, %v2862
      %v3093 = vadd.f32 %v3045, %v2867
      %v3094 = vadd.f32 %v3046, %v2870
      %v3095 = vadd.f32 %v3047, %v2875
      %v3096 = vadd.f32 %v3048, %v2878
      %v3097 = vadd.f32 %v3049, %v2883
      %v3098 = vadd.f32 %v3050, %v2886
      %v3099 = vadd.f32 %v3051, %v2891
      %v3100 = vadd.f32 %v3052, %v2894
      %v3101 = vadd.f32 %v3053, %v2899
      %v3102 = vadd.f32 %v3054, %v2902
      %v3103 = vadd.f32 %v3055, %v2907
      %v3104 = vadd.f32 %v3056, %v2910
      %v3105 = vadd.f32 %v3057, %v2915
      %v3106 = vadd.f32 %v3058, %v2918
      %v3107 = vadd.f32 %v3059, %v2923
      %v3108 = vadd.f32 %v3060, %v2926
      %v3109 = vadd.f32 %v3061, %v2931
      %v3110 = vadd.f32 %v3062, %v2934
      %v3111 = vadd.f32 %v3063, %v2939
      %v3112 = vadd.f32 %v3064, %v2942
      %v3113 = vadd.f32 %v3065, %v2947
      %v3114 = vadd.f32 %v3066, %v2950
      %v3115 = vadd.f32 %v3067, %v2955
      %v3116 = vadd.f32 %v3068, %v2958
      %v3117 = vadd.f32 %v3069, %v2963
      %v3118 = vadd.f32 %v3070, %v2966
      %v3119 = vadd.f32 %v3071, %v2971
      %v3120 = vadd.f32 %v3072, %v2974
      %v3121 = vadd.f32 %v3073, %v2979
      %v3122 = vadd.f32 %v3074, %v2982
      %v3123 = vadd.f32 %v3075, %v2987
      %v3124 = vadd.f32 %v3076, %v2990
      %v3125 = vadd.f32 %v3077, %v2995
      %v3126 = vadd.f32 %v3078, %v2998
      %v3127 = vadd.f32 %v3079, %v3003
      %v3128 = vadd.f32 %v3080, %v3006
      %v3129 = vadd.f32 %v3081, %v3011
      %v3130 = vadd.f32 %v3082, %v3014
      %v3131 = vadd.f32 %v3083, %v3019
      %v3132 = vadd.f32 %v3084, %v3022
      %v3133 = vadd.f32 %v3085, %v3027
      %v3134 = vadd.f32 %v3086, %v3030
      %v3135 = vadd.f32 %v3087, %v3035
      %v3136 = vadd.f32 %v3088, %v3038
      %3137 = vst.msk [vmem:[#allocation4] sm:$0xff] %vm1544, %v3089
      %3138 = vst.msk [vmem:[#allocation4 + $0x8] sm:$0xff] %vm1544, %v3090
      %3139 = vst.msk [vmem:[#allocation4 + $0x10] sm:$0xff] %vm1544, %v3091
      %3140 = vst.msk [vmem:[#allocation4 + $0x18] sm:$0xff] %vm1544, %v3092
      %3141 = vst.msk [vmem:[#allocation4 + $0x20] sm:$0xff] %vm1544, %v3093
      %3142 = vst.msk [vmem:[#allocation4 + $0x28] sm:$0xff] %vm1544, %v3094
      %3143 = vst.msk [vmem:[#allocation4 + $0x30] sm:$0xff] %vm1544, %v3095
      %3144 = vst.msk [vmem:[#allocation4 + $0x38] sm:$0xff] %vm1544, %v3096
      %3145 = vst.msk [vmem:[#allocation4 + $0x40] sm:$0xff] %vm1544, %v3097
      %3146 = vst.msk [vmem:[#allocation4 + $0x48] sm:$0xff] %vm1544, %v3098
      %3147 = vst.msk [vmem:[#allocation4 + $0x50] sm:$0xff] %vm1544, %v3099
      %3148 = vst.msk [vmem:[#allocation4 + $0x58] sm:$0xff] %vm1544, %v3100
      %3149 = vst.msk [vmem:[#allocation4 + $0x60] sm:$0xff] %vm1544, %v3101
      %3150 = vst.msk [vmem:[#allocation4 + $0x68] sm:$0xff] %vm1544, %v3102
      %3151 = vst.msk [vmem:[#allocation4 + $0x70] sm:$0xff] %vm1544, %v3103
      %3152 = vst.msk [vmem:[#allocation4 + $0x78] sm:$0xff] %vm1544, %v3104
      %3153 = vst.msk [vmem:[#allocation4 + $0x80] sm:$0xff] %vm1544, %v3105
      %3154 = vst.msk [vmem:[#allocation4 + $0x88] sm:$0xff] %vm1544, %v3106
      %3155 = vst.msk [vmem:[#allocation4 + $0x90] sm:$0xff] %vm1544, %v3107
      %3156 = vst.msk [vmem:[#allocation4 + $0x98] sm:$0xff] %vm1544, %v3108
      %3157 = vst.msk [vmem:[#allocation4 + $0xa0] sm:$0xff] %vm1544, %v3109
      %3158 = vst.msk [vmem:[#allocation4 + $0xa8] sm:$0xff] %vm1544, %v3110
      %3159 = vst.msk [vmem:[#allocation4 + $0xb0] sm:$0xff] %vm1544, %v3111
      %3160 = vst.msk [vmem:[#allocation4 + $0xb8] sm:$0xff] %vm1544, %v3112
      %3161 = vst.msk [vmem:[#allocation4 + $0xc0] sm:$0xff] %vm1544, %v3113
      %3162 = vst.msk [vmem:[#allocation4 + $0xc8] sm:$0xff] %vm1544, %v3114
      %3163 = vst.msk [vmem:[#allocation4 + $0xd0] sm:$0xff] %vm1544, %v3115
      %3164 = vst.msk [vmem:[#allocation4 + $0xd8] sm:$0xff] %vm1544, %v3116
      %3165 = vst.msk [vmem:[#allocation4 + $0xe0] sm:$0xff] %vm1544, %v3117
      %3166 = vst.msk [vmem:[#allocation4 + $0xe8] sm:$0xff] %vm1544, %v3118
      %3167 = vst.msk [vmem:[#allocation4 + $0xf0] sm:$0xff] %vm1544, %v3119
      %3168 = vst.msk [vmem:[#allocation4 + $0xf8] sm:$0xff] %vm1544, %v3120
      %3169 = vst.msk [vmem:[#allocation4 + $0x100] sm:$0xff] %vm1544, %v3121
      %3170 = vst.msk [vmem:[#allocation4 + $0x108] sm:$0xff] %vm1544, %v3122
      %3171 = vst.msk [vmem:[#allocation4 + $0x110] sm:$0xff] %vm1544, %v3123
      %3172 = vst.msk [vmem:[#allocation4 + $0x118] sm:$0xff] %vm1544, %v3124
      %3173 = vst.msk [vmem:[#allocation4 + $0x120] sm:$0xff] %vm1544, %v3125
      %3174 = vst.msk [vmem:[#allocation4 + $0x128] sm:$0xff] %vm1544, %v3126
      %3175 = vst.msk [vmem:[#allocation4 + $0x130] sm:$0xff] %vm1544, %v3127
      %3176 = vst.msk [vmem:[#allocation4 + $0x138] sm:$0xff] %vm1544, %v3128
      %3177 = vst.msk [vmem:[#allocation4 + $0x140] sm:$0xff] %vm1544, %v3129
      %3178 = vst.msk [vmem:[#allocation4 + $0x148] sm:$0xff] %vm1544, %v3130
      %3179 = vst.msk [vmem:[#allocation4 + $0x150] sm:$0xff] %vm1544, %v3131
      %3180 = vst.msk [vmem:[#allocation4 + $0x158] sm:$0xff] %vm1544, %v3132
      %3181 = vst.msk [vmem:[#allocation4 + $0x160] sm:$0xff] %vm1544, %v3133
      %3182 = vst.msk [vmem:[#allocation4 + $0x168] sm:$0xff] %vm1544, %v3134
      %3183 = vst.msk [vmem:[#allocation4 + $0x170] sm:$0xff] %vm1544, %v3135
      %3184 = vst.msk [vmem:[#allocation4 + $0x178] sm:$0xff] %vm1544, %v3136
      %s3185 = scalar_lea.vmem %s4, 8
      %v3186 = vld [vmem:[%s3185] sm:$0x3]
      %v3188 = vunpack.c.l.b16 %v1117
      %v3189 = vpack.c.b16 %v3188, %v3188
      %v3190 = vshrl.u32 %v2717, 16
      %v3192 = vshll.u32 %v2717, 16
      %v3194 = vrot.slane %v3192, 1
      %v3195 = vor.u32 %v3190, %v3194
      %v3196 = vshll.u32 %v2718, 16
      %v3198 = vrot.slane %v3196, 1
      %v3199 = vsel %vm1598, %v3195, %v3198
      %v3200 = vshrl.u32 %v2718, 16
      %v3202 = vor.u32 %v3200, %v3198
      %v3203 = vshll.u32 %v2719, 16
      %v3205 = vrot.slane %v3203, 1
      %v3206 = vsel %vm1598, %v3202, %v3205
      %v3207 = vshrl.u32 %v2719, 16
      %v3209 = vor.u32 %v3207, %v3205
      %v3210 = vshll.u32 %v2720, 16
      %v3212 = vrot.slane %v3210, 1
      %v3213 = vsel %vm1598, %v3209, %v3212
      %v3214 = vshrl.u32 %v2720, 16
      %v3216 = vor.u32 %v3214, %v3212
      %v3217 = vshll.u32 %v2721, 16
      %v3219 = vrot.slane %v3217, 1
      %v3220 = vsel %vm1598, %v3216, %v3219
      %v3221 = vshrl.u32 %v2721, 16
      %v3223 = vor.u32 %v3221, %v3219
      %v3224 = vshll.u32 %v2722, 16
      %v3226 = vrot.slane %v3224, 1
      %v3227 = vsel %vm1598, %v3223, %v3226
      %v3228 = vshrl.u32 %v2722, 16
      %v3230 = vor.u32 %v3228, %v3226
      %v3231 = vshll.u32 %v2723, 16
      %v3233 = vrot.slane %v3231, 1
      %v3234 = vsel %vm1598, %v3230, %v3233
      %v3235 = vshrl.u32 %v2723, 16
      %v3237 = vor.u32 %v3235, %v3233
      %v3238 = vshll.u32 %v2724, 16
      %v3240 = vrot.slane %v3238, 1
      %v3241 = vsel %vm1598, %v3237, %v3240
      %v3242 = vshrl.u32 %v2724, 16
      %v3244 = vor.u32 %v3242, %v3240
      %v3245 = vshll.u32 %v2725, 16
      %v3247 = vrot.slane %v3245, 1
      %v3248 = vsel %vm1598, %v3244, %v3247
      %v3249 = vshrl.u32 %v2725, 16
      %v3251 = vor.u32 %v3249, %v3247
      %v3252 = vshll.u32 %v2726, 16
      %v3254 = vrot.slane %v3252, 1
      %v3255 = vsel %vm1598, %v3251, %v3254
      %v3256 = vshrl.u32 %v2726, 16
      %v3258 = vor.u32 %v3256, %v3254
      %v3259 = vshll.u32 %v2727, 16
      %v3261 = vrot.slane %v3259, 1
      %v3262 = vsel %vm1598, %v3258, %v3261
      %v3263 = vshrl.u32 %v2727, 16
      %v3265 = vor.u32 %v3263, %v3261
      %v3266 = vshll.u32 %v2728, 16
      %v3268 = vrot.slane %v3266, 1
      %v3269 = vsel %vm1598, %v3265, %v3268
      %v3270 = vshrl.u32 %v2728, 16
      %v3272 = vor.u32 %v3270, %v3268
      %v3273 = vshll.u32 %v2729, 16
      %v3275 = vrot.slane %v3273, 1
      %v3276 = vsel %vm1598, %v3272, %v3275
      %v3277 = vshrl.u32 %v2729, 16
      %v3279 = vor.u32 %v3277, %v3275
      %v3280 = vshll.u32 %v2730, 16
      %v3282 = vrot.slane %v3280, 1
      %v3283 = vsel %vm1598, %v3279, %v3282
      %v3284 = vshrl.u32 %v2730, 16
      %v3286 = vor.u32 %v3284, %v3282
      %v3287 = vshll.u32 %v2731, 16
      %v3289 = vrot.slane %v3287, 1
      %v3290 = vsel %vm1598, %v3286, %v3289
      %v3291 = vshrl.u32 %v2731, 16
      %v3293 = vor.u32 %v3291, %v3289
      %v3294 = vshll.u32 %v2732, 16
      %v3296 = vrot.slane %v3294, 1
      %v3297 = vsel %vm1598, %v3293, %v3296
      %v3298 = vshrl.u32 %v2732, 16
      %v3300 = vor.u32 %v3298, %v3296
      %v3301 = vshll.u32 %v2733, 16
      %v3303 = vrot.slane %v3301, 1
      %v3304 = vsel %vm1598, %v3300, %v3303
      %v3305 = vshrl.u32 %v2733, 16
      %v3307 = vor.u32 %v3305, %v3303
      %v3308 = vshll.u32 %v2734, 16
      %v3310 = vrot.slane %v3308, 1
      %v3311 = vsel %vm1598, %v3307, %v3310
      %v3312 = vshrl.u32 %v2734, 16
      %v3314 = vor.u32 %v3312, %v3310
      %v3315 = vshll.u32 %v2735, 16
      %v3317 = vrot.slane %v3315, 1
      %v3318 = vsel %vm1598, %v3314, %v3317
      %v3319 = vshrl.u32 %v2735, 16
      %v3321 = vor.u32 %v3319, %v3317
      %v3322 = vshll.u32 %v2736, 16
      %v3324 = vrot.slane %v3322, 1
      %v3325 = vsel %vm1598, %v3321, %v3324
      %v3326 = vshrl.u32 %v2736, 16
      %v3328 = vor.u32 %v3326, %v3324
      %v3329 = vshll.u32 %v2737, 16
      %v3331 = vrot.slane %v3329, 1
      %v3332 = vsel %vm1598, %v3328, %v3331
      %v3333 = vshrl.u32 %v2737, 16
      %v3335 = vor.u32 %v3333, %v3331
      %v3336 = vshll.u32 %v2738, 16
      %v3338 = vrot.slane %v3336, 1
      %v3339 = vsel %vm1598, %v3335, %v3338
      %v3340 = vshrl.u32 %v2738, 16
      %v3342 = vor.u32 %v3340, %v3338
      %v3343 = vshll.u32 %v2739, 16
      %v3345 = vrot.slane %v3343, 1
      %v3346 = vsel %vm1598, %v3342, %v3345
      %v3347 = vshrl.u32 %v2739, 16
      %v3349 = vor.u32 %v3347, %v3345
      %v3350 = vshll.u32 %v2740, 16
      %v3352 = vrot.slane %v3350, 1
      %v3353 = vsel %vm1598, %v3349, %v3352
      %v3354 = vshrl.u32 %v2740, 16
      %v3356 = vor.u32 %v3354, %v3352
      %v3358 = vshll.u32 %v3189, 16
      %v3360 = vrot.slane %v3358, 1
      %v3361 = vsel %vm1598, %v3356, %v3360
      %v3363 = vsel %vm1242, %v3199, 0
      %v3366 = vsel %vm1242, %v3206, 0
      %v3369 = vsel %vm1242, %v3213, 0
      %v3372 = vsel %vm1242, %v3220, 0
      %v3375 = vsel %vm1242, %v3227, 0
      %v3378 = vsel %vm1242, %v3234, 0
      %v3381 = vsel %vm1242, %v3241, 0
      %v3384 = vsel %vm1242, %v3248, 0
      %v3387 = vsel %vm1242, %v3255, 0
      %v3390 = vsel %vm1242, %v3262, 0
      %v3393 = vsel %vm1242, %v3269, 0
      %v3396 = vsel %vm1242, %v3276, 0
      %v3399 = vsel %vm1242, %v3283, 0
      %v3402 = vsel %vm1242, %v3290, 0
      %v3405 = vsel %vm1242, %v3297, 0
      %v3408 = vsel %vm1242, %v3304, 0
      %v3411 = vsel %vm1242, %v3311, 0
      %v3414 = vsel %vm1242, %v3318, 0
      %v3417 = vsel %vm1242, %v3325, 0
      %v3420 = vsel %vm1242, %v3332, 0
      %v3423 = vsel %vm1242, %v3339, 0
      %v3426 = vsel %vm1242, %v3346, 0
      %v3429 = vsel %vm1242, %v3353, 0
      %v3432 = vsel %vm1242, %v3361, 0
      %v3435 = vsel %vm1315, %v3186, 0
      %3437 = vmatprep.subr.bf16.mxu0 0
      %3438 = vmatpush1.bf16.msra.mxu0 %v3435
      %3439 = vmatprep.subr.bf16.mxu0 0
      %3440 = vmatpush1.bf16.msra.mxu0 0
      %3441 = vmatprep.subr.bf16.mxu0 0
      %3442 = vmatpush1.bf16.msra.mxu0 0
      %3443 = vmatprep.subr.bf16.mxu0 0
      %3444 = vmatpush1.bf16.msra.mxu0 0
      %3445 = vmatprep.subr.bf16.mxu0 0
      %3446 = vmatpush1.bf16.msra.mxu0 0
      %3447 = vmatprep.subr.bf16.mxu0 0
      %3448 = vmatpush1.bf16.msra.mxu0 0
      %3449 = vmatprep.subr.bf16.mxu0 0
      %3450 = vmatpush1.bf16.msra.mxu0 0
      %3451 = vmatprep.subr.bf16.mxu0 0
      %3452 = vmatpush1.bf16.msra.mxu0 0
      %3453 = vmatprep.subr.bf16.mxu0 0
      %3454 = vmatpush1.bf16.msra.mxu0 0
      %3455 = vmatprep.subr.bf16.mxu0 0
      %3456 = vmatpush1.bf16.msra.mxu0 0
      %3457 = vmatprep.subr.bf16.mxu0 0
      %3458 = vmatpush1.bf16.msra.mxu0 0
      %3459 = vmatprep.subr.bf16.mxu0 0
      %3460 = vmatpush1.bf16.msra.mxu0 0
      %3461 = vmatprep.subr.bf16.mxu0 0
      %3462 = vmatpush1.bf16.msra.mxu0 0
      %3463 = vmatprep.subr.bf16.mxu0 0
      %3464 = vmatpush1.bf16.msra.mxu0 0
      %3465 = vmatprep.subr.bf16.mxu0 0
      %3466 = vmatpush1.bf16.msra.mxu0 0
      %3467 = vmatprep.subr.bf16.mxu0 0
      %3468 = vmatpush1.bf16.msra.mxu0 0
      %3469 = vmatprep.mubr.bf16.mxu0 0
      %3470 = vmatmul.mubr.bf16.gmra.mrb[0].mxu0 %v3363
      %v3471 = vpop.f32.mrb[0].mxu0
      %v3472 = vadd.f32 0.0, %v3471
      %v3473 = vpop.f32.mrb[0].mxu0
      %v3474 = vpop.f32.mrb[0].mxu0
      %v3475 = vadd.f32 0.0, %v3474
      %v3476 = vpop.f32.mrb[0].mxu0
      %3477 = vmatprep.mubr.bf16.mxu0 0
      %3478 = vmatmul.mubr.bf16.gmra.mrb[0].mxu0 %v3366
      %v3479 = vpop.f32.mrb[0].mxu0
      %v3480 = vadd.f32 0.0, %v3479
      %v3481 = vpop.f32.mrb[0].mxu0
      %v3482 = vpop.f32.mrb[0].mxu0
      %v3483 = vadd.f32 0.0, %v3482
      %v3484 = vpop.f32.mrb[0].mxu0
      %3485 = vmatprep.mubr.bf16.mxu0 0
      %3486 = vmatmul.mubr.bf16.gmra.mrb[0].mxu0 %v3369
      %v3487 = vpop.f32.mrb[0].mxu0
      %v3488 = vadd.f32 0.0, %v3487
      %v3489 = vpop.f32.mrb[0].mxu0
      %v3490 = vpop.f32.mrb[0].mxu0
      %v3491 = vadd.f32 0.0, %v3490
      %v3492 = vpop.f32.mrb[0].mxu0
      %3493 = vmatprep.mubr.bf16.mxu0 0
      %3494 = vmatmul.mubr.bf16.gmra.mrb[0].mxu0 %v3372
      %v3495 = vpop.f32.mrb[0].mxu0
      %v3496 = vadd.f32 0.0, %v3495
      %v3497 = vpop.f32.mrb[0].mxu0
      %v3498 = vpop.f32.mrb[0].mxu0
      %v3499 = vadd.f32 0.0, %v3498
      %v3500 = vpop.f32.mrb[0].mxu0
      %3501 = vmatprep.mubr.bf16.mxu0 0
      %3502 = vmatmul.mubr.bf16.gmra.mrb[0].mxu0 %v3375
      %v3503 = vpop.f32.mrb[0].mxu0
      %v3504 = vadd.f32 0.0, %v3503
      %v3505 = vpop.f32.mrb[0].mxu0
      %v3506 = vpop.f32.mrb[0].mxu0
      %v3507 = vadd.f32 0.0, %v3506
      %v3508 = vpop.f32.mrb[0].mxu0
      %3509 = vmatprep.mubr.bf16.mxu0 0
      %3510 = vmatmul.mubr.bf16.gmra.mrb[0].mxu0 %v3378
      %v3511 = vpop.f32.mrb[0].mxu0
      %v3512 = vadd.f32 0.0, %v3511
      %v3513 = vpop.f32.mrb[0].mxu0
      %v3514 = vpop.f32.mrb[0].mxu0
      %v3515 = vadd.f32 0.0, %v3514
      %v3516 = vpop.f32.mrb[0].mxu0
      %3517 = vmatprep.mubr.bf16.mxu0 0
      %3518 = vmatmul.mubr.bf16.gmra.mrb[0].mxu0 %v3381
      %v3519 = vpop.f32.mrb[0].mxu0
      %v3520 = vadd.f32 0.0, %v3519
      %v3521 = vpop.f32.mrb[0].mxu0
      %v3522 = vpop.f32.mrb[0].mxu0
      %v3523 = vadd.f32 0.0, %v3522
      %v3524 = vpop.f32.mrb[0].mxu0
      %3525 = vmatprep.mubr.bf16.mxu0 0
      %3526 = vmatmul.mubr.bf16.gmra.mrb[0].mxu0 %v3384
      %v3527 = vpop.f32.mrb[0].mxu0
      %v3528 = vadd.f32 0.0, %v3527
      %v3529 = vpop.f32.mrb[0].mxu0
      %v3530 = vpop.f32.mrb[0].mxu0
      %v3531 = vadd.f32 0.0, %v3530
      %v3532 = vpop.f32.mrb[0].mxu0
      %3533 = vmatprep.mubr.bf16.mxu0 0
      %3534 = vmatmul.mubr.bf16.gmra.mrb[0].mxu0 %v3387
      %v3535 = vpop.f32.mrb[0].mxu0
      %v3536 = vadd.f32 0.0, %v3535
      %v3537 = vpop.f32.mrb[0].mxu0
      %v3538 = vpop.f32.mrb[0].mxu0
      %v3539 = vadd.f32 0.0, %v3538
      %v3540 = vpop.f32.mrb[0].mxu0
      %3541 = vmatprep.mubr.bf16.mxu0 0
      %3542 = vmatmul.mubr.bf16.gmra.mrb[0].mxu0 %v3390
      %v3543 = vpop.f32.mrb[0].mxu0
      %v3544 = vadd.f32 0.0, %v3543
      %v3545 = vpop.f32.mrb[0].mxu0
      %v3546 = vpop.f32.mrb[0].mxu0
      %v3547 = vadd.f32 0.0, %v3546
      %v3548 = vpop.f32.mrb[0].mxu0
      %3549 = vmatprep.mubr.bf16.mxu0 0
      %3550 = vmatmul.mubr.bf16.gmra.mrb[0].mxu0 %v3393
      %v3551 = vpop.f32.mrb[0].mxu0
      %v3552 = vadd.f32 0.0, %v3551
      %v3553 = vpop.f32.mrb[0].mxu0
      %v3554 = vpop.f32.mrb[0].mxu0
      %v3555 = vadd.f32 0.0, %v3554
      %v3556 = vpop.f32.mrb[0].mxu0
      %3557 = vmatprep.mubr.bf16.mxu0 0
      %3558 = vmatmul.mubr.bf16.gmra.mrb[0].mxu0 %v3396
      %v3559 = vpop.f32.mrb[0].mxu0
      %v3560 = vadd.f32 0.0, %v3559
      %v3561 = vpop.f32.mrb[0].mxu0
      %v3562 = vpop.f32.mrb[0].mxu0
      %v3563 = vadd.f32 0.0, %v3562
      %v3564 = vpop.f32.mrb[0].mxu0
      %3565 = vmatprep.mubr.bf16.mxu0 0
      %3566 = vmatmul.mubr.bf16.gmra.mrb[0].mxu0 %v3399
      %v3567 = vpop.f32.mrb[0].mxu0
      %v3568 = vadd.f32 0.0, %v3567
      %v3569 = vpop.f32.mrb[0].mxu0
      %v3570 = vpop.f32.mrb[0].mxu0
      %v3571 = vadd.f32 0.0, %v3570
      %v3572 = vpop.f32.mrb[0].mxu0
      %3573 = vmatprep.mubr.bf16.mxu0 0
      %3574 = vmatmul.mubr.bf16.gmra.mrb[0].mxu0 %v3402
      %v3575 = vpop.f32.mrb[0].mxu0
      %v3576 = vadd.f32 0.0, %v3575
      %v3577 = vpop.f32.mrb[0].mxu0
      %v3578 = vpop.f32.mrb[0].mxu0
      %v3579 = vadd.f32 0.0, %v3578
      %v3580 = vpop.f32.mrb[0].mxu0
      %3581 = vmatprep.mubr.bf16.mxu0 0
      %3582 = vmatmul.mubr.bf16.gmra.mrb[0].mxu0 %v3405
      %v3583 = vpop.f32.mrb[0].mxu0
      %v3584 = vadd.f32 0.0, %v3583
      %v3585 = vpop.f32.mrb[0].mxu0
      %v3586 = vpop.f32.mrb[0].mxu0
      %v3587 = vadd.f32 0.0, %v3586
      %v3588 = vpop.f32.mrb[0].mxu0
      %3589 = vmatprep.mubr.bf16.mxu0 0
      %3590 = vmatmul.mubr.bf16.gmra.mrb[0].mxu0 %v3408
      %v3591 = vpop.f32.mrb[0].mxu0
      %v3592 = vadd.f32 0.0, %v3591
      %v3593 = vpop.f32.mrb[0].mxu0
      %v3594 = vpop.f32.mrb[0].mxu0
      %v3595 = vadd.f32 0.0, %v3594
      %v3596 = vpop.f32.mrb[0].mxu0
      %3597 = vmatprep.mubr.bf16.mxu0 0
      %3598 = vmatmul.mubr.bf16.gmra.mrb[0].mxu0 %v3411
      %v3599 = vpop.f32.mrb[0].mxu0
      %v3600 = vadd.f32 0.0, %v3599
      %v3601 = vpop.f32.mrb[0].mxu0
      %v3602 = vpop.f32.mrb[0].mxu0
      %v3603 = vadd.f32 0.0, %v3602
      %v3604 = vpop.f32.mrb[0].mxu0
      %3605 = vmatprep.mubr.bf16.mxu0 0
      %3606 = vmatmul.mubr.bf16.gmra.mrb[0].mxu0 %v3414
      %v3607 = vpop.f32.mrb[0].mxu0
      %v3608 = vadd.f32 0.0, %v3607
      %v3609 = vpop.f32.mrb[0].mxu0
      %v3610 = vpop.f32.mrb[0].mxu0
      %v3611 = vadd.f32 0.0, %v3610
      %v3612 = vpop.f32.mrb[0].mxu0
      %3613 = vmatprep.mubr.bf16.mxu0 0
      %3614 = vmatmul.mubr.bf16.gmra.mrb[0].mxu0 %v3417
      %v3615 = vpop.f32.mrb[0].mxu0
      %v3616 = vadd.f32 0.0, %v3615
      %v3617 = vpop.f32.mrb[0].mxu0
      %v3618 = vpop.f32.mrb[0].mxu0
      %v3619 = vadd.f32 0.0, %v3618
      %v3620 = vpop.f32.mrb[0].mxu0
      %3621 = vmatprep.mubr.bf16.mxu0 0
      %3622 = vmatmul.mubr.bf16.gmra.mrb[0].mxu0 %v3420
      %v3623 = vpop.f32.mrb[0].mxu0
      %v3624 = vadd.f32 0.0, %v3623
      %v3625 = vpop.f32.mrb[0].mxu0
      %v3626 = vpop.f32.mrb[0].mxu0
      %v3627 = vadd.f32 0.0, %v3626
      %v3628 = vpop.f32.mrb[0].mxu0
      %3629 = vmatprep.mubr.bf16.mxu0 0
      %3630 = vmatmul.mubr.bf16.gmra.mrb[0].mxu0 %v3423
      %v3631 = vpop.f32.mrb[0].mxu0
      %v3632 = vadd.f32 0.0, %v3631
      %v3633 = vpop.f32.mrb[0].mxu0
      %v3634 = vpop.f32.mrb[0].mxu0
      %v3635 = vadd.f32 0.0, %v3634
      %v3636 = vpop.f32.mrb[0].mxu0
      %3637 = vmatprep.mubr.bf16.mxu0 0
      %3638 = vmatmul.mubr.bf16.gmra.mrb[0].mxu0 %v3426
      %v3639 = vpop.f32.mrb[0].mxu0
      %v3640 = vadd.f32 0.0, %v3639
      %v3641 = vpop.f32.mrb[0].mxu0
      %v3642 = vpop.f32.mrb[0].mxu0
      %v3643 = vadd.f32 0.0, %v3642
      %v3644 = vpop.f32.mrb[0].mxu0
      %3645 = vmatprep.mubr.bf16.mxu0 0
      %3646 = vmatmul.mubr.bf16.gmra.mrb[0].mxu0 %v3429
      %v3647 = vpop.f32.mrb[0].mxu0
      %v3648 = vadd.f32 0.0, %v3647
      %v3649 = vpop.f32.mrb[0].mxu0
      %v3650 = vpop.f32.mrb[0].mxu0
      %v3651 = vadd.f32 0.0, %v3650
      %v3652 = vpop.f32.mrb[0].mxu0
      %3653 = vmatprep.mubr.bf16.mxu0 0
      %3654 = vmatmul.mubr.bf16.gmra.mrb[0].mxu0 %v3432
      %v3655 = vpop.f32.mrb[0].mxu0
      %v3656 = vadd.f32 0.0, %v3655
      %v3657 = vpop.f32.mrb[0].mxu0
      %v3658 = vpop.f32.mrb[0].mxu0
      %v3659 = vadd.f32 0.0, %v3658
      %v3660 = vpop.f32.mrb[0].mxu0
      %3661 = vdwg.mxu0
      %v3662 = vld [vmem:[#allocation4] sm:$0xff]
      %v3663 = vld [vmem:[#allocation4 + $0x8] sm:$0xff]
      %v3664 = vld [vmem:[#allocation4 + $0x10] sm:$0xff]
      %v3665 = vld [vmem:[#allocation4 + $0x18] sm:$0xff]
      %v3666 = vld [vmem:[#allocation4 + $0x20] sm:$0xff]
      %v3667 = vld [vmem:[#allocation4 + $0x28] sm:$0xff]
      %v3668 = vld [vmem:[#allocation4 + $0x30] sm:$0xff]
      %v3669 = vld [vmem:[#allocation4 + $0x38] sm:$0xff]
      %v3670 = vld [vmem:[#allocation4 + $0x40] sm:$0xff]
      %v3671 = vld [vmem:[#allocation4 + $0x48] sm:$0xff]
      %v3672 = vld [vmem:[#allocation4 + $0x50] sm:$0xff]
      %v3673 = vld [vmem:[#allocation4 + $0x58] sm:$0xff]
      %v3674 = vld [vmem:[#allocation4 + $0x60] sm:$0xff]
      %v3675 = vld [vmem:[#allocation4 + $0x68] sm:$0xff]
      %v3676 = vld [vmem:[#allocation4 + $0x70] sm:$0xff]
      %v3677 = vld [vmem:[#allocation4 + $0x78] sm:$0xff]
      %v3678 = vld [vmem:[#allocation4 + $0x80] sm:$0xff]
      %v3679 = vld [vmem:[#allocation4 + $0x88] sm:$0xff]
      %v3680 = vld [vmem:[#allocation4 + $0x90] sm:$0xff]
      %v3681 = vld [vmem:[#allocation4 + $0x98] sm:$0xff]
      %v3682 = vld [vmem:[#allocation4 + $0xa0] sm:$0xff]
      %v3683 = vld [vmem:[#allocation4 + $0xa8] sm:$0xff]
      %v3684 = vld [vmem:[#allocation4 + $0xb0] sm:$0xff]
      %v3685 = vld [vmem:[#allocation4 + $0xb8] sm:$0xff]
      %v3686 = vld [vmem:[#allocation4 + $0xc0] sm:$0xff]
      %v3687 = vld [vmem:[#allocation4 + $0xc8] sm:$0xff]
      %v3688 = vld [vmem:[#allocation4 + $0xd0] sm:$0xff]
      %v3689 = vld [vmem:[#allocation4 + $0xd8] sm:$0xff]
      %v3690 = vld [vmem:[#allocation4 + $0xe0] sm:$0xff]
      %v3691 = vld [vmem:[#allocation4 + $0xe8] sm:$0xff]
      %v3692 = vld [vmem:[#allocation4 + $0xf0] sm:$0xff]
      %v3693 = vld [vmem:[#allocation4 + $0xf8] sm:$0xff]
      %v3694 = vld [vmem:[#allocation4 + $0x100] sm:$0xff]
      %v3695 = vld [vmem:[#allocation4 + $0x108] sm:$0xff]
      %v3696 = vld [vmem:[#allocation4 + $0x110] sm:$0xff]
      %v3697 = vld [vmem:[#allocation4 + $0x118] sm:$0xff]
      %v3698 = vld [vmem:[#allocation4 + $0x120] sm:$0xff]
      %v3699 = vld [vmem:[#allocation4 + $0x128] sm:$0xff]
      %v3700 = vld [vmem:[#allocation4 + $0x130] sm:$0xff]
      %v3701 = vld [vmem:[#allocation4 + $0x138] sm:$0xff]
      %v3702 = vld [vmem:[#allocation4 + $0x140] sm:$0xff]
      %v3703 = vld [vmem:[#allocation4 + $0x148] sm:$0xff]
      %v3704 = vld [vmem:[#allocation4 + $0x150] sm:$0xff]
      %v3705 = vld [vmem:[#allocation4 + $0x158] sm:$0xff]
      %v3706 = vld [vmem:[#allocation4 + $0x160] sm:$0xff]
      %v3707 = vld [vmem:[#allocation4 + $0x168] sm:$0xff]
      %v3708 = vld [vmem:[#allocation4 + $0x170] sm:$0xff]
      %v3709 = vld [vmem:[#allocation4 + $0x178] sm:$0xff]
      %v3710 = vadd.f32 %v3662, %v3472
      %v3711 = vadd.f32 %v3663, %v3475
      %v3712 = vadd.f32 %v3664, %v3480
      %v3713 = vadd.f32 %v3665, %v3483
      %v3714 = vadd.f32 %v3666, %v3488
      %v3715 = vadd.f32 %v3667, %v3491
      %v3716 = vadd.f32 %v3668, %v3496
      %v3717 = vadd.f32 %v3669, %v3499
      %v3718 = vadd.f32 %v3670, %v3504
      %v3719 = vadd.f32 %v3671, %v3507
      %v3720 = vadd.f32 %v3672, %v3512
      %v3721 = vadd.f32 %v3673, %v3515
      %v3722 = vadd.f32 %v3674, %v3520
      %v3723 = vadd.f32 %v3675, %v3523
      %v3724 = vadd.f32 %v3676, %v3528
      %v3725 = vadd.f32 %v3677, %v3531
      %v3726 = vadd.f32 %v3678, %v3536
      %v3727 = vadd.f32 %v3679, %v3539
      %v3728 = vadd.f32 %v3680, %v3544
      %v3729 = vadd.f32 %v3681, %v3547
      %v3730 = vadd.f32 %v3682, %v3552
      %v3731 = vadd.f32 %v3683, %v3555
      %v3732 = vadd.f32 %v3684, %v3560
      %v3733 = vadd.f32 %v3685, %v3563
      %v3734 = vadd.f32 %v3686, %v3568
      %v3735 = vadd.f32 %v3687, %v3571
      %v3736 = vadd.f32 %v3688, %v3576
      %v3737 = vadd.f32 %v3689, %v3579
      %v3738 = vadd.f32 %v3690, %v3584
      %v3739 = vadd.f32 %v3691, %v3587
      %v3740 = vadd.f32 %v3692, %v3592
      %v3741 = vadd.f32 %v3693, %v3595
      %v3742 = vadd.f32 %v3694, %v3600
      %v3743 = vadd.f32 %v3695, %v3603
      %v3744 = vadd.f32 %v3696, %v3608
      %v3745 = vadd.f32 %v3697, %v3611
      %v3746 = vadd.f32 %v3698, %v3616
      %v3747 = vadd.f32 %v3699, %v3619
      %v3748 = vadd.f32 %v3700, %v3624
      %v3749 = vadd.f32 %v3701, %v3627
      %v3750 = vadd.f32 %v3702, %v3632
      %v3751 = vadd.f32 %v3703, %v3635
      %v3752 = vadd.f32 %v3704, %v3640
      %v3753 = vadd.f32 %v3705, %v3643
      %v3754 = vadd.f32 %v3706, %v3648
      %v3755 = vadd.f32 %v3707, %v3651
      %v3756 = vadd.f32 %v3708, %v3656
      %v3757 = vadd.f32 %v3709, %v3659
      %3758 = vst.msk [vmem:[#allocation4] sm:$0xff] %vm1544, %v3710
      %3759 = vst.msk [vmem:[#allocation4 + $0x8] sm:$0xff] %vm1544, %v3711
      %3760 = vst.msk [vmem:[#allocation4 + $0x10] sm:$0xff] %vm1544, %v3712
      %3761 = vst.msk [vmem:[#allocation4 + $0x18] sm:$0xff] %vm1544, %v3713
      %3762 = vst.msk [vmem:[#allocation4 + $0x20] sm:$0xff] %vm1544, %v3714
      %3763 = vst.msk [vmem:[#allocation4 + $0x28] sm:$0xff] %vm1544, %v3715
      %3764 = vst.msk [vmem:[#allocation4 + $0x30] sm:$0xff] %vm1544, %v3716
      %3765 = vst.msk [vmem:[#allocation4 + $0x38] sm:$0xff] %vm1544, %v3717
      %3766 = vst.msk [vmem:[#allocation4 + $0x40] sm:$0xff] %vm1544, %v3718
      %3767 = vst.msk [vmem:[#allocation4 + $0x48] sm:$0xff] %vm1544, %v3719
      %3768 = vst.msk [vmem:[#allocation4 + $0x50] sm:$0xff] %vm1544, %v3720
      %3769 = vst.msk [vmem:[#allocation4 + $0x58] sm:$0xff] %vm1544, %v3721
      %3770 = vst.msk [vmem:[#allocation4 + $0x60] sm:$0xff] %vm1544, %v3722
      %3771 = vst.msk [vmem:[#allocation4 + $0x68] sm:$0xff] %vm1544, %v3723
      %3772 = vst.msk [vmem:[#allocation4 + $0x70] sm:$0xff] %vm1544, %v3724
      %3773 = vst.msk [vmem:[#allocation4 + $0x78] sm:$0xff] %vm1544, %v3725
      %3774 = vst.msk [vmem:[#allocation4 + $0x80] sm:$0xff] %vm1544, %v3726
      %3775 = vst.msk [vmem:[#allocation4 + $0x88] sm:$0xff] %vm1544, %v3727
      %3776 = vst.msk [vmem:[#allocation4 + $0x90] sm:$0xff] %vm1544, %v3728
      %3777 = vst.msk [vmem:[#allocation4 + $0x98] sm:$0xff] %vm1544, %v3729
      %3778 = vst.msk [vmem:[#allocation4 + $0xa0] sm:$0xff] %vm1544, %v3730
      %3779 = vst.msk [vmem:[#allocation4 + $0xa8] sm:$0xff] %vm1544, %v3731
      %3780 = vst.msk [vmem:[#allocation4 + $0xb0] sm:$0xff] %vm1544, %v3732
      %3781 = vst.msk [vmem:[#allocation4 + $0xb8] sm:$0xff] %vm1544, %v3733
      %3782 = vst.msk [vmem:[#allocation4 + $0xc0] sm:$0xff] %vm1544, %v3734
      %3783 = vst.msk [vmem:[#allocation4 + $0xc8] sm:$0xff] %vm1544, %v3735
      %3784 = vst.msk [vmem:[#allocation4 + $0xd0] sm:$0xff] %vm1544, %v3736
      %3785 = vst.msk [vmem:[#allocation4 + $0xd8] sm:$0xff] %vm1544, %v3737
      %3786 = vst.msk [vmem:[#allocation4 + $0xe0] sm:$0xff] %vm1544, %v3738
      %3787 = vst.msk [vmem:[#allocation4 + $0xe8] sm:$0xff] %vm1544, %v3739
      %3788 = vst.msk [vmem:[#allocation4 + $0xf0] sm:$0xff] %vm1544, %v3740
      %3789 = vst.msk [vmem:[#allocation4 + $0xf8] sm:$0xff] %vm1544, %v3741
      %3790 = vst.msk [vmem:[#allocation4 + $0x100] sm:$0xff] %vm1544, %v3742
      %3791 = vst.msk [vmem:[#allocation4 + $0x108] sm:$0xff] %vm1544, %v3743
      %3792 = vst.msk [vmem:[#allocation4 + $0x110] sm:$0xff] %vm1544, %v3744
      %3793 = vst.msk [vmem:[#allocation4 + $0x118] sm:$0xff] %vm1544, %v3745
      %3794 = vst.msk [vmem:[#allocation4 + $0x120] sm:$0xff] %vm1544, %v3746
      %3795 = vst.msk [vmem:[#allocation4 + $0x128] sm:$0xff] %vm1544, %v3747
      %3796 = vst.msk [vmem:[#allocation4 + $0x130] sm:$0xff] %vm1544, %v3748
      %3797 = vst.msk [vmem:[#allocation4 + $0x138] sm:$0xff] %vm1544, %v3749
      %3798 = vst.msk [vmem:[#allocation4 + $0x140] sm:$0xff] %vm1544, %v3750
      %3799 = vst.msk [vmem:[#allocation4 + $0x148] sm:$0xff] %vm1544, %v3751
      %3800 = vst.msk [vmem:[#allocation4 + $0x150] sm:$0xff] %vm1544, %v3752
      %3801 = vst.msk [vmem:[#allocation4 + $0x158] sm:$0xff] %vm1544, %v3753
      %3802 = vst.msk [vmem:[#allocation4 + $0x160] sm:$0xff] %vm1544, %v3754
      %3803 = vst.msk [vmem:[#allocation4 + $0x168] sm:$0xff] %vm1544, %v3755
      %3804 = vst.msk [vmem:[#allocation4 + $0x170] sm:$0xff] %vm1544, %v3756
      %3805 = vst.msk [vmem:[#allocation4 + $0x178] sm:$0xff] %vm1544, %v3757
      %s3806 = scalar_lea.vmem %s4, 10
      %v3807 = vld [vmem:[%s3806] sm:$0x3]
      %v3808 = vrot.slane %v2717, 1
      %v3809 = vrot.slane %v2718, 1
      %v3810 = vsel %vm2217, %v3808, %v3809
      %v3811 = vrot.slane %v2719, 1
      %v3812 = vsel %vm2217, %v3809, %v3811
      %v3813 = vrot.slane %v2720, 1
      %v3814 = vsel %vm2217, %v3811, %v3813
      %v3815 = vrot.slane %v2721, 1
      %v3816 = vsel %vm2217, %v3813, %v3815
      %v3817 = vrot.slane %v2722, 1
      %v3818 = vsel %vm2217, %v3815, %v3817
      %v3819 = vrot.slane %v2723, 1
      %v3820 = vsel %vm2217, %v3817, %v3819
      %v3821 = vrot.slane %v2724, 1
      %v3822 = vsel %vm2217, %v3819, %v3821
      %v3823 = vrot.slane %v2725, 1
      %v3824 = vsel %vm2217, %v3821, %v3823
      %v3825 = vrot.slane %v2726, 1
      %v3826 = vsel %vm2217, %v3823, %v3825
      %v3827 = vrot.slane %v2727, 1
      %v3828 = vsel %vm2217, %v3825, %v3827
      %v3829 = vrot.slane %v2728, 1
      %v3830 = vsel %vm2217, %v3827, %v3829
      %v3831 = vrot.slane %v2729, 1
      %v3832 = vsel %vm2217, %v3829, %v3831
      %v3833 = vrot.slane %v2730, 1
      %v3834 = vsel %vm2217, %v3831, %v3833
      %v3835 = vrot.slane %v2731, 1
      %v3836 = vsel %vm2217, %v3833, %v3835
      %v3837 = vrot.slane %v2732, 1
      %v3838 = vsel %vm2217, %v3835, %v3837
      %v3839 = vrot.slane %v2733, 1
      %v3840 = vsel %vm2217, %v3837, %v3839
      %v3841 = vrot.slane %v2734, 1
      %v3842 = vsel %vm2217, %v3839, %v3841
      %v3843 = vrot.slane %v2735, 1
      %v3844 = vsel %vm2217, %v3841, %v3843
      %v3845 = vrot.slane %v2736, 1
      %v3846 = vsel %vm2217, %v3843, %v3845
      %v3847 = vrot.slane %v2737, 1
      %v3848 = vsel %vm2217, %v3845, %v3847
      %v3849 = vrot.slane %v2738, 1
      %v3850 = vsel %vm2217, %v3847, %v3849
      %v3851 = vrot.slane %v2739, 1
      %v3852 = vsel %vm2217, %v3849, %v3851
      %v3853 = vrot.slane %v2740, 1
      %v3854 = vsel %vm2217, %v3851, %v3853
      %v3855 = vrot.slane %v3189, 1
      %v3856 = vsel %vm2217, %v3853, %v3855
      %v3858 = vsel %vm1242, %v3810, 0
      %v3861 = vsel %vm1242, %v3812, 0
      %v3864 = vsel %vm1242, %v3814, 0
      %v3867 = vsel %vm1242, %v3816, 0
      %v3870 = vsel %vm1242, %v3818, 0
      %v3873 = vsel %vm1242, %v3820, 0
      %v3876 = vsel %vm1242, %v3822, 0
      %v3879 = vsel %vm1242, %v3824, 0
      %v3882 = vsel %vm1242, %v3826, 0
      %v3885 = vsel %vm1242, %v3828, 0
      %v3888 = vsel %vm1242, %v3830, 0
      %v3891 = vsel %vm1242, %v3832, 0
      %v3894 = vsel %vm1242, %v3834, 0
      %v3897 = vsel %vm1242, %v3836, 0
      %v3900 = vsel %vm1242, %v3838, 0
      %v3903 = vsel %vm1242, %v3840, 0
      %v3906 = vsel %vm1242, %v3842, 0
      %v3909 = vsel %vm1242, %v3844, 0
      %v3912 = vsel %vm1242, %v3846, 0
      %v3915 = vsel %vm1242, %v3848, 0
      %v3918 = vsel %vm1242, %v3850, 0
      %v3921 = vsel %vm1242, %v3852, 0
      %v3924 = vsel %vm1242, %v3854, 0
      %v3927 = vsel %vm1242, %v3856, 0
      %v3930 = vsel %vm1315, %v3807, 0
      %3932 = vmatprep.subr.bf16.mxu0 0
      %3933 = vmatpush1.bf16.msra.mxu0 %v3930
      %3934 = vmatprep.subr.bf16.mxu0 0
      %3935 = vmatpush1.bf16.msra.mxu0 0
      %3936 = vmatprep.subr.bf16.mxu0 0
      %3937 = vmatpush1.bf16.msra.mxu0 0
      %3938 = vmatprep.subr.bf16.mxu0 0
      %3939 = vmatpush1.bf16.msra.mxu0 0
      %3940 = vmatprep.subr.bf16.mxu0 0
      %3941 = vmatpush1.bf16.msra.mxu0 0
      %3942 = vmatprep.subr.bf16.mxu0 0
      %3943 = vmatpush1.bf16.msra.mxu0 0
      %3944 = vmatprep.subr.bf16.mxu0 0
      %3945 = vmatpush1.bf16.msra.mxu0 0
      %3946 = vmatprep.subr.bf16.mxu0 0
      %3947 = vmatpush1.bf16.msra.mxu0 0
      %3948 = vmatprep.subr.bf16.mxu0 0
      %3949 = vmatpush1.bf16.msra.mxu0 0
      %3950 = vmatprep.subr.bf16.mxu0 0
      %3951 = vmatpush1.bf16.msra.mxu0 0
      %3952 = vmatprep.subr.bf16.mxu0 0
      %3953 = vmatpush1.bf16.msra.mxu0 0
      %3954 = vmatprep.subr.bf16.mxu0 0
      %3955 = vmatpush1.bf16.msra.mxu0 0
      %3956 = vmatprep.subr.bf16.mxu0 0
      %3957 = vmatpush1.bf16.msra.mxu0 0
      %3958 = vmatprep.subr.bf16.mxu0 0
      %3959 = vmatpush1.bf16.msra.mxu0 0
      %3960 = vmatprep.subr.bf16.mxu0 0
      %3961 = vmatpush1.bf16.msra.mxu0 0
      %3962 = vmatprep.subr.bf16.mxu0 0
      %3963 = vmatpush1.bf16.msra.mxu0 0
      %3964 = vmatprep.mubr.bf16.mxu0 0
      %3965 = vmatmul.mubr.bf16.gmra.mrb[0].mxu0 %v3858
      %v3966 = vpop.f32.mrb[0].mxu0
      %v3967 = vadd.f32 0.0, %v3966
      %v3968 = vpop.f32.mrb[0].mxu0
      %v3969 = vpop.f32.mrb[0].mxu0
      %v3970 = vadd.f32 0.0, %v3969
      %v3971 = vpop.f32.mrb[0].mxu0
      %3972 = vmatprep.mubr.bf16.mxu0 0
      %3973 = vmatmul.mubr.bf16.gmra.mrb[0].mxu0 %v3861
      %v3974 = vpop.f32.mrb[0].mxu0
      %v3975 = vadd.f32 0.0, %v3974
      %v3976 = vpop.f32.mrb[0].mxu0
      %v3977 = vpop.f32.mrb[0].mxu0
      %v3978 = vadd.f32 0.0, %v3977
      %v3979 = vpop.f32.mrb[0].mxu0
      %3980 = vmatprep.mubr.bf16.mxu0 0
      %3981 = vmatmul.mubr.bf16.gmra.mrb[0].mxu0 %v3864
      %v3982 = vpop.f32.mrb[0].mxu0
      %v3983 = vadd.f32 0.0, %v3982
      %v3984 = vpop.f32.mrb[0].mxu0
      %v3985 = vpop.f32.mrb[0].mxu0
      %v3986 = vadd.f32 0.0, %v3985
      %v3987 = vpop.f32.mrb[0].mxu0
      %3988 = vmatprep.mubr.bf16.mxu0 0
      %3989 = vmatmul.mubr.bf16.gmra.mrb[0].mxu0 %v3867
      %v3990 = vpop.f32.mrb[0].mxu0
      %v3991 = vadd.f32 0.0, %v3990
      %v3992 = vpop.f32.mrb[0].mxu0
      %v3993 = vpop.f32.mrb[0].mxu0
      %v3994 = vadd.f32 0.0, %v3993
      %v3995 = vpop.f32.mrb[0].mxu0
      %3996 = vmatprep.mubr.bf16.mxu0 0
      %3997 = vmatmul.mubr.bf16.gmra.mrb[0].mxu0 %v3870
      %v3998 = vpop.f32.mrb[0].mxu0
      %v3999 = vadd.f32 0.0, %v3998
      %v4000 = vpop.f32.mrb[0].mxu0
      %v4001 = vpop.f32.mrb[0].mxu0
      %v4002 = vadd.f32 0.0, %v4001
      %v4003 = vpop.f32.mrb[0].mxu0
      %4004 = vmatprep.mubr.bf16.mxu0 0
      %4005 = vmatmul.mubr.bf16.gmra.mrb[0].mxu0 %v3873
      %v4006 = vpop.f32.mrb[0].mxu0
      %v4007 = vadd.f32 0.0, %v4006
      %v4008 = vpop.f32.mrb[0].mxu0
      %v4009 = vpop.f32.mrb[0].mxu0
      %v4010 = vadd.f32 0.0, %v4009
      %v4011 = vpop.f32.mrb[0].mxu0
      %4012 = vmatprep.mubr.bf16.mxu0 0
      %4013 = vmatmul.mubr.bf16.gmra.mrb[0].mxu0 %v3876
      %v4014 = vpop.f32.mrb[0].mxu0
      %v4015 = vadd.f32 0.0, %v4014
      %v4016 = vpop.f32.mrb[0].mxu0
      %v4017 = vpop.f32.mrb[0].mxu0
      %v4018 = vadd.f32 0.0, %v4017
      %v4019 = vpop.f32.mrb[0].mxu0
      %4020 = vmatprep.mubr.bf16.mxu0 0
      %4021 = vmatmul.mubr.bf16.gmra.mrb[0].mxu0 %v3879
      %v4022 = vpop.f32.mrb[0].mxu0
      %v4023 = vadd.f32 0.0, %v4022
      %v4024 = vpop.f32.mrb[0].mxu0
      %v4025 = vpop.f32.mrb[0].mxu0
      %v4026 = vadd.f32 0.0, %v4025
      %v4027 = vpop.f32.mrb[0].mxu0
      %4028 = vmatprep.mubr.bf16.mxu0 0
      %4029 = vmatmul.mubr.bf16.gmra.mrb[0].mxu0 %v3882
      %v4030 = vpop.f32.mrb[0].mxu0
      %v4031 = vadd.f32 0.0, %v4030
      %v4032 = vpop.f32.mrb[0].mxu0
      %v4033 = vpop.f32.mrb[0].mxu0
      %v4034 = vadd.f32 0.0, %v4033
      %v4035 = vpop.f32.mrb[0].mxu0
      %4036 = vmatprep.mubr.bf16.mxu0 0
      %4037 = vmatmul.mubr.bf16.gmra.mrb[0].mxu0 %v3885
      %v4038 = vpop.f32.mrb[0].mxu0
      %v4039 = vadd.f32 0.0, %v4038
      %v4040 = vpop.f32.mrb[0].mxu0
      %v4041 = vpop.f32.mrb[0].mxu0
      %v4042 = vadd.f32 0.0, %v4041
      %v4043 = vpop.f32.mrb[0].mxu0
      %4044 = vmatprep.mubr.bf16.mxu0 0
      %4045 = vmatmul.mubr.bf16.gmra.mrb[0].mxu0 %v3888
      %v4046 = vpop.f32.mrb[0].mxu0
      %v4047 = vadd.f32 0.0, %v4046
      %v4048 = vpop.f32.mrb[0].mxu0
      %v4049 = vpop.f32.mrb[0].mxu0
      %v4050 = vadd.f32 0.0, %v4049
      %v4051 = vpop.f32.mrb[0].mxu0
      %4052 = vmatprep.mubr.bf16.mxu0 0
      %4053 = vmatmul.mubr.bf16.gmra.mrb[0].mxu0 %v3891
      %v4054 = vpop.f32.mrb[0].mxu0
      %v4055 = vadd.f32 0.0, %v4054
      %v4056 = vpop.f32.mrb[0].mxu0
      %v4057 = vpop.f32.mrb[0].mxu0
      %v4058 = vadd.f32 0.0, %v4057
      %v4059 = vpop.f32.mrb[0].mxu0
      %4060 = vmatprep.mubr.bf16.mxu0 0
      %4061 = vmatmul.mubr.bf16.gmra.mrb[0].mxu0 %v3894
      %v4062 = vpop.f32.mrb[0].mxu0
      %v4063 = vadd.f32 0.0, %v4062
      %v4064 = vpop.f32.mrb[0].mxu0
      %v4065 = vpop.f32.mrb[0].mxu0
      %v4066 = vadd.f32 0.0, %v4065
      %v4067 = vpop.f32.mrb[0].mxu0
      %4068 = vmatprep.mubr.bf16.mxu0 0
      %4069 = vmatmul.mubr.bf16.gmra.mrb[0].mxu0 %v3897
      %v4070 = vpop.f32.mrb[0].mxu0
      %v4071 = vadd.f32 0.0, %v4070
      %v4072 = vpop.f32.mrb[0].mxu0
      %v4073 = vpop.f32.mrb[0].mxu0
      %v4074 = vadd.f32 0.0, %v4073
      %v4075 = vpop.f32.mrb[0].mxu0
      %4076 = vmatprep.mubr.bf16.mxu0 0
      %4077 = vmatmul.mubr.bf16.gmra.mrb[0].mxu0 %v3900
      %v4078 = vpop.f32.mrb[0].mxu0
      %v4079 = vadd.f32 0.0, %v4078
      %v4080 = vpop.f32.mrb[0].mxu0
      %v4081 = vpop.f32.mrb[0].mxu0
      %v4082 = vadd.f32 0.0, %v4081
      %v4083 = vpop.f32.mrb[0].mxu0
      %4084 = vmatprep.mubr.bf16.mxu0 0
      %4085 = vmatmul.mubr.bf16.gmra.mrb[0].mxu0 %v3903
      %v4086 = vpop.f32.mrb[0].mxu0
      %v4087 = vadd.f32 0.0, %v4086
      %v4088 = vpop.f32.mrb[0].mxu0
      %v4089 = vpop.f32.mrb[0].mxu0
      %v4090 = vadd.f32 0.0, %v4089
      %v4091 = vpop.f32.mrb[0].mxu0
      %4092 = vmatprep.mubr.bf16.mxu0 0
      %4093 = vmatmul.mubr.bf16.gmra.mrb[0].mxu0 %v3906
      %v4094 = vpop.f32.mrb[0].mxu0
      %v4095 = vadd.f32 0.0, %v4094
      %v4096 = vpop.f32.mrb[0].mxu0
      %v4097 = vpop.f32.mrb[0].mxu0
      %v4098 = vadd.f32 0.0, %v4097
      %v4099 = vpop.f32.mrb[0].mxu0
      %4100 = vmatprep.mubr.bf16.mxu0 0
      %4101 = vmatmul.mubr.bf16.gmra.mrb[0].mxu0 %v3909
      %v4102 = vpop.f32.mrb[0].mxu0
      %v4103 = vadd.f32 0.0, %v4102
      %v4104 = vpop.f32.mrb[0].mxu0
      %v4105 = vpop.f32.mrb[0].mxu0
      %v4106 = vadd.f32 0.0, %v4105
      %v4107 = vpop.f32.mrb[0].mxu0
      %4108 = vmatprep.mubr.bf16.mxu0 0
      %4109 = vmatmul.mubr.bf16.gmra.mrb[0].mxu0 %v3912
      %v4110 = vpop.f32.mrb[0].mxu0
      %v4111 = vadd.f32 0.0, %v4110
      %v4112 = vpop.f32.mrb[0].mxu0
      %v4113 = vpop.f32.mrb[0].mxu0
      %v4114 = vadd.f32 0.0, %v4113
      %v4115 = vpop.f32.mrb[0].mxu0
      %4116 = vmatprep.mubr.bf16.mxu0 0
      %4117 = vmatmul.mubr.bf16.gmra.mrb[0].mxu0 %v3915
      %v4118 = vpop.f32.mrb[0].mxu0
      %v4119 = vadd.f32 0.0, %v4118
      %v4120 = vpop.f32.mrb[0].mxu0
      %v4121 = vpop.f32.mrb[0].mxu0
      %v4122 = vadd.f32 0.0, %v4121
      %v4123 = vpop.f32.mrb[0].mxu0
      %4124 = vmatprep.mubr.bf16.mxu0 0
      %4125 = vmatmul.mubr.bf16.gmra.mrb[0].mxu0 %v3918
      %v4126 = vpop.f32.mrb[0].mxu0
      %v4127 = vadd.f32 0.0, %v4126
      %v4128 = vpop.f32.mrb[0].mxu0
      %v4129 = vpop.f32.mrb[0].mxu0
      %v4130 = vadd.f32 0.0, %v4129
      %v4131 = vpop.f32.mrb[0].mxu0
      %4132 = vmatprep.mubr.bf16.mxu0 0
      %4133 = vmatmul.mubr.bf16.gmra.mrb[0].mxu0 %v3921
      %v4134 = vpop.f32.mrb[0].mxu0
      %v4135 = vadd.f32 0.0, %v4134
      %v4136 = vpop.f32.mrb[0].mxu0
      %v4137 = vpop.f32.mrb[0].mxu0
      %v4138 = vadd.f32 0.0, %v4137
      %v4139 = vpop.f32.mrb[0].mxu0
      %4140 = vmatprep.mubr.bf16.mxu0 0
      %4141 = vmatmul.mubr.bf16.gmra.mrb[0].mxu0 %v3924
      %v4142 = vpop.f32.mrb[0].mxu0
      %v4143 = vadd.f32 0.0, %v4142
      %v4144 = vpop.f32.mrb[0].mxu0
      %v4145 = vpop.f32.mrb[0].mxu0
      %v4146 = vadd.f32 0.0, %v4145
      %v4147 = vpop.f32.mrb[0].mxu0
      %4148 = vmatprep.mubr.bf16.mxu0 0
      %4149 = vmatmul.mubr.bf16.gmra.mrb[0].mxu0 %v3927
      %v4150 = vpop.f32.mrb[0].mxu0
      %v4151 = vadd.f32 0.0, %v4150
      %v4152 = vpop.f32.mrb[0].mxu0
      %v4153 = vpop.f32.mrb[0].mxu0
      %v4154 = vadd.f32 0.0, %v4153
      %v4155 = vpop.f32.mrb[0].mxu0
      %4156 = vdwg.mxu0
      %v4157 = vld [vmem:[#allocation4] sm:$0xff]
      %v4158 = vld [vmem:[#allocation4 + $0x8] sm:$0xff]
      %v4159 = vld [vmem:[#allocation4 + $0x10] sm:$0xff]
      %v4160 = vld [vmem:[#allocation4 + $0x18] sm:$0xff]
      %v4161 = vld [vmem:[#allocation4 + $0x20] sm:$0xff]
      %v4162 = vld [vmem:[#allocation4 + $0x28] sm:$0xff]
      %v4163 = vld [vmem:[#allocation4 + $0x30] sm:$0xff]
      %v4164 = vld [vmem:[#allocation4 + $0x38] sm:$0xff]
      %v4165 = vld [vmem:[#allocation4 + $0x40] sm:$0xff]
      %v4166 = vld [vmem:[#allocation4 + $0x48] sm:$0xff]
      %v4167 = vld [vmem:[#allocation4 + $0x50] sm:$0xff]
      %v4168 = vld [vmem:[#allocation4 + $0x58] sm:$0xff]
      %v4169 = vld [vmem:[#allocation4 + $0x60] sm:$0xff]
      %v4170 = vld [vmem:[#allocation4 + $0x68] sm:$0xff]
      %v4171 = vld [vmem:[#allocation4 + $0x70] sm:$0xff]
      %v4172 = vld [vmem:[#allocation4 + $0x78] sm:$0xff]
      %v4173 = vld [vmem:[#allocation4 + $0x80] sm:$0xff]
      %v4174 = vld [vmem:[#allocation4 + $0x88] sm:$0xff]
      %v4175 = vld [vmem:[#allocation4 + $0x90] sm:$0xff]
      %v4176 = vld [vmem:[#allocation4 + $0x98] sm:$0xff]
      %v4177 = vld [vmem:[#allocation4 + $0xa0] sm:$0xff]
      %v4178 = vld [vmem:[#allocation4 + $0xa8] sm:$0xff]
      %v4179 = vld [vmem:[#allocation4 + $0xb0] sm:$0xff]
      %v4180 = vld [vmem:[#allocation4 + $0xb8] sm:$0xff]
      %v4181 = vld [vmem:[#allocation4 + $0xc0] sm:$0xff]
      %v4182 = vld [vmem:[#allocation4 + $0xc8] sm:$0xff]
      %v4183 = vld [vmem:[#allocation4 + $0xd0] sm:$0xff]
      %v4184 = vld [vmem:[#allocation4 + $0xd8] sm:$0xff]
      %v4185 = vld [vmem:[#allocation4 + $0xe0] sm:$0xff]
      %v4186 = vld [vmem:[#allocation4 + $0xe8] sm:$0xff]
      %v4187 = vld [vmem:[#allocation4 + $0xf0] sm:$0xff]
      %v4188 = vld [vmem:[#allocation4 + $0xf8] sm:$0xff]
      %v4189 = vld [vmem:[#allocation4 + $0x100] sm:$0xff]
      %v4190 = vld [vmem:[#allocation4 + $0x108] sm:$0xff]
      %v4191 = vld [vmem:[#allocation4 + $0x110] sm:$0xff]
      %v4192 = vld [vmem:[#allocation4 + $0x118] sm:$0xff]
      %v4193 = vld [vmem:[#allocation4 + $0x120] sm:$0xff]
      %v4194 = vld [vmem:[#allocation4 + $0x128] sm:$0xff]
      %v4195 = vld [vmem:[#allocation4 + $0x130] sm:$0xff]
      %v4196 = vld [vmem:[#allocation4 + $0x138] sm:$0xff]
      %v4197 = vld [vmem:[#allocation4 + $0x140] sm:$0xff]
      %v4198 = vld [vmem:[#allocation4 + $0x148] sm:$0xff]
      %v4199 = vld [vmem:[#allocation4 + $0x150] sm:$0xff]
      %v4200 = vld [vmem:[#allocation4 + $0x158] sm:$0xff]
      %v4201 = vld [vmem:[#allocation4 + $0x160] sm:$0xff]
      %v4202 = vld [vmem:[#allocation4 + $0x168] sm:$0xff]
      %v4203 = vld [vmem:[#allocation4 + $0x170] sm:$0xff]
      %v4204 = vld [vmem:[#allocation4 + $0x178] sm:$0xff]
      %v4205 = vadd.f32 %v4157, %v3967
      %v4206 = vadd.f32 %v4158, %v3970
      %v4207 = vadd.f32 %v4159, %v3975
      %v4208 = vadd.f32 %v4160, %v3978
      %v4209 = vadd.f32 %v4161, %v3983
      %v4210 = vadd.f32 %v4162, %v3986
      %v4211 = vadd.f32 %v4163, %v3991
      %v4212 = vadd.f32 %v4164, %v3994
      %v4213 = vadd.f32 %v4165, %v3999
      %v4214 = vadd.f32 %v4166, %v4002
      %v4215 = vadd.f32 %v4167, %v4007
      %v4216 = vadd.f32 %v4168, %v4010
      %v4217 = vadd.f32 %v4169, %v4015
      %v4218 = vadd.f32 %v4170, %v4018
      %v4219 = vadd.f32 %v4171, %v4023
      %v4220 = vadd.f32 %v4172, %v4026
      %v4221 = vadd.f32 %v4173, %v4031
      %v4222 = vadd.f32 %v4174, %v4034
      %v4223 = vadd.f32 %v4175, %v4039
      %v4224 = vadd.f32 %v4176, %v4042
      %v4225 = vadd.f32 %v4177, %v4047
      %v4226 = vadd.f32 %v4178, %v4050
      %v4227 = vadd.f32 %v4179, %v4055
      %v4228 = vadd.f32 %v4180, %v4058
      %v4229 = vadd.f32 %v4181, %v4063
      %v4230 = vadd.f32 %v4182, %v4066
      %v4231 = vadd.f32 %v4183, %v4071
      %v4232 = vadd.f32 %v4184, %v4074
      %v4233 = vadd.f32 %v4185, %v4079
      %v4234 = vadd.f32 %v4186, %v4082
      %v4235 = vadd.f32 %v4187, %v4087
      %v4236 = vadd.f32 %v4188, %v4090
      %v4237 = vadd.f32 %v4189, %v4095
      %v4238 = vadd.f32 %v4190, %v4098
      %v4239 = vadd.f32 %v4191, %v4103
      %v4240 = vadd.f32 %v4192, %v4106
      %v4241 = vadd.f32 %v4193, %v4111
      %v4242 = vadd.f32 %v4194, %v4114
      %v4243 = vadd.f32 %v4195, %v4119
      %v4244 = vadd.f32 %v4196, %v4122
      %v4245 = vadd.f32 %v4197, %v4127
      %v4246 = vadd.f32 %v4198, %v4130
      %v4247 = vadd.f32 %v4199, %v4135
      %v4248 = vadd.f32 %v4200, %v4138
      %v4249 = vadd.f32 %v4201, %v4143
      %v4250 = vadd.f32 %v4202, %v4146
      %v4251 = vadd.f32 %v4203, %v4151
      %v4252 = vadd.f32 %v4204, %v4154
      %4253 = vst.msk [vmem:[#allocation4] sm:$0xff] %vm1544, %v4205
      %4254 = vst.msk [vmem:[#allocation4 + $0x8] sm:$0xff] %vm1544, %v4206
      %4255 = vst.msk [vmem:[#allocation4 + $0x10] sm:$0xff] %vm1544, %v4207
      %4256 = vst.msk [vmem:[#allocation4 + $0x18] sm:$0xff] %vm1544, %v4208
      %4257 = vst.msk [vmem:[#allocation4 + $0x20] sm:$0xff] %vm1544, %v4209
      %4258 = vst.msk [vmem:[#allocation4 + $0x28] sm:$0xff] %vm1544, %v4210
      %4259 = vst.msk [vmem:[#allocation4 + $0x30] sm:$0xff] %vm1544, %v4211
      %4260 = vst.msk [vmem:[#allocation4 + $0x38] sm:$0xff] %vm1544, %v4212
      %4261 = vst.msk [vmem:[#allocation4 + $0x40] sm:$0xff] %vm1544, %v4213
      %4262 = vst.msk [vmem:[#allocation4 + $0x48] sm:$0xff] %vm1544, %v4214
      %4263 = vst.msk [vmem:[#allocation4 + $0x50] sm:$0xff] %vm1544, %v4215
      %4264 = vst.msk [vmem:[#allocation4 + $0x58] sm:$0xff] %vm1544, %v4216
      %4265 = vst.msk [vmem:[#allocation4 + $0x60] sm:$0xff] %vm1544, %v4217
      %4266 = vst.msk [vmem:[#allocation4 + $0x68] sm:$0xff] %vm1544, %v4218
      %4267 = vst.msk [vmem:[#allocation4 + $0x70] sm:$0xff] %vm1544, %v4219
      %4268 = vst.msk [vmem:[#allocation4 + $0x78] sm:$0xff] %vm1544, %v4220
      %4269 = vst.msk [vmem:[#allocation4 + $0x80] sm:$0xff] %vm1544, %v4221
      %4270 = vst.msk [vmem:[#allocation4 + $0x88] sm:$0xff] %vm1544, %v4222
      %4271 = vst.msk [vmem:[#allocation4 + $0x90] sm:$0xff] %vm1544, %v4223
      %4272 = vst.msk [vmem:[#allocation4 + $0x98] sm:$0xff] %vm1544, %v4224
      %4273 = vst.msk [vmem:[#allocation4 + $0xa0] sm:$0xff] %vm1544, %v4225
      %4274 = vst.msk [vmem:[#allocation4 + $0xa8] sm:$0xff] %vm1544, %v4226
      %4275 = vst.msk [vmem:[#allocation4 + $0xb0] sm:$0xff] %vm1544, %v4227
      %4276 = vst.msk [vmem:[#allocation4 + $0xb8] sm:$0xff] %vm1544, %v4228
      %4277 = vst.msk [vmem:[#allocation4 + $0xc0] sm:$0xff] %vm1544, %v4229
      %4278 = vst.msk [vmem:[#allocation4 + $0xc8] sm:$0xff] %vm1544, %v4230
      %4279 = vst.msk [vmem:[#allocation4 + $0xd0] sm:$0xff] %vm1544, %v4231
      %4280 = vst.msk [vmem:[#allocation4 + $0xd8] sm:$0xff] %vm1544, %v4232
      %4281 = vst.msk [vmem:[#allocation4 + $0xe0] sm:$0xff] %vm1544, %v4233
      %4282 = vst.msk [vmem:[#allocation4 + $0xe8] sm:$0xff] %vm1544, %v4234
      %4283 = vst.msk [vmem:[#allocation4 + $0xf0] sm:$0xff] %vm1544, %v4235
      %4284 = vst.msk [vmem:[#allocation4 + $0xf8] sm:$0xff] %vm1544, %v4236
      %4285 = vst.msk [vmem:[#allocation4 + $0x100] sm:$0xff] %vm1544, %v4237
      %4286 = vst.msk [vmem:[#allocation4 + $0x108] sm:$0xff] %vm1544, %v4238
      %4287 = vst.msk [vmem:[#allocation4 + $0x110] sm:$0xff] %vm1544, %v4239
      %4288 = vst.msk [vmem:[#allocation4 + $0x118] sm:$0xff] %vm1544, %v4240
      %4289 = vst.msk [vmem:[#allocation4 + $0x120] sm:$0xff] %vm1544, %v4241
      %4290 = vst.msk [vmem:[#allocation4 + $0x128] sm:$0xff] %vm1544, %v4242
      %4291 = vst.msk [vmem:[#allocation4 + $0x130] sm:$0xff] %vm1544, %v4243
      %4292 = vst.msk [vmem:[#allocation4 + $0x138] sm:$0xff] %vm1544, %v4244
      %4293 = vst.msk [vmem:[#allocation4 + $0x140] sm:$0xff] %vm1544, %v4245
      %4294 = vst.msk [vmem:[#allocation4 + $0x148] sm:$0xff] %vm1544, %v4246
      %4295 = vst.msk [vmem:[#allocation4 + $0x150] sm:$0xff] %vm1544, %v4247
      %4296 = vst.msk [vmem:[#allocation4 + $0x158] sm:$0xff] %vm1544, %v4248
      %4297 = vst.msk [vmem:[#allocation4 + $0x160] sm:$0xff] %vm1544, %v4249
      %4298 = vst.msk [vmem:[#allocation4 + $0x168] sm:$0xff] %vm1544, %v4250
      %4299 = vst.msk [vmem:[#allocation4 + $0x170] sm:$0xff] %vm1544, %v4251
      %4300 = vst.msk [vmem:[#allocation4 + $0x178] sm:$0xff] %vm1544, %v4252
      %s4301 = scalar_lea.vmem %s4, 12
      %v4302 = vld [vmem:[%s4301] sm:$0x3]
      %v4305 = vunpack.c.l.b16 %v1118
      %v4306 = vunpack.c.l.b16 %v1119
      %v4307 = vpack.c.b16 %v2715, %v1596
      %v4308 = vpack.c.b16 %v3188, %v2716
      %v4309 = vpack.c.b16 %v4306, %v4305
      %v4311 = vsel %vm1242, %v4307, 0
      %v4314 = vsel %vm1242, %v4308, 0
      %v4317 = vsel %vm1242, %v4309, 0
      %v4320 = vsel %vm1315, %v4302, 0
      %4322 = vmatprep.subr.bf16.mxu0 0
      %4323 = vmatpush1.bf16.msra.mxu0 %v4320
      %4324 = vmatprep.subr.bf16.mxu0 0
      %4325 = vmatpush1.bf16.msra.mxu0 0
      %4326 = vmatprep.subr.bf16.mxu0 0
      %4327 = vmatpush1.bf16.msra.mxu0 0
      %4328 = vmatprep.subr.bf16.mxu0 0
      %4329 = vmatpush1.bf16.msra.mxu0 0
      %4330 = vmatprep.subr.bf16.mxu0 0
      %4331 = vmatpush1.bf16.msra.mxu0 0
      %4332 = vmatprep.subr.bf16.mxu0 0
      %4333 = vmatpush1.bf16.msra.mxu0 0
      %4334 = vmatprep.subr.bf16.mxu0 0
      %4335 = vmatpush1.bf16.msra.mxu0 0
      %4336 = vmatprep.subr.bf16.mxu0 0
      %4337 = vmatpush1.bf16.msra.mxu0 0
      %4338 = vmatprep.subr.bf16.mxu0 0
      %4339 = vmatpush1.bf16.msra.mxu0 0
      %4340 = vmatprep.subr.bf16.mxu0 0
      %4341 = vmatpush1.bf16.msra.mxu0 0
      %4342 = vmatprep.subr.bf16.mxu0 0
      %4343 = vmatpush1.bf16.msra.mxu0 0
      %4344 = vmatprep.subr.bf16.mxu0 0
      %4345 = vmatpush1.bf16.msra.mxu0 0
      %4346 = vmatprep.subr.bf16.mxu0 0
      %4347 = vmatpush1.bf16.msra.mxu0 0
      %4348 = vmatprep.subr.bf16.mxu0 0
      %4349 = vmatpush1.bf16.msra.mxu0 0
      %4350 = vmatprep.subr.bf16.mxu0 0
      %4351 = vmatpush1.bf16.msra.mxu0 0
      %4352 = vmatprep.subr.bf16.mxu0 0
      %4353 = vmatpush1.bf16.msra.mxu0 0
      %4354 = vmatprep.mubr.bf16.mxu0 0
      %4355 = vmatmul.mubr.bf16.gmra.mrb[0].mxu0 %v1253
      %v4356 = vpop.f32.mrb[0].mxu0
      %v4357 = vadd.f32 0.0, %v4356
      %v4358 = vpop.f32.mrb[0].mxu0
      %v4359 = vpop.f32.mrb[0].mxu0
      %v4360 = vadd.f32 0.0, %v4359
      %v4361 = vpop.f32.mrb[0].mxu0
      %4362 = vmatprep.mubr.bf16.mxu0 0
      %4363 = vmatmul.mubr.bf16.gmra.mrb[0].mxu0 %v1256
      %v4364 = vpop.f32.mrb[0].mxu0
      %v4365 = vadd.f32 0.0, %v4364
      %v4366 = vpop.f32.mrb[0].mxu0
      %v4367 = vpop.f32.mrb[0].mxu0
      %v4368 = vadd.f32 0.0, %v4367
      %v4369 = vpop.f32.mrb[0].mxu0
      %4370 = vmatprep.mubr.bf16.mxu0 0
      %4371 = vmatmul.mubr.bf16.gmra.mrb[0].mxu0 %v1259
      %v4372 = vpop.f32.mrb[0].mxu0
      %v4373 = vadd.f32 0.0, %v4372
      %v4374 = vpop.f32.mrb[0].mxu0
      %v4375 = vpop.f32.mrb[0].mxu0
      %v4376 = vadd.f32 0.0, %v4375
      %v4377 = vpop.f32.mrb[0].mxu0
      %4378 = vmatprep.mubr.bf16.mxu0 0
      %4379 = vmatmul.mubr.bf16.gmra.mrb[0].mxu0 %v1262
      %v4380 = vpop.f32.mrb[0].mxu0
      %v4381 = vadd.f32 0.0, %v4380
      %v4382 = vpop.f32.mrb[0].mxu0
      %v4383 = vpop.f32.mrb[0].mxu0
      %v4384 = vadd.f32 0.0, %v4383
      %v4385 = vpop.f32.mrb[0].mxu0
      %4386 = vmatprep.mubr.bf16.mxu0 0
      %4387 = vmatmul.mubr.bf16.gmra.mrb[0].mxu0 %v1265
      %v4388 = vpop.f32.mrb[0].mxu0
      %v4389 = vadd.f32 0.0, %v4388
      %v4390 = vpop.f32.mrb[0].mxu0
      %v4391 = vpop.f32.mrb[0].mxu0
      %v4392 = vadd.f32 0.0, %v4391
      %v4393 = vpop.f32.mrb[0].mxu0
      %4394 = vmatprep.mubr.bf16.mxu0 0
      %4395 = vmatmul.mubr.bf16.gmra.mrb[0].mxu0 %v1268
      %v4396 = vpop.f32.mrb[0].mxu0
      %v4397 = vadd.f32 0.0, %v4396
      %v4398 = vpop.f32.mrb[0].mxu0
      %v4399 = vpop.f32.mrb[0].mxu0
      %v4400 = vadd.f32 0.0, %v4399
      %v4401 = vpop.f32.mrb[0].mxu0
      %4402 = vmatprep.mubr.bf16.mxu0 0
      %4403 = vmatmul.mubr.bf16.gmra.mrb[0].mxu0 %v1271
      %v4404 = vpop.f32.mrb[0].mxu0
      %v4405 = vadd.f32 0.0, %v4404
      %v4406 = vpop.f32.mrb[0].mxu0
      %v4407 = vpop.f32.mrb[0].mxu0
      %v4408 = vadd.f32 0.0, %v4407
      %v4409 = vpop.f32.mrb[0].mxu0
      %4410 = vmatprep.mubr.bf16.mxu0 0
      %4411 = vmatmul.mubr.bf16.gmra.mrb[0].mxu0 %v1274
      %v4412 = vpop.f32.mrb[0].mxu0
      %v4413 = vadd.f32 0.0, %v4412
      %v4414 = vpop.f32.mrb[0].mxu0
      %v4415 = vpop.f32.mrb[0].mxu0
      %v4416 = vadd.f32 0.0, %v4415
      %v4417 = vpop.f32.mrb[0].mxu0
      %4418 = vmatprep.mubr.bf16.mxu0 0
      %4419 = vmatmul.mubr.bf16.gmra.mrb[0].mxu0 %v1277
      %v4420 = vpop.f32.mrb[0].mxu0
      %v4421 = vadd.f32 0.0, %v4420
      %v4422 = vpop.f32.mrb[0].mxu0
      %v4423 = vpop.f32.mrb[0].mxu0
      %v4424 = vadd.f32 0.0, %v4423
      %v4425 = vpop.f32.mrb[0].mxu0
      %4426 = vmatprep.mubr.bf16.mxu0 0
      %4427 = vmatmul.mubr.bf16.gmra.mrb[0].mxu0 %v1280
      %v4428 = vpop.f32.mrb[0].mxu0
      %v4429 = vadd.f32 0.0, %v4428
      %v4430 = vpop.f32.mrb[0].mxu0
      %v4431 = vpop.f32.mrb[0].mxu0
      %v4432 = vadd.f32 0.0, %v4431
      %v4433 = vpop.f32.mrb[0].mxu0
      %4434 = vmatprep.mubr.bf16.mxu0 0
      %4435 = vmatmul.mubr.bf16.gmra.mrb[0].mxu0 %v1283
      %v4436 = vpop.f32.mrb[0].mxu0
      %v4437 = vadd.f32 0.0, %v4436
      %v4438 = vpop.f32.mrb[0].mxu0
      %v4439 = vpop.f32.mrb[0].mxu0
      %v4440 = vadd.f32 0.0, %v4439
      %v4441 = vpop.f32.mrb[0].mxu0
      %4442 = vmatprep.mubr.bf16.mxu0 0
      %4443 = vmatmul.mubr.bf16.gmra.mrb[0].mxu0 %v1286
      %v4444 = vpop.f32.mrb[0].mxu0
      %v4445 = vadd.f32 0.0, %v4444
      %v4446 = vpop.f32.mrb[0].mxu0
      %v4447 = vpop.f32.mrb[0].mxu0
      %v4448 = vadd.f32 0.0, %v4447
      %v4449 = vpop.f32.mrb[0].mxu0
      %4450 = vmatprep.mubr.bf16.mxu0 0
      %4451 = vmatmul.mubr.bf16.gmra.mrb[0].mxu0 %v1289
      %v4452 = vpop.f32.mrb[0].mxu0
      %v4453 = vadd.f32 0.0, %v4452
      %v4454 = vpop.f32.mrb[0].mxu0
      %v4455 = vpop.f32.mrb[0].mxu0
      %v4456 = vadd.f32 0.0, %v4455
      %v4457 = vpop.f32.mrb[0].mxu0
      %4458 = vmatprep.mubr.bf16.mxu0 0
      %4459 = vmatmul.mubr.bf16.gmra.mrb[0].mxu0 %v1292
      %v4460 = vpop.f32.mrb[0].mxu0
      %v4461 = vadd.f32 0.0, %v4460
      %v4462 = vpop.f32.mrb[0].mxu0
      %v4463 = vpop.f32.mrb[0].mxu0
      %v4464 = vadd.f32 0.0, %v4463
      %v4465 = vpop.f32.mrb[0].mxu0
      %4466 = vmatprep.mubr.bf16.mxu0 0
      %4467 = vmatmul.mubr.bf16.gmra.mrb[0].mxu0 %v1295
      %v4468 = vpop.f32.mrb[0].mxu0
      %v4469 = vadd.f32 0.0, %v4468
      %v4470 = vpop.f32.mrb[0].mxu0
      %v4471 = vpop.f32.mrb[0].mxu0
      %v4472 = vadd.f32 0.0, %v4471
      %v4473 = vpop.f32.mrb[0].mxu0
      %4474 = vmatprep.mubr.bf16.mxu0 0
      %4475 = vmatmul.mubr.bf16.gmra.mrb[0].mxu0 %v1298
      %v4476 = vpop.f32.mrb[0].mxu0
      %v4477 = vadd.f32 0.0, %v4476
      %v4478 = vpop.f32.mrb[0].mxu0
      %v4479 = vpop.f32.mrb[0].mxu0
      %v4480 = vadd.f32 0.0, %v4479
      %v4481 = vpop.f32.mrb[0].mxu0
      %4482 = vmatprep.mubr.bf16.mxu0 0
      %4483 = vmatmul.mubr.bf16.gmra.mrb[0].mxu0 %v1301
      %v4484 = vpop.f32.mrb[0].mxu0
      %v4485 = vadd.f32 0.0, %v4484
      %v4486 = vpop.f32.mrb[0].mxu0
      %v4487 = vpop.f32.mrb[0].mxu0
      %v4488 = vadd.f32 0.0, %v4487
      %v4489 = vpop.f32.mrb[0].mxu0
      %4490 = vmatprep.mubr.bf16.mxu0 0
      %4491 = vmatmul.mubr.bf16.gmra.mrb[0].mxu0 %v1304
      %v4492 = vpop.f32.mrb[0].mxu0
      %v4493 = vadd.f32 0.0, %v4492
      %v4494 = vpop.f32.mrb[0].mxu0
      %v4495 = vpop.f32.mrb[0].mxu0
      %v4496 = vadd.f32 0.0, %v4495
      %v4497 = vpop.f32.mrb[0].mxu0
      %4498 = vmatprep.mubr.bf16.mxu0 0
      %4499 = vmatmul.mubr.bf16.gmra.mrb[0].mxu0 %v1307
      %v4500 = vpop.f32.mrb[0].mxu0
      %v4501 = vadd.f32 0.0, %v4500
      %v4502 = vpop.f32.mrb[0].mxu0
      %v4503 = vpop.f32.mrb[0].mxu0
      %v4504 = vadd.f32 0.0, %v4503
      %v4505 = vpop.f32.mrb[0].mxu0
      %4506 = vmatprep.mubr.bf16.mxu0 0
      %4507 = vmatmul.mubr.bf16.gmra.mrb[0].mxu0 %v1310
      %v4508 = vpop.f32.mrb[0].mxu0
      %v4509 = vadd.f32 0.0, %v4508
      %v4510 = vpop.f32.mrb[0].mxu0
      %v4511 = vpop.f32.mrb[0].mxu0
      %v4512 = vadd.f32 0.0, %v4511
      %v4513 = vpop.f32.mrb[0].mxu0
      %4514 = vmatprep.mubr.bf16.mxu0 0
      %4515 = vmatmul.mubr.bf16.gmra.mrb[0].mxu0 %v1313
      %v4516 = vpop.f32.mrb[0].mxu0
      %v4517 = vadd.f32 0.0, %v4516
      %v4518 = vpop.f32.mrb[0].mxu0
      %v4519 = vpop.f32.mrb[0].mxu0
      %v4520 = vadd.f32 0.0, %v4519
      %v4521 = vpop.f32.mrb[0].mxu0
      %4522 = vmatprep.mubr.bf16.mxu0 0
      %4523 = vmatmul.mubr.bf16.gmra.mrb[0].mxu0 %v4311
      %v4524 = vpop.f32.mrb[0].mxu0
      %v4525 = vadd.f32 0.0, %v4524
      %v4526 = vpop.f32.mrb[0].mxu0
      %v4527 = vpop.f32.mrb[0].mxu0
      %v4528 = vadd.f32 0.0, %v4527
      %v4529 = vpop.f32.mrb[0].mxu0
      %4530 = vmatprep.mubr.bf16.mxu0 0
      %4531 = vmatmul.mubr.bf16.gmra.mrb[0].mxu0 %v4314
      %v4532 = vpop.f32.mrb[0].mxu0
      %v4533 = vadd.f32 0.0, %v4532
      %v4534 = vpop.f32.mrb[0].mxu0
      %v4535 = vpop.f32.mrb[0].mxu0
      %v4536 = vadd.f32 0.0, %v4535
      %v4537 = vpop.f32.mrb[0].mxu0
      %4538 = vmatprep.mubr.bf16.mxu0 0
      %4539 = vmatmul.mubr.bf16.gmra.mrb[0].mxu0 %v4317
      %v4540 = vpop.f32.mrb[0].mxu0
      %v4541 = vadd.f32 0.0, %v4540
      %v4542 = vpop.f32.mrb[0].mxu0
      %v4543 = vpop.f32.mrb[0].mxu0
      %v4544 = vadd.f32 0.0, %v4543
      %v4545 = vpop.f32.mrb[0].mxu0
      %4546 = vdwg.mxu0
      %v4547 = vld [vmem:[#allocation4] sm:$0xff]
      %v4548 = vld [vmem:[#allocation4 + $0x8] sm:$0xff]
      %v4549 = vld [vmem:[#allocation4 + $0x10] sm:$0xff]
      %v4550 = vld [vmem:[#allocation4 + $0x18] sm:$0xff]
      %v4551 = vld [vmem:[#allocation4 + $0x20] sm:$0xff]
      %v4552 = vld [vmem:[#allocation4 + $0x28] sm:$0xff]
      %v4553 = vld [vmem:[#allocation4 + $0x30] sm:$0xff]
      %v4554 = vld [vmem:[#allocation4 + $0x38] sm:$0xff]
      %v4555 = vld [vmem:[#allocation4 + $0x40] sm:$0xff]
      %v4556 = vld [vmem:[#allocation4 + $0x48] sm:$0xff]
      %v4557 = vld [vmem:[#allocation4 + $0x50] sm:$0xff]
      %v4558 = vld [vmem:[#allocation4 + $0x58] sm:$0xff]
      %v4559 = vld [vmem:[#allocation4 + $0x60] sm:$0xff]
      %v4560 = vld [vmem:[#allocation4 + $0x68] sm:$0xff]
      %v4561 = vld [vmem:[#allocation4 + $0x70] sm:$0xff]
      %v4562 = vld [vmem:[#allocation4 + $0x78] sm:$0xff]
      %v4563 = vld [vmem:[#allocation4 + $0x80] sm:$0xff]
      %v4564 = vld [vmem:[#allocation4 + $0x88] sm:$0xff]
      %v4565 = vld [vmem:[#allocation4 + $0x90] sm:$0xff]
      %v4566 = vld [vmem:[#allocation4 + $0x98] sm:$0xff]
      %v4567 = vld [vmem:[#allocation4 + $0xa0] sm:$0xff]
      %v4568 = vld [vmem:[#allocation4 + $0xa8] sm:$0xff]
      %v4569 = vld [vmem:[#allocation4 + $0xb0] sm:$0xff]
      %v4570 = vld [vmem:[#allocation4 + $0xb8] sm:$0xff]
      %v4571 = vld [vmem:[#allocation4 + $0xc0] sm:$0xff]
      %v4572 = vld [vmem:[#allocation4 + $0xc8] sm:$0xff]
      %v4573 = vld [vmem:[#allocation4 + $0xd0] sm:$0xff]
      %v4574 = vld [vmem:[#allocation4 + $0xd8] sm:$0xff]
      %v4575 = vld [vmem:[#allocation4 + $0xe0] sm:$0xff]
      %v4576 = vld [vmem:[#allocation4 + $0xe8] sm:$0xff]
      %v4577 = vld [vmem:[#allocation4 + $0xf0] sm:$0xff]
      %v4578 = vld [vmem:[#allocation4 + $0xf8] sm:$0xff]
      %v4579 = vld [vmem:[#allocation4 + $0x100] sm:$0xff]
      %v4580 = vld [vmem:[#allocation4 + $0x108] sm:$0xff]
      %v4581 = vld [vmem:[#allocation4 + $0x110] sm:$0xff]
      %v4582 = vld [vmem:[#allocation4 + $0x118] sm:$0xff]
      %v4583 = vld [vmem:[#allocation4 + $0x120] sm:$0xff]
      %v4584 = vld [vmem:[#allocation4 + $0x128] sm:$0xff]
      %v4585 = vld [vmem:[#allocation4 + $0x130] sm:$0xff]
      %v4586 = vld [vmem:[#allocation4 + $0x138] sm:$0xff]
      %v4587 = vld [vmem:[#allocation4 + $0x140] sm:$0xff]
      %v4588 = vld [vmem:[#allocation4 + $0x148] sm:$0xff]
      %v4589 = vld [vmem:[#allocation4 + $0x150] sm:$0xff]
      %v4590 = vld [vmem:[#allocation4 + $0x158] sm:$0xff]
      %v4591 = vld [vmem:[#allocation4 + $0x160] sm:$0xff]
      %v4592 = vld [vmem:[#allocation4 + $0x168] sm:$0xff]
      %v4593 = vld [vmem:[#allocation4 + $0x170] sm:$0xff]
      %v4594 = vld [vmem:[#allocation4 + $0x178] sm:$0xff]
      %v4595 = vadd.f32 %v4547, %v4357
      %v4596 = vadd.f32 %v4548, %v4360
      %v4597 = vadd.f32 %v4549, %v4365
      %v4598 = vadd.f32 %v4550, %v4368
      %v4599 = vadd.f32 %v4551, %v4373
      %v4600 = vadd.f32 %v4552, %v4376
      %v4601 = vadd.f32 %v4553, %v4381
      %v4602 = vadd.f32 %v4554, %v4384
      %v4603 = vadd.f32 %v4555, %v4389
      %v4604 = vadd.f32 %v4556, %v4392
      %v4605 = vadd.f32 %v4557, %v4397
      %v4606 = vadd.f32 %v4558, %v4400
      %v4607 = vadd.f32 %v4559, %v4405
      %v4608 = vadd.f32 %v4560, %v4408
      %v4609 = vadd.f32 %v4561, %v4413
      %v4610 = vadd.f32 %v4562, %v4416
      %v4611 = vadd.f32 %v4563, %v4421
      %v4612 = vadd.f32 %v4564, %v4424
      %v4613 = vadd.f32 %v4565, %v4429
      %v4614 = vadd.f32 %v4566, %v4432
      %v4615 = vadd.f32 %v4567, %v4437
      %v4616 = vadd.f32 %v4568, %v4440
      %v4617 = vadd.f32 %v4569, %v4445
      %v4618 = vadd.f32 %v4570, %v4448
      %v4619 = vadd.f32 %v4571, %v4453
      %v4620 = vadd.f32 %v4572, %v4456
      %v4621 = vadd.f32 %v4573, %v4461
      %v4622 = vadd.f32 %v4574, %v4464
      %v4623 = vadd.f32 %v4575, %v4469
      %v4624 = vadd.f32 %v4576, %v4472
      %v4625 = vadd.f32 %v4577, %v4477
      %v4626 = vadd.f32 %v4578, %v4480
      %v4627 = vadd.f32 %v4579, %v4485
      %v4628 = vadd.f32 %v4580, %v4488
      %v4629 = vadd.f32 %v4581, %v4493
      %v4630 = vadd.f32 %v4582, %v4496
      %v4631 = vadd.f32 %v4583, %v4501
      %v4632 = vadd.f32 %v4584, %v4504
      %v4633 = vadd.f32 %v4585, %v4509
      %v4634 = vadd.f32 %v4586, %v4512
      %v4635 = vadd.f32 %v4587, %v4517
      %v4636 = vadd.f32 %v4588, %v4520
      %v4637 = vadd.f32 %v4589, %v4525
      %v4638 = vadd.f32 %v4590, %v4528
      %v4639 = vadd.f32 %v4591, %v4533
      %v4640 = vadd.f32 %v4592, %v4536
      %v4641 = vadd.f32 %v4593, %v4541
      %v4642 = vadd.f32 %v4594, %v4544
      %4643 = vst.msk [vmem:[#allocation4] sm:$0xff] %vm1544, %v4595
      %4644 = vst.msk [vmem:[#allocation4 + $0x8] sm:$0xff] %vm1544, %v4596
      %4645 = vst.msk [vmem:[#allocation4 + $0x10] sm:$0xff] %vm1544, %v4597
      %4646 = vst.msk [vmem:[#allocation4 + $0x18] sm:$0xff] %vm1544, %v4598
      %4647 = vst.msk [vmem:[#allocation4 + $0x20] sm:$0xff] %vm1544, %v4599
      %4648 = vst.msk [vmem:[#allocation4 + $0x28] sm:$0xff] %vm1544, %v4600
      %4649 = vst.msk [vmem:[#allocation4 + $0x30] sm:$0xff] %vm1544, %v4601
      %4650 = vst.msk [vmem:[#allocation4 + $0x38] sm:$0xff] %vm1544, %v4602
      %4651 = vst.msk [vmem:[#allocation4 + $0x40] sm:$0xff] %vm1544, %v4603
      %4652 = vst.msk [vmem:[#allocation4 + $0x48] sm:$0xff] %vm1544, %v4604
      %4653 = vst.msk [vmem:[#allocation4 + $0x50] sm:$0xff] %vm1544, %v4605
      %4654 = vst.msk [vmem:[#allocation4 + $0x58] sm:$0xff] %vm1544, %v4606
      %4655 = vst.msk [vmem:[#allocation4 + $0x60] sm:$0xff] %vm1544, %v4607
      %4656 = vst.msk [vmem:[#allocation4 + $0x68] sm:$0xff] %vm1544, %v4608
      %4657 = vst.msk [vmem:[#allocation4 + $0x70] sm:$0xff] %vm1544, %v4609
      %4658 = vst.msk [vmem:[#allocation4 + $0x78] sm:$0xff] %vm1544, %v4610
      %4659 = vst.msk [vmem:[#allocation4 + $0x80] sm:$0xff] %vm1544, %v4611
      %4660 = vst.msk [vmem:[#allocation4 + $0x88] sm:$0xff] %vm1544, %v4612
      %4661 = vst.msk [vmem:[#allocation4 + $0x90] sm:$0xff] %vm1544, %v4613
      %4662 = vst.msk [vmem:[#allocation4 + $0x98] sm:$0xff] %vm1544, %v4614
      %4663 = vst.msk [vmem:[#allocation4 + $0xa0] sm:$0xff] %vm1544, %v4615
      %4664 = vst.msk [vmem:[#allocation4 + $0xa8] sm:$0xff] %vm1544, %v4616
      %4665 = vst.msk [vmem:[#allocation4 + $0xb0] sm:$0xff] %vm1544, %v4617
      %4666 = vst.msk [vmem:[#allocation4 + $0xb8] sm:$0xff] %vm1544, %v4618
      %4667 = vst.msk [vmem:[#allocation4 + $0xc0] sm:$0xff] %vm1544, %v4619
      %4668 = vst.msk [vmem:[#allocation4 + $0xc8] sm:$0xff] %vm1544, %v4620
      %4669 = vst.msk [vmem:[#allocation4 + $0xd0] sm:$0xff] %vm1544, %v4621
      %4670 = vst.msk [vmem:[#allocation4 + $0xd8] sm:$0xff] %vm1544, %v4622
      %4671 = vst.msk [vmem:[#allocation4 + $0xe0] sm:$0xff] %vm1544, %v4623
      %4672 = vst.msk [vmem:[#allocation4 + $0xe8] sm:$0xff] %vm1544, %v4624
      %4673 = vst.msk [vmem:[#allocation4 + $0xf0] sm:$0xff] %vm1544, %v4625
      %4674 = vst.msk [vmem:[#allocation4 + $0xf8] sm:$0xff] %vm1544, %v4626
      %4675 = vst.msk [vmem:[#allocation4 + $0x100] sm:$0xff] %vm1544, %v4627
      %4676 = vst.msk [vmem:[#allocation4 + $0x108] sm:$0xff] %vm1544, %v4628
      %4677 = vst.msk [vmem:[#allocation4 + $0x110] sm:$0xff] %vm1544, %v4629
      %4678 = vst.msk [vmem:[#allocation4 + $0x118] sm:$0xff] %vm1544, %v4630
      %4679 = vst.msk [vmem:[#allocation4 + $0x120] sm:$0xff] %vm1544, %v4631
      %4680 = vst.msk [vmem:[#allocation4 + $0x128] sm:$0xff] %vm1544, %v4632
      %4681 = vst.msk [vmem:[#allocation4 + $0x130] sm:$0xff] %vm1544, %v4633
      %4682 = vst.msk [vmem:[#allocation4 + $0x138] sm:$0xff] %vm1544, %v4634
      %4683 = vst.msk [vmem:[#allocation4 + $0x140] sm:$0xff] %vm1544, %v4635
      %4684 = vst.msk [vmem:[#allocation4 + $0x148] sm:$0xff] %vm1544, %v4636
      %4685 = vst.msk [vmem:[#allocation4 + $0x150] sm:$0xff] %vm1544, %v4637
      %4686 = vst.msk [vmem:[#allocation4 + $0x158] sm:$0xff] %vm1544, %v4638
      %4687 = vst.msk [vmem:[#allocation4 + $0x160] sm:$0xff] %vm1544, %v4639
      %4688 = vst.msk [vmem:[#allocation4 + $0x168] sm:$0xff] %vm1544, %v4640
      %4689 = vst.msk [vmem:[#allocation4 + $0x170] sm:$0xff] %vm1544, %v4641
      %4690 = vst.msk [vmem:[#allocation4 + $0x178] sm:$0xff] %vm1544, %v4642
      %s4691 = scalar_lea.vmem %s4, 14
      %v4692 = vld [vmem:[%s4691] sm:$0x3]
      %v4694 = vunpack.c.l.b16 %v1120
      %v4695 = vpack.c.b16 %v4694, %v4694
      %v4696 = vshll.u32 %v4307, 16
      %v4698 = vrot.slane %v4696, 1
      %v4699 = vsel %vm1598, %v1765, %v4698
      %v4700 = vshrl.u32 %v4307, 16
      %v4702 = vor.u32 %v4700, %v4698
      %v4703 = vshll.u32 %v4308, 16
      %v4705 = vrot.slane %v4703, 1
      %v4706 = vsel %vm1598, %v4702, %v4705
      %v4707 = vshrl.u32 %v4308, 16
      %v4709 = vor.u32 %v4707, %v4705
      %v4710 = vshll.u32 %v4309, 16
      %v4712 = vrot.slane %v4710, 1
      %v4713 = vsel %vm1598, %v4709, %v4712
      %v4714 = vshrl.u32 %v4309, 16
      %v4716 = vor.u32 %v4714, %v4712
      %v4718 = vshll.u32 %v4695, 16
      %v4720 = vrot.slane %v4718, 1
      %v4721 = vsel %vm1598, %v4716, %v4720
      %v4723 = vsel %vm1242, %v4699, 0
      %v4726 = vsel %vm1242, %v4706, 0
      %v4729 = vsel %vm1242, %v4713, 0
      %v4732 = vsel %vm1242, %v4721, 0
      %v4735 = vsel %vm1315, %v4692, 0
      %4737 = vmatprep.subr.bf16.mxu0 0
      %4738 = vmatpush1.bf16.msra.mxu0 %v4735
      %4739 = vmatprep.subr.bf16.mxu0 0
      %4740 = vmatpush1.bf16.msra.mxu0 0
      %4741 = vmatprep.subr.bf16.mxu0 0
      %4742 = vmatpush1.bf16.msra.mxu0 0
      %4743 = vmatprep.subr.bf16.mxu0 0
      %4744 = vmatpush1.bf16.msra.mxu0 0
      %4745 = vmatprep.subr.bf16.mxu0 0
      %4746 = vmatpush1.bf16.msra.mxu0 0
      %4747 = vmatprep.subr.bf16.mxu0 0
      %4748 = vmatpush1.bf16.msra.mxu0 0
      %4749 = vmatprep.subr.bf16.mxu0 0
      %4750 = vmatpush1.bf16.msra.mxu0 0
      %4751 = vmatprep.subr.bf16.mxu0 0
      %4752 = vmatpush1.bf16.msra.mxu0 0
      %4753 = vmatprep.subr.bf16.mxu0 0
      %4754 = vmatpush1.bf16.msra.mxu0 0
      %4755 = vmatprep.subr.bf16.mxu0 0
      %4756 = vmatpush1.bf16.msra.mxu0 0
      %4757 = vmatprep.subr.bf16.mxu0 0
      %4758 = vmatpush1.bf16.msra.mxu0 0
      %4759 = vmatprep.subr.bf16.mxu0 0
      %4760 = vmatpush1.bf16.msra.mxu0 0
      %4761 = vmatprep.subr.bf16.mxu0 0
      %4762 = vmatpush1.bf16.msra.mxu0 0
      %4763 = vmatprep.subr.bf16.mxu0 0
      %4764 = vmatpush1.bf16.msra.mxu0 0
      %4765 = vmatprep.subr.bf16.mxu0 0
      %4766 = vmatpush1.bf16.msra.mxu0 0
      %4767 = vmatprep.subr.bf16.mxu0 0
      %4768 = vmatpush1.bf16.msra.mxu0 0
      %4769 = vmatprep.mubr.bf16.mxu0 0
      %4770 = vmatmul.mubr.bf16.gmra.mrb[0].mxu0 %v1781
      %v4771 = vpop.f32.mrb[0].mxu0
      %v4772 = vadd.f32 0.0, %v4771
      %v4773 = vpop.f32.mrb[0].mxu0
      %v4774 = vpop.f32.mrb[0].mxu0
      %v4775 = vadd.f32 0.0, %v4774
      %v4776 = vpop.f32.mrb[0].mxu0
      %4777 = vmatprep.mubr.bf16.mxu0 0
      %4778 = vmatmul.mubr.bf16.gmra.mrb[0].mxu0 %v1784
      %v4779 = vpop.f32.mrb[0].mxu0
      %v4780 = vadd.f32 0.0, %v4779
      %v4781 = vpop.f32.mrb[0].mxu0
      %v4782 = vpop.f32.mrb[0].mxu0
      %v4783 = vadd.f32 0.0, %v4782
      %v4784 = vpop.f32.mrb[0].mxu0
      %4785 = vmatprep.mubr.bf16.mxu0 0
      %4786 = vmatmul.mubr.bf16.gmra.mrb[0].mxu0 %v1787
      %v4787 = vpop.f32.mrb[0].mxu0
      %v4788 = vadd.f32 0.0, %v4787
      %v4789 = vpop.f32.mrb[0].mxu0
      %v4790 = vpop.f32.mrb[0].mxu0
      %v4791 = vadd.f32 0.0, %v4790
      %v4792 = vpop.f32.mrb[0].mxu0
      %4793 = vmatprep.mubr.bf16.mxu0 0
      %4794 = vmatmul.mubr.bf16.gmra.mrb[0].mxu0 %v1790
      %v4795 = vpop.f32.mrb[0].mxu0
      %v4796 = vadd.f32 0.0, %v4795
      %v4797 = vpop.f32.mrb[0].mxu0
      %v4798 = vpop.f32.mrb[0].mxu0
      %v4799 = vadd.f32 0.0, %v4798
      %v4800 = vpop.f32.mrb[0].mxu0
      %4801 = vmatprep.mubr.bf16.mxu0 0
      %4802 = vmatmul.mubr.bf16.gmra.mrb[0].mxu0 %v1793
      %v4803 = vpop.f32.mrb[0].mxu0
      %v4804 = vadd.f32 0.0, %v4803
      %v4805 = vpop.f32.mrb[0].mxu0
      %v4806 = vpop.f32.mrb[0].mxu0
      %v4807 = vadd.f32 0.0, %v4806
      %v4808 = vpop.f32.mrb[0].mxu0
      %4809 = vmatprep.mubr.bf16.mxu0 0
      %4810 = vmatmul.mubr.bf16.gmra.mrb[0].mxu0 %v1796
      %v4811 = vpop.f32.mrb[0].mxu0
      %v4812 = vadd.f32 0.0, %v4811
      %v4813 = vpop.f32.mrb[0].mxu0
      %v4814 = vpop.f32.mrb[0].mxu0
      %v4815 = vadd.f32 0.0, %v4814
      %v4816 = vpop.f32.mrb[0].mxu0
      %4817 = vmatprep.mubr.bf16.mxu0 0
      %4818 = vmatmul.mubr.bf16.gmra.mrb[0].mxu0 %v1799
      %v4819 = vpop.f32.mrb[0].mxu0
      %v4820 = vadd.f32 0.0, %v4819
      %v4821 = vpop.f32.mrb[0].mxu0
      %v4822 = vpop.f32.mrb[0].mxu0
      %v4823 = vadd.f32 0.0, %v4822
      %v4824 = vpop.f32.mrb[0].mxu0
      %4825 = vmatprep.mubr.bf16.mxu0 0
      %4826 = vmatmul.mubr.bf16.gmra.mrb[0].mxu0 %v1802
      %v4827 = vpop.f32.mrb[0].mxu0
      %v4828 = vadd.f32 0.0, %v4827
      %v4829 = vpop.f32.mrb[0].mxu0
      %v4830 = vpop.f32.mrb[0].mxu0
      %v4831 = vadd.f32 0.0, %v4830
      %v4832 = vpop.f32.mrb[0].mxu0
      %4833 = vmatprep.mubr.bf16.mxu0 0
      %4834 = vmatmul.mubr.bf16.gmra.mrb[0].mxu0 %v1805
      %v4835 = vpop.f32.mrb[0].mxu0
      %v4836 = vadd.f32 0.0, %v4835
      %v4837 = vpop.f32.mrb[0].mxu0
      %v4838 = vpop.f32.mrb[0].mxu0
      %v4839 = vadd.f32 0.0, %v4838
      %v4840 = vpop.f32.mrb[0].mxu0
      %4841 = vmatprep.mubr.bf16.mxu0 0
      %4842 = vmatmul.mubr.bf16.gmra.mrb[0].mxu0 %v1808
      %v4843 = vpop.f32.mrb[0].mxu0
      %v4844 = vadd.f32 0.0, %v4843
      %v4845 = vpop.f32.mrb[0].mxu0
      %v4846 = vpop.f32.mrb[0].mxu0
      %v4847 = vadd.f32 0.0, %v4846
      %v4848 = vpop.f32.mrb[0].mxu0
      %4849 = vmatprep.mubr.bf16.mxu0 0
      %4850 = vmatmul.mubr.bf16.gmra.mrb[0].mxu0 %v1811
      %v4851 = vpop.f32.mrb[0].mxu0
      %v4852 = vadd.f32 0.0, %v4851
      %v4853 = vpop.f32.mrb[0].mxu0
      %v4854 = vpop.f32.mrb[0].mxu0
      %v4855 = vadd.f32 0.0, %v4854
      %v4856 = vpop.f32.mrb[0].mxu0
      %4857 = vmatprep.mubr.bf16.mxu0 0
      %4858 = vmatmul.mubr.bf16.gmra.mrb[0].mxu0 %v1814
      %v4859 = vpop.f32.mrb[0].mxu0
      %v4860 = vadd.f32 0.0, %v4859
      %v4861 = vpop.f32.mrb[0].mxu0
      %v4862 = vpop.f32.mrb[0].mxu0
      %v4863 = vadd.f32 0.0, %v4862
      %v4864 = vpop.f32.mrb[0].mxu0
      %4865 = vmatprep.mubr.bf16.mxu0 0
      %4866 = vmatmul.mubr.bf16.gmra.mrb[0].mxu0 %v1817
      %v4867 = vpop.f32.mrb[0].mxu0
      %v4868 = vadd.f32 0.0, %v4867
      %v4869 = vpop.f32.mrb[0].mxu0
      %v4870 = vpop.f32.mrb[0].mxu0
      %v4871 = vadd.f32 0.0, %v4870
      %v4872 = vpop.f32.mrb[0].mxu0
      %4873 = vmatprep.mubr.bf16.mxu0 0
      %4874 = vmatmul.mubr.bf16.gmra.mrb[0].mxu0 %v1820
      %v4875 = vpop.f32.mrb[0].mxu0
      %v4876 = vadd.f32 0.0, %v4875
      %v4877 = vpop.f32.mrb[0].mxu0
      %v4878 = vpop.f32.mrb[0].mxu0
      %v4879 = vadd.f32 0.0, %v4878
      %v4880 = vpop.f32.mrb[0].mxu0
      %4881 = vmatprep.mubr.bf16.mxu0 0
      %4882 = vmatmul.mubr.bf16.gmra.mrb[0].mxu0 %v1823
      %v4883 = vpop.f32.mrb[0].mxu0
      %v4884 = vadd.f32 0.0, %v4883
      %v4885 = vpop.f32.mrb[0].mxu0
      %v4886 = vpop.f32.mrb[0].mxu0
      %v4887 = vadd.f32 0.0, %v4886
      %v4888 = vpop.f32.mrb[0].mxu0
      %4889 = vmatprep.mubr.bf16.mxu0 0
      %4890 = vmatmul.mubr.bf16.gmra.mrb[0].mxu0 %v1826
      %v4891 = vpop.f32.mrb[0].mxu0
      %v4892 = vadd.f32 0.0, %v4891
      %v4893 = vpop.f32.mrb[0].mxu0
      %v4894 = vpop.f32.mrb[0].mxu0
      %v4895 = vadd.f32 0.0, %v4894
      %v4896 = vpop.f32.mrb[0].mxu0
      %4897 = vmatprep.mubr.bf16.mxu0 0
      %4898 = vmatmul.mubr.bf16.gmra.mrb[0].mxu0 %v1829
      %v4899 = vpop.f32.mrb[0].mxu0
      %v4900 = vadd.f32 0.0, %v4899
      %v4901 = vpop.f32.mrb[0].mxu0
      %v4902 = vpop.f32.mrb[0].mxu0
      %v4903 = vadd.f32 0.0, %v4902
      %v4904 = vpop.f32.mrb[0].mxu0
      %4905 = vmatprep.mubr.bf16.mxu0 0
      %4906 = vmatmul.mubr.bf16.gmra.mrb[0].mxu0 %v1832
      %v4907 = vpop.f32.mrb[0].mxu0
      %v4908 = vadd.f32 0.0, %v4907
      %v4909 = vpop.f32.mrb[0].mxu0
      %v4910 = vpop.f32.mrb[0].mxu0
      %v4911 = vadd.f32 0.0, %v4910
      %v4912 = vpop.f32.mrb[0].mxu0
      %4913 = vmatprep.mubr.bf16.mxu0 0
      %4914 = vmatmul.mubr.bf16.gmra.mrb[0].mxu0 %v1835
      %v4915 = vpop.f32.mrb[0].mxu0
      %v4916 = vadd.f32 0.0, %v4915
      %v4917 = vpop.f32.mrb[0].mxu0
      %v4918 = vpop.f32.mrb[0].mxu0
      %v4919 = vadd.f32 0.0, %v4918
      %v4920 = vpop.f32.mrb[0].mxu0
      %4921 = vmatprep.mubr.bf16.mxu0 0
      %4922 = vmatmul.mubr.bf16.gmra.mrb[0].mxu0 %v1838
      %v4923 = vpop.f32.mrb[0].mxu0
      %v4924 = vadd.f32 0.0, %v4923
      %v4925 = vpop.f32.mrb[0].mxu0
      %v4926 = vpop.f32.mrb[0].mxu0
      %v4927 = vadd.f32 0.0, %v4926
      %v4928 = vpop.f32.mrb[0].mxu0
      %4929 = vmatprep.mubr.bf16.mxu0 0
      %4930 = vmatmul.mubr.bf16.gmra.mrb[0].mxu0 %v4723
      %v4931 = vpop.f32.mrb[0].mxu0
      %v4932 = vadd.f32 0.0, %v4931
      %v4933 = vpop.f32.mrb[0].mxu0
      %v4934 = vpop.f32.mrb[0].mxu0
      %v4935 = vadd.f32 0.0, %v4934
      %v4936 = vpop.f32.mrb[0].mxu0
      %4937 = vmatprep.mubr.bf16.mxu0 0
      %4938 = vmatmul.mubr.bf16.gmra.mrb[0].mxu0 %v4726
      %v4939 = vpop.f32.mrb[0].mxu0
      %v4940 = vadd.f32 0.0, %v4939
      %v4941 = vpop.f32.mrb[0].mxu0
      %v4942 = vpop.f32.mrb[0].mxu0
      %v4943 = vadd.f32 0.0, %v4942
      %v4944 = vpop.f32.mrb[0].mxu0
      %4945 = vmatprep.mubr.bf16.mxu0 0
      %4946 = vmatmul.mubr.bf16.gmra.mrb[0].mxu0 %v4729
      %v4947 = vpop.f32.mrb[0].mxu0
      %v4948 = vadd.f32 0.0, %v4947
      %v4949 = vpop.f32.mrb[0].mxu0
      %v4950 = vpop.f32.mrb[0].mxu0
      %v4951 = vadd.f32 0.0, %v4950
      %v4952 = vpop.f32.mrb[0].mxu0
      %4953 = vmatprep.mubr.bf16.mxu0 0
      %4954 = vmatmul.mubr.bf16.gmra.mrb[0].mxu0 %v4732
      %v4955 = vpop.f32.mrb[0].mxu0
      %v4956 = vadd.f32 0.0, %v4955
      %v4957 = vpop.f32.mrb[0].mxu0
      %v4958 = vpop.f32.mrb[0].mxu0
      %v4959 = vadd.f32 0.0, %v4958
      %v4960 = vpop.f32.mrb[0].mxu0
      %4961 = vdwg.mxu0
      %v4962 = vld [vmem:[#allocation4] sm:$0xff]
      %v4963 = vld [vmem:[#allocation4 + $0x8] sm:$0xff]
      %v4964 = vld [vmem:[#allocation4 + $0x10] sm:$0xff]
      %v4965 = vld [vmem:[#allocation4 + $0x18] sm:$0xff]
      %v4966 = vld [vmem:[#allocation4 + $0x20] sm:$0xff]
      %v4967 = vld [vmem:[#allocation4 + $0x28] sm:$0xff]
      %v4968 = vld [vmem:[#allocation4 + $0x30] sm:$0xff]
      %v4969 = vld [vmem:[#allocation4 + $0x38] sm:$0xff]
      %v4970 = vld [vmem:[#allocation4 + $0x40] sm:$0xff]
      %v4971 = vld [vmem:[#allocation4 + $0x48] sm:$0xff]
      %v4972 = vld [vmem:[#allocation4 + $0x50] sm:$0xff]
      %v4973 = vld [vmem:[#allocation4 + $0x58] sm:$0xff]
      %v4974 = vld [vmem:[#allocation4 + $0x60] sm:$0xff]
      %v4975 = vld [vmem:[#allocation4 + $0x68] sm:$0xff]
      %v4976 = vld [vmem:[#allocation4 + $0x70] sm:$0xff]
      %v4977 = vld [vmem:[#allocation4 + $0x78] sm:$0xff]
      %v4978 = vld [vmem:[#allocation4 + $0x80] sm:$0xff]
      %v4979 = vld [vmem:[#allocation4 + $0x88] sm:$0xff]
      %v4980 = vld [vmem:[#allocation4 + $0x90] sm:$0xff]
      %v4981 = vld [vmem:[#allocation4 + $0x98] sm:$0xff]
      %v4982 = vld [vmem:[#allocation4 + $0xa0] sm:$0xff]
      %v4983 = vld [vmem:[#allocation4 + $0xa8] sm:$0xff]
      %v4984 = vld [vmem:[#allocation4 + $0xb0] sm:$0xff]
      %v4985 = vld [vmem:[#allocation4 + $0xb8] sm:$0xff]
      %v4986 = vld [vmem:[#allocation4 + $0xc0] sm:$0xff]
      %v4987 = vld [vmem:[#allocation4 + $0xc8] sm:$0xff]
      %v4988 = vld [vmem:[#allocation4 + $0xd0] sm:$0xff]
      %v4989 = vld [vmem:[#allocation4 + $0xd8] sm:$0xff]
      %v4990 = vld [vmem:[#allocation4 + $0xe0] sm:$0xff]
      %v4991 = vld [vmem:[#allocation4 + $0xe8] sm:$0xff]
      %v4992 = vld [vmem:[#allocation4 + $0xf0] sm:$0xff]
      %v4993 = vld [vmem:[#allocation4 + $0xf8] sm:$0xff]
      %v4994 = vld [vmem:[#allocation4 + $0x100] sm:$0xff]
      %v4995 = vld [vmem:[#allocation4 + $0x108] sm:$0xff]
      %v4996 = vld [vmem:[#allocation4 + $0x110] sm:$0xff]
      %v4997 = vld [vmem:[#allocation4 + $0x118] sm:$0xff]
      %v4998 = vld [vmem:[#allocation4 + $0x120] sm:$0xff]
      %v4999 = vld [vmem:[#allocation4 + $0x128] sm:$0xff]
      %v5000 = vld [vmem:[#allocation4 + $0x130] sm:$0xff]
      %v5001 = vld [vmem:[#allocation4 + $0x138] sm:$0xff]
      %v5002 = vld [vmem:[#allocation4 + $0x140] sm:$0xff]
      %v5003 = vld [vmem:[#allocation4 + $0x148] sm:$0xff]
      %v5004 = vld [vmem:[#allocation4 + $0x150] sm:$0xff]
      %v5005 = vld [vmem:[#allocation4 + $0x158] sm:$0xff]
      %v5006 = vld [vmem:[#allocation4 + $0x160] sm:$0xff]
      %v5007 = vld [vmem:[#allocation4 + $0x168] sm:$0xff]
      %v5008 = vld [vmem:[#allocation4 + $0x170] sm:$0xff]
      %v5009 = vld [vmem:[#allocation4 + $0x178] sm:$0xff]
      %v5010 = vadd.f32 %v4962, %v4772
      %v5011 = vadd.f32 %v4963, %v4775
      %v5012 = vadd.f32 %v4964, %v4780
      %v5013 = vadd.f32 %v4965, %v4783
      %v5014 = vadd.f32 %v4966, %v4788
      %v5015 = vadd.f32 %v4967, %v4791
      %v5016 = vadd.f32 %v4968, %v4796
      %v5017 = vadd.f32 %v4969, %v4799
      %v5018 = vadd.f32 %v4970, %v4804
      %v5019 = vadd.f32 %v4971, %v4807
      %v5020 = vadd.f32 %v4972, %v4812
      %v5021 = vadd.f32 %v4973, %v4815
      %v5022 = vadd.f32 %v4974, %v4820
      %v5023 = vadd.f32 %v4975, %v4823
      %v5024 = vadd.f32 %v4976, %v4828
      %v5025 = vadd.f32 %v4977, %v4831
      %v5026 = vadd.f32 %v4978, %v4836
      %v5027 = vadd.f32 %v4979, %v4839
      %v5028 = vadd.f32 %v4980, %v4844
      %v5029 = vadd.f32 %v4981, %v4847
      %v5030 = vadd.f32 %v4982, %v4852
      %v5031 = vadd.f32 %v4983, %v4855
      %v5032 = vadd.f32 %v4984, %v4860
      %v5033 = vadd.f32 %v4985, %v4863
      %v5034 = vadd.f32 %v4986, %v4868
      %v5035 = vadd.f32 %v4987, %v4871
      %v5036 = vadd.f32 %v4988, %v4876
      %v5037 = vadd.f32 %v4989, %v4879
      %v5038 = vadd.f32 %v4990, %v4884
      %v5039 = vadd.f32 %v4991, %v4887
      %v5040 = vadd.f32 %v4992, %v4892
      %v5041 = vadd.f32 %v4993, %v4895
      %v5042 = vadd.f32 %v4994, %v4900
      %v5043 = vadd.f32 %v4995, %v4903
      %v5044 = vadd.f32 %v4996, %v4908
      %v5045 = vadd.f32 %v4997, %v4911
      %v5046 = vadd.f32 %v4998, %v4916
      %v5047 = vadd.f32 %v4999, %v4919
      %v5048 = vadd.f32 %v5000, %v4924
      %v5049 = vadd.f32 %v5001, %v4927
      %v5050 = vadd.f32 %v5002, %v4932
      %v5051 = vadd.f32 %v5003, %v4935
      %v5052 = vadd.f32 %v5004, %v4940
      %v5053 = vadd.f32 %v5005, %v4943
      %v5054 = vadd.f32 %v5006, %v4948
      %v5055 = vadd.f32 %v5007, %v4951
      %v5056 = vadd.f32 %v5008, %v4956
      %v5057 = vadd.f32 %v5009, %v4959
      %5058 = vst.msk [vmem:[#allocation4] sm:$0xff] %vm1544, %v5010
      %5059 = vst.msk [vmem:[#allocation4 + $0x8] sm:$0xff] %vm1544, %v5011
      %5060 = vst.msk [vmem:[#allocation4 + $0x10] sm:$0xff] %vm1544, %v5012
      %5061 = vst.msk [vmem:[#allocation4 + $0x18] sm:$0xff] %vm1544, %v5013
      %5062 = vst.msk [vmem:[#allocation4 + $0x20] sm:$0xff] %vm1544, %v5014
      %5063 = vst.msk [vmem:[#allocation4 + $0x28] sm:$0xff] %vm1544, %v5015
      %5064 = vst.msk [vmem:[#allocation4 + $0x30] sm:$0xff] %vm1544, %v5016
      %5065 = vst.msk [vmem:[#allocation4 + $0x38] sm:$0xff] %vm1544, %v5017
      %5066 = vst.msk [vmem:[#allocation4 + $0x40] sm:$0xff] %vm1544, %v5018
      %5067 = vst.msk [vmem:[#allocation4 + $0x48] sm:$0xff] %vm1544, %v5019
      %5068 = vst.msk [vmem:[#allocation4 + $0x50] sm:$0xff] %vm1544, %v5020
      %5069 = vst.msk [vmem:[#allocation4 + $0x58] sm:$0xff] %vm1544, %v5021
      %5070 = vst.msk [vmem:[#allocation4 + $0x60] sm:$0xff] %vm1544, %v5022
      %5071 = vst.msk [vmem:[#allocation4 + $0x68] sm:$0xff] %vm1544, %v5023
      %5072 = vst.msk [vmem:[#allocation4 + $0x70] sm:$0xff] %vm1544, %v5024
      %5073 = vst.msk [vmem:[#allocation4 + $0x78] sm:$0xff] %vm1544, %v5025
      %5074 = vst.msk [vmem:[#allocation4 + $0x80] sm:$0xff] %vm1544, %v5026
      %5075 = vst.msk [vmem:[#allocation4 + $0x88] sm:$0xff] %vm1544, %v5027
      %5076 = vst.msk [vmem:[#allocation4 + $0x90] sm:$0xff] %vm1544, %v5028
      %5077 = vst.msk [vmem:[#allocation4 + $0x98] sm:$0xff] %vm1544, %v5029
      %5078 = vst.msk [vmem:[#allocation4 + $0xa0] sm:$0xff] %vm1544, %v5030
      %5079 = vst.msk [vmem:[#allocation4 + $0xa8] sm:$0xff] %vm1544, %v5031
      %5080 = vst.msk [vmem:[#allocation4 + $0xb0] sm:$0xff] %vm1544, %v5032
      %5081 = vst.msk [vmem:[#allocation4 + $0xb8] sm:$0xff] %vm1544, %v5033
      %5082 = vst.msk [vmem:[#allocation4 + $0xc0] sm:$0xff] %vm1544, %v5034
      %5083 = vst.msk [vmem:[#allocation4 + $0xc8] sm:$0xff] %vm1544, %v5035
      %5084 = vst.msk [vmem:[#allocation4 + $0xd0] sm:$0xff] %vm1544, %v5036
      %5085 = vst.msk [vmem:[#allocation4 + $0xd8] sm:$0xff] %vm1544, %v5037
      %5086 = vst.msk [vmem:[#allocation4 + $0xe0] sm:$0xff] %vm1544, %v5038
      %5087 = vst.msk [vmem:[#allocation4 + $0xe8] sm:$0xff] %vm1544, %v5039
      %5088 = vst.msk [vmem:[#allocation4 + $0xf0] sm:$0xff] %vm1544, %v5040
      %5089 = vst.msk [vmem:[#allocation4 + $0xf8] sm:$0xff] %vm1544, %v5041
      %5090 = vst.msk [vmem:[#allocation4 + $0x100] sm:$0xff] %vm1544, %v5042
      %5091 = vst.msk [vmem:[#allocation4 + $0x108] sm:$0xff] %vm1544, %v5043
      %5092 = vst.msk [vmem:[#allocation4 + $0x110] sm:$0xff] %vm1544, %v5044
      %5093 = vst.msk [vmem:[#allocation4 + $0x118] sm:$0xff] %vm1544, %v5045
      %5094 = vst.msk [vmem:[#allocation4 + $0x120] sm:$0xff] %vm1544, %v5046
      %5095 = vst.msk [vmem:[#allocation4 + $0x128] sm:$0xff] %vm1544, %v5047
      %5096 = vst.msk [vmem:[#allocation4 + $0x130] sm:$0xff] %vm1544, %v5048
      %5097 = vst.msk [vmem:[#allocation4 + $0x138] sm:$0xff] %vm1544, %v5049
      %5098 = vst.msk [vmem:[#allocation4 + $0x140] sm:$0xff] %vm1544, %v5050
      %5099 = vst.msk [vmem:[#allocation4 + $0x148] sm:$0xff] %vm1544, %v5051
      %5100 = vst.msk [vmem:[#allocation4 + $0x150] sm:$0xff] %vm1544, %v5052
      %5101 = vst.msk [vmem:[#allocation4 + $0x158] sm:$0xff] %vm1544, %v5053
      %5102 = vst.msk [vmem:[#allocation4 + $0x160] sm:$0xff] %vm1544, %v5054
      %5103 = vst.msk [vmem:[#allocation4 + $0x168] sm:$0xff] %vm1544, %v5055
      %5104 = vst.msk [vmem:[#allocation4 + $0x170] sm:$0xff] %vm1544, %v5056
      %5105 = vst.msk [vmem:[#allocation4 + $0x178] sm:$0xff] %vm1544, %v5057
      %s5106 = scalar_lea.vmem %s4, 16
      %v5107 = vld [vmem:[%s5106] sm:$0x3]
      %v5108 = vrot.slane %v4307, 1
      %v5109 = vsel %vm2217, %v2263, %v5108
      %v5110 = vrot.slane %v4308, 1
      %v5111 = vsel %vm2217, %v5108, %v5110
      %v5112 = vrot.slane %v4309, 1
      %v5113 = vsel %vm2217, %v5110, %v5112
      %v5114 = vrot.slane %v4695, 1
      %v5115 = vsel %vm2217, %v5112, %v5114
      %v5117 = vsel %vm1242, %v5109, 0
      %v5120 = vsel %vm1242, %v5111, 0
      %v5123 = vsel %vm1242, %v5113, 0
      %v5126 = vsel %vm1242, %v5115, 0
      %v5129 = vsel %vm1315, %v5107, 0
      %5131 = vmatprep.subr.bf16.mxu0 0
      %5132 = vmatpush1.bf16.msra.mxu0 %v5129
      %5133 = vmatprep.subr.bf16.mxu0 0
      %5134 = vmatpush1.bf16.msra.mxu0 0
      %5135 = vmatprep.subr.bf16.mxu0 0
      %5136 = vmatpush1.bf16.msra.mxu0 0
      %5137 = vmatprep.subr.bf16.mxu0 0
      %5138 = vmatpush1.bf16.msra.mxu0 0
      %5139 = vmatprep.subr.bf16.mxu0 0
      %5140 = vmatpush1.bf16.msra.mxu0 0
      %5141 = vmatprep.subr.bf16.mxu0 0
      %5142 = vmatpush1.bf16.msra.mxu0 0
      %5143 = vmatprep.subr.bf16.mxu0 0
      %5144 = vmatpush1.bf16.msra.mxu0 0
      %5145 = vmatprep.subr.bf16.mxu0 0
      %5146 = vmatpush1.bf16.msra.mxu0 0
      %5147 = vmatprep.subr.bf16.mxu0 0
      %5148 = vmatpush1.bf16.msra.mxu0 0
      %5149 = vmatprep.subr.bf16.mxu0 0
      %5150 = vmatpush1.bf16.msra.mxu0 0
      %5151 = vmatprep.subr.bf16.mxu0 0
      %5152 = vmatpush1.bf16.msra.mxu0 0
      %5153 = vmatprep.subr.bf16.mxu0 0
      %5154 = vmatpush1.bf16.msra.mxu0 0
      %5155 = vmatprep.subr.bf16.mxu0 0
      %5156 = vmatpush1.bf16.msra.mxu0 0
      %5157 = vmatprep.subr.bf16.mxu0 0
      %5158 = vmatpush1.bf16.msra.mxu0 0
      %5159 = vmatprep.subr.bf16.mxu0 0
      %5160 = vmatpush1.bf16.msra.mxu0 0
      %5161 = vmatprep.subr.bf16.mxu0 0
      %5162 = vmatpush1.bf16.msra.mxu0 0
      %5163 = vmatprep.mubr.bf16.mxu0 0
      %5164 = vmatmul.mubr.bf16.gmra.mrb[0].mxu0 %v2277
      %v5165 = vpop.f32.mrb[0].mxu0
      %v5166 = vadd.f32 0.0, %v5165
      %v5167 = vpop.f32.mrb[0].mxu0
      %v5168 = vpop.f32.mrb[0].mxu0
      %v5169 = vadd.f32 0.0, %v5168
      %v5170 = vpop.f32.mrb[0].mxu0
      %5171 = vmatprep.mubr.bf16.mxu0 0
      %5172 = vmatmul.mubr.bf16.gmra.mrb[0].mxu0 %v2280
      %v5173 = vpop.f32.mrb[0].mxu0
      %v5174 = vadd.f32 0.0, %v5173
      %v5175 = vpop.f32.mrb[0].mxu0
      %v5176 = vpop.f32.mrb[0].mxu0
      %v5177 = vadd.f32 0.0, %v5176
      %v5178 = vpop.f32.mrb[0].mxu0
      %5179 = vmatprep.mubr.bf16.mxu0 0
      %5180 = vmatmul.mubr.bf16.gmra.mrb[0].mxu0 %v2283
      %v5181 = vpop.f32.mrb[0].mxu0
      %v5182 = vadd.f32 0.0, %v5181
      %v5183 = vpop.f32.mrb[0].mxu0
      %v5184 = vpop.f32.mrb[0].mxu0
      %v5185 = vadd.f32 0.0, %v5184
      %v5186 = vpop.f32.mrb[0].mxu0
      %5187 = vmatprep.mubr.bf16.mxu0 0
      %5188 = vmatmul.mubr.bf16.gmra.mrb[0].mxu0 %v2286
      %v5189 = vpop.f32.mrb[0].mxu0
      %v5190 = vadd.f32 0.0, %v5189
      %v5191 = vpop.f32.mrb[0].mxu0
      %v5192 = vpop.f32.mrb[0].mxu0
      %v5193 = vadd.f32 0.0, %v5192
      %v5194 = vpop.f32.mrb[0].mxu0
      %5195 = vmatprep.mubr.bf16.mxu0 0
      %5196 = vmatmul.mubr.bf16.gmra.mrb[0].mxu0 %v2289
      %v5197 = vpop.f32.mrb[0].mxu0
      %v5198 = vadd.f32 0.0, %v5197
      %v5199 = vpop.f32.mrb[0].mxu0
      %v5200 = vpop.f32.mrb[0].mxu0
      %v5201 = vadd.f32 0.0, %v5200
      %v5202 = vpop.f32.mrb[0].mxu0
      %5203 = vmatprep.mubr.bf16.mxu0 0
      %5204 = vmatmul.mubr.bf16.gmra.mrb[0].mxu0 %v2292
      %v5205 = vpop.f32.mrb[0].mxu0
      %v5206 = vadd.f32 0.0, %v5205
      %v5207 = vpop.f32.mrb[0].mxu0
      %v5208 = vpop.f32.mrb[0].mxu0
      %v5209 = vadd.f32 0.0, %v5208
      %v5210 = vpop.f32.mrb[0].mxu0
      %5211 = vmatprep.mubr.bf16.mxu0 0
      %5212 = vmatmul.mubr.bf16.gmra.mrb[0].mxu0 %v2295
      %v5213 = vpop.f32.mrb[0].mxu0
      %v5214 = vadd.f32 0.0, %v5213
      %v5215 = vpop.f32.mrb[0].mxu0
      %v5216 = vpop.f32.mrb[0].mxu0
      %v5217 = vadd.f32 0.0, %v5216
      %v5218 = vpop.f32.mrb[0].mxu0
      %5219 = vmatprep.mubr.bf16.mxu0 0
      %5220 = vmatmul.mubr.bf16.gmra.mrb[0].mxu0 %v2298
      %v5221 = vpop.f32.mrb[0].mxu0
      %v5222 = vadd.f32 0.0, %v5221
      %v5223 = vpop.f32.mrb[0].mxu0
      %v5224 = vpop.f32.mrb[0].mxu0
      %v5225 = vadd.f32 0.0, %v5224
      %v5226 = vpop.f32.mrb[0].mxu0
      %5227 = vmatprep.mubr.bf16.mxu0 0
      %5228 = vmatmul.mubr.bf16.gmra.mrb[0].mxu0 %v2301
      %v5229 = vpop.f32.mrb[0].mxu0
      %v5230 = vadd.f32 0.0, %v5229
      %v5231 = vpop.f32.mrb[0].mxu0
      %v5232 = vpop.f32.mrb[0].mxu0
      %v5233 = vadd.f32 0.0, %v5232
      %v5234 = vpop.f32.mrb[0].mxu0
      %5235 = vmatprep.mubr.bf16.mxu0 0
      %5236 = vmatmul.mubr.bf16.gmra.mrb[0].mxu0 %v2304
      %v5237 = vpop.f32.mrb[0].mxu0
      %v5238 = vadd.f32 0.0, %v5237
      %v5239 = vpop.f32.mrb[0].mxu0
      %v5240 = vpop.f32.mrb[0].mxu0
      %v5241 = vadd.f32 0.0, %v5240
      %v5242 = vpop.f32.mrb[0].mxu0
      %5243 = vmatprep.mubr.bf16.mxu0 0
      %5244 = vmatmul.mubr.bf16.gmra.mrb[0].mxu0 %v2307
      %v5245 = vpop.f32.mrb[0].mxu0
      %v5246 = vadd.f32 0.0, %v5245
      %v5247 = vpop.f32.mrb[0].mxu0
      %v5248 = vpop.f32.mrb[0].mxu0
      %v5249 = vadd.f32 0.0, %v5248
      %v5250 = vpop.f32.mrb[0].mxu0
      %5251 = vmatprep.mubr.bf16.mxu0 0
      %5252 = vmatmul.mubr.bf16.gmra.mrb[0].mxu0 %v2310
      %v5253 = vpop.f32.mrb[0].mxu0
      %v5254 = vadd.f32 0.0, %v5253
      %v5255 = vpop.f32.mrb[0].mxu0
      %v5256 = vpop.f32.mrb[0].mxu0
      %v5257 = vadd.f32 0.0, %v5256
      %v5258 = vpop.f32.mrb[0].mxu0
      %5259 = vmatprep.mubr.bf16.mxu0 0
      %5260 = vmatmul.mubr.bf16.gmra.mrb[0].mxu0 %v2313
      %v5261 = vpop.f32.mrb[0].mxu0
      %v5262 = vadd.f32 0.0, %v5261
      %v5263 = vpop.f32.mrb[0].mxu0
      %v5264 = vpop.f32.mrb[0].mxu0
      %v5265 = vadd.f32 0.0, %v5264
      %v5266 = vpop.f32.mrb[0].mxu0
      %5267 = vmatprep.mubr.bf16.mxu0 0
      %5268 = vmatmul.mubr.bf16.gmra.mrb[0].mxu0 %v2316
      %v5269 = vpop.f32.mrb[0].mxu0
      %v5270 = vadd.f32 0.0, %v5269
      %v5271 = vpop.f32.mrb[0].mxu0
      %v5272 = vpop.f32.mrb[0].mxu0
      %v5273 = vadd.f32 0.0, %v5272
      %v5274 = vpop.f32.mrb[0].mxu0
      %5275 = vmatprep.mubr.bf16.mxu0 0
      %5276 = vmatmul.mubr.bf16.gmra.mrb[0].mxu0 %v2319
      %v5277 = vpop.f32.mrb[0].mxu0
      %v5278 = vadd.f32 0.0, %v5277
      %v5279 = vpop.f32.mrb[0].mxu0
      %v5280 = vpop.f32.mrb[0].mxu0
      %v5281 = vadd.f32 0.0, %v5280
      %v5282 = vpop.f32.mrb[0].mxu0
      %5283 = vmatprep.mubr.bf16.mxu0 0
      %5284 = vmatmul.mubr.bf16.gmra.mrb[0].mxu0 %v2322
      %v5285 = vpop.f32.mrb[0].mxu0
      %v5286 = vadd.f32 0.0, %v5285
      %v5287 = vpop.f32.mrb[0].mxu0
      %v5288 = vpop.f32.mrb[0].mxu0
      %v5289 = vadd.f32 0.0, %v5288
      %v5290 = vpop.f32.mrb[0].mxu0
      %5291 = vmatprep.mubr.bf16.mxu0 0
      %5292 = vmatmul.mubr.bf16.gmra.mrb[0].mxu0 %v2325
      %v5293 = vpop.f32.mrb[0].mxu0
      %v5294 = vadd.f32 0.0, %v5293
      %v5295 = vpop.f32.mrb[0].mxu0
      %v5296 = vpop.f32.mrb[0].mxu0
      %v5297 = vadd.f32 0.0, %v5296
      %v5298 = vpop.f32.mrb[0].mxu0
      %5299 = vmatprep.mubr.bf16.mxu0 0
      %5300 = vmatmul.mubr.bf16.gmra.mrb[0].mxu0 %v2328
      %v5301 = vpop.f32.mrb[0].mxu0
      %v5302 = vadd.f32 0.0, %v5301
      %v5303 = vpop.f32.mrb[0].mxu0
      %v5304 = vpop.f32.mrb[0].mxu0
      %v5305 = vadd.f32 0.0, %v5304
      %v5306 = vpop.f32.mrb[0].mxu0
      %5307 = vmatprep.mubr.bf16.mxu0 0
      %5308 = vmatmul.mubr.bf16.gmra.mrb[0].mxu0 %v2331
      %v5309 = vpop.f32.mrb[0].mxu0
      %v5310 = vadd.f32 0.0, %v5309
      %v5311 = vpop.f32.mrb[0].mxu0
      %v5312 = vpop.f32.mrb[0].mxu0
      %v5313 = vadd.f32 0.0, %v5312
      %v5314 = vpop.f32.mrb[0].mxu0
      %5315 = vmatprep.mubr.bf16.mxu0 0
      %5316 = vmatmul.mubr.bf16.gmra.mrb[0].mxu0 %v2334
      %v5317 = vpop.f32.mrb[0].mxu0
      %v5318 = vadd.f32 0.0, %v5317
      %v5319 = vpop.f32.mrb[0].mxu0
      %v5320 = vpop.f32.mrb[0].mxu0
      %v5321 = vadd.f32 0.0, %v5320
      %v5322 = vpop.f32.mrb[0].mxu0
      %5323 = vmatprep.mubr.bf16.mxu0 0
      %5324 = vmatmul.mubr.bf16.gmra.mrb[0].mxu0 %v5117
      %v5325 = vpop.f32.mrb[0].mxu0
      %v5326 = vadd.f32 0.0, %v5325
      %v5327 = vpop.f32.mrb[0].mxu0
      %v5328 = vpop.f32.mrb[0].mxu0
      %v5329 = vadd.f32 0.0, %v5328
      %v5330 = vpop.f32.mrb[0].mxu0
      %5331 = vmatprep.mubr.bf16.mxu0 0
      %5332 = vmatmul.mubr.bf16.gmra.mrb[0].mxu0 %v5120
      %v5333 = vpop.f32.mrb[0].mxu0
      %v5334 = vadd.f32 0.0, %v5333
      %v5335 = vpop.f32.mrb[0].mxu0
      %v5336 = vpop.f32.mrb[0].mxu0
      %v5337 = vadd.f32 0.0, %v5336
      %v5338 = vpop.f32.mrb[0].mxu0
      %5339 = vmatprep.mubr.bf16.mxu0 0
      %5340 = vmatmul.mubr.bf16.gmra.mrb[0].mxu0 %v5123
      %v5341 = vpop.f32.mrb[0].mxu0
      %v5342 = vadd.f32 0.0, %v5341
      %v5343 = vpop.f32.mrb[0].mxu0
      %v5344 = vpop.f32.mrb[0].mxu0
      %v5345 = vadd.f32 0.0, %v5344
      %v5346 = vpop.f32.mrb[0].mxu0
      %5347 = vmatprep.mubr.bf16.mxu0 0
      %5348 = vmatmul.mubr.bf16.gmra.mrb[0].mxu0 %v5126
      %v5349 = vpop.f32.mrb[0].mxu0
      %v5350 = vadd.f32 0.0, %v5349
      %v5351 = vpop.f32.mrb[0].mxu0
      %v5352 = vpop.f32.mrb[0].mxu0
      %v5353 = vadd.f32 0.0, %v5352
      %v5354 = vpop.f32.mrb[0].mxu0
      %5355 = vdwg.mxu0
      %v5356 = vld [vmem:[#allocation4] sm:$0xff]
      %v5357 = vld [vmem:[#allocation4 + $0x8] sm:$0xff]
      %v5358 = vld [vmem:[#allocation4 + $0x10] sm:$0xff]
      %v5359 = vld [vmem:[#allocation4 + $0x18] sm:$0xff]
      %v5360 = vld [vmem:[#allocation4 + $0x20] sm:$0xff]
      %v5361 = vld [vmem:[#allocation4 + $0x28] sm:$0xff]
      %v5362 = vld [vmem:[#allocation4 + $0x30] sm:$0xff]
      %v5363 = vld [vmem:[#allocation4 + $0x38] sm:$0xff]
      %v5364 = vld [vmem:[#allocation4 + $0x40] sm:$0xff]
      %v5365 = vld [vmem:[#allocation4 + $0x48] sm:$0xff]
      %v5366 = vld [vmem:[#allocation4 + $0x50] sm:$0xff]
      %v5367 = vld [vmem:[#allocation4 + $0x58] sm:$0xff]
      %v5368 = vld [vmem:[#allocation4 + $0x60] sm:$0xff]
      %v5369 = vld [vmem:[#allocation4 + $0x68] sm:$0xff]
      %v5370 = vld [vmem:[#allocation4 + $0x70] sm:$0xff]
      %v5371 = vld [vmem:[#allocation4 + $0x78] sm:$0xff]
      %v5372 = vld [vmem:[#allocation4 + $0x80] sm:$0xff]
      %v5373 = vld [vmem:[#allocation4 + $0x88] sm:$0xff]
      %v5374 = vld [vmem:[#allocation4 + $0x90] sm:$0xff]
      %v5375 = vld [vmem:[#allocation4 + $0x98] sm:$0xff]
      %v5376 = vld [vmem:[#allocation4 + $0xa0] sm:$0xff]
      %v5377 = vld [vmem:[#allocation4 + $0xa8] sm:$0xff]
      %v5378 = vld [vmem:[#allocation4 + $0xb0] sm:$0xff]
      %v5379 = vld [vmem:[#allocation4 + $0xb8] sm:$0xff]
      %v5380 = vld [vmem:[#allocation4 + $0xc0] sm:$0xff]
      %v5381 = vld [vmem:[#allocation4 + $0xc8] sm:$0xff]
      %v5382 = vld [vmem:[#allocation4 + $0xd0] sm:$0xff]
      %v5383 = vld [vmem:[#allocation4 + $0xd8] sm:$0xff]
      %v5384 = vld [vmem:[#allocation4 + $0xe0] sm:$0xff]
      %v5385 = vld [vmem:[#allocation4 + $0xe8] sm:$0xff]
      %v5386 = vld [vmem:[#allocation4 + $0xf0] sm:$0xff]
      %v5387 = vld [vmem:[#allocation4 + $0xf8] sm:$0xff]
      %v5388 = vld [vmem:[#allocation4 + $0x100] sm:$0xff]
      %v5389 = vld [vmem:[#allocation4 + $0x108] sm:$0xff]
      %v5390 = vld [vmem:[#allocation4 + $0x110] sm:$0xff]
      %v5391 = vld [vmem:[#allocation4 + $0x118] sm:$0xff]
      %v5392 = vld [vmem:[#allocation4 + $0x120] sm:$0xff]
      %v5393 = vld [vmem:[#allocation4 + $0x128] sm:$0xff]
      %v5394 = vld [vmem:[#allocation4 + $0x130] sm:$0xff]
      %v5395 = vld [vmem:[#allocation4 + $0x138] sm:$0xff]
      %v5396 = vld [vmem:[#allocation4 + $0x140] sm:$0xff]
      %v5397 = vld [vmem:[#allocation4 + $0x148] sm:$0xff]
      %v5398 = vld [vmem:[#allocation4 + $0x150] sm:$0xff]
      %v5399 = vld [vmem:[#allocation4 + $0x158] sm:$0xff]
      %v5400 = vld [vmem:[#allocation4 + $0x160] sm:$0xff]
      %v5401 = vld [vmem:[#allocation4 + $0x168] sm:$0xff]
      %v5402 = vld [vmem:[#allocation4 + $0x170] sm:$0xff]
      %v5403 = vld [vmem:[#allocation4 + $0x178] sm:$0xff]
      %v5404 = vadd.f32 %v5356, %v5166
      %v5405 = vadd.f32 %v5357, %v5169
      %v5406 = vadd.f32 %v5358, %v5174
      %v5407 = vadd.f32 %v5359, %v5177
      %v5408 = vadd.f32 %v5360, %v5182
      %v5409 = vadd.f32 %v5361, %v5185
      %v5410 = vadd.f32 %v5362, %v5190
      %v5411 = vadd.f32 %v5363, %v5193
      %v5412 = vadd.f32 %v5364, %v5198
      %v5413 = vadd.f32 %v5365, %v5201
      %v5414 = vadd.f32 %v5366, %v5206
      %v5415 = vadd.f32 %v5367, %v5209
      %v5416 = vadd.f32 %v5368, %v5214
      %v5417 = vadd.f32 %v5369, %v5217
      %v5418 = vadd.f32 %v5370, %v5222
      %v5419 = vadd.f32 %v5371, %v5225
      %v5420 = vadd.f32 %v5372, %v5230
      %v5421 = vadd.f32 %v5373, %v5233
      %v5422 = vadd.f32 %v5374, %v5238
      %v5423 = vadd.f32 %v5375, %v5241
      %v5424 = vadd.f32 %v5376, %v5246
      %v5425 = vadd.f32 %v5377, %v5249
      %v5426 = vadd.f32 %v5378, %v5254
      %v5427 = vadd.f32 %v5379, %v5257
      %v5428 = vadd.f32 %v5380, %v5262
      %v5429 = vadd.f32 %v5381, %v5265
      %v5430 = vadd.f32 %v5382, %v5270
      %v5431 = vadd.f32 %v5383, %v5273
      %v5432 = vadd.f32 %v5384, %v5278
      %v5433 = vadd.f32 %v5385, %v5281
      %v5434 = vadd.f32 %v5386, %v5286
      %v5435 = vadd.f32 %v5387, %v5289
      %v5436 = vadd.f32 %v5388, %v5294
      %v5437 = vadd.f32 %v5389, %v5297
      %v5438 = vadd.f32 %v5390, %v5302
      %v5439 = vadd.f32 %v5391, %v5305
      %v5440 = vadd.f32 %v5392, %v5310
      %v5441 = vadd.f32 %v5393, %v5313
      %v5442 = vadd.f32 %v5394, %v5318
      %v5443 = vadd.f32 %v5395, %v5321
      %v5444 = vadd.f32 %v5396, %v5326
      %v5445 = vadd.f32 %v5397, %v5329
      %v5446 = vadd.f32 %v5398, %v5334
      %v5447 = vadd.f32 %v5399, %v5337
      %v5448 = vadd.f32 %v5400, %v5342
      %v5449 = vadd.f32 %v5401, %v5345
      %v5450 = vadd.f32 %v5402, %v5350
      %v5451 = vadd.f32 %v5403, %v5353
      %5452 = vst.msk [vmem:[#allocation4] sm:$0xff] %vm1544, %v5404
      %5453 = vst.msk [vmem:[#allocation4 + $0x8] sm:$0xff] %vm1544, %v5405
      %5454 = vst.msk [vmem:[#allocation4 + $0x10] sm:$0xff] %vm1544, %v5406
      %5455 = vst.msk [vmem:[#allocation4 + $0x18] sm:$0xff] %vm1544, %v5407
      %5456 = vst.msk [vmem:[#allocation4 + $0x20] sm:$0xff] %vm1544, %v5408
      %5457 = vst.msk [vmem:[#allocation4 + $0x28] sm:$0xff] %vm1544, %v5409
      %5458 = vst.msk [vmem:[#allocation4 + $0x30] sm:$0xff] %vm1544, %v5410
      %5459 = vst.msk [vmem:[#allocation4 + $0x38] sm:$0xff] %vm1544, %v5411
      %5460 = vst.msk [vmem:[#allocation4 + $0x40] sm:$0xff] %vm1544, %v5412
      %5461 = vst.msk [vmem:[#allocation4 + $0x48] sm:$0xff] %vm1544, %v5413
      %5462 = vst.msk [vmem:[#allocation4 + $0x50] sm:$0xff] %vm1544, %v5414
      %5463 = vst.msk [vmem:[#allocation4 + $0x58] sm:$0xff] %vm1544, %v5415
      %5464 = vst.msk [vmem:[#allocation4 + $0x60] sm:$0xff] %vm1544, %v5416
      %5465 = vst.msk [vmem:[#allocation4 + $0x68] sm:$0xff] %vm1544, %v5417
      %5466 = vst.msk [vmem:[#allocation4 + $0x70] sm:$0xff] %vm1544, %v5418
      %5467 = vst.msk [vmem:[#allocation4 + $0x78] sm:$0xff] %vm1544, %v5419
      %5468 = vst.msk [vmem:[#allocation4 + $0x80] sm:$0xff] %vm1544, %v5420
      %5469 = vst.msk [vmem:[#allocation4 + $0x88] sm:$0xff] %vm1544, %v5421
      %5470 = vst.msk [vmem:[#allocation4 + $0x90] sm:$0xff] %vm1544, %v5422
      %5471 = vst.msk [vmem:[#allocation4 + $0x98] sm:$0xff] %vm1544, %v5423
      %5472 = vst.msk [vmem:[#allocation4 + $0xa0] sm:$0xff] %vm1544, %v5424
      %5473 = vst.msk [vmem:[#allocation4 + $0xa8] sm:$0xff] %vm1544, %v5425
      %5474 = vst.msk [vmem:[#allocation4 + $0xb0] sm:$0xff] %vm1544, %v5426
      %5475 = vst.msk [vmem:[#allocation4 + $0xb8] sm:$0xff] %vm1544, %v5427
      %5476 = vst.msk [vmem:[#allocation4 + $0xc0] sm:$0xff] %vm1544, %v5428
      %5477 = vst.msk [vmem:[#allocation4 + $0xc8] sm:$0xff] %vm1544, %v5429
      %5478 = vst.msk [vmem:[#allocation4 + $0xd0] sm:$0xff] %vm1544, %v5430
      %5479 = vst.msk [vmem:[#allocation4 + $0xd8] sm:$0xff] %vm1544, %v5431
      %5480 = vst.msk [vmem:[#allocation4 + $0xe0] sm:$0xff] %vm1544, %v5432
      %5481 = vst.msk [vmem:[#allocation4 + $0xe8] sm:$0xff] %vm1544, %v5433
      %5482 = vst.msk [vmem:[#allocation4 + $0xf0] sm:$0xff] %vm1544, %v5434
      %5483 = vst.msk [vmem:[#allocation4 + $0xf8] sm:$0xff] %vm1544, %v5435
      %5484 = vst.msk [vmem:[#allocation4 + $0x100] sm:$0xff] %vm1544, %v5436
      %5485 = vst.msk [vmem:[#allocation4 + $0x108] sm:$0xff] %vm1544, %v5437
      %5486 = vst.msk [vmem:[#allocation4 + $0x110] sm:$0xff] %vm1544, %v5438
      %5487 = vst.msk [vmem:[#allocation4 + $0x118] sm:$0xff] %vm1544, %v5439
      %5488 = vst.msk [vmem:[#allocation4 + $0x120] sm:$0xff] %vm1544, %v5440
      %5489 = vst.msk [vmem:[#allocation4 + $0x128] sm:$0xff] %vm1544, %v5441
      %5490 = vst.msk [vmem:[#allocation4 + $0x130] sm:$0xff] %vm1544, %v5442
      %5491 = vst.msk [vmem:[#allocation4 + $0x138] sm:$0xff] %vm1544, %v5443
      %5492 = vst.msk [vmem:[#allocation4 + $0x140] sm:$0xff] %vm1544, %v5444
      %5493 = vst.msk [vmem:[#allocation4 + $0x148] sm:$0xff] %vm1544, %v5445
      %5494 = vst.msk [vmem:[#allocation4 + $0x150] sm:$0xff] %vm1544, %v5446
      %5495 = vst.msk [vmem:[#allocation4 + $0x158] sm:$0xff] %vm1544, %v5447
      %5496 = vst.msk [vmem:[#allocation4 + $0x160] sm:$0xff] %vm1544, %v5448
      %5497 = vst.msk [vmem:[#allocation4 + $0x168] sm:$0xff] %vm1544, %v5449
      %5498 = vst.msk [vmem:[#allocation4 + $0x170] sm:$0xff] %vm1544, %v5450
      %5499 = vst.msk [vmem:[#allocation4 + $0x178] sm:$0xff] %vm1544, %v5451
      %v5500 = vld [vmem:[#allocation4] sm:$0xff]
      %v5501 = vld [vmem:[#allocation4 + $0x8] sm:$0xff]
      %v5502 = vld [vmem:[#allocation4 + $0x18] sm:$0xff]
      %v5503 = vld [vmem:[#allocation4 + $0x20] sm:$0xff]
      %v5504 = vld [vmem:[#allocation4 + $0x30] sm:$0xff]
      %v5505 = vld [vmem:[#allocation4 + $0x38] sm:$0xff]
      %v5506 = vld [vmem:[#allocation4 + $0x48] sm:$0xff]
      %v5507 = vld [vmem:[#allocation4 + $0x50] sm:$0xff]
      %v5508 = vld [vmem:[#allocation4 + $0x60] sm:$0xff]
      %v5509 = vld [vmem:[#allocation4 + $0x68] sm:$0xff]
      %v5510 = vld [vmem:[#allocation4 + $0x78] sm:$0xff]
      %v5511 = vld [vmem:[#allocation4 + $0x80] sm:$0xff]
      %v5512 = vld [vmem:[#allocation4 + $0x90] sm:$0xff]
      %v5513 = vld [vmem:[#allocation4 + $0x98] sm:$0xff]
      %v5514 = vld [vmem:[#allocation4 + $0xa8] sm:$0xff]
      %v5515 = vld [vmem:[#allocation4 + $0xb0] sm:$0xff]
      %v5516 = vld [vmem:[#allocation4 + $0xc0] sm:$0xff]
      %v5517 = vld [vmem:[#allocation4 + $0xc8] sm:$0xff]
      %v5518 = vld [vmem:[#allocation4 + $0xd8] sm:$0xff]
      %v5519 = vld [vmem:[#allocation4 + $0xe0] sm:$0xff]
      %v5520 = vld [vmem:[#allocation4 + $0xf0] sm:$0xff]
      %v5521 = vld [vmem:[#allocation4 + $0xf8] sm:$0xff]
      %v5522 = vld [vmem:[#allocation4 + $0x108] sm:$0xff]
      %v5523 = vld [vmem:[#allocation4 + $0x110] sm:$0xff]
      %v5524 = vld [vmem:[#allocation4 + $0x120] sm:$0xff]
      %v5525 = vld [vmem:[#allocation4 + $0x128] sm:$0xff]
      %v5526 = vld [vmem:[#allocation4 + $0x138] sm:$0xff]
      %v5527 = vld [vmem:[#allocation4 + $0x140] sm:$0xff]
      %v5528 = vld [vmem:[#allocation4 + $0x150] sm:$0xff]
      %v5529 = vld [vmem:[#allocation4 + $0x158] sm:$0xff]
      %v5530 = vld [vmem:[#allocation4 + $0x168] sm:$0xff]
      %v5531 = vld [vmem:[#allocation4 + $0x170] sm:$0xff]
      %v5532 = vld [vmem:[%s3] sm:$0x1]
      %v5534 = vlaneseq
      %v5535 = vshrl.u32 %v5534, 7
      %v5536 = vsub.s32 0, %v5535
      %v5537 = vrot.slane %v5532, %v5536
      %v5539 = vadd.f32 %v5500, %v5537
      %v5540 = vadd.f32 %v5501, %v5537
      %v5541 = vadd.f32 %v5502, %v5537
      %v5542 = vadd.f32 %v5503, %v5537
      %v5543 = vadd.f32 %v5504, %v5537
      %v5544 = vadd.f32 %v5505, %v5537
      %v5545 = vadd.f32 %v5506, %v5537
      %v5546 = vadd.f32 %v5507, %v5537
      %v5547 = vadd.f32 %v5508, %v5537
      %v5548 = vadd.f32 %v5509, %v5537
      %v5549 = vadd.f32 %v5510, %v5537
      %v5550 = vadd.f32 %v5511, %v5537
      %v5551 = vadd.f32 %v5512, %v5537
      %v5552 = vadd.f32 %v5513, %v5537
      %v5553 = vadd.f32 %v5514, %v5537
      %v5554 = vadd.f32 %v5515, %v5537
      %v5555 = vadd.f32 %v5516, %v5537
      %v5556 = vadd.f32 %v5517, %v5537
      %v5557 = vadd.f32 %v5518, %v5537
      %v5558 = vadd.f32 %v5519, %v5537
      %v5559 = vadd.f32 %v5520, %v5537
      %v5560 = vadd.f32 %v5521, %v5537
      %v5561 = vadd.f32 %v5522, %v5537
      %v5562 = vadd.f32 %v5523, %v5537
      %v5563 = vadd.f32 %v5524, %v5537
      %v5564 = vadd.f32 %v5525, %v5537
      %v5565 = vadd.f32 %v5526, %v5537
      %v5566 = vadd.f32 %v5527, %v5537
      %v5567 = vadd.f32 %v5528, %v5537
      %v5568 = vadd.f32 %v5529, %v5537
      %v5569 = vadd.f32 %v5530, %v5537
      %v5570 = vadd.f32 %v5531, %v5537
      %v5571 = vmax.f32 %v5539, 0.0
      %v5572 = vmax.f32 %v5540, 0.0
      %v5573 = vmax.f32 %v5541, 0.0
      %v5574 = vmax.f32 %v5542, 0.0
      %v5575 = vmax.f32 %v5543, 0.0
      %v5576 = vmax.f32 %v5544, 0.0
      %v5577 = vmax.f32 %v5545, 0.0
      %v5578 = vmax.f32 %v5546, 0.0
      %v5579 = vmax.f32 %v5547, 0.0
      %v5580 = vmax.f32 %v5548, 0.0
      %v5581 = vmax.f32 %v5549, 0.0
      %v5582 = vmax.f32 %v5550, 0.0
      %v5583 = vmax.f32 %v5551, 0.0
      %v5584 = vmax.f32 %v5552, 0.0
      %v5585 = vmax.f32 %v5553, 0.0
      %v5586 = vmax.f32 %v5554, 0.0
      %v5587 = vmax.f32 %v5555, 0.0
      %v5588 = vmax.f32 %v5556, 0.0
      %v5589 = vmax.f32 %v5557, 0.0
      %v5590 = vmax.f32 %v5558, 0.0
      %v5591 = vmax.f32 %v5559, 0.0
      %v5592 = vmax.f32 %v5560, 0.0
      %v5593 = vmax.f32 %v5561, 0.0
      %v5594 = vmax.f32 %v5562, 0.0
      %v5595 = vmax.f32 %v5563, 0.0
      %v5596 = vmax.f32 %v5564, 0.0
      %v5597 = vmax.f32 %v5565, 0.0
      %v5598 = vmax.f32 %v5566, 0.0
      %v5599 = vmax.f32 %v5567, 0.0
      %v5600 = vmax.f32 %v5568, 0.0
      %v5601 = vmax.f32 %v5569, 0.0
      %v5602 = vmax.f32 %v5570, 0.0
      %vm5603 = vcmask 60416
      %5604 = vst.msk [vmem:[#allocation3] sm:$0xf] %vm5603, 0
      %5605 = vst.msk [vmem:[#allocation3 + $0x4] sm:$0xf] %vm5603, 0
      %5606 = vst.msk [vmem:[#allocation3 + $0x8] sm:$0xf] %vm5603, 0
      %s5607 = scalar_lea.vmem [#allocation3], 204
      %5608 = vst.msk [vmem:[%s5607] sm:$0xf] %vm5603, 0
      %5609 = vst.msk [vmem:[%s5607 + $0x4] sm:$0xf] %vm5603, 0
      %5610 = vst.msk [vmem:[%s5607 + $0x8] sm:$0xf] %vm5603, 0
      %5611 = vst.msk [vmem:[%s5607 + $0xc] sm:$0xf] %vm5603, 0
      %5612 = vst.msk [vmem:[%s5607 + $0x10] sm:$0xf] %vm5603, 0
      %5613 = vst.msk [vmem:[%s5607 + $0x14] sm:$0xf] %vm5603, 0
      %s5614 = scalar_lea.vmem [#allocation3], 12
      %vm5615 = vcmask 57344
      %vm5616 = vmand %vm5615, %vm435
      %v5617 = vld [vmem:[%s5614] sm:$0x1]
      %v5618 = vsel %vm5616, 0, %v5617
      %5619 = vst [vmem:[%s5614] sm:$0x1] %v5618
      %v5620 = vld [vmem:[%s5614 + $0xc] sm:$0x1]
      %v5621 = vsel %vm5616, 0, %v5620
      %5622 = vst [vmem:[%s5614 + $0xc] sm:$0x1] %v5621
      %v5623 = vld [vmem:[%s5614 + $0x18] sm:$0x1]
      %v5624 = vsel %vm5616, 0, %v5623
      %5625 = vst [vmem:[%s5614 + $0x18] sm:$0x1] %v5624
      %v5626 = vld [vmem:[%s5614 + $0x24] sm:$0x1]
      %v5627 = vsel %vm5616, 0, %v5626
      %5628 = vst [vmem:[%s5614 + $0x24] sm:$0x1] %v5627
      %v5629 = vld [vmem:[%s5614 + $0x30] sm:$0x1]
      %v5630 = vsel %vm5616, 0, %v5629
      %5631 = vst [vmem:[%s5614 + $0x30] sm:$0x1] %v5630
      %v5632 = vld [vmem:[%s5614 + $0x3c] sm:$0x1]
      %v5633 = vsel %vm5616, 0, %v5632
      %5634 = vst [vmem:[%s5614 + $0x3c] sm:$0x1] %v5633
      %v5635 = vld [vmem:[%s5614 + $0x48] sm:$0x1]
      %v5636 = vsel %vm5616, 0, %v5635
      %5637 = vst [vmem:[%s5614 + $0x48] sm:$0x1] %v5636
      %v5638 = vld [vmem:[%s5614 + $0x54] sm:$0x1]
      %v5639 = vsel %vm5616, 0, %v5638
      %5640 = vst [vmem:[%s5614 + $0x54] sm:$0x1] %v5639
      %v5641 = vld [vmem:[%s5614 + $0x60] sm:$0x1]
      %v5642 = vsel %vm5616, 0, %v5641
      %5643 = vst [vmem:[%s5614 + $0x60] sm:$0x1] %v5642
      %v5644 = vld [vmem:[%s5614 + $0x6c] sm:$0x1]
      %v5645 = vsel %vm5616, 0, %v5644
      %5646 = vst [vmem:[%s5614 + $0x6c] sm:$0x1] %v5645
      %v5647 = vld [vmem:[%s5614 + $0x78] sm:$0x1]
      %v5648 = vsel %vm5616, 0, %v5647
      %5649 = vst [vmem:[%s5614 + $0x78] sm:$0x1] %v5648
      %v5650 = vld [vmem:[%s5614 + $0x84] sm:$0x1]
      %v5651 = vsel %vm5616, 0, %v5650
      %5652 = vst [vmem:[%s5614 + $0x84] sm:$0x1] %v5651
      %v5653 = vld [vmem:[%s5614 + $0x90] sm:$0x1]
      %v5654 = vsel %vm5616, 0, %v5653
      %5655 = vst [vmem:[%s5614 + $0x90] sm:$0x1] %v5654
      %v5656 = vld [vmem:[%s5614 + $0x9c] sm:$0x1]
      %v5657 = vsel %vm5616, 0, %v5656
      %5658 = vst [vmem:[%s5614 + $0x9c] sm:$0x1] %v5657
      %v5659 = vld [vmem:[%s5614 + $0xa8] sm:$0x1]
      %v5660 = vsel %vm5616, 0, %v5659
      %5661 = vst [vmem:[%s5614 + $0xa8] sm:$0x1] %v5660
      %v5662 = vld [vmem:[%s5614 + $0xb4] sm:$0x1]
      %v5663 = vsel %vm5616, 0, %v5662
      %5664 = vst [vmem:[%s5614 + $0xb4] sm:$0x1] %v5663
      %vm5665 = vcmask 60416
      %vm5666 = vmand %vm5665, %vm486
      %v5667 = vld [vmem:[%s5614 + $0x8] sm:$0xf]
      %v5668 = vsel %vm5666, 0, %v5667
      %5669 = vst [vmem:[%s5614 + $0x8] sm:$0xf] %v5668
      %v5670 = vld [vmem:[%s5614 + $0x14] sm:$0xf]
      %v5671 = vsel %vm5666, 0, %v5670
      %5672 = vst [vmem:[%s5614 + $0x14] sm:$0xf] %v5671
      %v5673 = vld [vmem:[%s5614 + $0x20] sm:$0xf]
      %v5674 = vsel %vm5666, 0, %v5673
      %5675 = vst [vmem:[%s5614 + $0x20] sm:$0xf] %v5674
      %v5676 = vld [vmem:[%s5614 + $0x2c] sm:$0xf]
      %v5677 = vsel %vm5666, 0, %v5676
      %5678 = vst [vmem:[%s5614 + $0x2c] sm:$0xf] %v5677
      %v5679 = vld [vmem:[%s5614 + $0x38] sm:$0xf]
      %v5680 = vsel %vm5666, 0, %v5679
      %5681 = vst [vmem:[%s5614 + $0x38] sm:$0xf] %v5680
      %v5682 = vld [vmem:[%s5614 + $0x44] sm:$0xf]
      %v5683 = vsel %vm5666, 0, %v5682
      %5684 = vst [vmem:[%s5614 + $0x44] sm:$0xf] %v5683
      %v5685 = vld [vmem:[%s5614 + $0x50] sm:$0xf]
      %v5686 = vsel %vm5666, 0, %v5685
      %5687 = vst [vmem:[%s5614 + $0x50] sm:$0xf] %v5686
      %v5688 = vld [vmem:[%s5614 + $0x5c] sm:$0xf]
      %v5689 = vsel %vm5666, 0, %v5688
      %5690 = vst [vmem:[%s5614 + $0x5c] sm:$0xf] %v5689
      %v5691 = vld [vmem:[%s5614 + $0x68] sm:$0xf]
      %v5692 = vsel %vm5666, 0, %v5691
      %5693 = vst [vmem:[%s5614 + $0x68] sm:$0xf] %v5692
      %v5694 = vld [vmem:[%s5614 + $0x74] sm:$0xf]
      %v5695 = vsel %vm5666, 0, %v5694
      %5696 = vst [vmem:[%s5614 + $0x74] sm:$0xf] %v5695
      %v5697 = vld [vmem:[%s5614 + $0x80] sm:$0xf]
      %v5698 = vsel %vm5666, 0, %v5697
      %5699 = vst [vmem:[%s5614 + $0x80] sm:$0xf] %v5698
      %v5700 = vld [vmem:[%s5614 + $0x8c] sm:$0xf]
      %v5701 = vsel %vm5666, 0, %v5700
      %5702 = vst [vmem:[%s5614 + $0x8c] sm:$0xf] %v5701
      %v5703 = vld [vmem:[%s5614 + $0x98] sm:$0xf]
      %v5704 = vsel %vm5666, 0, %v5703
      %5705 = vst [vmem:[%s5614 + $0x98] sm:$0xf] %v5704
      %v5706 = vld [vmem:[%s5614 + $0xa4] sm:$0xf]
      %v5707 = vsel %vm5666, 0, %v5706
      %5708 = vst [vmem:[%s5614 + $0xa4] sm:$0xf] %v5707
      %v5709 = vld [vmem:[%s5614 + $0xb0] sm:$0xf]
      %v5710 = vsel %vm5666, 0, %v5709
      %5711 = vst [vmem:[%s5614 + $0xb0] sm:$0xf] %v5710
      %v5712 = vld [vmem:[%s5614 + $0xbc] sm:$0xf]
      %v5713 = vsel %vm5666, 0, %v5712
      %5714 = vst [vmem:[%s5614 + $0xbc] sm:$0xf] %v5713
      %v5715 = vpack.c.bf16 %v5572, %v5571
      %v5716 = vpack.c.bf16 %v5574, %v5573
      %v5717 = vpack.c.bf16 %v5576, %v5575
      %v5718 = vpack.c.bf16 %v5578, %v5577
      %v5719 = vpack.c.bf16 %v5580, %v5579
      %v5720 = vpack.c.bf16 %v5582, %v5581
      %v5721 = vpack.c.bf16 %v5584, %v5583
      %v5722 = vpack.c.bf16 %v5586, %v5585
      %v5723 = vpack.c.bf16 %v5588, %v5587
      %v5724 = vpack.c.bf16 %v5590, %v5589
      %v5725 = vpack.c.bf16 %v5592, %v5591
      %v5726 = vpack.c.bf16 %v5594, %v5593
      %v5727 = vpack.c.bf16 %v5596, %v5595
      %v5728 = vpack.c.bf16 %v5598, %v5597
      %v5729 = vpack.c.bf16 %v5600, %v5599
      %v5730 = vpack.c.bf16 %v5602, %v5601
      %v5747 = vunpack.c.l.b16 %v5715
      %v5748 = vunpack.c.h.b16 %v5715
      %v5749 = vunpack.c.l.b16 %v5716
      %v5750 = vunpack.c.h.b16 %v5716
      %v5751 = vunpack.c.l.b16 %v5717
      %v5752 = vunpack.c.h.b16 %v5717
      %v5753 = vunpack.c.l.b16 %v5718
      %v5754 = vunpack.c.h.b16 %v5718
      %v5755 = vunpack.c.l.b16 %v5719
      %v5756 = vunpack.c.h.b16 %v5719
      %v5757 = vunpack.c.l.b16 %v5720
      %v5758 = vunpack.c.h.b16 %v5720
      %v5759 = vunpack.c.l.b16 %v5721
      %v5760 = vunpack.c.h.b16 %v5721
      %v5761 = vunpack.c.l.b16 %v5722
      %v5762 = vunpack.c.h.b16 %v5722
      %v5763 = vunpack.c.l.b16 %v5723
      %v5764 = vunpack.c.h.b16 %v5723
      %v5765 = vunpack.c.l.b16 %v5724
      %v5766 = vunpack.c.h.b16 %v5724
      %v5767 = vunpack.c.l.b16 %v5725
      %v5768 = vunpack.c.h.b16 %v5725
      %v5769 = vunpack.c.l.b16 %v5726
      %v5770 = vunpack.c.h.b16 %v5726
      %v5771 = vunpack.c.l.b16 %v5727
      %v5772 = vunpack.c.h.b16 %v5727
      %v5773 = vunpack.c.l.b16 %v5728
      %v5774 = vunpack.c.h.b16 %v5728
      %v5775 = vunpack.c.l.b16 %v5729
      %v5776 = vunpack.c.h.b16 %v5729
      %v5777 = vunpack.c.l.b16 %v5730
      %v5778 = vunpack.c.h.b16 %v5730
      %v5779 = vpack.c.b16 %v5747, %v5747
      %v5780 = vpack.c.b16 %v5748, %v5748
      %v5781 = vpack.c.b16 %v5749, %v5749
      %v5782 = vpack.c.b16 %v5750, %v5750
      %v5783 = vpack.c.b16 %v5751, %v5751
      %v5784 = vpack.c.b16 %v5752, %v5752
      %v5785 = vpack.c.b16 %v5753, %v5753
      %v5786 = vpack.c.b16 %v5754, %v5754
      %v5787 = vpack.c.b16 %v5755, %v5755
      %v5788 = vpack.c.b16 %v5756, %v5756
      %v5789 = vpack.c.b16 %v5757, %v5757
      %v5790 = vpack.c.b16 %v5758, %v5758
      %v5791 = vpack.c.b16 %v5759, %v5759
      %v5792 = vpack.c.b16 %v5760, %v5760
      %v5793 = vpack.c.b16 %v5761, %v5761
      %v5794 = vpack.c.b16 %v5762, %v5762
      %v5795 = vpack.c.b16 %v5763, %v5763
      %v5796 = vpack.c.b16 %v5764, %v5764
      %v5797 = vpack.c.b16 %v5765, %v5765
      %v5798 = vpack.c.b16 %v5766, %v5766
      %v5799 = vpack.c.b16 %v5767, %v5767
      %v5800 = vpack.c.b16 %v5768, %v5768
      %v5801 = vpack.c.b16 %v5769, %v5769
      %v5802 = vpack.c.b16 %v5770, %v5770
      %v5803 = vpack.c.b16 %v5771, %v5771
      %v5804 = vpack.c.b16 %v5772, %v5772
      %v5805 = vpack.c.b16 %v5773, %v5773
      %v5806 = vpack.c.b16 %v5774, %v5774
      %v5807 = vpack.c.b16 %v5775, %v5775
      %v5808 = vpack.c.b16 %v5776, %v5776
      %v5809 = vpack.c.b16 %v5777, %v5777
      %v5810 = vpack.c.b16 %v5778, %v5778
      %v5812 = vshrl.u32 %v5779, 16
      %v5814 = vrot.slane %v5812, 7
      %v5815 = vshll.u32 %v5779, 16
      %v5817 = vor.u32 %v5814, %v5815
      %v5818 = vrot.slane %v5814, 4
      %v5820 = vshrl.u32 %v5780, 16
      %v5822 = vrot.slane %v5820, 7
      %v5823 = vshll.u32 %v5780, 16
      %v5825 = vor.u32 %v5822, %v5823
      %v5826 = vsel %vm633, %v5818, %v5825
      %v5827 = vrot.slane %v5822, 4
      %v5829 = vshrl.u32 %v5781, 16
      %v5831 = vrot.slane %v5829, 7
      %v5832 = vshll.u32 %v5781, 16
      %v5834 = vor.u32 %v5831, %v5832
      %v5835 = vrot.slane %v5831, 4
      %v5837 = vshrl.u32 %v5782, 16
      %v5839 = vrot.slane %v5837, 7
      %v5840 = vshll.u32 %v5782, 16
      %v5842 = vor.u32 %v5839, %v5840
      %v5843 = vsel %vm633, %v5835, %v5842
      %v5844 = vrot.slane %v5839, 4
      %v5846 = vshrl.u32 %v5783, 16
      %v5848 = vrot.slane %v5846, 7
      %v5849 = vshll.u32 %v5783, 16
      %v5851 = vor.u32 %v5848, %v5849
      %v5852 = vrot.slane %v5848, 4
      %v5854 = vshrl.u32 %v5784, 16
      %v5856 = vrot.slane %v5854, 7
      %v5857 = vshll.u32 %v5784, 16
      %v5859 = vor.u32 %v5856, %v5857
      %v5860 = vsel %vm633, %v5852, %v5859
      %v5861 = vrot.slane %v5856, 4
      %v5863 = vshrl.u32 %v5785, 16
      %v5865 = vrot.slane %v5863, 7
      %v5866 = vshll.u32 %v5785, 16
      %v5868 = vor.u32 %v5865, %v5866
      %v5869 = vrot.slane %v5865, 4
      %v5871 = vshrl.u32 %v5786, 16
      %v5873 = vrot.slane %v5871, 7
      %v5874 = vshll.u32 %v5786, 16
      %v5876 = vor.u32 %v5873, %v5874
      %v5877 = vsel %vm633, %v5869, %v5876
      %v5878 = vrot.slane %v5873, 4
      %v5880 = vshrl.u32 %v5787, 16
      %v5882 = vrot.slane %v5880, 7
      %v5883 = vshll.u32 %v5787, 16
      %v5885 = vor.u32 %v5882, %v5883
      %v5886 = vrot.slane %v5882, 4
      %v5888 = vshrl.u32 %v5788, 16
      %v5890 = vrot.slane %v5888, 7
      %v5891 = vshll.u32 %v5788, 16
      %v5893 = vor.u32 %v5890, %v5891
      %v5894 = vsel %vm633, %v5886, %v5893
      %v5895 = vrot.slane %v5890, 4
      %v5897 = vshrl.u32 %v5789, 16
      %v5899 = vrot.slane %v5897, 7
      %v5900 = vshll.u32 %v5789, 16
      %v5902 = vor.u32 %v5899, %v5900
      %v5903 = vrot.slane %v5899, 4
      %v5905 = vshrl.u32 %v5790, 16
      %v5907 = vrot.slane %v5905, 7
      %v5908 = vshll.u32 %v5790, 16
      %v5910 = vor.u32 %v5907, %v5908
      %v5911 = vsel %vm633, %v5903, %v5910
      %v5912 = vrot.slane %v5907, 4
      %v5914 = vshrl.u32 %v5791, 16
      %v5916 = vrot.slane %v5914, 7
      %v5917 = vshll.u32 %v5791, 16
      %v5919 = vor.u32 %v5916, %v5917
      %v5920 = vrot.slane %v5916, 4
      %v5922 = vshrl.u32 %v5792, 16
      %v5924 = vrot.slane %v5922, 7
      %v5925 = vshll.u32 %v5792, 16
      %v5927 = vor.u32 %v5924, %v5925
      %v5928 = vsel %vm633, %v5920, %v5927
      %v5929 = vrot.slane %v5924, 4
      %v5931 = vshrl.u32 %v5793, 16
      %v5933 = vrot.slane %v5931, 7
      %v5934 = vshll.u32 %v5793, 16
      %v5936 = vor.u32 %v5933, %v5934
      %v5937 = vrot.slane %v5933, 4
      %v5939 = vshrl.u32 %v5794, 16
      %v5941 = vrot.slane %v5939, 7
      %v5942 = vshll.u32 %v5794, 16
      %v5944 = vor.u32 %v5941, %v5942
      %v5945 = vsel %vm633, %v5937, %v5944
      %v5946 = vrot.slane %v5941, 4
      %v5948 = vshrl.u32 %v5795, 16
      %v5950 = vrot.slane %v5948, 7
      %v5951 = vshll.u32 %v5795, 16
      %v5953 = vor.u32 %v5950, %v5951
      %v5954 = vrot.slane %v5950, 4
      %v5956 = vshrl.u32 %v5796, 16
      %v5958 = vrot.slane %v5956, 7
      %v5959 = vshll.u32 %v5796, 16
      %v5961 = vor.u32 %v5958, %v5959
      %v5962 = vsel %vm633, %v5954, %v5961
      %v5963 = vrot.slane %v5958, 4
      %v5965 = vshrl.u32 %v5797, 16
      %v5967 = vrot.slane %v5965, 7
      %v5968 = vshll.u32 %v5797, 16
      %v5970 = vor.u32 %v5967, %v5968
      %v5971 = vrot.slane %v5967, 4
      %v5973 = vshrl.u32 %v5798, 16
      %v5975 = vrot.slane %v5973, 7
      %v5976 = vshll.u32 %v5798, 16
      %v5978 = vor.u32 %v5975, %v5976
      %v5979 = vsel %vm633, %v5971, %v5978
      %v5980 = vrot.slane %v5975, 4
      %v5982 = vshrl.u32 %v5799, 16
      %v5984 = vrot.slane %v5982, 7
      %v5985 = vshll.u32 %v5799, 16
      %v5987 = vor.u32 %v5984, %v5985
      %v5988 = vrot.slane %v5984, 4
      %v5990 = vshrl.u32 %v5800, 16
      %v5992 = vrot.slane %v5990, 7
      %v5993 = vshll.u32 %v5800, 16
      %v5995 = vor.u32 %v5992, %v5993
      %v5996 = vsel %vm633, %v5988, %v5995
      %v5997 = vrot.slane %v5992, 4
      %v5999 = vshrl.u32 %v5801, 16
      %v6001 = vrot.slane %v5999, 7
      %v6002 = vshll.u32 %v5801, 16
      %v6004 = vor.u32 %v6001, %v6002
      %v6005 = vrot.slane %v6001, 4
      %v6007 = vshrl.u32 %v5802, 16
      %v6009 = vrot.slane %v6007, 7
      %v6010 = vshll.u32 %v5802, 16
      %v6012 = vor.u32 %v6009, %v6010
      %v6013 = vsel %vm633, %v6005, %v6012
      %v6014 = vrot.slane %v6009, 4
      %v6016 = vshrl.u32 %v5803, 16
      %v6018 = vrot.slane %v6016, 7
      %v6019 = vshll.u32 %v5803, 16
      %v6021 = vor.u32 %v6018, %v6019
      %v6022 = vrot.slane %v6018, 4
      %v6024 = vshrl.u32 %v5804, 16
      %v6026 = vrot.slane %v6024, 7
      %v6027 = vshll.u32 %v5804, 16
      %v6029 = vor.u32 %v6026, %v6027
      %v6030 = vsel %vm633, %v6022, %v6029
      %v6031 = vrot.slane %v6026, 4
      %v6033 = vshrl.u32 %v5805, 16
      %v6035 = vrot.slane %v6033, 7
      %v6036 = vshll.u32 %v5805, 16
      %v6038 = vor.u32 %v6035, %v6036
      %v6039 = vrot.slane %v6035, 4
      %v6041 = vshrl.u32 %v5806, 16
      %v6043 = vrot.slane %v6041, 7
      %v6044 = vshll.u32 %v5806, 16
      %v6046 = vor.u32 %v6043, %v6044
      %v6047 = vsel %vm633, %v6039, %v6046
      %v6048 = vrot.slane %v6043, 4
      %v6050 = vshrl.u32 %v5807, 16
      %v6052 = vrot.slane %v6050, 7
      %v6053 = vshll.u32 %v5807, 16
      %v6055 = vor.u32 %v6052, %v6053
      %v6056 = vrot.slane %v6052, 4
      %v6058 = vshrl.u32 %v5808, 16
      %v6060 = vrot.slane %v6058, 7
      %v6061 = vshll.u32 %v5808, 16
      %v6063 = vor.u32 %v6060, %v6061
      %v6064 = vsel %vm633, %v6056, %v6063
      %v6065 = vrot.slane %v6060, 4
      %v6067 = vshrl.u32 %v5809, 16
      %v6069 = vrot.slane %v6067, 7
      %v6070 = vshll.u32 %v5809, 16
      %v6072 = vor.u32 %v6069, %v6070
      %v6073 = vrot.slane %v6069, 4
      %v6075 = vshrl.u32 %v5810, 16
      %v6077 = vrot.slane %v6075, 7
      %v6078 = vshll.u32 %v5810, 16
      %v6080 = vor.u32 %v6077, %v6078
      %v6081 = vsel %vm633, %v6073, %v6080
      %v6082 = vrot.slane %v6077, 4
      %v6131 = vld [vmem:[%s5614] sm:$0xf]
      %v6132 = vsel %vm5666, %v5817, %v6131
      %6133 = vst [vmem:[%s5614] sm:$0xf] %v6132
      %6134 = vst.msk [vmem:[%s5614 + $0x4] sm:$0xf] %vm5603, %v5826
      %v6135 = vld [vmem:[%s5614 + $0x8] sm:$0x1]
      %v6136 = vsel %vm5616, %v5827, %v6135
      %6137 = vst [vmem:[%s5614 + $0x8] sm:$0x1] %v6136
      %v6138 = vld [vmem:[%s5614 + $0xc] sm:$0xf]
      %v6139 = vsel %vm5666, %v5834, %v6138
      %6140 = vst [vmem:[%s5614 + $0xc] sm:$0xf] %v6139
      %6141 = vst.msk [vmem:[%s5614 + $0x10] sm:$0xf] %vm5603, %v5843
      %v6142 = vld [vmem:[%s5614 + $0x14] sm:$0x1]
      %v6143 = vsel %vm5616, %v5844, %v6142
      %6144 = vst [vmem:[%s5614 + $0x14] sm:$0x1] %v6143
      %v6145 = vld [vmem:[%s5614 + $0x18] sm:$0xf]
      %v6146 = vsel %vm5666, %v5851, %v6145
      %6147 = vst [vmem:[%s5614 + $0x18] sm:$0xf] %v6146
      %6148 = vst.msk [vmem:[%s5614 + $0x1c] sm:$0xf] %vm5603, %v5860
      %v6149 = vld [vmem:[%s5614 + $0x20] sm:$0x1]
      %v6150 = vsel %vm5616, %v5861, %v6149
      %6151 = vst [vmem:[%s5614 + $0x20] sm:$0x1] %v6150
      %v6152 = vld [vmem:[%s5614 + $0x24] sm:$0xf]
      %v6153 = vsel %vm5666, %v5868, %v6152
      %6154 = vst [vmem:[%s5614 + $0x24] sm:$0xf] %v6153
      %6155 = vst.msk [vmem:[%s5614 + $0x28] sm:$0xf] %vm5603, %v5877
      %v6156 = vld [vmem:[%s5614 + $0x2c] sm:$0x1]
      %v6157 = vsel %vm5616, %v5878, %v6156
      %6158 = vst [vmem:[%s5614 + $0x2c] sm:$0x1] %v6157
      %v6159 = vld [vmem:[%s5614 + $0x30] sm:$0xf]
      %v6160 = vsel %vm5666, %v5885, %v6159
      %6161 = vst [vmem:[%s5614 + $0x30] sm:$0xf] %v6160
      %6162 = vst.msk [vmem:[%s5614 + $0x34] sm:$0xf] %vm5603, %v5894
      %v6163 = vld [vmem:[%s5614 + $0x38] sm:$0x1]
      %v6164 = vsel %vm5616, %v5895, %v6163
      %6165 = vst [vmem:[%s5614 + $0x38] sm:$0x1] %v6164
      %v6166 = vld [vmem:[%s5614 + $0x3c] sm:$0xf]
      %v6167 = vsel %vm5666, %v5902, %v6166
      %6168 = vst [vmem:[%s5614 + $0x3c] sm:$0xf] %v6167
      %6169 = vst.msk [vmem:[%s5614 + $0x40] sm:$0xf] %vm5603, %v5911
      %v6170 = vld [vmem:[%s5614 + $0x44] sm:$0x1]
      %v6171 = vsel %vm5616, %v5912, %v6170
      %6172 = vst [vmem:[%s5614 + $0x44] sm:$0x1] %v6171
      %v6173 = vld [vmem:[%s5614 + $0x48] sm:$0xf]
      %v6174 = vsel %vm5666, %v5919, %v6173
      %6175 = vst [vmem:[%s5614 + $0x48] sm:$0xf] %v6174
      %6176 = vst.msk [vmem:[%s5614 + $0x4c] sm:$0xf] %vm5603, %v5928
      %v6177 = vld [vmem:[%s5614 + $0x50] sm:$0x1]
      %v6178 = vsel %vm5616, %v5929, %v6177
      %6179 = vst [vmem:[%s5614 + $0x50] sm:$0x1] %v6178
      %v6180 = vld [vmem:[%s5614 + $0x54] sm:$0xf]
      %v6181 = vsel %vm5666, %v5936, %v6180
      %6182 = vst [vmem:[%s5614 + $0x54] sm:$0xf] %v6181
      %6183 = vst.msk [vmem:[%s5614 + $0x58] sm:$0xf] %vm5603, %v5945
      %v6184 = vld [vmem:[%s5614 + $0x5c] sm:$0x1]
      %v6185 = vsel %vm5616, %v5946, %v6184
      %6186 = vst [vmem:[%s5614 + $0x5c] sm:$0x1] %v6185
      %v6187 = vld [vmem:[%s5614 + $0x60] sm:$0xf]
      %v6188 = vsel %vm5666, %v5953, %v6187
      %6189 = vst [vmem:[%s5614 + $0x60] sm:$0xf] %v6188
      %6190 = vst.msk [vmem:[%s5614 + $0x64] sm:$0xf] %vm5603, %v5962
      %v6191 = vld [vmem:[%s5614 + $0x68] sm:$0x1]
      %v6192 = vsel %vm5616, %v5963, %v6191
      %6193 = vst [vmem:[%s5614 + $0x68] sm:$0x1] %v6192
      %v6194 = vld [vmem:[%s5614 + $0x6c] sm:$0xf]
      %v6195 = vsel %vm5666, %v5970, %v6194
      %6196 = vst [vmem:[%s5614 + $0x6c] sm:$0xf] %v6195
      %6197 = vst.msk [vmem:[%s5614 + $0x70] sm:$0xf] %vm5603, %v5979
      %v6198 = vld [vmem:[%s5614 + $0x74] sm:$0x1]
      %v6199 = vsel %vm5616, %v5980, %v6198
      %6200 = vst [vmem:[%s5614 + $0x74] sm:$0x1] %v6199
      %v6201 = vld [vmem:[%s5614 + $0x78] sm:$0xf]
      %v6202 = vsel %vm5666, %v5987, %v6201
      %6203 = vst [vmem:[%s5614 + $0x78] sm:$0xf] %v6202
      %6204 = vst.msk [vmem:[%s5614 + $0x7c] sm:$0xf] %vm5603, %v5996
      %v6205 = vld [vmem:[%s5614 + $0x80] sm:$0x1]
      %v6206 = vsel %vm5616, %v5997, %v6205
      %6207 = vst [vmem:[%s5614 + $0x80] sm:$0x1] %v6206
      %v6208 = vld [vmem:[%s5614 + $0x84] sm:$0xf]
      %v6209 = vsel %vm5666, %v6004, %v6208
      %6210 = vst [vmem:[%s5614 + $0x84] sm:$0xf] %v6209
      %6211 = vst.msk [vmem:[%s5614 + $0x88] sm:$0xf] %vm5603, %v6013
      %v6212 = vld [vmem:[%s5614 + $0x8c] sm:$0x1]
      %v6213 = vsel %vm5616, %v6014, %v6212
      %6214 = vst [vmem:[%s5614 + $0x8c] sm:$0x1] %v6213
      %v6215 = vld [vmem:[%s5614 + $0x90] sm:$0xf]
      %v6216 = vsel %vm5666, %v6021, %v6215
      %6217 = vst [vmem:[%s5614 + $0x90] sm:$0xf] %v6216
      %6218 = vst.msk [vmem:[%s5614 + $0x94] sm:$0xf] %vm5603, %v6030
      %v6219 = vld [vmem:[%s5614 + $0x98] sm:$0x1]
      %v6220 = vsel %vm5616, %v6031, %v6219
      %6221 = vst [vmem:[%s5614 + $0x98] sm:$0x1] %v6220
      %v6222 = vld [vmem:[%s5614 + $0x9c] sm:$0xf]
      %v6223 = vsel %vm5666, %v6038, %v6222
      %6224 = vst [vmem:[%s5614 + $0x9c] sm:$0xf] %v6223
      %6225 = vst.msk [vmem:[%s5614 + $0xa0] sm:$0xf] %vm5603, %v6047
      %v6226 = vld [vmem:[%s5614 + $0xa4] sm:$0x1]
      %v6227 = vsel %vm5616, %v6048, %v6226
      %6228 = vst [vmem:[%s5614 + $0xa4] sm:$0x1] %v6227
      %v6229 = vld [vmem:[%s5614 + $0xa8] sm:$0xf]
      %v6230 = vsel %vm5666, %v6055, %v6229
      %6231 = vst [vmem:[%s5614 + $0xa8] sm:$0xf] %v6230
      %6232 = vst.msk [vmem:[%s5614 + $0xac] sm:$0xf] %vm5603, %v6064
      %v6233 = vld [vmem:[%s5614 + $0xb0] sm:$0x1]
      %v6234 = vsel %vm5616, %v6065, %v6233
      %6235 = vst [vmem:[%s5614 + $0xb0] sm:$0x1] %v6234
      %v6236 = vld [vmem:[%s5614 + $0xb4] sm:$0xf]
      %v6237 = vsel %vm5666, %v6072, %v6236
      %6238 = vst [vmem:[%s5614 + $0xb4] sm:$0xf] %v6237
      %6239 = vst.msk [vmem:[%s5614 + $0xb8] sm:$0xf] %vm5603, %v6081
      %v6240 = vld [vmem:[%s5614 + $0xbc] sm:$0x1]
      %v6241 = vsel %vm5616, %v6082, %v6240
      %6242 = vst [vmem:[%s5614 + $0xbc] sm:$0x1] %v6241
      %v6243 = vld [vmem:[#allocation3] sm:$0xf]
      %v6244 = vld [vmem:[#allocation3 + $0x4] sm:$0xf]
      %v6245 = vld [vmem:[#allocation3 + $0x8] sm:$0xf]
      %v6246 = vld [vmem:[#allocation3 + $0xc] sm:$0xf]
      %v6247 = vld [vmem:[#allocation3 + $0x10] sm:$0xf]
      %v6248 = vld [vmem:[#allocation3 + $0x14] sm:$0xf]
      %v6249 = vld [vmem:[#allocation3 + $0x18] sm:$0xf]
      %v6250 = vld [vmem:[#allocation3 + $0x1c] sm:$0xf]
      %v6251 = vld [vmem:[#allocation3 + $0x20] sm:$0xf]
      %v6252 = vld [vmem:[#allocation3 + $0x24] sm:$0xf]
      %v6253 = vld [vmem:[#allocation3 + $0x28] sm:$0xf]
      %v6254 = vld [vmem:[#allocation3 + $0x2c] sm:$0xf]
      %v6255 = vld [vmem:[#allocation3 + $0x30] sm:$0xf]
      %v6256 = vld [vmem:[#allocation3 + $0x34] sm:$0xf]
      %v6257 = vld [vmem:[#allocation3 + $0x38] sm:$0xf]
      %v6258 = vld [vmem:[#allocation3 + $0x3c] sm:$0xf]
      %v6259 = vld [vmem:[#allocation3 + $0x40] sm:$0xf]
      %v6260 = vld [vmem:[#allocation3 + $0x44] sm:$0xf]
      %v6261 = vld [vmem:[#allocation3 + $0x48] sm:$0xf]
      %v6262 = vld [vmem:[#allocation3 + $0x4c] sm:$0xf]
      %v6263 = vld [vmem:[#allocation3 + $0x50] sm:$0xf]
      %v6264 = vld [vmem:[#allocation3 + $0x54] sm:$0xf]
      %v6265 = vld [vmem:[#allocation3 + $0x58] sm:$0xf]
      %v6266 = vld [vmem:[#allocation3 + $0x5c] sm:$0xf]
      %v6267 = vld [vmem:[#allocation3 + $0x60] sm:$0xf]
      %v6268 = vld [vmem:[#allocation3 + $0x64] sm:$0xf]
      %v6269 = vld [vmem:[#allocation3 + $0x68] sm:$0xf]
      %v6270 = vld [vmem:[#allocation3 + $0x6c] sm:$0xf]
      %v6271 = vld [vmem:[#allocation3 + $0x70] sm:$0xf]
      %v6272 = vld [vmem:[#allocation3 + $0x74] sm:$0xf]
      %v6273 = vld [vmem:[#allocation3 + $0x78] sm:$0xf]
      %v6274 = vld [vmem:[#allocation3 + $0x7c] sm:$0xf]
      %v6275 = vld [vmem:[#allocation3 + $0x80] sm:$0xf]
      %v6276 = vld [vmem:[#allocation3 + $0x84] sm:$0xf]
      %v6277 = vld [vmem:[#allocation3 + $0x88] sm:$0xf]
      %v6278 = vld [vmem:[#allocation3 + $0x8c] sm:$0xf]
      %v6279 = vld [vmem:[#allocation3 + $0x90] sm:$0xf]
      %v6280 = vld [vmem:[#allocation3 + $0x94] sm:$0xf]
      %v6281 = vld [vmem:[#allocation3 + $0x98] sm:$0xf]
      %v6282 = vld [vmem:[#allocation3 + $0x9c] sm:$0xf]
      %v6283 = vld [vmem:[#allocation3 + $0xa0] sm:$0xf]
      %v6284 = vld [vmem:[#allocation3 + $0xa4] sm:$0xf]
      %v6285 = vld [vmem:[#allocation3 + $0xa8] sm:$0xf]
      %v6286 = vld [vmem:[#allocation3 + $0xac] sm:$0xf]
      %v6287 = vld [vmem:[#allocation3 + $0xb0] sm:$0xf]
      %v6288 = vld [vmem:[#allocation3 + $0xb4] sm:$0xf]
      %v6289 = vld [vmem:[#allocation3 + $0xb8] sm:$0xf]
      %v6290 = vld [vmem:[#allocation3 + $0xbc] sm:$0xf]
      %v6291 = vld [vmem:[#allocation3 + $0xc0] sm:$0xf]
      %v6292 = vld [vmem:[#allocation3 + $0xc4] sm:$0xf]
      %v6293 = vld [vmem:[#allocation3 + $0xc8] sm:$0xf]
      %v6294 = vld [vmem:[#allocation3 + $0xcc] sm:$0xf]
      %v6295 = vld [vmem:[#allocation3 + $0xd0] sm:$0xf]
      %v6296 = vld [vmem:[#allocation3 + $0xd4] sm:$0xf]
      %v6297 = vld [vmem:[#allocation3 + $0xd8] sm:$0xf]
      %v6298 = vld [vmem:[%s6] sm:$0x3]
      %v6300 = vsel %vm1315, %v6298, 0
      %6302 = vmatprep.subr.bf16.mxu0 0
      %6303 = vmatpush1.bf16.msra.mxu0 %v6300
      %6304 = vmatprep.subr.bf16.mxu0 0
      %6305 = vmatpush1.bf16.msra.mxu0 0
      %6306 = vmatprep.subr.bf16.mxu0 0
      %6307 = vmatpush1.bf16.msra.mxu0 0
      %6308 = vmatprep.subr.bf16.mxu0 0
      %6309 = vmatpush1.bf16.msra.mxu0 0
      %6310 = vmatprep.subr.bf16.mxu0 0
      %6311 = vmatpush1.bf16.msra.mxu0 0
      %6312 = vmatprep.subr.bf16.mxu0 0
      %6313 = vmatpush1.bf16.msra.mxu0 0
      %6314 = vmatprep.subr.bf16.mxu0 0
      %6315 = vmatpush1.bf16.msra.mxu0 0
      %6316 = vmatprep.subr.bf16.mxu0 0
      %6317 = vmatpush1.bf16.msra.mxu0 0
      %6318 = vmatprep.subr.bf16.mxu0 0
      %6319 = vmatpush1.bf16.msra.mxu0 0
      %6320 = vmatprep.subr.bf16.mxu0 0
      %6321 = vmatpush1.bf16.msra.mxu0 0
      %6322 = vmatprep.subr.bf16.mxu0 0
      %6323 = vmatpush1.bf16.msra.mxu0 0
      %6324 = vmatprep.subr.bf16.mxu0 0
      %6325 = vmatpush1.bf16.msra.mxu0 0
      %6326 = vmatprep.subr.bf16.mxu0 0
      %6327 = vmatpush1.bf16.msra.mxu0 0
      %6328 = vmatprep.subr.bf16.mxu0 0
      %6329 = vmatpush1.bf16.msra.mxu0 0
      %6330 = vmatprep.subr.bf16.mxu0 0
      %6331 = vmatpush1.bf16.msra.mxu0 0
      %6332 = vmatprep.subr.bf16.mxu0 0
      %6333 = vmatpush1.bf16.msra.mxu0 0
      %6334 = vmatprep.mubr.bf16.mxu0 0
      %6335 = vmatmul.mubr.bf16.gmra.mrb[0].mxu0 %v3363
      %v6336 = vpop.f32.mrb[0].mxu0
      %v6337 = vadd.f32 0.0, %v6336
      %v6338 = vpop.f32.mrb[0].mxu0
      %v6339 = vpop.f32.mrb[0].mxu0
      %v6340 = vadd.f32 0.0, %v6339
      %v6341 = vpop.f32.mrb[0].mxu0
      %6342 = vmatprep.mubr.bf16.mxu0 0
      %6343 = vmatmul.mubr.bf16.gmra.mrb[0].mxu0 %v3366
      %v6344 = vpop.f32.mrb[0].mxu0
      %v6345 = vadd.f32 0.0, %v6344
      %v6346 = vpop.f32.mrb[0].mxu0
      %v6347 = vpop.f32.mrb[0].mxu0
      %v6348 = vadd.f32 0.0, %v6347
      %v6349 = vpop.f32.mrb[0].mxu0
      %6350 = vmatprep.mubr.bf16.mxu0 0
      %6351 = vmatmul.mubr.bf16.gmra.mrb[0].mxu0 %v3369
      %v6352 = vpop.f32.mrb[0].mxu0
      %v6353 = vadd.f32 0.0, %v6352
      %v6354 = vpop.f32.mrb[0].mxu0
      %v6355 = vpop.f32.mrb[0].mxu0
      %v6356 = vadd.f32 0.0, %v6355
      %v6357 = vpop.f32.mrb[0].mxu0
      %6358 = vmatprep.mubr.bf16.mxu0 0
      %6359 = vmatmul.mubr.bf16.gmra.mrb[0].mxu0 %v3372
      %v6360 = vpop.f32.mrb[0].mxu0
      %v6361 = vadd.f32 0.0, %v6360
      %v6362 = vpop.f32.mrb[0].mxu0
      %v6363 = vpop.f32.mrb[0].mxu0
      %v6364 = vadd.f32 0.0, %v6363
      %v6365 = vpop.f32.mrb[0].mxu0
      %6366 = vmatprep.mubr.bf16.mxu0 0
      %6367 = vmatmul.mubr.bf16.gmra.mrb[0].mxu0 %v3375
      %v6368 = vpop.f32.mrb[0].mxu0
      %v6369 = vadd.f32 0.0, %v6368
      %v6370 = vpop.f32.mrb[0].mxu0
      %v6371 = vpop.f32.mrb[0].mxu0
      %v6372 = vadd.f32 0.0, %v6371
      %v6373 = vpop.f32.mrb[0].mxu0
      %6374 = vmatprep.mubr.bf16.mxu0 0
      %6375 = vmatmul.mubr.bf16.gmra.mrb[0].mxu0 %v3378
      %v6376 = vpop.f32.mrb[0].mxu0
      %v6377 = vadd.f32 0.0, %v6376
      %v6378 = vpop.f32.mrb[0].mxu0
      %v6379 = vpop.f32.mrb[0].mxu0
      %v6380 = vadd.f32 0.0, %v6379
      %v6381 = vpop.f32.mrb[0].mxu0
      %6382 = vmatprep.mubr.bf16.mxu0 0
      %6383 = vmatmul.mubr.bf16.gmra.mrb[0].mxu0 %v3381
      %v6384 = vpop.f32.mrb[0].mxu0
      %v6385 = vadd.f32 0.0, %v6384
      %v6386 = vpop.f32.mrb[0].mxu0
      %v6387 = vpop.f32.mrb[0].mxu0
      %v6388 = vadd.f32 0.0, %v6387
      %v6389 = vpop.f32.mrb[0].mxu0
      %6390 = vmatprep.mubr.bf16.mxu0 0
      %6391 = vmatmul.mubr.bf16.gmra.mrb[0].mxu0 %v3384
      %v6392 = vpop.f32.mrb[0].mxu0
      %v6393 = vadd.f32 0.0, %v6392
      %v6394 = vpop.f32.mrb[0].mxu0
      %v6395 = vpop.f32.mrb[0].mxu0
      %v6396 = vadd.f32 0.0, %v6395
      %v6397 = vpop.f32.mrb[0].mxu0
      %6398 = vmatprep.mubr.bf16.mxu0 0
      %6399 = vmatmul.mubr.bf16.gmra.mrb[0].mxu0 %v3387
      %v6400 = vpop.f32.mrb[0].mxu0
      %v6401 = vadd.f32 0.0, %v6400
      %v6402 = vpop.f32.mrb[0].mxu0
      %v6403 = vpop.f32.mrb[0].mxu0
      %v6404 = vadd.f32 0.0, %v6403
      %v6405 = vpop.f32.mrb[0].mxu0
      %6406 = vmatprep.mubr.bf16.mxu0 0
      %6407 = vmatmul.mubr.bf16.gmra.mrb[0].mxu0 %v3390
      %v6408 = vpop.f32.mrb[0].mxu0
      %v6409 = vadd.f32 0.0, %v6408
      %v6410 = vpop.f32.mrb[0].mxu0
      %v6411 = vpop.f32.mrb[0].mxu0
      %v6412 = vadd.f32 0.0, %v6411
      %v6413 = vpop.f32.mrb[0].mxu0
      %6414 = vmatprep.mubr.bf16.mxu0 0
      %6415 = vmatmul.mubr.bf16.gmra.mrb[0].mxu0 %v3393
      %v6416 = vpop.f32.mrb[0].mxu0
      %v6417 = vadd.f32 0.0, %v6416
      %v6418 = vpop.f32.mrb[0].mxu0
      %v6419 = vpop.f32.mrb[0].mxu0
      %v6420 = vadd.f32 0.0, %v6419
      %v6421 = vpop.f32.mrb[0].mxu0
      %6422 = vmatprep.mubr.bf16.mxu0 0
      %6423 = vmatmul.mubr.bf16.gmra.mrb[0].mxu0 %v3396
      %v6424 = vpop.f32.mrb[0].mxu0
      %v6425 = vadd.f32 0.0, %v6424
      %v6426 = vpop.f32.mrb[0].mxu0
      %v6427 = vpop.f32.mrb[0].mxu0
      %v6428 = vadd.f32 0.0, %v6427
      %v6429 = vpop.f32.mrb[0].mxu0
      %6430 = vmatprep.mubr.bf16.mxu0 0
      %6431 = vmatmul.mubr.bf16.gmra.mrb[0].mxu0 %v3399
      %v6432 = vpop.f32.mrb[0].mxu0
      %v6433 = vadd.f32 0.0, %v6432
      %v6434 = vpop.f32.mrb[0].mxu0
      %v6435 = vpop.f32.mrb[0].mxu0
      %v6436 = vadd.f32 0.0, %v6435
      %v6437 = vpop.f32.mrb[0].mxu0
      %6438 = vmatprep.mubr.bf16.mxu0 0
      %6439 = vmatmul.mubr.bf16.gmra.mrb[0].mxu0 %v3402
      %v6440 = vpop.f32.mrb[0].mxu0
      %v6441 = vadd.f32 0.0, %v6440
      %v6442 = vpop.f32.mrb[0].mxu0
      %v6443 = vpop.f32.mrb[0].mxu0
      %v6444 = vadd.f32 0.0, %v6443
      %v6445 = vpop.f32.mrb[0].mxu0
      %6446 = vmatprep.mubr.bf16.mxu0 0
      %6447 = vmatmul.mubr.bf16.gmra.mrb[0].mxu0 %v3405
      %v6448 = vpop.f32.mrb[0].mxu0
      %v6449 = vadd.f32 0.0, %v6448
      %v6450 = vpop.f32.mrb[0].mxu0
      %v6451 = vpop.f32.mrb[0].mxu0
      %v6452 = vadd.f32 0.0, %v6451
      %v6453 = vpop.f32.mrb[0].mxu0
      %6454 = vmatprep.mubr.bf16.mxu0 0
      %6455 = vmatmul.mubr.bf16.gmra.mrb[0].mxu0 %v3408
      %v6456 = vpop.f32.mrb[0].mxu0
      %v6457 = vadd.f32 0.0, %v6456
      %v6458 = vpop.f32.mrb[0].mxu0
      %v6459 = vpop.f32.mrb[0].mxu0
      %v6460 = vadd.f32 0.0, %v6459
      %v6461 = vpop.f32.mrb[0].mxu0
      %6462 = vmatprep.mubr.bf16.mxu0 0
      %6463 = vmatmul.mubr.bf16.gmra.mrb[0].mxu0 %v3411
      %v6464 = vpop.f32.mrb[0].mxu0
      %v6465 = vadd.f32 0.0, %v6464
      %v6466 = vpop.f32.mrb[0].mxu0
      %v6467 = vpop.f32.mrb[0].mxu0
      %v6468 = vadd.f32 0.0, %v6467
      %v6469 = vpop.f32.mrb[0].mxu0
      %6470 = vmatprep.mubr.bf16.mxu0 0
      %6471 = vmatmul.mubr.bf16.gmra.mrb[0].mxu0 %v3414
      %v6472 = vpop.f32.mrb[0].mxu0
      %v6473 = vadd.f32 0.0, %v6472
      %v6474 = vpop.f32.mrb[0].mxu0
      %v6475 = vpop.f32.mrb[0].mxu0
      %v6476 = vadd.f32 0.0, %v6475
      %v6477 = vpop.f32.mrb[0].mxu0
      %6478 = vmatprep.mubr.bf16.mxu0 0
      %6479 = vmatmul.mubr.bf16.gmra.mrb[0].mxu0 %v3417
      %v6480 = vpop.f32.mrb[0].mxu0
      %v6481 = vadd.f32 0.0, %v6480
      %v6482 = vpop.f32.mrb[0].mxu0
      %v6483 = vpop.f32.mrb[0].mxu0
      %v6484 = vadd.f32 0.0, %v6483
      %v6485 = vpop.f32.mrb[0].mxu0
      %6486 = vmatprep.mubr.bf16.mxu0 0
      %6487 = vmatmul.mubr.bf16.gmra.mrb[0].mxu0 %v3420
      %v6488 = vpop.f32.mrb[0].mxu0
      %v6489 = vadd.f32 0.0, %v6488
      %v6490 = vpop.f32.mrb[0].mxu0
      %v6491 = vpop.f32.mrb[0].mxu0
      %v6492 = vadd.f32 0.0, %v6491
      %v6493 = vpop.f32.mrb[0].mxu0
      %6494 = vmatprep.mubr.bf16.mxu0 0
      %6495 = vmatmul.mubr.bf16.gmra.mrb[0].mxu0 %v3423
      %v6496 = vpop.f32.mrb[0].mxu0
      %v6497 = vadd.f32 0.0, %v6496
      %v6498 = vpop.f32.mrb[0].mxu0
      %v6499 = vpop.f32.mrb[0].mxu0
      %v6500 = vadd.f32 0.0, %v6499
      %v6501 = vpop.f32.mrb[0].mxu0
      %6502 = vmatprep.mubr.bf16.mxu0 0
      %6503 = vmatmul.mubr.bf16.gmra.mrb[0].mxu0 %v3426
      %v6504 = vpop.f32.mrb[0].mxu0
      %v6505 = vadd.f32 0.0, %v6504
      %v6506 = vpop.f32.mrb[0].mxu0
      %v6507 = vpop.f32.mrb[0].mxu0
      %v6508 = vadd.f32 0.0, %v6507
      %v6509 = vpop.f32.mrb[0].mxu0
      %6510 = vmatprep.mubr.bf16.mxu0 0
      %6511 = vmatmul.mubr.bf16.gmra.mrb[0].mxu0 %v3429
      %v6512 = vpop.f32.mrb[0].mxu0
      %v6513 = vadd.f32 0.0, %v6512
      %v6514 = vpop.f32.mrb[0].mxu0
      %v6515 = vpop.f32.mrb[0].mxu0
      %v6516 = vadd.f32 0.0, %v6515
      %v6517 = vpop.f32.mrb[0].mxu0
      %6518 = vmatprep.mubr.bf16.mxu0 0
      %6519 = vmatmul.mubr.bf16.gmra.mrb[0].mxu0 %v3432
      %v6520 = vpop.f32.mrb[0].mxu0
      %v6521 = vadd.f32 0.0, %v6520
      %v6522 = vpop.f32.mrb[0].mxu0
      %v6523 = vpop.f32.mrb[0].mxu0
      %v6524 = vadd.f32 0.0, %v6523
      %v6525 = vpop.f32.mrb[0].mxu0
      %6526 = vdwg.mxu0
      %6527 = vst.msk [vmem:[#allocation5] sm:$0xff] %vm1544, %v6337
      %6528 = vst.msk [vmem:[#allocation5 + $0x8] sm:$0xff] %vm1544, %v6340
      %6529 = vst.msk [vmem:[#allocation5 + $0x10] sm:$0xff] %vm1544, %v6345
      %6530 = vst.msk [vmem:[#allocation5 + $0x18] sm:$0xff] %vm1544, %v6348
      %6531 = vst.msk [vmem:[#allocation5 + $0x20] sm:$0xff] %vm1544, %v6353
      %6532 = vst.msk [vmem:[#allocation5 + $0x28] sm:$0xff] %vm1544, %v6356
      %6533 = vst.msk [vmem:[#allocation5 + $0x30] sm:$0xff] %vm1544, %v6361
      %6534 = vst.msk [vmem:[#allocation5 + $0x38] sm:$0xff] %vm1544, %v6364
      %6535 = vst.msk [vmem:[#allocation5 + $0x40] sm:$0xff] %vm1544, %v6369
      %6536 = vst.msk [vmem:[#allocation5 + $0x48] sm:$0xff] %vm1544, %v6372
      %6537 = vst.msk [vmem:[#allocation5 + $0x50] sm:$0xff] %vm1544, %v6377
      %6538 = vst.msk [vmem:[#allocation5 + $0x58] sm:$0xff] %vm1544, %v6380
      %6539 = vst.msk [vmem:[#allocation5 + $0x60] sm:$0xff] %vm1544, %v6385
      %6540 = vst.msk [vmem:[#allocation5 + $0x68] sm:$0xff] %vm1544, %v6388
      %6541 = vst.msk [vmem:[#allocation5 + $0x70] sm:$0xff] %vm1544, %v6393
      %6542 = vst.msk [vmem:[#allocation5 + $0x78] sm:$0xff] %vm1544, %v6396
      %6543 = vst.msk [vmem:[#allocation5 + $0x80] sm:$0xff] %vm1544, %v6401
      %6544 = vst.msk [vmem:[#allocation5 + $0x88] sm:$0xff] %vm1544, %v6404
      %6545 = vst.msk [vmem:[#allocation5 + $0x90] sm:$0xff] %vm1544, %v6409
      %6546 = vst.msk [vmem:[#allocation5 + $0x98] sm:$0xff] %vm1544, %v6412
      %6547 = vst.msk [vmem:[#allocation5 + $0xa0] sm:$0xff] %vm1544, %v6417
      %6548 = vst.msk [vmem:[#allocation5 + $0xa8] sm:$0xff] %vm1544, %v6420
      %6549 = vst.msk [vmem:[#allocation5 + $0xb0] sm:$0xff] %vm1544, %v6425
      %6550 = vst.msk [vmem:[#allocation5 + $0xb8] sm:$0xff] %vm1544, %v6428
      %6551 = vst.msk [vmem:[#allocation5 + $0xc0] sm:$0xff] %vm1544, %v6433
      %6552 = vst.msk [vmem:[#allocation5 + $0xc8] sm:$0xff] %vm1544, %v6436
      %6553 = vst.msk [vmem:[#allocation5 + $0xd0] sm:$0xff] %vm1544, %v6441
      %6554 = vst.msk [vmem:[#allocation5 + $0xd8] sm:$0xff] %vm1544, %v6444
      %6555 = vst.msk [vmem:[#allocation5 + $0xe0] sm:$0xff] %vm1544, %v6449
      %6556 = vst.msk [vmem:[#allocation5 + $0xe8] sm:$0xff] %vm1544, %v6452
      %6557 = vst.msk [vmem:[#allocation5 + $0xf0] sm:$0xff] %vm1544, %v6457
      %6558 = vst.msk [vmem:[#allocation5 + $0xf8] sm:$0xff] %vm1544, %v6460
      %6559 = vst.msk [vmem:[#allocation5 + $0x100] sm:$0xff] %vm1544, %v6465
      %6560 = vst.msk [vmem:[#allocation5 + $0x108] sm:$0xff] %vm1544, %v6468
      %6561 = vst.msk [vmem:[#allocation5 + $0x110] sm:$0xff] %vm1544, %v6473
      %6562 = vst.msk [vmem:[#allocation5 + $0x118] sm:$0xff] %vm1544, %v6476
      %6563 = vst.msk [vmem:[#allocation5 + $0x120] sm:$0xff] %vm1544, %v6481
      %6564 = vst.msk [vmem:[#allocation5 + $0x128] sm:$0xff] %vm1544, %v6484
      %6565 = vst.msk [vmem:[#allocation5 + $0x130] sm:$0xff] %vm1544, %v6489
      %6566 = vst.msk [vmem:[#allocation5 + $0x138] sm:$0xff] %vm1544, %v6492
      %6567 = vst.msk [vmem:[#allocation5 + $0x140] sm:$0xff] %vm1544, %v6497
      %6568 = vst.msk [vmem:[#allocation5 + $0x148] sm:$0xff] %vm1544, %v6500
      %6569 = vst.msk [vmem:[#allocation5 + $0x150] sm:$0xff] %vm1544, %v6505
      %6570 = vst.msk [vmem:[#allocation5 + $0x158] sm:$0xff] %vm1544, %v6508
      %6571 = vst.msk [vmem:[#allocation5 + $0x160] sm:$0xff] %vm1544, %v6513
      %6572 = vst.msk [vmem:[#allocation5 + $0x168] sm:$0xff] %vm1544, %v6516
      %6573 = vst.msk [vmem:[#allocation5 + $0x170] sm:$0xff] %vm1544, %v6521
      %6574 = vst.msk [vmem:[#allocation5 + $0x178] sm:$0xff] %vm1544, %v6524
      %v6575 = vld [vmem:[%s5] sm:$0xf]
      %v6624 = vunpack.c.l.b16 %v6243
      %v6625 = vunpack.c.l.b16 %v6244
      %v6626 = vunpack.c.l.b16 %v6245
      %v6627 = vunpack.c.l.b16 %v6246
      %v6628 = vunpack.c.l.b16 %v6247
      %v6629 = vunpack.c.l.b16 %v6248
      %v6630 = vunpack.c.l.b16 %v6249
      %v6631 = vunpack.c.l.b16 %v6250
      %v6632 = vunpack.c.l.b16 %v6251
      %v6633 = vunpack.c.l.b16 %v6252
      %v6634 = vunpack.c.l.b16 %v6253
      %v6635 = vunpack.c.l.b16 %v6254
      %v6636 = vunpack.c.l.b16 %v6255
      %v6637 = vunpack.c.l.b16 %v6256
      %v6638 = vunpack.c.l.b16 %v6257
      %v6639 = vunpack.c.l.b16 %v6258
      %v6640 = vunpack.c.l.b16 %v6259
      %v6641 = vunpack.c.l.b16 %v6260
      %v6642 = vunpack.c.l.b16 %v6261
      %v6643 = vunpack.c.l.b16 %v6262
      %v6644 = vunpack.c.l.b16 %v6263
      %v6645 = vunpack.c.l.b16 %v6264
      %v6646 = vunpack.c.l.b16 %v6265
      %v6647 = vunpack.c.l.b16 %v6266
      %v6648 = vunpack.c.l.b16 %v6267
      %v6649 = vunpack.c.l.b16 %v6268
      %v6650 = vunpack.c.l.b16 %v6269
      %v6651 = vunpack.c.l.b16 %v6270
      %v6652 = vunpack.c.l.b16 %v6271
      %v6653 = vunpack.c.l.b16 %v6272
      %v6654 = vunpack.c.l.b16 %v6273
      %v6655 = vunpack.c.l.b16 %v6274
      %v6656 = vunpack.c.l.b16 %v6275
      %v6657 = vunpack.c.l.b16 %v6276
      %v6658 = vunpack.c.l.b16 %v6277
      %v6659 = vunpack.c.l.b16 %v6278
      %v6660 = vunpack.c.l.b16 %v6279
      %v6661 = vunpack.c.l.b16 %v6280
      %v6662 = vunpack.c.l.b16 %v6281
      %v6663 = vunpack.c.l.b16 %v6282
      %v6664 = vunpack.c.l.b16 %v6283
      %v6665 = vunpack.c.l.b16 %v6284
      %v6666 = vunpack.c.l.b16 %v6285
      %v6667 = vunpack.c.l.b16 %v6286
      %v6668 = vunpack.c.l.b16 %v6287
      %v6669 = vunpack.c.l.b16 %v6288
      %v6670 = vunpack.c.l.b16 %v6289
      %v6671 = vunpack.c.l.b16 %v6290
      %v6672 = vpack.c.b16 %v6625, %v6624
      %v6673 = vpack.c.b16 %v6627, %v6626
      %v6674 = vpack.c.b16 %v6629, %v6628
      %v6675 = vpack.c.b16 %v6631, %v6630
      %v6676 = vpack.c.b16 %v6633, %v6632
      %v6677 = vpack.c.b16 %v6635, %v6634
      %v6678 = vpack.c.b16 %v6637, %v6636
      %v6679 = vpack.c.b16 %v6639, %v6638
      %v6680 = vpack.c.b16 %v6641, %v6640
      %v6681 = vpack.c.b16 %v6643, %v6642
      %v6682 = vpack.c.b16 %v6645, %v6644
      %v6683 = vpack.c.b16 %v6647, %v6646
      %v6684 = vpack.c.b16 %v6649, %v6648
      %v6685 = vpack.c.b16 %v6651, %v6650
      %v6686 = vpack.c.b16 %v6653, %v6652
      %v6687 = vpack.c.b16 %v6655, %v6654
      %v6688 = vpack.c.b16 %v6657, %v6656
      %v6689 = vpack.c.b16 %v6659, %v6658
      %v6690 = vpack.c.b16 %v6661, %v6660
      %v6691 = vpack.c.b16 %v6663, %v6662
      %v6692 = vpack.c.b16 %v6665, %v6664
      %v6693 = vpack.c.b16 %v6667, %v6666
      %v6694 = vpack.c.b16 %v6669, %v6668
      %v6695 = vpack.c.b16 %v6671, %v6670
      %v6697 = vsel %vm1544, %v6672, 0
      %v6700 = vsel %vm1544, %v6673, 0
      %v6703 = vsel %vm1544, %v6674, 0
      %v6706 = vsel %vm1544, %v6675, 0
      %v6709 = vsel %vm1544, %v6676, 0
      %v6712 = vsel %vm1544, %v6677, 0
      %v6715 = vsel %vm1544, %v6678, 0
      %v6718 = vsel %vm1544, %v6679, 0
      %v6721 = vsel %vm1544, %v6680, 0
      %v6724 = vsel %vm1544, %v6681, 0
      %v6727 = vsel %vm1544, %v6682, 0
      %v6730 = vsel %vm1544, %v6683, 0
      %v6733 = vsel %vm1544, %v6684, 0
      %v6736 = vsel %vm1544, %v6685, 0
      %v6739 = vsel %vm1544, %v6686, 0
      %v6742 = vsel %vm1544, %v6687, 0
      %v6745 = vsel %vm1544, %v6688, 0
      %v6748 = vsel %vm1544, %v6689, 0
      %v6751 = vsel %vm1544, %v6690, 0
      %v6754 = vsel %vm1544, %v6691, 0
      %v6757 = vsel %vm1544, %v6692, 0
      %v6760 = vsel %vm1544, %v6693, 0
      %v6763 = vsel %vm1544, %v6694, 0
      %v6766 = vsel %vm1544, %v6695, 0
      %vm6768 = vcmask 1043456
      %v6770 = vsel %vm6768, %v6575, 0
      %6772 = vmatprep.subr.bf16.mxu0 0
      %6773 = vmatpush1.bf16.msra.mxu0 %v6770
      %6774 = vmatprep.subr.bf16.mxu0 0
      %6775 = vmatpush1.bf16.msra.mxu0 0
      %6776 = vmatprep.subr.bf16.mxu0 0
      %6777 = vmatpush1.bf16.msra.mxu0 0
      %6778 = vmatprep.subr.bf16.mxu0 0
      %6779 = vmatpush1.bf16.msra.mxu0 0
      %6780 = vmatprep.subr.bf16.mxu0 0
      %6781 = vmatpush1.bf16.msra.mxu0 0
      %6782 = vmatprep.subr.bf16.mxu0 0
      %6783 = vmatpush1.bf16.msra.mxu0 0
      %6784 = vmatprep.subr.bf16.mxu0 0
      %6785 = vmatpush1.bf16.msra.mxu0 0
      %6786 = vmatprep.subr.bf16.mxu0 0
      %6787 = vmatpush1.bf16.msra.mxu0 0
      %6788 = vmatprep.subr.bf16.mxu0 0
      %6789 = vmatpush1.bf16.msra.mxu0 0
      %6790 = vmatprep.subr.bf16.mxu0 0
      %6791 = vmatpush1.bf16.msra.mxu0 0
      %6792 = vmatprep.subr.bf16.mxu0 0
      %6793 = vmatpush1.bf16.msra.mxu0 0
      %6794 = vmatprep.subr.bf16.mxu0 0
      %6795 = vmatpush1.bf16.msra.mxu0 0
      %6796 = vmatprep.subr.bf16.mxu0 0
      %6797 = vmatpush1.bf16.msra.mxu0 0
      %6798 = vmatprep.subr.bf16.mxu0 0
      %6799 = vmatpush1.bf16.msra.mxu0 0
      %6800 = vmatprep.subr.bf16.mxu0 0
      %6801 = vmatpush1.bf16.msra.mxu0 0
      %6802 = vmatprep.subr.bf16.mxu0 0
      %6803 = vmatpush1.bf16.msra.mxu0 0
      %6804 = vmatprep.mubr.bf16.mxu0 0
      %6805 = vmatmul.mubr.bf16.gmra.mrb[0].mxu0 %v6697
      %v6806 = vpop.f32.mrb[0].mxu0
      %v6807 = vadd.f32 0.0, %v6806
      %v6808 = vpop.f32.mrb[0].mxu0
      %v6809 = vpop.f32.mrb[0].mxu0
      %v6810 = vadd.f32 0.0, %v6809
      %v6811 = vpop.f32.mrb[0].mxu0
      %6812 = vmatprep.mubr.bf16.mxu0 0
      %6813 = vmatmul.mubr.bf16.gmra.mrb[0].mxu0 %v6700
      %v6814 = vpop.f32.mrb[0].mxu0
      %v6815 = vadd.f32 0.0, %v6814
      %v6816 = vpop.f32.mrb[0].mxu0
      %v6817 = vpop.f32.mrb[0].mxu0
      %v6818 = vadd.f32 0.0, %v6817
      %v6819 = vpop.f32.mrb[0].mxu0
      %6820 = vmatprep.mubr.bf16.mxu0 0
      %6821 = vmatmul.mubr.bf16.gmra.mrb[0].mxu0 %v6703
      %v6822 = vpop.f32.mrb[0].mxu0
      %v6823 = vadd.f32 0.0, %v6822
      %v6824 = vpop.f32.mrb[0].mxu0
      %v6825 = vpop.f32.mrb[0].mxu0
      %v6826 = vadd.f32 0.0, %v6825
      %v6827 = vpop.f32.mrb[0].mxu0
      %6828 = vmatprep.mubr.bf16.mxu0 0
      %6829 = vmatmul.mubr.bf16.gmra.mrb[0].mxu0 %v6706
      %v6830 = vpop.f32.mrb[0].mxu0
      %v6831 = vadd.f32 0.0, %v6830
      %v6832 = vpop.f32.mrb[0].mxu0
      %v6833 = vpop.f32.mrb[0].mxu0
      %v6834 = vadd.f32 0.0, %v6833
      %v6835 = vpop.f32.mrb[0].mxu0
      %6836 = vmatprep.mubr.bf16.mxu0 0
      %6837 = vmatmul.mubr.bf16.gmra.mrb[0].mxu0 %v6709
      %v6838 = vpop.f32.mrb[0].mxu0
      %v6839 = vadd.f32 0.0, %v6838
      %v6840 = vpop.f32.mrb[0].mxu0
      %v6841 = vpop.f32.mrb[0].mxu0
      %v6842 = vadd.f32 0.0, %v6841
      %v6843 = vpop.f32.mrb[0].mxu0
      %6844 = vmatprep.mubr.bf16.mxu0 0
      %6845 = vmatmul.mubr.bf16.gmra.mrb[0].mxu0 %v6712
      %v6846 = vpop.f32.mrb[0].mxu0
      %v6847 = vadd.f32 0.0, %v6846
      %v6848 = vpop.f32.mrb[0].mxu0
      %v6849 = vpop.f32.mrb[0].mxu0
      %v6850 = vadd.f32 0.0, %v6849
      %v6851 = vpop.f32.mrb[0].mxu0
      %6852 = vmatprep.mubr.bf16.mxu0 0
      %6853 = vmatmul.mubr.bf16.gmra.mrb[0].mxu0 %v6715
      %v6854 = vpop.f32.mrb[0].mxu0
      %v6855 = vadd.f32 0.0, %v6854
      %v6856 = vpop.f32.mrb[0].mxu0
      %v6857 = vpop.f32.mrb[0].mxu0
      %v6858 = vadd.f32 0.0, %v6857
      %v6859 = vpop.f32.mrb[0].mxu0
      %6860 = vmatprep.mubr.bf16.mxu0 0
      %6861 = vmatmul.mubr.bf16.gmra.mrb[0].mxu0 %v6718
      %v6862 = vpop.f32.mrb[0].mxu0
      %v6863 = vadd.f32 0.0, %v6862
      %v6864 = vpop.f32.mrb[0].mxu0
      %v6865 = vpop.f32.mrb[0].mxu0
      %v6866 = vadd.f32 0.0, %v6865
      %v6867 = vpop.f32.mrb[0].mxu0
      %6868 = vmatprep.mubr.bf16.mxu0 0
      %6869 = vmatmul.mubr.bf16.gmra.mrb[0].mxu0 %v6721
      %v6870 = vpop.f32.mrb[0].mxu0
      %v6871 = vadd.f32 0.0, %v6870
      %v6872 = vpop.f32.mrb[0].mxu0
      %v6873 = vpop.f32.mrb[0].mxu0
      %v6874 = vadd.f32 0.0, %v6873
      %v6875 = vpop.f32.mrb[0].mxu0
      %6876 = vmatprep.mubr.bf16.mxu0 0
      %6877 = vmatmul.mubr.bf16.gmra.mrb[0].mxu0 %v6724
      %v6878 = vpop.f32.mrb[0].mxu0
      %v6879 = vadd.f32 0.0, %v6878
      %v6880 = vpop.f32.mrb[0].mxu0
      %v6881 = vpop.f32.mrb[0].mxu0
      %v6882 = vadd.f32 0.0, %v6881
      %v6883 = vpop.f32.mrb[0].mxu0
      %6884 = vmatprep.mubr.bf16.mxu0 0
      %6885 = vmatmul.mubr.bf16.gmra.mrb[0].mxu0 %v6727
      %v6886 = vpop.f32.mrb[0].mxu0
      %v6887 = vadd.f32 0.0, %v6886
      %v6888 = vpop.f32.mrb[0].mxu0
      %v6889 = vpop.f32.mrb[0].mxu0
      %v6890 = vadd.f32 0.0, %v6889
      %v6891 = vpop.f32.mrb[0].mxu0
      %6892 = vmatprep.mubr.bf16.mxu0 0
      %6893 = vmatmul.mubr.bf16.gmra.mrb[0].mxu0 %v6730
      %v6894 = vpop.f32.mrb[0].mxu0
      %v6895 = vadd.f32 0.0, %v6894
      %v6896 = vpop.f32.mrb[0].mxu0
      %v6897 = vpop.f32.mrb[0].mxu0
      %v6898 = vadd.f32 0.0, %v6897
      %v6899 = vpop.f32.mrb[0].mxu0
      %6900 = vmatprep.mubr.bf16.mxu0 0
      %6901 = vmatmul.mubr.bf16.gmra.mrb[0].mxu0 %v6733
      %v6902 = vpop.f32.mrb[0].mxu0
      %v6903 = vadd.f32 0.0, %v6902
      %v6904 = vpop.f32.mrb[0].mxu0
      %v6905 = vpop.f32.mrb[0].mxu0
      %v6906 = vadd.f32 0.0, %v6905
      %v6907 = vpop.f32.mrb[0].mxu0
      %6908 = vmatprep.mubr.bf16.mxu0 0
      %6909 = vmatmul.mubr.bf16.gmra.mrb[0].mxu0 %v6736
      %v6910 = vpop.f32.mrb[0].mxu0
      %v6911 = vadd.f32 0.0, %v6910
      %v6912 = vpop.f32.mrb[0].mxu0
      %v6913 = vpop.f32.mrb[0].mxu0
      %v6914 = vadd.f32 0.0, %v6913
      %v6915 = vpop.f32.mrb[0].mxu0
      %6916 = vmatprep.mubr.bf16.mxu0 0
      %6917 = vmatmul.mubr.bf16.gmra.mrb[0].mxu0 %v6739
      %v6918 = vpop.f32.mrb[0].mxu0
      %v6919 = vadd.f32 0.0, %v6918
      %v6920 = vpop.f32.mrb[0].mxu0
      %v6921 = vpop.f32.mrb[0].mxu0
      %v6922 = vadd.f32 0.0, %v6921
      %v6923 = vpop.f32.mrb[0].mxu0
      %6924 = vmatprep.mubr.bf16.mxu0 0
      %6925 = vmatmul.mubr.bf16.gmra.mrb[0].mxu0 %v6742
      %v6926 = vpop.f32.mrb[0].mxu0
      %v6927 = vadd.f32 0.0, %v6926
      %v6928 = vpop.f32.mrb[0].mxu0
      %v6929 = vpop.f32.mrb[0].mxu0
      %v6930 = vadd.f32 0.0, %v6929
      %v6931 = vpop.f32.mrb[0].mxu0
      %6932 = vmatprep.mubr.bf16.mxu0 0
      %6933 = vmatmul.mubr.bf16.gmra.mrb[0].mxu0 %v6745
      %v6934 = vpop.f32.mrb[0].mxu0
      %v6935 = vadd.f32 0.0, %v6934
      %v6936 = vpop.f32.mrb[0].mxu0
      %v6937 = vpop.f32.mrb[0].mxu0
      %v6938 = vadd.f32 0.0, %v6937
      %v6939 = vpop.f32.mrb[0].mxu0
      %6940 = vmatprep.mubr.bf16.mxu0 0
      %6941 = vmatmul.mubr.bf16.gmra.mrb[0].mxu0 %v6748
      %v6942 = vpop.f32.mrb[0].mxu0
      %v6943 = vadd.f32 0.0, %v6942
      %v6944 = vpop.f32.mrb[0].mxu0
      %v6945 = vpop.f32.mrb[0].mxu0
      %v6946 = vadd.f32 0.0, %v6945
      %v6947 = vpop.f32.mrb[0].mxu0
      %6948 = vmatprep.mubr.bf16.mxu0 0
      %6949 = vmatmul.mubr.bf16.gmra.mrb[0].mxu0 %v6751
      %v6950 = vpop.f32.mrb[0].mxu0
      %v6951 = vadd.f32 0.0, %v6950
      %v6952 = vpop.f32.mrb[0].mxu0
      %v6953 = vpop.f32.mrb[0].mxu0
      %v6954 = vadd.f32 0.0, %v6953
      %v6955 = vpop.f32.mrb[0].mxu0
      %6956 = vmatprep.mubr.bf16.mxu0 0
      %6957 = vmatmul.mubr.bf16.gmra.mrb[0].mxu0 %v6754
      %v6958 = vpop.f32.mrb[0].mxu0
      %v6959 = vadd.f32 0.0, %v6958
      %v6960 = vpop.f32.mrb[0].mxu0
      %v6961 = vpop.f32.mrb[0].mxu0
      %v6962 = vadd.f32 0.0, %v6961
      %v6963 = vpop.f32.mrb[0].mxu0
      %6964 = vmatprep.mubr.bf16.mxu0 0
      %6965 = vmatmul.mubr.bf16.gmra.mrb[0].mxu0 %v6757
      %v6966 = vpop.f32.mrb[0].mxu0
      %v6967 = vadd.f32 0.0, %v6966
      %v6968 = vpop.f32.mrb[0].mxu0
      %v6969 = vpop.f32.mrb[0].mxu0
      %v6970 = vadd.f32 0.0, %v6969
      %v6971 = vpop.f32.mrb[0].mxu0
      %6972 = vmatprep.mubr.bf16.mxu0 0
      %6973 = vmatmul.mubr.bf16.gmra.mrb[0].mxu0 %v6760
      %v6974 = vpop.f32.mrb[0].mxu0
      %v6975 = vadd.f32 0.0, %v6974
      %v6976 = vpop.f32.mrb[0].mxu0
      %v6977 = vpop.f32.mrb[0].mxu0
      %v6978 = vadd.f32 0.0, %v6977
      %v6979 = vpop.f32.mrb[0].mxu0
      %6980 = vmatprep.mubr.bf16.mxu0 0
      %6981 = vmatmul.mubr.bf16.gmra.mrb[0].mxu0 %v6763
      %v6982 = vpop.f32.mrb[0].mxu0
      %v6983 = vadd.f32 0.0, %v6982
      %v6984 = vpop.f32.mrb[0].mxu0
      %v6985 = vpop.f32.mrb[0].mxu0
      %v6986 = vadd.f32 0.0, %v6985
      %v6987 = vpop.f32.mrb[0].mxu0
      %6988 = vmatprep.mubr.bf16.mxu0 0
      %6989 = vmatmul.mubr.bf16.gmra.mrb[0].mxu0 %v6766
      %v6990 = vpop.f32.mrb[0].mxu0
      %v6991 = vadd.f32 0.0, %v6990
      %v6992 = vpop.f32.mrb[0].mxu0
      %v6993 = vpop.f32.mrb[0].mxu0
      %v6994 = vadd.f32 0.0, %v6993
      %v6995 = vpop.f32.mrb[0].mxu0
      %6996 = vdwg.mxu0
      %v6997 = vld [vmem:[#allocation5] sm:$0xff]
      %v6998 = vld [vmem:[#allocation5 + $0x8] sm:$0xff]
      %v6999 = vld [vmem:[#allocation5 + $0x10] sm:$0xff]
      %v7000 = vld [vmem:[#allocation5 + $0x18] sm:$0xff]
      %v7001 = vld [vmem:[#allocation5 + $0x20] sm:$0xff]
      %v7002 = vld [vmem:[#allocation5 + $0x28] sm:$0xff]
      %v7003 = vld [vmem:[#allocation5 + $0x30] sm:$0xff]
      %v7004 = vld [vmem:[#allocation5 + $0x38] sm:$0xff]
      %v7005 = vld [vmem:[#allocation5 + $0x40] sm:$0xff]
      %v7006 = vld [vmem:[#allocation5 + $0x48] sm:$0xff]
      %v7007 = vld [vmem:[#allocation5 + $0x50] sm:$0xff]
      %v7008 = vld [vmem:[#allocation5 + $0x58] sm:$0xff]
      %v7009 = vld [vmem:[#allocation5 + $0x60] sm:$0xff]
      %v7010 = vld [vmem:[#allocation5 + $0x68] sm:$0xff]
      %v7011 = vld [vmem:[#allocation5 + $0x70] sm:$0xff]
      %v7012 = vld [vmem:[#allocation5 + $0x78] sm:$0xff]
      %v7013 = vld [vmem:[#allocation5 + $0x80] sm:$0xff]
      %v7014 = vld [vmem:[#allocation5 + $0x88] sm:$0xff]
      %v7015 = vld [vmem:[#allocation5 + $0x90] sm:$0xff]
      %v7016 = vld [vmem:[#allocation5 + $0x98] sm:$0xff]
      %v7017 = vld [vmem:[#allocation5 + $0xa0] sm:$0xff]
      %v7018 = vld [vmem:[#allocation5 + $0xa8] sm:$0xff]
      %v7019 = vld [vmem:[#allocation5 + $0xb0] sm:$0xff]
      %v7020 = vld [vmem:[#allocation5 + $0xb8] sm:$0xff]
      %v7021 = vld [vmem:[#allocation5 + $0xc0] sm:$0xff]
      %v7022 = vld [vmem:[#allocation5 + $0xc8] sm:$0xff]
      %v7023 = vld [vmem:[#allocation5 + $0xd0] sm:$0xff]
      %v7024 = vld [vmem:[#allocation5 + $0xd8] sm:$0xff]
      %v7025 = vld [vmem:[#allocation5 + $0xe0] sm:$0xff]
      %v7026 = vld [vmem:[#allocation5 + $0xe8] sm:$0xff]
      %v7027 = vld [vmem:[#allocation5 + $0xf0] sm:$0xff]
      %v7028 = vld [vmem:[#allocation5 + $0xf8] sm:$0xff]
      %v7029 = vld [vmem:[#allocation5 + $0x100] sm:$0xff]
      %v7030 = vld [vmem:[#allocation5 + $0x108] sm:$0xff]
      %v7031 = vld [vmem:[#allocation5 + $0x110] sm:$0xff]
      %v7032 = vld [vmem:[#allocation5 + $0x118] sm:$0xff]
      %v7033 = vld [vmem:[#allocation5 + $0x120] sm:$0xff]
      %v7034 = vld [vmem:[#allocation5 + $0x128] sm:$0xff]
      %v7035 = vld [vmem:[#allocation5 + $0x130] sm:$0xff]
      %v7036 = vld [vmem:[#allocation5 + $0x138] sm:$0xff]
      %v7037 = vld [vmem:[#allocation5 + $0x140] sm:$0xff]
      %v7038 = vld [vmem:[#allocation5 + $0x148] sm:$0xff]
      %v7039 = vld [vmem:[#allocation5 + $0x150] sm:$0xff]
      %v7040 = vld [vmem:[#allocation5 + $0x158] sm:$0xff]
      %v7041 = vld [vmem:[#allocation5 + $0x160] sm:$0xff]
      %v7042 = vld [vmem:[#allocation5 + $0x168] sm:$0xff]
      %v7043 = vld [vmem:[#allocation5 + $0x170] sm:$0xff]
      %v7044 = vld [vmem:[#allocation5 + $0x178] sm:$0xff]
      %v7045 = vadd.f32 %v6997, %v6807
      %v7046 = vadd.f32 %v6998, %v6810
      %v7047 = vadd.f32 %v6999, %v6815
      %v7048 = vadd.f32 %v7000, %v6818
      %v7049 = vadd.f32 %v7001, %v6823
      %v7050 = vadd.f32 %v7002, %v6826
      %v7051 = vadd.f32 %v7003, %v6831
      %v7052 = vadd.f32 %v7004, %v6834
      %v7053 = vadd.f32 %v7005, %v6839
      %v7054 = vadd.f32 %v7006, %v6842
      %v7055 = vadd.f32 %v7007, %v6847
      %v7056 = vadd.f32 %v7008, %v6850
      %v7057 = vadd.f32 %v7009, %v6855
      %v7058 = vadd.f32 %v7010, %v6858
      %v7059 = vadd.f32 %v7011, %v6863
      %v7060 = vadd.f32 %v7012, %v6866
      %v7061 = vadd.f32 %v7013, %v6871
      %v7062 = vadd.f32 %v7014, %v6874
      %v7063 = vadd.f32 %v7015, %v6879
      %v7064 = vadd.f32 %v7016, %v6882
      %v7065 = vadd.f32 %v7017, %v6887
      %v7066 = vadd.f32 %v7018, %v6890
      %v7067 = vadd.f32 %v7019, %v6895
      %v7068 = vadd.f32 %v7020, %v6898
      %v7069 = vadd.f32 %v7021, %v6903
      %v7070 = vadd.f32 %v7022, %v6906
      %v7071 = vadd.f32 %v7023, %v6911
      %v7072 = vadd.f32 %v7024, %v6914
      %v7073 = vadd.f32 %v7025, %v6919
      %v7074 = vadd.f32 %v7026, %v6922
      %v7075 = vadd.f32 %v7027, %v6927
      %v7076 = vadd.f32 %v7028, %v6930
      %v7077 = vadd.f32 %v7029, %v6935
      %v7078 = vadd.f32 %v7030, %v6938
      %v7079 = vadd.f32 %v7031, %v6943
      %v7080 = vadd.f32 %v7032, %v6946
      %v7081 = vadd.f32 %v7033, %v6951
      %v7082 = vadd.f32 %v7034, %v6954
      %v7083 = vadd.f32 %v7035, %v6959
      %v7084 = vadd.f32 %v7036, %v6962
      %v7085 = vadd.f32 %v7037, %v6967
      %v7086 = vadd.f32 %v7038, %v6970
      %v7087 = vadd.f32 %v7039, %v6975
      %v7088 = vadd.f32 %v7040, %v6978
      %v7089 = vadd.f32 %v7041, %v6983
      %v7090 = vadd.f32 %v7042, %v6986
      %v7091 = vadd.f32 %v7043, %v6991
      %v7092 = vadd.f32 %v7044, %v6994
      %7093 = vst.msk [vmem:[#allocation5] sm:$0xff] %vm1544, %v7045
      %7094 = vst.msk [vmem:[#allocation5 + $0x8] sm:$0xff] %vm1544, %v7046
      %7095 = vst.msk [vmem:[#allocation5 + $0x10] sm:$0xff] %vm1544, %v7047
      %7096 = vst.msk [vmem:[#allocation5 + $0x18] sm:$0xff] %vm1544, %v7048
      %7097 = vst.msk [vmem:[#allocation5 + $0x20] sm:$0xff] %vm1544, %v7049
      %7098 = vst.msk [vmem:[#allocation5 + $0x28] sm:$0xff] %vm1544, %v7050
      %7099 = vst.msk [vmem:[#allocation5 + $0x30] sm:$0xff] %vm1544, %v7051
      %7100 = vst.msk [vmem:[#allocation5 + $0x38] sm:$0xff] %vm1544, %v7052
      %7101 = vst.msk [vmem:[#allocation5 + $0x40] sm:$0xff] %vm1544, %v7053
      %7102 = vst.msk [vmem:[#allocation5 + $0x48] sm:$0xff] %vm1544, %v7054
      %7103 = vst.msk [vmem:[#allocation5 + $0x50] sm:$0xff] %vm1544, %v7055
      %7104 = vst.msk [vmem:[#allocation5 + $0x58] sm:$0xff] %vm1544, %v7056
      %7105 = vst.msk [vmem:[#allocation5 + $0x60] sm:$0xff] %vm1544, %v7057
      %7106 = vst.msk [vmem:[#allocation5 + $0x68] sm:$0xff] %vm1544, %v7058
      %7107 = vst.msk [vmem:[#allocation5 + $0x70] sm:$0xff] %vm1544, %v7059
      %7108 = vst.msk [vmem:[#allocation5 + $0x78] sm:$0xff] %vm1544, %v7060
      %7109 = vst.msk [vmem:[#allocation5 + $0x80] sm:$0xff] %vm1544, %v7061
      %7110 = vst.msk [vmem:[#allocation5 + $0x88] sm:$0xff] %vm1544, %v7062
      %7111 = vst.msk [vmem:[#allocation5 + $0x90] sm:$0xff] %vm1544, %v7063
      %7112 = vst.msk [vmem:[#allocation5 + $0x98] sm:$0xff] %vm1544, %v7064
      %7113 = vst.msk [vmem:[#allocation5 + $0xa0] sm:$0xff] %vm1544, %v7065
      %7114 = vst.msk [vmem:[#allocation5 + $0xa8] sm:$0xff] %vm1544, %v7066
      %7115 = vst.msk [vmem:[#allocation5 + $0xb0] sm:$0xff] %vm1544, %v7067
      %7116 = vst.msk [vmem:[#allocation5 + $0xb8] sm:$0xff] %vm1544, %v7068
      %7117 = vst.msk [vmem:[#allocation5 + $0xc0] sm:$0xff] %vm1544, %v7069
      %7118 = vst.msk [vmem:[#allocation5 + $0xc8] sm:$0xff] %vm1544, %v7070
      %7119 = vst.msk [vmem:[#allocation5 + $0xd0] sm:$0xff] %vm1544, %v7071
      %7120 = vst.msk [vmem:[#allocation5 + $0xd8] sm:$0xff] %vm1544, %v7072
      %7121 = vst.msk [vmem:[#allocation5 + $0xe0] sm:$0xff] %vm1544, %v7073
      %7122 = vst.msk [vmem:[#allocation5 + $0xe8] sm:$0xff] %vm1544, %v7074
      %7123 = vst.msk [vmem:[#allocation5 + $0xf0] sm:$0xff] %vm1544, %v7075
      %7124 = vst.msk [vmem:[#allocation5 + $0xf8] sm:$0xff] %vm1544, %v7076
      %7125 = vst.msk [vmem:[#allocation5 + $0x100] sm:$0xff] %vm1544, %v7077
      %7126 = vst.msk [vmem:[#allocation5 + $0x108] sm:$0xff] %vm1544, %v7078
      %7127 = vst.msk [vmem:[#allocation5 + $0x110] sm:$0xff] %vm1544, %v7079
      %7128 = vst.msk [vmem:[#allocation5 + $0x118] sm:$0xff] %vm1544, %v7080
      %7129 = vst.msk [vmem:[#allocation5 + $0x120] sm:$0xff] %vm1544, %v7081
      %7130 = vst.msk [vmem:[#allocation5 + $0x128] sm:$0xff] %vm1544, %v7082
      %7131 = vst.msk [vmem:[#allocation5 + $0x130] sm:$0xff] %vm1544, %v7083
      %7132 = vst.msk [vmem:[#allocation5 + $0x138] sm:$0xff] %vm1544, %v7084
      %7133 = vst.msk [vmem:[#allocation5 + $0x140] sm:$0xff] %vm1544, %v7085
      %7134 = vst.msk [vmem:[#allocation5 + $0x148] sm:$0xff] %vm1544, %v7086
      %7135 = vst.msk [vmem:[#allocation5 + $0x150] sm:$0xff] %vm1544, %v7087
      %7136 = vst.msk [vmem:[#allocation5 + $0x158] sm:$0xff] %vm1544, %v7088
      %7137 = vst.msk [vmem:[#allocation5 + $0x160] sm:$0xff] %vm1544, %v7089
      %7138 = vst.msk [vmem:[#allocation5 + $0x168] sm:$0xff] %vm1544, %v7090
      %7139 = vst.msk [vmem:[#allocation5 + $0x170] sm:$0xff] %vm1544, %v7091
      %7140 = vst.msk [vmem:[#allocation5 + $0x178] sm:$0xff] %vm1544, %v7092
      %s7141 = scalar_lea.vmem %s5, 4
      %v7142 = vld [vmem:[%s7141] sm:$0xf]
      %v7144 = vunpack.c.l.b16 %v6291
      %v7145 = vpack.c.b16 %v7144, %v7144
      %v7146 = vshrl.u32 %v6672, 16
      %v7148 = vshll.u32 %v6672, 16
      %v7150 = vrot.slane %v7148, 1
      %v7151 = vor.u32 %v7146, %v7150
      %v7152 = vshll.u32 %v6673, 16
      %v7154 = vrot.slane %v7152, 1
      %v7155 = vsel %vm1598, %v7151, %v7154
      %v7156 = vshrl.u32 %v6673, 16
      %v7158 = vor.u32 %v7156, %v7154
      %v7159 = vshll.u32 %v6674, 16
      %v7161 = vrot.slane %v7159, 1
      %v7162 = vsel %vm1598, %v7158, %v7161
      %v7163 = vshrl.u32 %v6674, 16
      %v7165 = vor.u32 %v7163, %v7161
      %v7166 = vshll.u32 %v6675, 16
      %v7168 = vrot.slane %v7166, 1
      %v7169 = vsel %vm1598, %v7165, %v7168
      %v7170 = vshrl.u32 %v6675, 16
      %v7172 = vor.u32 %v7170, %v7168
      %v7173 = vshll.u32 %v6676, 16
      %v7175 = vrot.slane %v7173, 1
      %v7176 = vsel %vm1598, %v7172, %v7175
      %v7177 = vshrl.u32 %v6676, 16
      %v7179 = vor.u32 %v7177, %v7175
      %v7180 = vshll.u32 %v6677, 16
      %v7182 = vrot.slane %v7180, 1
      %v7183 = vsel %vm1598, %v7179, %v7182
      %v7184 = vshrl.u32 %v6677, 16
      %v7186 = vor.u32 %v7184, %v7182
      %v7187 = vshll.u32 %v6678, 16
      %v7189 = vrot.slane %v7187, 1
      %v7190 = vsel %vm1598, %v7186, %v7189
      %v7191 = vshrl.u32 %v6678, 16
      %v7193 = vor.u32 %v7191, %v7189
      %v7194 = vshll.u32 %v6679, 16
      %v7196 = vrot.slane %v7194, 1
      %v7197 = vsel %vm1598, %v7193, %v7196
      %v7198 = vshrl.u32 %v6679, 16
      %v7200 = vor.u32 %v7198, %v7196
      %v7201 = vshll.u32 %v6680, 16
      %v7203 = vrot.slane %v7201, 1
      %v7204 = vsel %vm1598, %v7200, %v7203
      %v7205 = vshrl.u32 %v6680, 16
      %v7207 = vor.u32 %v7205, %v7203
      %v7208 = vshll.u32 %v6681, 16
      %v7210 = vrot.slane %v7208, 1
      %v7211 = vsel %vm1598, %v7207, %v7210
      %v7212 = vshrl.u32 %v6681, 16
      %v7214 = vor.u32 %v7212, %v7210
      %v7215 = vshll.u32 %v6682, 16
      %v7217 = vrot.slane %v7215, 1
      %v7218 = vsel %vm1598, %v7214, %v7217
      %v7219 = vshrl.u32 %v6682, 16
      %v7221 = vor.u32 %v7219, %v7217
      %v7222 = vshll.u32 %v6683, 16
      %v7224 = vrot.slane %v7222, 1
      %v7225 = vsel %vm1598, %v7221, %v7224
      %v7226 = vshrl.u32 %v6683, 16
      %v7228 = vor.u32 %v7226, %v7224
      %v7229 = vshll.u32 %v6684, 16
      %v7231 = vrot.slane %v7229, 1
      %v7232 = vsel %vm1598, %v7228, %v7231
      %v7233 = vshrl.u32 %v6684, 16
      %v7235 = vor.u32 %v7233, %v7231
      %v7236 = vshll.u32 %v6685, 16
      %v7238 = vrot.slane %v7236, 1
      %v7239 = vsel %vm1598, %v7235, %v7238
      %v7240 = vshrl.u32 %v6685, 16
      %v7242 = vor.u32 %v7240, %v7238
      %v7243 = vshll.u32 %v6686, 16
      %v7245 = vrot.slane %v7243, 1
      %v7246 = vsel %vm1598, %v7242, %v7245
      %v7247 = vshrl.u32 %v6686, 16
      %v7249 = vor.u32 %v7247, %v7245
      %v7250 = vshll.u32 %v6687, 16
      %v7252 = vrot.slane %v7250, 1
      %v7253 = vsel %vm1598, %v7249, %v7252
      %v7254 = vshrl.u32 %v6687, 16
      %v7256 = vor.u32 %v7254, %v7252
      %v7257 = vshll.u32 %v6688, 16
      %v7259 = vrot.slane %v7257, 1
      %v7260 = vsel %vm1598, %v7256, %v7259
      %v7261 = vshrl.u32 %v6688, 16
      %v7263 = vor.u32 %v7261, %v7259
      %v7264 = vshll.u32 %v6689, 16
      %v7266 = vrot.slane %v7264, 1
      %v7267 = vsel %vm1598, %v7263, %v7266
      %v7268 = vshrl.u32 %v6689, 16
      %v7270 = vor.u32 %v7268, %v7266
      %v7271 = vshll.u32 %v6690, 16
      %v7273 = vrot.slane %v7271, 1
      %v7274 = vsel %vm1598, %v7270, %v7273
      %v7275 = vshrl.u32 %v6690, 16
      %v7277 = vor.u32 %v7275, %v7273
      %v7278 = vshll.u32 %v6691, 16
      %v7280 = vrot.slane %v7278, 1
      %v7281 = vsel %vm1598, %v7277, %v7280
      %v7282 = vshrl.u32 %v6691, 16
      %v7284 = vor.u32 %v7282, %v7280
      %v7285 = vshll.u32 %v6692, 16
      %v7287 = vrot.slane %v7285, 1
      %v7288 = vsel %vm1598, %v7284, %v7287
      %v7289 = vshrl.u32 %v6692, 16
      %v7291 = vor.u32 %v7289, %v7287
      %v7292 = vshll.u32 %v6693, 16
      %v7294 = vrot.slane %v7292, 1
      %v7295 = vsel %vm1598, %v7291, %v7294
      %v7296 = vshrl.u32 %v6693, 16
      %v7298 = vor.u32 %v7296, %v7294
      %v7299 = vshll.u32 %v6694, 16
      %v7301 = vrot.slane %v7299, 1
      %v7302 = vsel %vm1598, %v7298, %v7301
      %v7303 = vshrl.u32 %v6694, 16
      %v7305 = vor.u32 %v7303, %v7301
      %v7306 = vshll.u32 %v6695, 16
      %v7308 = vrot.slane %v7306, 1
      %v7309 = vsel %vm1598, %v7305, %v7308
      %v7310 = vshrl.u32 %v6695, 16
      %v7312 = vor.u32 %v7310, %v7308
      %v7314 = vshll.u32 %v7145, 16
      %v7316 = vrot.slane %v7314, 1
      %v7317 = vsel %vm1598, %v7312, %v7316
      %v7319 = vsel %vm1544, %v7155, 0
      %v7322 = vsel %vm1544, %v7162, 0
      %v7325 = vsel %vm1544, %v7169, 0
      %v7328 = vsel %vm1544, %v7176, 0
      %v7331 = vsel %vm1544, %v7183, 0
      %v7334 = vsel %vm1544, %v7190, 0
      %v7337 = vsel %vm1544, %v7197, 0
      %v7340 = vsel %vm1544, %v7204, 0
      %v7343 = vsel %vm1544, %v7211, 0
      %v7346 = vsel %vm1544, %v7218, 0
      %v7349 = vsel %vm1544, %v7225, 0
      %v7352 = vsel %vm1544, %v7232, 0
      %v7355 = vsel %vm1544, %v7239, 0
      %v7358 = vsel %vm1544, %v7246, 0
      %v7361 = vsel %vm1544, %v7253, 0
      %v7364 = vsel %vm1544, %v7260, 0
      %v7367 = vsel %vm1544, %v7267, 0
      %v7370 = vsel %vm1544, %v7274, 0
      %v7373 = vsel %vm1544, %v7281, 0
      %v7376 = vsel %vm1544, %v7288, 0
      %v7379 = vsel %vm1544, %v7295, 0
      %v7382 = vsel %vm1544, %v7302, 0
      %v7385 = vsel %vm1544, %v7309, 0
      %v7388 = vsel %vm1544, %v7317, 0
      %v7391 = vsel %vm6768, %v7142, 0
      %7393 = vmatprep.subr.bf16.mxu0 0
      %7394 = vmatpush1.bf16.msra.mxu0 %v7391
      %7395 = vmatprep.subr.bf16.mxu0 0
      %7396 = vmatpush1.bf16.msra.mxu0 0
      %7397 = vmatprep.subr.bf16.mxu0 0
      %7398 = vmatpush1.bf16.msra.mxu0 0
      %7399 = vmatprep.subr.bf16.mxu0 0
      %7400 = vmatpush1.bf16.msra.mxu0 0
      %7401 = vmatprep.subr.bf16.mxu0 0
      %7402 = vmatpush1.bf16.msra.mxu0 0
      %7403 = vmatprep.subr.bf16.mxu0 0
      %7404 = vmatpush1.bf16.msra.mxu0 0
      %7405 = vmatprep.subr.bf16.mxu0 0
      %7406 = vmatpush1.bf16.msra.mxu0 0
      %7407 = vmatprep.subr.bf16.mxu0 0
      %7408 = vmatpush1.bf16.msra.mxu0 0
      %7409 = vmatprep.subr.bf16.mxu0 0
      %7410 = vmatpush1.bf16.msra.mxu0 0
      %7411 = vmatprep.subr.bf16.mxu0 0
      %7412 = vmatpush1.bf16.msra.mxu0 0
      %7413 = vmatprep.subr.bf16.mxu0 0
      %7414 = vmatpush1.bf16.msra.mxu0 0
      %7415 = vmatprep.subr.bf16.mxu0 0
      %7416 = vmatpush1.bf16.msra.mxu0 0
      %7417 = vmatprep.subr.bf16.mxu0 0
      %7418 = vmatpush1.bf16.msra.mxu0 0
      %7419 = vmatprep.subr.bf16.mxu0 0
      %7420 = vmatpush1.bf16.msra.mxu0 0
      %7421 = vmatprep.subr.bf16.mxu0 0
      %7422 = vmatpush1.bf16.msra.mxu0 0
      %7423 = vmatprep.subr.bf16.mxu0 0
      %7424 = vmatpush1.bf16.msra.mxu0 0
      %7425 = vmatprep.mubr.bf16.mxu0 0
      %7426 = vmatmul.mubr.bf16.gmra.mrb[0].mxu0 %v7319
      %v7427 = vpop.f32.mrb[0].mxu0
      %v7428 = vadd.f32 0.0, %v7427
      %v7429 = vpop.f32.mrb[0].mxu0
      %v7430 = vpop.f32.mrb[0].mxu0
      %v7431 = vadd.f32 0.0, %v7430
      %v7432 = vpop.f32.mrb[0].mxu0
      %7433 = vmatprep.mubr.bf16.mxu0 0
      %7434 = vmatmul.mubr.bf16.gmra.mrb[0].mxu0 %v7322
      %v7435 = vpop.f32.mrb[0].mxu0
      %v7436 = vadd.f32 0.0, %v7435
      %v7437 = vpop.f32.mrb[0].mxu0
      %v7438 = vpop.f32.mrb[0].mxu0
      %v7439 = vadd.f32 0.0, %v7438
      %v7440 = vpop.f32.mrb[0].mxu0
      %7441 = vmatprep.mubr.bf16.mxu0 0
      %7442 = vmatmul.mubr.bf16.gmra.mrb[0].mxu0 %v7325
      %v7443 = vpop.f32.mrb[0].mxu0
      %v7444 = vadd.f32 0.0, %v7443
      %v7445 = vpop.f32.mrb[0].mxu0
      %v7446 = vpop.f32.mrb[0].mxu0
      %v7447 = vadd.f32 0.0, %v7446
      %v7448 = vpop.f32.mrb[0].mxu0
      %7449 = vmatprep.mubr.bf16.mxu0 0
      %7450 = vmatmul.mubr.bf16.gmra.mrb[0].mxu0 %v7328
      %v7451 = vpop.f32.mrb[0].mxu0
      %v7452 = vadd.f32 0.0, %v7451
      %v7453 = vpop.f32.mrb[0].mxu0
      %v7454 = vpop.f32.mrb[0].mxu0
      %v7455 = vadd.f32 0.0, %v7454
      %v7456 = vpop.f32.mrb[0].mxu0
      %7457 = vmatprep.mubr.bf16.mxu0 0
      %7458 = vmatmul.mubr.bf16.gmra.mrb[0].mxu0 %v7331
      %v7459 = vpop.f32.mrb[0].mxu0
      %v7460 = vadd.f32 0.0, %v7459
      %v7461 = vpop.f32.mrb[0].mxu0
      %v7462 = vpop.f32.mrb[0].mxu0
      %v7463 = vadd.f32 0.0, %v7462
      %v7464 = vpop.f32.mrb[0].mxu0
      %7465 = vmatprep.mubr.bf16.mxu0 0
      %7466 = vmatmul.mubr.bf16.gmra.mrb[0].mxu0 %v7334
      %v7467 = vpop.f32.mrb[0].mxu0
      %v7468 = vadd.f32 0.0, %v7467
      %v7469 = vpop.f32.mrb[0].mxu0
      %v7470 = vpop.f32.mrb[0].mxu0
      %v7471 = vadd.f32 0.0, %v7470
      %v7472 = vpop.f32.mrb[0].mxu0
      %7473 = vmatprep.mubr.bf16.mxu0 0
      %7474 = vmatmul.mubr.bf16.gmra.mrb[0].mxu0 %v7337
      %v7475 = vpop.f32.mrb[0].mxu0
      %v7476 = vadd.f32 0.0, %v7475
      %v7477 = vpop.f32.mrb[0].mxu0
      %v7478 = vpop.f32.mrb[0].mxu0
      %v7479 = vadd.f32 0.0, %v7478
      %v7480 = vpop.f32.mrb[0].mxu0
      %7481 = vmatprep.mubr.bf16.mxu0 0
      %7482 = vmatmul.mubr.bf16.gmra.mrb[0].mxu0 %v7340
      %v7483 = vpop.f32.mrb[0].mxu0
      %v7484 = vadd.f32 0.0, %v7483
      %v7485 = vpop.f32.mrb[0].mxu0
      %v7486 = vpop.f32.mrb[0].mxu0
      %v7487 = vadd.f32 0.0, %v7486
      %v7488 = vpop.f32.mrb[0].mxu0
      %7489 = vmatprep.mubr.bf16.mxu0 0
      %7490 = vmatmul.mubr.bf16.gmra.mrb[0].mxu0 %v7343
      %v7491 = vpop.f32.mrb[0].mxu0
      %v7492 = vadd.f32 0.0, %v7491
      %v7493 = vpop.f32.mrb[0].mxu0
      %v7494 = vpop.f32.mrb[0].mxu0
      %v7495 = vadd.f32 0.0, %v7494
      %v7496 = vpop.f32.mrb[0].mxu0
      %7497 = vmatprep.mubr.bf16.mxu0 0
      %7498 = vmatmul.mubr.bf16.gmra.mrb[0].mxu0 %v7346
      %v7499 = vpop.f32.mrb[0].mxu0
      %v7500 = vadd.f32 0.0, %v7499
      %v7501 = vpop.f32.mrb[0].mxu0
      %v7502 = vpop.f32.mrb[0].mxu0
      %v7503 = vadd.f32 0.0, %v7502
      %v7504 = vpop.f32.mrb[0].mxu0
      %7505 = vmatprep.mubr.bf16.mxu0 0
      %7506 = vmatmul.mubr.bf16.gmra.mrb[0].mxu0 %v7349
      %v7507 = vpop.f32.mrb[0].mxu0
      %v7508 = vadd.f32 0.0, %v7507
      %v7509 = vpop.f32.mrb[0].mxu0
      %v7510 = vpop.f32.mrb[0].mxu0
      %v7511 = vadd.f32 0.0, %v7510
      %v7512 = vpop.f32.mrb[0].mxu0
      %7513 = vmatprep.mubr.bf16.mxu0 0
      %7514 = vmatmul.mubr.bf16.gmra.mrb[0].mxu0 %v7352
      %v7515 = vpop.f32.mrb[0].mxu0
      %v7516 = vadd.f32 0.0, %v7515
      %v7517 = vpop.f32.mrb[0].mxu0
      %v7518 = vpop.f32.mrb[0].mxu0
      %v7519 = vadd.f32 0.0, %v7518
      %v7520 = vpop.f32.mrb[0].mxu0
      %7521 = vmatprep.mubr.bf16.mxu0 0
      %7522 = vmatmul.mubr.bf16.gmra.mrb[0].mxu0 %v7355
      %v7523 = vpop.f32.mrb[0].mxu0
      %v7524 = vadd.f32 0.0, %v7523
      %v7525 = vpop.f32.mrb[0].mxu0
      %v7526 = vpop.f32.mrb[0].mxu0
      %v7527 = vadd.f32 0.0, %v7526
      %v7528 = vpop.f32.mrb[0].mxu0
      %7529 = vmatprep.mubr.bf16.mxu0 0
      %7530 = vmatmul.mubr.bf16.gmra.mrb[0].mxu0 %v7358
      %v7531 = vpop.f32.mrb[0].mxu0
      %v7532 = vadd.f32 0.0, %v7531
      %v7533 = vpop.f32.mrb[0].mxu0
      %v7534 = vpop.f32.mrb[0].mxu0
      %v7535 = vadd.f32 0.0, %v7534
      %v7536 = vpop.f32.mrb[0].mxu0
      %7537 = vmatprep.mubr.bf16.mxu0 0
      %7538 = vmatmul.mubr.bf16.gmra.mrb[0].mxu0 %v7361
      %v7539 = vpop.f32.mrb[0].mxu0
      %v7540 = vadd.f32 0.0, %v7539
      %v7541 = vpop.f32.mrb[0].mxu0
      %v7542 = vpop.f32.mrb[0].mxu0
      %v7543 = vadd.f32 0.0, %v7542
      %v7544 = vpop.f32.mrb[0].mxu0
      %7545 = vmatprep.mubr.bf16.mxu0 0
      %7546 = vmatmul.mubr.bf16.gmra.mrb[0].mxu0 %v7364
      %v7547 = vpop.f32.mrb[0].mxu0
      %v7548 = vadd.f32 0.0, %v7547
      %v7549 = vpop.f32.mrb[0].mxu0
      %v7550 = vpop.f32.mrb[0].mxu0
      %v7551 = vadd.f32 0.0, %v7550
      %v7552 = vpop.f32.mrb[0].mxu0
      %7553 = vmatprep.mubr.bf16.mxu0 0
      %7554 = vmatmul.mubr.bf16.gmra.mrb[0].mxu0 %v7367
      %v7555 = vpop.f32.mrb[0].mxu0
      %v7556 = vadd.f32 0.0, %v7555
      %v7557 = vpop.f32.mrb[0].mxu0
      %v7558 = vpop.f32.mrb[0].mxu0
      %v7559 = vadd.f32 0.0, %v7558
      %v7560 = vpop.f32.mrb[0].mxu0
      %7561 = vmatprep.mubr.bf16.mxu0 0
      %7562 = vmatmul.mubr.bf16.gmra.mrb[0].mxu0 %v7370
      %v7563 = vpop.f32.mrb[0].mxu0
      %v7564 = vadd.f32 0.0, %v7563
      %v7565 = vpop.f32.mrb[0].mxu0
      %v7566 = vpop.f32.mrb[0].mxu0
      %v7567 = vadd.f32 0.0, %v7566
      %v7568 = vpop.f32.mrb[0].mxu0
      %7569 = vmatprep.mubr.bf16.mxu0 0
      %7570 = vmatmul.mubr.bf16.gmra.mrb[0].mxu0 %v7373
      %v7571 = vpop.f32.mrb[0].mxu0
      %v7572 = vadd.f32 0.0, %v7571
      %v7573 = vpop.f32.mrb[0].mxu0
      %v7574 = vpop.f32.mrb[0].mxu0
      %v7575 = vadd.f32 0.0, %v7574
      %v7576 = vpop.f32.mrb[0].mxu0
      %7577 = vmatprep.mubr.bf16.mxu0 0
      %7578 = vmatmul.mubr.bf16.gmra.mrb[0].mxu0 %v7376
      %v7579 = vpop.f32.mrb[0].mxu0
      %v7580 = vadd.f32 0.0, %v7579
      %v7581 = vpop.f32.mrb[0].mxu0
      %v7582 = vpop.f32.mrb[0].mxu0
      %v7583 = vadd.f32 0.0, %v7582
      %v7584 = vpop.f32.mrb[0].mxu0
      %7585 = vmatprep.mubr.bf16.mxu0 0
      %7586 = vmatmul.mubr.bf16.gmra.mrb[0].mxu0 %v7379
      %v7587 = vpop.f32.mrb[0].mxu0
      %v7588 = vadd.f32 0.0, %v7587
      %v7589 = vpop.f32.mrb[0].mxu0
      %v7590 = vpop.f32.mrb[0].mxu0
      %v7591 = vadd.f32 0.0, %v7590
      %v7592 = vpop.f32.mrb[0].mxu0
      %7593 = vmatprep.mubr.bf16.mxu0 0
      %7594 = vmatmul.mubr.bf16.gmra.mrb[0].mxu0 %v7382
      %v7595 = vpop.f32.mrb[0].mxu0
      %v7596 = vadd.f32 0.0, %v7595
      %v7597 = vpop.f32.mrb[0].mxu0
      %v7598 = vpop.f32.mrb[0].mxu0
      %v7599 = vadd.f32 0.0, %v7598
      %v7600 = vpop.f32.mrb[0].mxu0
      %7601 = vmatprep.mubr.bf16.mxu0 0
      %7602 = vmatmul.mubr.bf16.gmra.mrb[0].mxu0 %v7385
      %v7603 = vpop.f32.mrb[0].mxu0
      %v7604 = vadd.f32 0.0, %v7603
      %v7605 = vpop.f32.mrb[0].mxu0
      %v7606 = vpop.f32.mrb[0].mxu0
      %v7607 = vadd.f32 0.0, %v7606
      %v7608 = vpop.f32.mrb[0].mxu0
      %7609 = vmatprep.mubr.bf16.mxu0 0
      %7610 = vmatmul.mubr.bf16.gmra.mrb[0].mxu0 %v7388
      %v7611 = vpop.f32.mrb[0].mxu0
      %v7612 = vadd.f32 0.0, %v7611
      %v7613 = vpop.f32.mrb[0].mxu0
      %v7614 = vpop.f32.mrb[0].mxu0
      %v7615 = vadd.f32 0.0, %v7614
      %v7616 = vpop.f32.mrb[0].mxu0
      %7617 = vdwg.mxu0
      %v7618 = vld [vmem:[#allocation5] sm:$0xff]
      %v7619 = vld [vmem:[#allocation5 + $0x8] sm:$0xff]
      %v7620 = vld [vmem:[#allocation5 + $0x10] sm:$0xff]
      %v7621 = vld [vmem:[#allocation5 + $0x18] sm:$0xff]
      %v7622 = vld [vmem:[#allocation5 + $0x20] sm:$0xff]
      %v7623 = vld [vmem:[#allocation5 + $0x28] sm:$0xff]
      %v7624 = vld [vmem:[#allocation5 + $0x30] sm:$0xff]
      %v7625 = vld [vmem:[#allocation5 + $0x38] sm:$0xff]
      %v7626 = vld [vmem:[#allocation5 + $0x40] sm:$0xff]
      %v7627 = vld [vmem:[#allocation5 + $0x48] sm:$0xff]
      %v7628 = vld [vmem:[#allocation5 + $0x50] sm:$0xff]
      %v7629 = vld [vmem:[#allocation5 + $0x58] sm:$0xff]
      %v7630 = vld [vmem:[#allocation5 + $0x60] sm:$0xff]
      %v7631 = vld [vmem:[#allocation5 + $0x68] sm:$0xff]
      %v7632 = vld [vmem:[#allocation5 + $0x70] sm:$0xff]
      %v7633 = vld [vmem:[#allocation5 + $0x78] sm:$0xff]
      %v7634 = vld [vmem:[#allocation5 + $0x80] sm:$0xff]
      %v7635 = vld [vmem:[#allocation5 + $0x88] sm:$0xff]
      %v7636 = vld [vmem:[#allocation5 + $0x90] sm:$0xff]
      %v7637 = vld [vmem:[#allocation5 + $0x98] sm:$0xff]
      %v7638 = vld [vmem:[#allocation5 + $0xa0] sm:$0xff]
      %v7639 = vld [vmem:[#allocation5 + $0xa8] sm:$0xff]
      %v7640 = vld [vmem:[#allocation5 + $0xb0] sm:$0xff]
      %v7641 = vld [vmem:[#allocation5 + $0xb8] sm:$0xff]
      %v7642 = vld [vmem:[#allocation5 + $0xc0] sm:$0xff]
      %v7643 = vld [vmem:[#allocation5 + $0xc8] sm:$0xff]
      %v7644 = vld [vmem:[#allocation5 + $0xd0] sm:$0xff]
      %v7645 = vld [vmem:[#allocation5 + $0xd8] sm:$0xff]
      %v7646 = vld [vmem:[#allocation5 + $0xe0] sm:$0xff]
      %v7647 = vld [vmem:[#allocation5 + $0xe8] sm:$0xff]
      %v7648 = vld [vmem:[#allocation5 + $0xf0] sm:$0xff]
      %v7649 = vld [vmem:[#allocation5 + $0xf8] sm:$0xff]
      %v7650 = vld [vmem:[#allocation5 + $0x100] sm:$0xff]
      %v7651 = vld [vmem:[#allocation5 + $0x108] sm:$0xff]
      %v7652 = vld [vmem:[#allocation5 + $0x110] sm:$0xff]
      %v7653 = vld [vmem:[#allocation5 + $0x118] sm:$0xff]
      %v7654 = vld [vmem:[#allocation5 + $0x120] sm:$0xff]
      %v7655 = vld [vmem:[#allocation5 + $0x128] sm:$0xff]
      %v7656 = vld [vmem:[#allocation5 + $0x130] sm:$0xff]
      %v7657 = vld [vmem:[#allocation5 + $0x138] sm:$0xff]
      %v7658 = vld [vmem:[#allocation5 + $0x140] sm:$0xff]
      %v7659 = vld [vmem:[#allocation5 + $0x148] sm:$0xff]
      %v7660 = vld [vmem:[#allocation5 + $0x150] sm:$0xff]
      %v7661 = vld [vmem:[#allocation5 + $0x158] sm:$0xff]
      %v7662 = vld [vmem:[#allocation5 + $0x160] sm:$0xff]
      %v7663 = vld [vmem:[#allocation5 + $0x168] sm:$0xff]
      %v7664 = vld [vmem:[#allocation5 + $0x170] sm:$0xff]
      %v7665 = vld [vmem:[#allocation5 + $0x178] sm:$0xff]
      %v7666 = vadd.f32 %v7618, %v7428
      %v7667 = vadd.f32 %v7619, %v7431
      %v7668 = vadd.f32 %v7620, %v7436
      %v7669 = vadd.f32 %v7621, %v7439
      %v7670 = vadd.f32 %v7622, %v7444
      %v7671 = vadd.f32 %v7623, %v7447
      %v7672 = vadd.f32 %v7624, %v7452
      %v7673 = vadd.f32 %v7625, %v7455
      %v7674 = vadd.f32 %v7626, %v7460
      %v7675 = vadd.f32 %v7627, %v7463
      %v7676 = vadd.f32 %v7628, %v7468
      %v7677 = vadd.f32 %v7629, %v7471
      %v7678 = vadd.f32 %v7630, %v7476
      %v7679 = vadd.f32 %v7631, %v7479
      %v7680 = vadd.f32 %v7632, %v7484
      %v7681 = vadd.f32 %v7633, %v7487
      %v7682 = vadd.f32 %v7634, %v7492
      %v7683 = vadd.f32 %v7635, %v7495
      %v7684 = vadd.f32 %v7636, %v7500
      %v7685 = vadd.f32 %v7637, %v7503
      %v7686 = vadd.f32 %v7638, %v7508
      %v7687 = vadd.f32 %v7639, %v7511
      %v7688 = vadd.f32 %v7640, %v7516
      %v7689 = vadd.f32 %v7641, %v7519
      %v7690 = vadd.f32 %v7642, %v7524
      %v7691 = vadd.f32 %v7643, %v7527
      %v7692 = vadd.f32 %v7644, %v7532
      %v7693 = vadd.f32 %v7645, %v7535
      %v7694 = vadd.f32 %v7646, %v7540
      %v7695 = vadd.f32 %v7647, %v7543
      %v7696 = vadd.f32 %v7648, %v7548
      %v7697 = vadd.f32 %v7649, %v7551
      %v7698 = vadd.f32 %v7650, %v7556
      %v7699 = vadd.f32 %v7651, %v7559
      %v7700 = vadd.f32 %v7652, %v7564
      %v7701 = vadd.f32 %v7653, %v7567
      %v7702 = vadd.f32 %v7654, %v7572
      %v7703 = vadd.f32 %v7655, %v7575
      %v7704 = vadd.f32 %v7656, %v7580
      %v7705 = vadd.f32 %v7657, %v7583
      %v7706 = vadd.f32 %v7658, %v7588
      %v7707 = vadd.f32 %v7659, %v7591
      %v7708 = vadd.f32 %v7660, %v7596
      %v7709 = vadd.f32 %v7661, %v7599
      %v7710 = vadd.f32 %v7662, %v7604
      %v7711 = vadd.f32 %v7663, %v7607
      %v7712 = vadd.f32 %v7664, %v7612
      %v7713 = vadd.f32 %v7665, %v7615
      %7714 = vst.msk [vmem:[#allocation5] sm:$0xff] %vm1544, %v7666
      %7715 = vst.msk [vmem:[#allocation5 + $0x8] sm:$0xff] %vm1544, %v7667
      %7716 = vst.msk [vmem:[#allocation5 + $0x10] sm:$0xff] %vm1544, %v7668
      %7717 = vst.msk [vmem:[#allocation5 + $0x18] sm:$0xff] %vm1544, %v7669
      %7718 = vst.msk [vmem:[#allocation5 + $0x20] sm:$0xff] %vm1544, %v7670
      %7719 = vst.msk [vmem:[#allocation5 + $0x28] sm:$0xff] %vm1544, %v7671
      %7720 = vst.msk [vmem:[#allocation5 + $0x30] sm:$0xff] %vm1544, %v7672
      %7721 = vst.msk [vmem:[#allocation5 + $0x38] sm:$0xff] %vm1544, %v7673
      %7722 = vst.msk [vmem:[#allocation5 + $0x40] sm:$0xff] %vm1544, %v7674
      %7723 = vst.msk [vmem:[#allocation5 + $0x48] sm:$0xff] %vm1544, %v7675
      %7724 = vst.msk [vmem:[#allocation5 + $0x50] sm:$0xff] %vm1544, %v7676
      %7725 = vst.msk [vmem:[#allocation5 + $0x58] sm:$0xff] %vm1544, %v7677
      %7726 = vst.msk [vmem:[#allocation5 + $0x60] sm:$0xff] %vm1544, %v7678
      %7727 = vst.msk [vmem:[#allocation5 + $0x68] sm:$0xff] %vm1544, %v7679
      %7728 = vst.msk [vmem:[#allocation5 + $0x70] sm:$0xff] %vm1544, %v7680
      %7729 = vst.msk [vmem:[#allocation5 + $0x78] sm:$0xff] %vm1544, %v7681
      %7730 = vst.msk [vmem:[#allocation5 + $0x80] sm:$0xff] %vm1544, %v7682
      %7731 = vst.msk [vmem:[#allocation5 + $0x88] sm:$0xff] %vm1544, %v7683
      %7732 = vst.msk [vmem:[#allocation5 + $0x90] sm:$0xff] %vm1544, %v7684
      %7733 = vst.msk [vmem:[#allocation5 + $0x98] sm:$0xff] %vm1544, %v7685
      %7734 = vst.msk [vmem:[#allocation5 + $0xa0] sm:$0xff] %vm1544, %v7686
      %7735 = vst.msk [vmem:[#allocation5 + $0xa8] sm:$0xff] %vm1544, %v7687
      %7736 = vst.msk [vmem:[#allocation5 + $0xb0] sm:$0xff] %vm1544, %v7688
      %7737 = vst.msk [vmem:[#allocation5 + $0xb8] sm:$0xff] %vm1544, %v7689
      %7738 = vst.msk [vmem:[#allocation5 + $0xc0] sm:$0xff] %vm1544, %v7690
      %7739 = vst.msk [vmem:[#allocation5 + $0xc8] sm:$0xff] %vm1544, %v7691
      %7740 = vst.msk [vmem:[#allocation5 + $0xd0] sm:$0xff] %vm1544, %v7692
      %7741 = vst.msk [vmem:[#allocation5 + $0xd8] sm:$0xff] %vm1544, %v7693
      %7742 = vst.msk [vmem:[#allocation5 + $0xe0] sm:$0xff] %vm1544, %v7694
      %7743 = vst.msk [vmem:[#allocation5 + $0xe8] sm:$0xff] %vm1544, %v7695
      %7744 = vst.msk [vmem:[#allocation5 + $0xf0] sm:$0xff] %vm1544, %v7696
      %7745 = vst.msk [vmem:[#allocation5 + $0xf8] sm:$0xff] %vm1544, %v7697
      %7746 = vst.msk [vmem:[#allocation5 + $0x100] sm:$0xff] %vm1544, %v7698
      %7747 = vst.msk [vmem:[#allocation5 + $0x108] sm:$0xff] %vm1544, %v7699
      %7748 = vst.msk [vmem:[#allocation5 + $0x110] sm:$0xff] %vm1544, %v7700
      %7749 = vst.msk [vmem:[#allocation5 + $0x118] sm:$0xff] %vm1544, %v7701
      %7750 = vst.msk [vmem:[#allocation5 + $0x120] sm:$0xff] %vm1544, %v7702
      %7751 = vst.msk [vmem:[#allocation5 + $0x128] sm:$0xff] %vm1544, %v7703
      %7752 = vst.msk [vmem:[#allocation5 + $0x130] sm:$0xff] %vm1544, %v7704
      %7753 = vst.msk [vmem:[#allocation5 + $0x138] sm:$0xff] %vm1544, %v7705
      %7754 = vst.msk [vmem:[#allocation5 + $0x140] sm:$0xff] %vm1544, %v7706
      %7755 = vst.msk [vmem:[#allocation5 + $0x148] sm:$0xff] %vm1544, %v7707
      %7756 = vst.msk [vmem:[#allocation5 + $0x150] sm:$0xff] %vm1544, %v7708
      %7757 = vst.msk [vmem:[#allocation5 + $0x158] sm:$0xff] %vm1544, %v7709
      %7758 = vst.msk [vmem:[#allocation5 + $0x160] sm:$0xff] %vm1544, %v7710
      %7759 = vst.msk [vmem:[#allocation5 + $0x168] sm:$0xff] %vm1544, %v7711
      %7760 = vst.msk [vmem:[#allocation5 + $0x170] sm:$0xff] %vm1544, %v7712
      %7761 = vst.msk [vmem:[#allocation5 + $0x178] sm:$0xff] %vm1544, %v7713
      %s7762 = scalar_lea.vmem %s5, 8
      %v7763 = vld [vmem:[%s7762] sm:$0xf]
      %v7764 = vrot.slane %v6672, 1
      %v7765 = vrot.slane %v6673, 1
      %v7766 = vsel %vm2217, %v7764, %v7765
      %v7767 = vrot.slane %v6674, 1
      %v7768 = vsel %vm2217, %v7765, %v7767
      %v7769 = vrot.slane %v6675, 1
      %v7770 = vsel %vm2217, %v7767, %v7769
      %v7771 = vrot.slane %v6676, 1
      %v7772 = vsel %vm2217, %v7769, %v7771
      %v7773 = vrot.slane %v6677, 1
      %v7774 = vsel %vm2217, %v7771, %v7773
      %v7775 = vrot.slane %v6678, 1
      %v7776 = vsel %vm2217, %v7773, %v7775
      %v7777 = vrot.slane %v6679, 1
      %v7778 = vsel %vm2217, %v7775, %v7777
      %v7779 = vrot.slane %v6680, 1
      %v7780 = vsel %vm2217, %v7777, %v7779
      %v7781 = vrot.slane %v6681, 1
      %v7782 = vsel %vm2217, %v7779, %v7781
      %v7783 = vrot.slane %v6682, 1
      %v7784 = vsel %vm2217, %v7781, %v7783
      %v7785 = vrot.slane %v6683, 1
      %v7786 = vsel %vm2217, %v7783, %v7785
      %v7787 = vrot.slane %v6684, 1
      %v7788 = vsel %vm2217, %v7785, %v7787
      %v7789 = vrot.slane %v6685, 1
      %v7790 = vsel %vm2217, %v7787, %v7789
      %v7791 = vrot.slane %v6686, 1
      %v7792 = vsel %vm2217, %v7789, %v7791
      %v7793 = vrot.slane %v6687, 1
      %v7794 = vsel %vm2217, %v7791, %v7793
      %v7795 = vrot.slane %v6688, 1
      %v7796 = vsel %vm2217, %v7793, %v7795
      %v7797 = vrot.slane %v6689, 1
      %v7798 = vsel %vm2217, %v7795, %v7797
      %v7799 = vrot.slane %v6690, 1
      %v7800 = vsel %vm2217, %v7797, %v7799
      %v7801 = vrot.slane %v6691, 1
      %v7802 = vsel %vm2217, %v7799, %v7801
      %v7803 = vrot.slane %v6692, 1
      %v7804 = vsel %vm2217, %v7801, %v7803
      %v7805 = vrot.slane %v6693, 1
      %v7806 = vsel %vm2217, %v7803, %v7805
      %v7807 = vrot.slane %v6694, 1
      %v7808 = vsel %vm2217, %v7805, %v7807
      %v7809 = vrot.slane %v6695, 1
      %v7810 = vsel %vm2217, %v7807, %v7809
      %v7811 = vrot.slane %v7145, 1
      %v7812 = vsel %vm2217, %v7809, %v7811
      %v7814 = vsel %vm1544, %v7766, 0
      %v7817 = vsel %vm1544, %v7768, 0
      %v7820 = vsel %vm1544, %v7770, 0
      %v7823 = vsel %vm1544, %v7772, 0
      %v7826 = vsel %vm1544, %v7774, 0
      %v7829 = vsel %vm1544, %v7776, 0
      %v7832 = vsel %vm1544, %v7778, 0
      %v7835 = vsel %vm1544, %v7780, 0
      %v7838 = vsel %vm1544, %v7782, 0
      %v7841 = vsel %vm1544, %v7784, 0
      %v7844 = vsel %vm1544, %v7786, 0
      %v7847 = vsel %vm1544, %v7788, 0
      %v7850 = vsel %vm1544, %v7790, 0
      %v7853 = vsel %vm1544, %v7792, 0
      %v7856 = vsel %vm1544, %v7794, 0
      %v7859 = vsel %vm1544, %v7796, 0
      %v7862 = vsel %vm1544, %v7798, 0
      %v7865 = vsel %vm1544, %v7800, 0
      %v7868 = vsel %vm1544, %v7802, 0
      %v7871 = vsel %vm1544, %v7804, 0
      %v7874 = vsel %vm1544, %v7806, 0
      %v7877 = vsel %vm1544, %v7808, 0
      %v7880 = vsel %vm1544, %v7810, 0
      %v7883 = vsel %vm1544, %v7812, 0
      %v7886 = vsel %vm6768, %v7763, 0
      %7888 = vmatprep.subr.bf16.mxu0 0
      %7889 = vmatpush1.bf16.msra.mxu0 %v7886
      %7890 = vmatprep.subr.bf16.mxu0 0
      %7891 = vmatpush1.bf16.msra.mxu0 0
      %7892 = vmatprep.subr.bf16.mxu0 0
      %7893 = vmatpush1.bf16.msra.mxu0 0
      %7894 = vmatprep.subr.bf16.mxu0 0
      %7895 = vmatpush1.bf16.msra.mxu0 0
      %7896 = vmatprep.subr.bf16.mxu0 0
      %7897 = vmatpush1.bf16.msra.mxu0 0
      %7898 = vmatprep.subr.bf16.mxu0 0
      %7899 = vmatpush1.bf16.msra.mxu0 0
      %7900 = vmatprep.subr.bf16.mxu0 0
      %7901 = vmatpush1.bf16.msra.mxu0 0
      %7902 = vmatprep.subr.bf16.mxu0 0
      %7903 = vmatpush1.bf16.msra.mxu0 0
      %7904 = vmatprep.subr.bf16.mxu0 0
      %7905 = vmatpush1.bf16.msra.mxu0 0
      %7906 = vmatprep.subr.bf16.mxu0 0
      %7907 = vmatpush1.bf16.msra.mxu0 0
      %7908 = vmatprep.subr.bf16.mxu0 0
      %7909 = vmatpush1.bf16.msra.mxu0 0
      %7910 = vmatprep.subr.bf16.mxu0 0
      %7911 = vmatpush1.bf16.msra.mxu0 0
      %7912 = vmatprep.subr.bf16.mxu0 0
      %7913 = vmatpush1.bf16.msra.mxu0 0
      %7914 = vmatprep.subr.bf16.mxu0 0
      %7915 = vmatpush1.bf16.msra.mxu0 0
      %7916 = vmatprep.subr.bf16.mxu0 0
      %7917 = vmatpush1.bf16.msra.mxu0 0
      %7918 = vmatprep.subr.bf16.mxu0 0
      %7919 = vmatpush1.bf16.msra.mxu0 0
      %7920 = vmatprep.mubr.bf16.mxu0 0
      %7921 = vmatmul.mubr.bf16.gmra.mrb[0].mxu0 %v7814
      %v7922 = vpop.f32.mrb[0].mxu0
      %v7923 = vadd.f32 0.0, %v7922
      %v7924 = vpop.f32.mrb[0].mxu0
      %v7925 = vpop.f32.mrb[0].mxu0
      %v7926 = vadd.f32 0.0, %v7925
      %v7927 = vpop.f32.mrb[0].mxu0
      %7928 = vmatprep.mubr.bf16.mxu0 0
      %7929 = vmatmul.mubr.bf16.gmra.mrb[0].mxu0 %v7817
      %v7930 = vpop.f32.mrb[0].mxu0
      %v7931 = vadd.f32 0.0, %v7930
      %v7932 = vpop.f32.mrb[0].mxu0
      %v7933 = vpop.f32.mrb[0].mxu0
      %v7934 = vadd.f32 0.0, %v7933
      %v7935 = vpop.f32.mrb[0].mxu0
      %7936 = vmatprep.mubr.bf16.mxu0 0
      %7937 = vmatmul.mubr.bf16.gmra.mrb[0].mxu0 %v7820
      %v7938 = vpop.f32.mrb[0].mxu0
      %v7939 = vadd.f32 0.0, %v7938
      %v7940 = vpop.f32.mrb[0].mxu0
      %v7941 = vpop.f32.mrb[0].mxu0
      %v7942 = vadd.f32 0.0, %v7941
      %v7943 = vpop.f32.mrb[0].mxu0
      %7944 = vmatprep.mubr.bf16.mxu0 0
      %7945 = vmatmul.mubr.bf16.gmra.mrb[0].mxu0 %v7823
      %v7946 = vpop.f32.mrb[0].mxu0
      %v7947 = vadd.f32 0.0, %v7946
      %v7948 = vpop.f32.mrb[0].mxu0
      %v7949 = vpop.f32.mrb[0].mxu0
      %v7950 = vadd.f32 0.0, %v7949
      %v7951 = vpop.f32.mrb[0].mxu0
      %7952 = vmatprep.mubr.bf16.mxu0 0
      %7953 = vmatmul.mubr.bf16.gmra.mrb[0].mxu0 %v7826
      %v7954 = vpop.f32.mrb[0].mxu0
      %v7955 = vadd.f32 0.0, %v7954
      %v7956 = vpop.f32.mrb[0].mxu0
      %v7957 = vpop.f32.mrb[0].mxu0
      %v7958 = vadd.f32 0.0, %v7957
      %v7959 = vpop.f32.mrb[0].mxu0
      %7960 = vmatprep.mubr.bf16.mxu0 0
      %7961 = vmatmul.mubr.bf16.gmra.mrb[0].mxu0 %v7829
      %v7962 = vpop.f32.mrb[0].mxu0
      %v7963 = vadd.f32 0.0, %v7962
      %v7964 = vpop.f32.mrb[0].mxu0
      %v7965 = vpop.f32.mrb[0].mxu0
      %v7966 = vadd.f32 0.0, %v7965
      %v7967 = vpop.f32.mrb[0].mxu0
      %7968 = vmatprep.mubr.bf16.mxu0 0
      %7969 = vmatmul.mubr.bf16.gmra.mrb[0].mxu0 %v7832
      %v7970 = vpop.f32.mrb[0].mxu0
      %v7971 = vadd.f32 0.0, %v7970
      %v7972 = vpop.f32.mrb[0].mxu0
      %v7973 = vpop.f32.mrb[0].mxu0
      %v7974 = vadd.f32 0.0, %v7973
      %v7975 = vpop.f32.mrb[0].mxu0
      %7976 = vmatprep.mubr.bf16.mxu0 0
      %7977 = vmatmul.mubr.bf16.gmra.mrb[0].mxu0 %v7835
      %v7978 = vpop.f32.mrb[0].mxu0
      %v7979 = vadd.f32 0.0, %v7978
      %v7980 = vpop.f32.mrb[0].mxu0
      %v7981 = vpop.f32.mrb[0].mxu0
      %v7982 = vadd.f32 0.0, %v7981
      %v7983 = vpop.f32.mrb[0].mxu0
      %7984 = vmatprep.mubr.bf16.mxu0 0
      %7985 = vmatmul.mubr.bf16.gmra.mrb[0].mxu0 %v7838
      %v7986 = vpop.f32.mrb[0].mxu0
      %v7987 = vadd.f32 0.0, %v7986
      %v7988 = vpop.f32.mrb[0].mxu0
      %v7989 = vpop.f32.mrb[0].mxu0
      %v7990 = vadd.f32 0.0, %v7989
      %v7991 = vpop.f32.mrb[0].mxu0
      %7992 = vmatprep.mubr.bf16.mxu0 0
      %7993 = vmatmul.mubr.bf16.gmra.mrb[0].mxu0 %v7841
      %v7994 = vpop.f32.mrb[0].mxu0
      %v7995 = vadd.f32 0.0, %v7994
      %v7996 = vpop.f32.mrb[0].mxu0
      %v7997 = vpop.f32.mrb[0].mxu0
      %v7998 = vadd.f32 0.0, %v7997
      %v7999 = vpop.f32.mrb[0].mxu0
      %8000 = vmatprep.mubr.bf16.mxu0 0
      %8001 = vmatmul.mubr.bf16.gmra.mrb[0].mxu0 %v7844
      %v8002 = vpop.f32.mrb[0].mxu0
      %v8003 = vadd.f32 0.0, %v8002
      %v8004 = vpop.f32.mrb[0].mxu0
      %v8005 = vpop.f32.mrb[0].mxu0
      %v8006 = vadd.f32 0.0, %v8005
      %v8007 = vpop.f32.mrb[0].mxu0
      %8008 = vmatprep.mubr.bf16.mxu0 0
      %8009 = vmatmul.mubr.bf16.gmra.mrb[0].mxu0 %v7847
      %v8010 = vpop.f32.mrb[0].mxu0
      %v8011 = vadd.f32 0.0, %v8010
      %v8012 = vpop.f32.mrb[0].mxu0
      %v8013 = vpop.f32.mrb[0].mxu0
      %v8014 = vadd.f32 0.0, %v8013
      %v8015 = vpop.f32.mrb[0].mxu0
      %8016 = vmatprep.mubr.bf16.mxu0 0
      %8017 = vmatmul.mubr.bf16.gmra.mrb[0].mxu0 %v7850
      %v8018 = vpop.f32.mrb[0].mxu0
      %v8019 = vadd.f32 0.0, %v8018
      %v8020 = vpop.f32.mrb[0].mxu0
      %v8021 = vpop.f32.mrb[0].mxu0
      %v8022 = vadd.f32 0.0, %v8021
      %v8023 = vpop.f32.mrb[0].mxu0
      %8024 = vmatprep.mubr.bf16.mxu0 0
      %8025 = vmatmul.mubr.bf16.gmra.mrb[0].mxu0 %v7853
      %v8026 = vpop.f32.mrb[0].mxu0
      %v8027 = vadd.f32 0.0, %v8026
      %v8028 = vpop.f32.mrb[0].mxu0
      %v8029 = vpop.f32.mrb[0].mxu0
      %v8030 = vadd.f32 0.0, %v8029
      %v8031 = vpop.f32.mrb[0].mxu0
      %8032 = vmatprep.mubr.bf16.mxu0 0
      %8033 = vmatmul.mubr.bf16.gmra.mrb[0].mxu0 %v7856
      %v8034 = vpop.f32.mrb[0].mxu0
      %v8035 = vadd.f32 0.0, %v8034
      %v8036 = vpop.f32.mrb[0].mxu0
      %v8037 = vpop.f32.mrb[0].mxu0
      %v8038 = vadd.f32 0.0, %v8037
      %v8039 = vpop.f32.mrb[0].mxu0
      %8040 = vmatprep.mubr.bf16.mxu0 0
      %8041 = vmatmul.mubr.bf16.gmra.mrb[0].mxu0 %v7859
      %v8042 = vpop.f32.mrb[0].mxu0
      %v8043 = vadd.f32 0.0, %v8042
      %v8044 = vpop.f32.mrb[0].mxu0
      %v8045 = vpop.f32.mrb[0].mxu0
      %v8046 = vadd.f32 0.0, %v8045
      %v8047 = vpop.f32.mrb[0].mxu0
      %8048 = vmatprep.mubr.bf16.mxu0 0
      %8049 = vmatmul.mubr.bf16.gmra.mrb[0].mxu0 %v7862
      %v8050 = vpop.f32.mrb[0].mxu0
      %v8051 = vadd.f32 0.0, %v8050
      %v8052 = vpop.f32.mrb[0].mxu0
      %v8053 = vpop.f32.mrb[0].mxu0
      %v8054 = vadd.f32 0.0, %v8053
      %v8055 = vpop.f32.mrb[0].mxu0
      %8056 = vmatprep.mubr.bf16.mxu0 0
      %8057 = vmatmul.mubr.bf16.gmra.mrb[0].mxu0 %v7865
      %v8058 = vpop.f32.mrb[0].mxu0
      %v8059 = vadd.f32 0.0, %v8058
      %v8060 = vpop.f32.mrb[0].mxu0
      %v8061 = vpop.f32.mrb[0].mxu0
      %v8062 = vadd.f32 0.0, %v8061
      %v8063 = vpop.f32.mrb[0].mxu0
      %8064 = vmatprep.mubr.bf16.mxu0 0
      %8065 = vmatmul.mubr.bf16.gmra.mrb[0].mxu0 %v7868
      %v8066 = vpop.f32.mrb[0].mxu0
      %v8067 = vadd.f32 0.0, %v8066
      %v8068 = vpop.f32.mrb[0].mxu0
      %v8069 = vpop.f32.mrb[0].mxu0
      %v8070 = vadd.f32 0.0, %v8069
      %v8071 = vpop.f32.mrb[0].mxu0
      %8072 = vmatprep.mubr.bf16.mxu0 0
      %8073 = vmatmul.mubr.bf16.gmra.mrb[0].mxu0 %v7871
      %v8074 = vpop.f32.mrb[0].mxu0
      %v8075 = vadd.f32 0.0, %v8074
      %v8076 = vpop.f32.mrb[0].mxu0
      %v8077 = vpop.f32.mrb[0].mxu0
      %v8078 = vadd.f32 0.0, %v8077
      %v8079 = vpop.f32.mrb[0].mxu0
      %8080 = vmatprep.mubr.bf16.mxu0 0
      %8081 = vmatmul.mubr.bf16.gmra.mrb[0].mxu0 %v7874
      %v8082 = vpop.f32.mrb[0].mxu0
      %v8083 = vadd.f32 0.0, %v8082
      %v8084 = vpop.f32.mrb[0].mxu0
      %v8085 = vpop.f32.mrb[0].mxu0
      %v8086 = vadd.f32 0.0, %v8085
      %v8087 = vpop.f32.mrb[0].mxu0
      %8088 = vmatprep.mubr.bf16.mxu0 0
      %8089 = vmatmul.mubr.bf16.gmra.mrb[0].mxu0 %v7877
      %v8090 = vpop.f32.mrb[0].mxu0
      %v8091 = vadd.f32 0.0, %v8090
      %v8092 = vpop.f32.mrb[0].mxu0
      %v8093 = vpop.f32.mrb[0].mxu0
      %v8094 = vadd.f32 0.0, %v8093
      %v8095 = vpop.f32.mrb[0].mxu0
      %8096 = vmatprep.mubr.bf16.mxu0 0
      %8097 = vmatmul.mubr.bf16.gmra.mrb[0].mxu0 %v7880
      %v8098 = vpop.f32.mrb[0].mxu0
      %v8099 = vadd.f32 0.0, %v8098
      %v8100 = vpop.f32.mrb[0].mxu0
      %v8101 = vpop.f32.mrb[0].mxu0
      %v8102 = vadd.f32 0.0, %v8101
      %v8103 = vpop.f32.mrb[0].mxu0
      %8104 = vmatprep.mubr.bf16.mxu0 0
      %8105 = vmatmul.mubr.bf16.gmra.mrb[0].mxu0 %v7883
      %v8106 = vpop.f32.mrb[0].mxu0
      %v8107 = vadd.f32 0.0, %v8106
      %v8108 = vpop.f32.mrb[0].mxu0
      %v8109 = vpop.f32.mrb[0].mxu0
      %v8110 = vadd.f32 0.0, %v8109
      %v8111 = vpop.f32.mrb[0].mxu0
      %8112 = vdwg.mxu0
      %v8113 = vld [vmem:[#allocation5] sm:$0xff]
      %v8114 = vld [vmem:[#allocation5 + $0x8] sm:$0xff]
      %v8115 = vld [vmem:[#allocation5 + $0x10] sm:$0xff]
      %v8116 = vld [vmem:[#allocation5 + $0x18] sm:$0xff]
      %v8117 = vld [vmem:[#allocation5 + $0x20] sm:$0xff]
      %v8118 = vld [vmem:[#allocation5 + $0x28] sm:$0xff]
      %v8119 = vld [vmem:[#allocation5 + $0x30] sm:$0xff]
      %v8120 = vld [vmem:[#allocation5 + $0x38] sm:$0xff]
      %v8121 = vld [vmem:[#allocation5 + $0x40] sm:$0xff]
      %v8122 = vld [vmem:[#allocation5 + $0x48] sm:$0xff]
      %v8123 = vld [vmem:[#allocation5 + $0x50] sm:$0xff]
      %v8124 = vld [vmem:[#allocation5 + $0x58] sm:$0xff]
      %v8125 = vld [vmem:[#allocation5 + $0x60] sm:$0xff]
      %v8126 = vld [vmem:[#allocation5 + $0x68] sm:$0xff]
      %v8127 = vld [vmem:[#allocation5 + $0x70] sm:$0xff]
      %v8128 = vld [vmem:[#allocation5 + $0x78] sm:$0xff]
      %v8129 = vld [vmem:[#allocation5 + $0x80] sm:$0xff]
      %v8130 = vld [vmem:[#allocation5 + $0x88] sm:$0xff]
      %v8131 = vld [vmem:[#allocation5 + $0x90] sm:$0xff]
      %v8132 = vld [vmem:[#allocation5 + $0x98] sm:$0xff]
      %v8133 = vld [vmem:[#allocation5 + $0xa0] sm:$0xff]
      %v8134 = vld [vmem:[#allocation5 + $0xa8] sm:$0xff]
      %v8135 = vld [vmem:[#allocation5 + $0xb0] sm:$0xff]
      %v8136 = vld [vmem:[#allocation5 + $0xb8] sm:$0xff]
      %v8137 = vld [vmem:[#allocation5 + $0xc0] sm:$0xff]
      %v8138 = vld [vmem:[#allocation5 + $0xc8] sm:$0xff]
      %v8139 = vld [vmem:[#allocation5 + $0xd0] sm:$0xff]
      %v8140 = vld [vmem:[#allocation5 + $0xd8] sm:$0xff]
      %v8141 = vld [vmem:[#allocation5 + $0xe0] sm:$0xff]
      %v8142 = vld [vmem:[#allocation5 + $0xe8] sm:$0xff]
      %v8143 = vld [vmem:[#allocation5 + $0xf0] sm:$0xff]
      %v8144 = vld [vmem:[#allocation5 + $0xf8] sm:$0xff]
      %v8145 = vld [vmem:[#allocation5 + $0x100] sm:$0xff]
      %v8146 = vld [vmem:[#allocation5 + $0x108] sm:$0xff]
      %v8147 = vld [vmem:[#allocation5 + $0x110] sm:$0xff]
      %v8148 = vld [vmem:[#allocation5 + $0x118] sm:$0xff]
      %v8149 = vld [vmem:[#allocation5 + $0x120] sm:$0xff]
      %v8150 = vld [vmem:[#allocation5 + $0x128] sm:$0xff]
      %v8151 = vld [vmem:[#allocation5 + $0x130] sm:$0xff]
      %v8152 = vld [vmem:[#allocation5 + $0x138] sm:$0xff]
      %v8153 = vld [vmem:[#allocation5 + $0x140] sm:$0xff]
      %v8154 = vld [vmem:[#allocation5 + $0x148] sm:$0xff]
      %v8155 = vld [vmem:[#allocation5 + $0x150] sm:$0xff]
      %v8156 = vld [vmem:[#allocation5 + $0x158] sm:$0xff]
      %v8157 = vld [vmem:[#allocation5 + $0x160] sm:$0xff]
      %v8158 = vld [vmem:[#allocation5 + $0x168] sm:$0xff]
      %v8159 = vld [vmem:[#allocation5 + $0x170] sm:$0xff]
      %v8160 = vld [vmem:[#allocation5 + $0x178] sm:$0xff]
      %v8161 = vadd.f32 %v8113, %v7923
      %v8162 = vadd.f32 %v8114, %v7926
      %v8163 = vadd.f32 %v8115, %v7931
      %v8164 = vadd.f32 %v8116, %v7934
      %v8165 = vadd.f32 %v8117, %v7939
      %v8166 = vadd.f32 %v8118, %v7942
      %v8167 = vadd.f32 %v8119, %v7947
      %v8168 = vadd.f32 %v8120, %v7950
      %v8169 = vadd.f32 %v8121, %v7955
      %v8170 = vadd.f32 %v8122, %v7958
      %v8171 = vadd.f32 %v8123, %v7963
      %v8172 = vadd.f32 %v8124, %v7966
      %v8173 = vadd.f32 %v8125, %v7971
      %v8174 = vadd.f32 %v8126, %v7974
      %v8175 = vadd.f32 %v8127, %v7979
      %v8176 = vadd.f32 %v8128, %v7982
      %v8177 = vadd.f32 %v8129, %v7987
      %v8178 = vadd.f32 %v8130, %v7990
      %v8179 = vadd.f32 %v8131, %v7995
      %v8180 = vadd.f32 %v8132, %v7998
      %v8181 = vadd.f32 %v8133, %v8003
      %v8182 = vadd.f32 %v8134, %v8006
      %v8183 = vadd.f32 %v8135, %v8011
      %v8184 = vadd.f32 %v8136, %v8014
      %v8185 = vadd.f32 %v8137, %v8019
      %v8186 = vadd.f32 %v8138, %v8022
      %v8187 = vadd.f32 %v8139, %v8027
      %v8188 = vadd.f32 %v8140, %v8030
      %v8189 = vadd.f32 %v8141, %v8035
      %v8190 = vadd.f32 %v8142, %v8038
      %v8191 = vadd.f32 %v8143, %v8043
      %v8192 = vadd.f32 %v8144, %v8046
      %v8193 = vadd.f32 %v8145, %v8051
      %v8194 = vadd.f32 %v8146, %v8054
      %v8195 = vadd.f32 %v8147, %v8059
      %v8196 = vadd.f32 %v8148, %v8062
      %v8197 = vadd.f32 %v8149, %v8067
      %v8198 = vadd.f32 %v8150, %v8070
      %v8199 = vadd.f32 %v8151, %v8075
      %v8200 = vadd.f32 %v8152, %v8078
      %v8201 = vadd.f32 %v8153, %v8083
      %v8202 = vadd.f32 %v8154, %v8086
      %v8203 = vadd.f32 %v8155, %v8091
      %v8204 = vadd.f32 %v8156, %v8094
      %v8205 = vadd.f32 %v8157, %v8099
      %v8206 = vadd.f32 %v8158, %v8102
      %v8207 = vadd.f32 %v8159, %v8107
      %v8208 = vadd.f32 %v8160, %v8110
      %8209 = vst.msk [vmem:[#allocation5] sm:$0xff] %vm1544, %v8161
      %8210 = vst.msk [vmem:[#allocation5 + $0x8] sm:$0xff] %vm1544, %v8162
      %8211 = vst.msk [vmem:[#allocation5 + $0x10] sm:$0xff] %vm1544, %v8163
      %8212 = vst.msk [vmem:[#allocation5 + $0x18] sm:$0xff] %vm1544, %v8164
      %8213 = vst.msk [vmem:[#allocation5 + $0x20] sm:$0xff] %vm1544, %v8165
      %8214 = vst.msk [vmem:[#allocation5 + $0x28] sm:$0xff] %vm1544, %v8166
      %8215 = vst.msk [vmem:[#allocation5 + $0x30] sm:$0xff] %vm1544, %v8167
      %8216 = vst.msk [vmem:[#allocation5 + $0x38] sm:$0xff] %vm1544, %v8168
      %8217 = vst.msk [vmem:[#allocation5 + $0x40] sm:$0xff] %vm1544, %v8169
      %8218 = vst.msk [vmem:[#allocation5 + $0x48] sm:$0xff] %vm1544, %v8170
      %8219 = vst.msk [vmem:[#allocation5 + $0x50] sm:$0xff] %vm1544, %v8171
      %8220 = vst.msk [vmem:[#allocation5 + $0x58] sm:$0xff] %vm1544, %v8172
      %8221 = vst.msk [vmem:[#allocation5 + $0x60] sm:$0xff] %vm1544, %v8173
      %8222 = vst.msk [vmem:[#allocation5 + $0x68] sm:$0xff] %vm1544, %v8174
      %8223 = vst.msk [vmem:[#allocation5 + $0x70] sm:$0xff] %vm1544, %v8175
      %8224 = vst.msk [vmem:[#allocation5 + $0x78] sm:$0xff] %vm1544, %v8176
      %8225 = vst.msk [vmem:[#allocation5 + $0x80] sm:$0xff] %vm1544, %v8177
      %8226 = vst.msk [vmem:[#allocation5 + $0x88] sm:$0xff] %vm1544, %v8178
      %8227 = vst.msk [vmem:[#allocation5 + $0x90] sm:$0xff] %vm1544, %v8179
      %8228 = vst.msk [vmem:[#allocation5 + $0x98] sm:$0xff] %vm1544, %v8180
      %8229 = vst.msk [vmem:[#allocation5 + $0xa0] sm:$0xff] %vm1544, %v8181
      %8230 = vst.msk [vmem:[#allocation5 + $0xa8] sm:$0xff] %vm1544, %v8182
      %8231 = vst.msk [vmem:[#allocation5 + $0xb0] sm:$0xff] %vm1544, %v8183
      %8232 = vst.msk [vmem:[#allocation5 + $0xb8] sm:$0xff] %vm1544, %v8184
      %8233 = vst.msk [vmem:[#allocation5 + $0xc0] sm:$0xff] %vm1544, %v8185
      %8234 = vst.msk [vmem:[#allocation5 + $0xc8] sm:$0xff] %vm1544, %v8186
      %8235 = vst.msk [vmem:[#allocation5 + $0xd0] sm:$0xff] %vm1544, %v8187
      %8236 = vst.msk [vmem:[#allocation5 + $0xd8] sm:$0xff] %vm1544, %v8188
      %8237 = vst.msk [vmem:[#allocation5 + $0xe0] sm:$0xff] %vm1544, %v8189
      %8238 = vst.msk [vmem:[#allocation5 + $0xe8] sm:$0xff] %vm1544, %v8190
      %8239 = vst.msk [vmem:[#allocation5 + $0xf0] sm:$0xff] %vm1544, %v8191
      %8240 = vst.msk [vmem:[#allocation5 + $0xf8] sm:$0xff] %vm1544, %v8192
      %8241 = vst.msk [vmem:[#allocation5 + $0x100] sm:$0xff] %vm1544, %v8193
      %8242 = vst.msk [vmem:[#allocation5 + $0x108] sm:$0xff] %vm1544, %v8194
      %8243 = vst.msk [vmem:[#allocation5 + $0x110] sm:$0xff] %vm1544, %v8195
      %8244 = vst.msk [vmem:[#allocation5 + $0x118] sm:$0xff] %vm1544, %v8196
      %8245 = vst.msk [vmem:[#allocation5 + $0x120] sm:$0xff] %vm1544, %v8197
      %8246 = vst.msk [vmem:[#allocation5 + $0x128] sm:$0xff] %vm1544, %v8198
      %8247 = vst.msk [vmem:[#allocation5 + $0x130] sm:$0xff] %vm1544, %v8199
      %8248 = vst.msk [vmem:[#allocation5 + $0x138] sm:$0xff] %vm1544, %v8200
      %8249 = vst.msk [vmem:[#allocation5 + $0x140] sm:$0xff] %vm1544, %v8201
      %8250 = vst.msk [vmem:[#allocation5 + $0x148] sm:$0xff] %vm1544, %v8202
      %8251 = vst.msk [vmem:[#allocation5 + $0x150] sm:$0xff] %vm1544, %v8203
      %8252 = vst.msk [vmem:[#allocation5 + $0x158] sm:$0xff] %vm1544, %v8204
      %8253 = vst.msk [vmem:[#allocation5 + $0x160] sm:$0xff] %vm1544, %v8205
      %8254 = vst.msk [vmem:[#allocation5 + $0x168] sm:$0xff] %vm1544, %v8206
      %8255 = vst.msk [vmem:[#allocation5 + $0x170] sm:$0xff] %vm1544, %v8207
      %8256 = vst.msk [vmem:[#allocation5 + $0x178] sm:$0xff] %vm1544, %v8208
      %s8257 = scalar_lea.vmem %s5, 12
      %v8258 = vld [vmem:[%s8257] sm:$0xf]
      %v8261 = vunpack.c.l.b16 %v6292
      %v8262 = vunpack.c.l.b16 %v6293
      %v8263 = vpack.c.b16 %v6628, %v6627
      %v8264 = vpack.c.b16 %v6630, %v6629
      %v8265 = vpack.c.b16 %v6632, %v6631
      %v8266 = vpack.c.b16 %v6634, %v6633
      %v8267 = vpack.c.b16 %v6636, %v6635
      %v8268 = vpack.c.b16 %v6638, %v6637
      %v8269 = vpack.c.b16 %v6640, %v6639
      %v8270 = vpack.c.b16 %v6642, %v6641
      %v8271 = vpack.c.b16 %v6644, %v6643
      %v8272 = vpack.c.b16 %v6646, %v6645
      %v8273 = vpack.c.b16 %v6648, %v6647
      %v8274 = vpack.c.b16 %v6650, %v6649
      %v8275 = vpack.c.b16 %v6652, %v6651
      %v8276 = vpack.c.b16 %v6654, %v6653
      %v8277 = vpack.c.b16 %v6656, %v6655
      %v8278 = vpack.c.b16 %v6658, %v6657
      %v8279 = vpack.c.b16 %v6660, %v6659
      %v8280 = vpack.c.b16 %v6662, %v6661
      %v8281 = vpack.c.b16 %v6664, %v6663
      %v8282 = vpack.c.b16 %v6666, %v6665
      %v8283 = vpack.c.b16 %v6668, %v6667
      %v8284 = vpack.c.b16 %v6670, %v6669
      %v8285 = vpack.c.b16 %v7144, %v6671
      %v8286 = vpack.c.b16 %v8262, %v8261
      %v8288 = vsel %vm1544, %v8263, 0
      %v8291 = vsel %vm1544, %v8264, 0
      %v8294 = vsel %vm1544, %v8265, 0
      %v8297 = vsel %vm1544, %v8266, 0
      %v8300 = vsel %vm1544, %v8267, 0
      %v8303 = vsel %vm1544, %v8268, 0
      %v8306 = vsel %vm1544, %v8269, 0
      %v8309 = vsel %vm1544, %v8270, 0
      %v8312 = vsel %vm1544, %v8271, 0
      %v8315 = vsel %vm1544, %v8272, 0
      %v8318 = vsel %vm1544, %v8273, 0
      %v8321 = vsel %vm1544, %v8274, 0
      %v8324 = vsel %vm1544, %v8275, 0
      %v8327 = vsel %vm1544, %v8276, 0
      %v8330 = vsel %vm1544, %v8277, 0
      %v8333 = vsel %vm1544, %v8278, 0
      %v8336 = vsel %vm1544, %v8279, 0
      %v8339 = vsel %vm1544, %v8280, 0
      %v8342 = vsel %vm1544, %v8281, 0
      %v8345 = vsel %vm1544, %v8282, 0
      %v8348 = vsel %vm1544, %v8283, 0
      %v8351 = vsel %vm1544, %v8284, 0
      %v8354 = vsel %vm1544, %v8285, 0
      %v8357 = vsel %vm1544, %v8286, 0
      %v8360 = vsel %vm6768, %v8258, 0
      %8362 = vmatprep.subr.bf16.mxu0 0
      %8363 = vmatpush1.bf16.msra.mxu0 %v8360
      %8364 = vmatprep.subr.bf16.mxu0 0
      %8365 = vmatpush1.bf16.msra.mxu0 0
      %8366 = vmatprep.subr.bf16.mxu0 0
      %8367 = vmatpush1.bf16.msra.mxu0 0
      %8368 = vmatprep.subr.bf16.mxu0 0
      %8369 = vmatpush1.bf16.msra.mxu0 0
      %8370 = vmatprep.subr.bf16.mxu0 0
      %8371 = vmatpush1.bf16.msra.mxu0 0
      %8372 = vmatprep.subr.bf16.mxu0 0
      %8373 = vmatpush1.bf16.msra.mxu0 0
      %8374 = vmatprep.subr.bf16.mxu0 0
      %8375 = vmatpush1.bf16.msra.mxu0 0
      %8376 = vmatprep.subr.bf16.mxu0 0
      %8377 = vmatpush1.bf16.msra.mxu0 0
      %8378 = vmatprep.subr.bf16.mxu0 0
      %8379 = vmatpush1.bf16.msra.mxu0 0
      %8380 = vmatprep.subr.bf16.mxu0 0
      %8381 = vmatpush1.bf16.msra.mxu0 0
      %8382 = vmatprep.subr.bf16.mxu0 0
      %8383 = vmatpush1.bf16.msra.mxu0 0
      %8384 = vmatprep.subr.bf16.mxu0 0
      %8385 = vmatpush1.bf16.msra.mxu0 0
      %8386 = vmatprep.subr.bf16.mxu0 0
      %8387 = vmatpush1.bf16.msra.mxu0 0
      %8388 = vmatprep.subr.bf16.mxu0 0
      %8389 = vmatpush1.bf16.msra.mxu0 0
      %8390 = vmatprep.subr.bf16.mxu0 0
      %8391 = vmatpush1.bf16.msra.mxu0 0
      %8392 = vmatprep.subr.bf16.mxu0 0
      %8393 = vmatpush1.bf16.msra.mxu0 0
      %8394 = vmatprep.mubr.bf16.mxu0 0
      %8395 = vmatmul.mubr.bf16.gmra.mrb[0].mxu0 %v8288
      %v8396 = vpop.f32.mrb[0].mxu0
      %v8397 = vadd.f32 0.0, %v8396
      %v8398 = vpop.f32.mrb[0].mxu0
      %v8399 = vpop.f32.mrb[0].mxu0
      %v8400 = vadd.f32 0.0, %v8399
      %v8401 = vpop.f32.mrb[0].mxu0
      %8402 = vmatprep.mubr.bf16.mxu0 0
      %8403 = vmatmul.mubr.bf16.gmra.mrb[0].mxu0 %v8291
      %v8404 = vpop.f32.mrb[0].mxu0
      %v8405 = vadd.f32 0.0, %v8404
      %v8406 = vpop.f32.mrb[0].mxu0
      %v8407 = vpop.f32.mrb[0].mxu0
      %v8408 = vadd.f32 0.0, %v8407
      %v8409 = vpop.f32.mrb[0].mxu0
      %8410 = vmatprep.mubr.bf16.mxu0 0
      %8411 = vmatmul.mubr.bf16.gmra.mrb[0].mxu0 %v8294
      %v8412 = vpop.f32.mrb[0].mxu0
      %v8413 = vadd.f32 0.0, %v8412
      %v8414 = vpop.f32.mrb[0].mxu0
      %v8415 = vpop.f32.mrb[0].mxu0
      %v8416 = vadd.f32 0.0, %v8415
      %v8417 = vpop.f32.mrb[0].mxu0
      %8418 = vmatprep.mubr.bf16.mxu0 0
      %8419 = vmatmul.mubr.bf16.gmra.mrb[0].mxu0 %v8297
      %v8420 = vpop.f32.mrb[0].mxu0
      %v8421 = vadd.f32 0.0, %v8420
      %v8422 = vpop.f32.mrb[0].mxu0
      %v8423 = vpop.f32.mrb[0].mxu0
      %v8424 = vadd.f32 0.0, %v8423
      %v8425 = vpop.f32.mrb[0].mxu0
      %8426 = vmatprep.mubr.bf16.mxu0 0
      %8427 = vmatmul.mubr.bf16.gmra.mrb[0].mxu0 %v8300
      %v8428 = vpop.f32.mrb[0].mxu0
      %v8429 = vadd.f32 0.0, %v8428
      %v8430 = vpop.f32.mrb[0].mxu0
      %v8431 = vpop.f32.mrb[0].mxu0
      %v8432 = vadd.f32 0.0, %v8431
      %v8433 = vpop.f32.mrb[0].mxu0
      %8434 = vmatprep.mubr.bf16.mxu0 0
      %8435 = vmatmul.mubr.bf16.gmra.mrb[0].mxu0 %v8303
      %v8436 = vpop.f32.mrb[0].mxu0
      %v8437 = vadd.f32 0.0, %v8436
      %v8438 = vpop.f32.mrb[0].mxu0
      %v8439 = vpop.f32.mrb[0].mxu0
      %v8440 = vadd.f32 0.0, %v8439
      %v8441 = vpop.f32.mrb[0].mxu0
      %8442 = vmatprep.mubr.bf16.mxu0 0
      %8443 = vmatmul.mubr.bf16.gmra.mrb[0].mxu0 %v8306
      %v8444 = vpop.f32.mrb[0].mxu0
      %v8445 = vadd.f32 0.0, %v8444
      %v8446 = vpop.f32.mrb[0].mxu0
      %v8447 = vpop.f32.mrb[0].mxu0
      %v8448 = vadd.f32 0.0, %v8447
      %v8449 = vpop.f32.mrb[0].mxu0
      %8450 = vmatprep.mubr.bf16.mxu0 0
      %8451 = vmatmul.mubr.bf16.gmra.mrb[0].mxu0 %v8309
      %v8452 = vpop.f32.mrb[0].mxu0
      %v8453 = vadd.f32 0.0, %v8452
      %v8454 = vpop.f32.mrb[0].mxu0
      %v8455 = vpop.f32.mrb[0].mxu0
      %v8456 = vadd.f32 0.0, %v8455
      %v8457 = vpop.f32.mrb[0].mxu0
      %8458 = vmatprep.mubr.bf16.mxu0 0
      %8459 = vmatmul.mubr.bf16.gmra.mrb[0].mxu0 %v8312
      %v8460 = vpop.f32.mrb[0].mxu0
      %v8461 = vadd.f32 0.0, %v8460
      %v8462 = vpop.f32.mrb[0].mxu0
      %v8463 = vpop.f32.mrb[0].mxu0
      %v8464 = vadd.f32 0.0, %v8463
      %v8465 = vpop.f32.mrb[0].mxu0
      %8466 = vmatprep.mubr.bf16.mxu0 0
      %8467 = vmatmul.mubr.bf16.gmra.mrb[0].mxu0 %v8315
      %v8468 = vpop.f32.mrb[0].mxu0
      %v8469 = vadd.f32 0.0, %v8468
      %v8470 = vpop.f32.mrb[0].mxu0
      %v8471 = vpop.f32.mrb[0].mxu0
      %v8472 = vadd.f32 0.0, %v8471
      %v8473 = vpop.f32.mrb[0].mxu0
      %8474 = vmatprep.mubr.bf16.mxu0 0
      %8475 = vmatmul.mubr.bf16.gmra.mrb[0].mxu0 %v8318
      %v8476 = vpop.f32.mrb[0].mxu0
      %v8477 = vadd.f32 0.0, %v8476
      %v8478 = vpop.f32.mrb[0].mxu0
      %v8479 = vpop.f32.mrb[0].mxu0
      %v8480 = vadd.f32 0.0, %v8479
      %v8481 = vpop.f32.mrb[0].mxu0
      %8482 = vmatprep.mubr.bf16.mxu0 0
      %8483 = vmatmul.mubr.bf16.gmra.mrb[0].mxu0 %v8321
      %v8484 = vpop.f32.mrb[0].mxu0
      %v8485 = vadd.f32 0.0, %v8484
      %v8486 = vpop.f32.mrb[0].mxu0
      %v8487 = vpop.f32.mrb[0].mxu0
      %v8488 = vadd.f32 0.0, %v8487
      %v8489 = vpop.f32.mrb[0].mxu0
      %8490 = vmatprep.mubr.bf16.mxu0 0
      %8491 = vmatmul.mubr.bf16.gmra.mrb[0].mxu0 %v8324
      %v8492 = vpop.f32.mrb[0].mxu0
      %v8493 = vadd.f32 0.0, %v8492
      %v8494 = vpop.f32.mrb[0].mxu0
      %v8495 = vpop.f32.mrb[0].mxu0
      %v8496 = vadd.f32 0.0, %v8495
      %v8497 = vpop.f32.mrb[0].mxu0
      %8498 = vmatprep.mubr.bf16.mxu0 0
      %8499 = vmatmul.mubr.bf16.gmra.mrb[0].mxu0 %v8327
      %v8500 = vpop.f32.mrb[0].mxu0
      %v8501 = vadd.f32 0.0, %v8500
      %v8502 = vpop.f32.mrb[0].mxu0
      %v8503 = vpop.f32.mrb[0].mxu0
      %v8504 = vadd.f32 0.0, %v8503
      %v8505 = vpop.f32.mrb[0].mxu0
      %8506 = vmatprep.mubr.bf16.mxu0 0
      %8507 = vmatmul.mubr.bf16.gmra.mrb[0].mxu0 %v8330
      %v8508 = vpop.f32.mrb[0].mxu0
      %v8509 = vadd.f32 0.0, %v8508
      %v8510 = vpop.f32.mrb[0].mxu0
      %v8511 = vpop.f32.mrb[0].mxu0
      %v8512 = vadd.f32 0.0, %v8511
      %v8513 = vpop.f32.mrb[0].mxu0
      %8514 = vmatprep.mubr.bf16.mxu0 0
      %8515 = vmatmul.mubr.bf16.gmra.mrb[0].mxu0 %v8333
      %v8516 = vpop.f32.mrb[0].mxu0
      %v8517 = vadd.f32 0.0, %v8516
      %v8518 = vpop.f32.mrb[0].mxu0
      %v8519 = vpop.f32.mrb[0].mxu0
      %v8520 = vadd.f32 0.0, %v8519
      %v8521 = vpop.f32.mrb[0].mxu0
      %8522 = vmatprep.mubr.bf16.mxu0 0
      %8523 = vmatmul.mubr.bf16.gmra.mrb[0].mxu0 %v8336
      %v8524 = vpop.f32.mrb[0].mxu0
      %v8525 = vadd.f32 0.0, %v8524
      %v8526 = vpop.f32.mrb[0].mxu0
      %v8527 = vpop.f32.mrb[0].mxu0
      %v8528 = vadd.f32 0.0, %v8527
      %v8529 = vpop.f32.mrb[0].mxu0
      %8530 = vmatprep.mubr.bf16.mxu0 0
      %8531 = vmatmul.mubr.bf16.gmra.mrb[0].mxu0 %v8339
      %v8532 = vpop.f32.mrb[0].mxu0
      %v8533 = vadd.f32 0.0, %v8532
      %v8534 = vpop.f32.mrb[0].mxu0
      %v8535 = vpop.f32.mrb[0].mxu0
      %v8536 = vadd.f32 0.0, %v8535
      %v8537 = vpop.f32.mrb[0].mxu0
      %8538 = vmatprep.mubr.bf16.mxu0 0
      %8539 = vmatmul.mubr.bf16.gmra.mrb[0].mxu0 %v8342
      %v8540 = vpop.f32.mrb[0].mxu0
      %v8541 = vadd.f32 0.0, %v8540
      %v8542 = vpop.f32.mrb[0].mxu0
      %v8543 = vpop.f32.mrb[0].mxu0
      %v8544 = vadd.f32 0.0, %v8543
      %v8545 = vpop.f32.mrb[0].mxu0
      %8546 = vmatprep.mubr.bf16.mxu0 0
      %8547 = vmatmul.mubr.bf16.gmra.mrb[0].mxu0 %v8345
      %v8548 = vpop.f32.mrb[0].mxu0
      %v8549 = vadd.f32 0.0, %v8548
      %v8550 = vpop.f32.mrb[0].mxu0
      %v8551 = vpop.f32.mrb[0].mxu0
      %v8552 = vadd.f32 0.0, %v8551
      %v8553 = vpop.f32.mrb[0].mxu0
      %8554 = vmatprep.mubr.bf16.mxu0 0
      %8555 = vmatmul.mubr.bf16.gmra.mrb[0].mxu0 %v8348
      %v8556 = vpop.f32.mrb[0].mxu0
      %v8557 = vadd.f32 0.0, %v8556
      %v8558 = vpop.f32.mrb[0].mxu0
      %v8559 = vpop.f32.mrb[0].mxu0
      %v8560 = vadd.f32 0.0, %v8559
      %v8561 = vpop.f32.mrb[0].mxu0
      %8562 = vmatprep.mubr.bf16.mxu0 0
      %8563 = vmatmul.mubr.bf16.gmra.mrb[0].mxu0 %v8351
      %v8564 = vpop.f32.mrb[0].mxu0
      %v8565 = vadd.f32 0.0, %v8564
      %v8566 = vpop.f32.mrb[0].mxu0
      %v8567 = vpop.f32.mrb[0].mxu0
      %v8568 = vadd.f32 0.0, %v8567
      %v8569 = vpop.f32.mrb[0].mxu0
      %8570 = vmatprep.mubr.bf16.mxu0 0
      %8571 = vmatmul.mubr.bf16.gmra.mrb[0].mxu0 %v8354
      %v8572 = vpop.f32.mrb[0].mxu0
      %v8573 = vadd.f32 0.0, %v8572
      %v8574 = vpop.f32.mrb[0].mxu0
      %v8575 = vpop.f32.mrb[0].mxu0
      %v8576 = vadd.f32 0.0, %v8575
      %v8577 = vpop.f32.mrb[0].mxu0
      %8578 = vmatprep.mubr.bf16.mxu0 0
      %8579 = vmatmul.mubr.bf16.gmra.mrb[0].mxu0 %v8357
      %v8580 = vpop.f32.mrb[0].mxu0
      %v8581 = vadd.f32 0.0, %v8580
      %v8582 = vpop.f32.mrb[0].mxu0
      %v8583 = vpop.f32.mrb[0].mxu0
      %v8584 = vadd.f32 0.0, %v8583
      %v8585 = vpop.f32.mrb[0].mxu0
      %8586 = vdwg.mxu0
      %v8587 = vld [vmem:[#allocation5] sm:$0xff]
      %v8588 = vld [vmem:[#allocation5 + $0x8] sm:$0xff]
      %v8589 = vld [vmem:[#allocation5 + $0x10] sm:$0xff]
      %v8590 = vld [vmem:[#allocation5 + $0x18] sm:$0xff]
      %v8591 = vld [vmem:[#allocation5 + $0x20] sm:$0xff]
      %v8592 = vld [vmem:[#allocation5 + $0x28] sm:$0xff]
      %v8593 = vld [vmem:[#allocation5 + $0x30] sm:$0xff]
      %v8594 = vld [vmem:[#allocation5 + $0x38] sm:$0xff]
      %v8595 = vld [vmem:[#allocation5 + $0x40] sm:$0xff]
      %v8596 = vld [vmem:[#allocation5 + $0x48] sm:$0xff]
      %v8597 = vld [vmem:[#allocation5 + $0x50] sm:$0xff]
      %v8598 = vld [vmem:[#allocation5 + $0x58] sm:$0xff]
      %v8599 = vld [vmem:[#allocation5 + $0x60] sm:$0xff]
      %v8600 = vld [vmem:[#allocation5 + $0x68] sm:$0xff]
      %v8601 = vld [vmem:[#allocation5 + $0x70] sm:$0xff]
      %v8602 = vld [vmem:[#allocation5 + $0x78] sm:$0xff]
      %v8603 = vld [vmem:[#allocation5 + $0x80] sm:$0xff]
      %v8604 = vld [vmem:[#allocation5 + $0x88] sm:$0xff]
      %v8605 = vld [vmem:[#allocation5 + $0x90] sm:$0xff]
      %v8606 = vld [vmem:[#allocation5 + $0x98] sm:$0xff]
      %v8607 = vld [vmem:[#allocation5 + $0xa0] sm:$0xff]
      %v8608 = vld [vmem:[#allocation5 + $0xa8] sm:$0xff]
      %v8609 = vld [vmem:[#allocation5 + $0xb0] sm:$0xff]
      %v8610 = vld [vmem:[#allocation5 + $0xb8] sm:$0xff]
      %v8611 = vld [vmem:[#allocation5 + $0xc0] sm:$0xff]
      %v8612 = vld [vmem:[#allocation5 + $0xc8] sm:$0xff]
      %v8613 = vld [vmem:[#allocation5 + $0xd0] sm:$0xff]
      %v8614 = vld [vmem:[#allocation5 + $0xd8] sm:$0xff]
      %v8615 = vld [vmem:[#allocation5 + $0xe0] sm:$0xff]
      %v8616 = vld [vmem:[#allocation5 + $0xe8] sm:$0xff]
      %v8617 = vld [vmem:[#allocation5 + $0xf0] sm:$0xff]
      %v8618 = vld [vmem:[#allocation5 + $0xf8] sm:$0xff]
      %v8619 = vld [vmem:[#allocation5 + $0x100] sm:$0xff]
      %v8620 = vld [vmem:[#allocation5 + $0x108] sm:$0xff]
      %v8621 = vld [vmem:[#allocation5 + $0x110] sm:$0xff]
      %v8622 = vld [vmem:[#allocation5 + $0x118] sm:$0xff]
      %v8623 = vld [vmem:[#allocation5 + $0x120] sm:$0xff]
      %v8624 = vld [vmem:[#allocation5 + $0x128] sm:$0xff]
      %v8625 = vld [vmem:[#allocation5 + $0x130] sm:$0xff]
      %v8626 = vld [vmem:[#allocation5 + $0x138] sm:$0xff]
      %v8627 = vld [vmem:[#allocation5 + $0x140] sm:$0xff]
      %v8628 = vld [vmem:[#allocation5 + $0x148] sm:$0xff]
      %v8629 = vld [vmem:[#allocation5 + $0x150] sm:$0xff]
      %v8630 = vld [vmem:[#allocation5 + $0x158] sm:$0xff]
      %v8631 = vld [vmem:[#allocation5 + $0x160] sm:$0xff]
      %v8632 = vld [vmem:[#allocation5 + $0x168] sm:$0xff]
      %v8633 = vld [vmem:[#allocation5 + $0x170] sm:$0xff]
      %v8634 = vld [vmem:[#allocation5 + $0x178] sm:$0xff]
      %v8635 = vadd.f32 %v8587, %v8397
      %v8636 = vadd.f32 %v8588, %v8400
      %v8637 = vadd.f32 %v8589, %v8405
      %v8638 = vadd.f32 %v8590, %v8408
      %v8639 = vadd.f32 %v8591, %v8413
      %v8640 = vadd.f32 %v8592, %v8416
      %v8641 = vadd.f32 %v8593, %v8421
      %v8642 = vadd.f32 %v8594, %v8424
      %v8643 = vadd.f32 %v8595, %v8429
      %v8644 = vadd.f32 %v8596, %v8432
      %v8645 = vadd.f32 %v8597, %v8437
      %v8646 = vadd.f32 %v8598, %v8440
      %v8647 = vadd.f32 %v8599, %v8445
      %v8648 = vadd.f32 %v8600, %v8448
      %v8649 = vadd.f32 %v8601, %v8453
      %v8650 = vadd.f32 %v8602, %v8456
      %v8651 = vadd.f32 %v8603, %v8461
      %v8652 = vadd.f32 %v8604, %v8464
      %v8653 = vadd.f32 %v8605, %v8469
      %v8654 = vadd.f32 %v8606, %v8472
      %v8655 = vadd.f32 %v8607, %v8477
      %v8656 = vadd.f32 %v8608, %v8480
      %v8657 = vadd.f32 %v8609, %v8485
      %v8658 = vadd.f32 %v8610, %v8488
      %v8659 = vadd.f32 %v8611, %v8493
      %v8660 = vadd.f32 %v8612, %v8496
      %v8661 = vadd.f32 %v8613, %v8501
      %v8662 = vadd.f32 %v8614, %v8504
      %v8663 = vadd.f32 %v8615, %v8509
      %v8664 = vadd.f32 %v8616, %v8512
      %v8665 = vadd.f32 %v8617, %v8517
      %v8666 = vadd.f32 %v8618, %v8520
      %v8667 = vadd.f32 %v8619, %v8525
      %v8668 = vadd.f32 %v8620, %v8528
      %v8669 = vadd.f32 %v8621, %v8533
      %v8670 = vadd.f32 %v8622, %v8536
      %v8671 = vadd.f32 %v8623, %v8541
      %v8672 = vadd.f32 %v8624, %v8544
      %v8673 = vadd.f32 %v8625, %v8549
      %v8674 = vadd.f32 %v8626, %v8552
      %v8675 = vadd.f32 %v8627, %v8557
      %v8676 = vadd.f32 %v8628, %v8560
      %v8677 = vadd.f32 %v8629, %v8565
      %v8678 = vadd.f32 %v8630, %v8568
      %v8679 = vadd.f32 %v8631, %v8573
      %v8680 = vadd.f32 %v8632, %v8576
      %v8681 = vadd.f32 %v8633, %v8581
      %v8682 = vadd.f32 %v8634, %v8584
      %8683 = vst.msk [vmem:[#allocation5] sm:$0xff] %vm1544, %v8635
      %8684 = vst.msk [vmem:[#allocation5 + $0x8] sm:$0xff] %vm1544, %v8636
      %8685 = vst.msk [vmem:[#allocation5 + $0x10] sm:$0xff] %vm1544, %v8637
      %8686 = vst.msk [vmem:[#allocation5 + $0x18] sm:$0xff] %vm1544, %v8638
      %8687 = vst.msk [vmem:[#allocation5 + $0x20] sm:$0xff] %vm1544, %v8639
      %8688 = vst.msk [vmem:[#allocation5 + $0x28] sm:$0xff] %vm1544, %v8640
      %8689 = vst.msk [vmem:[#allocation5 + $0x30] sm:$0xff] %vm1544, %v8641
      %8690 = vst.msk [vmem:[#allocation5 + $0x38] sm:$0xff] %vm1544, %v8642
      %8691 = vst.msk [vmem:[#allocation5 + $0x40] sm:$0xff] %vm1544, %v8643
      %8692 = vst.msk [vmem:[#allocation5 + $0x48] sm:$0xff] %vm1544, %v8644
      %8693 = vst.msk [vmem:[#allocation5 + $0x50] sm:$0xff] %vm1544, %v8645
      %8694 = vst.msk [vmem:[#allocation5 + $0x58] sm:$0xff] %vm1544, %v8646
      %8695 = vst.msk [vmem:[#allocation5 + $0x60] sm:$0xff] %vm1544, %v8647
      %8696 = vst.msk [vmem:[#allocation5 + $0x68] sm:$0xff] %vm1544, %v8648
      %8697 = vst.msk [vmem:[#allocation5 + $0x70] sm:$0xff] %vm1544, %v8649
      %8698 = vst.msk [vmem:[#allocation5 + $0x78] sm:$0xff] %vm1544, %v8650
      %8699 = vst.msk [vmem:[#allocation5 + $0x80] sm:$0xff] %vm1544, %v8651
      %8700 = vst.msk [vmem:[#allocation5 + $0x88] sm:$0xff] %vm1544, %v8652
      %8701 = vst.msk [vmem:[#allocation5 + $0x90] sm:$0xff] %vm1544, %v8653
      %8702 = vst.msk [vmem:[#allocation5 + $0x98] sm:$0xff] %vm1544, %v8654
      %8703 = vst.msk [vmem:[#allocation5 + $0xa0] sm:$0xff] %vm1544, %v8655
      %8704 = vst.msk [vmem:[#allocation5 + $0xa8] sm:$0xff] %vm1544, %v8656
      %8705 = vst.msk [vmem:[#allocation5 + $0xb0] sm:$0xff] %vm1544, %v8657
      %8706 = vst.msk [vmem:[#allocation5 + $0xb8] sm:$0xff] %vm1544, %v8658
      %8707 = vst.msk [vmem:[#allocation5 + $0xc0] sm:$0xff] %vm1544, %v8659
      %8708 = vst.msk [vmem:[#allocation5 + $0xc8] sm:$0xff] %vm1544, %v8660
      %8709 = vst.msk [vmem:[#allocation5 + $0xd0] sm:$0xff] %vm1544, %v8661
      %8710 = vst.msk [vmem:[#allocation5 + $0xd8] sm:$0xff] %vm1544, %v8662
      %8711 = vst.msk [vmem:[#allocation5 + $0xe0] sm:$0xff] %vm1544, %v8663
      %8712 = vst.msk [vmem:[#allocation5 + $0xe8] sm:$0xff] %vm1544, %v8664
      %8713 = vst.msk [vmem:[#allocation5 + $0xf0] sm:$0xff] %vm1544, %v8665
      %8714 = vst.msk [vmem:[#allocation5 + $0xf8] sm:$0xff] %vm1544, %v8666
      %8715 = vst.msk [vmem:[#allocation5 + $0x100] sm:$0xff] %vm1544, %v8667
      %8716 = vst.msk [vmem:[#allocation5 + $0x108] sm:$0xff] %vm1544, %v8668
      %8717 = vst.msk [vmem:[#allocation5 + $0x110] sm:$0xff] %vm1544, %v8669
      %8718 = vst.msk [vmem:[#allocation5 + $0x118] sm:$0xff] %vm1544, %v8670
      %8719 = vst.msk [vmem:[#allocation5 + $0x120] sm:$0xff] %vm1544, %v8671
      %8720 = vst.msk [vmem:[#allocation5 + $0x128] sm:$0xff] %vm1544, %v8672
      %8721 = vst.msk [vmem:[#allocation5 + $0x130] sm:$0xff] %vm1544, %v8673
      %8722 = vst.msk [vmem:[#allocation5 + $0x138] sm:$0xff] %vm1544, %v8674
      %8723 = vst.msk [vmem:[#allocation5 + $0x140] sm:$0xff] %vm1544, %v8675
      %8724 = vst.msk [vmem:[#allocation5 + $0x148] sm:$0xff] %vm1544, %v8676
      %8725 = vst.msk [vmem:[#allocation5 + $0x150] sm:$0xff] %vm1544, %v8677
      %8726 = vst.msk [vmem:[#allocation5 + $0x158] sm:$0xff] %vm1544, %v8678
      %8727 = vst.msk [vmem:[#allocation5 + $0x160] sm:$0xff] %vm1544, %v8679
      %8728 = vst.msk [vmem:[#allocation5 + $0x168] sm:$0xff] %vm1544, %v8680
      %8729 = vst.msk [vmem:[#allocation5 + $0x170] sm:$0xff] %vm1544, %v8681
      %8730 = vst.msk [vmem:[#allocation5 + $0x178] sm:$0xff] %vm1544, %v8682
      %s8731 = scalar_lea.vmem %s5, 16
      %v8732 = vld [vmem:[%s8731] sm:$0xf]
      %v8734 = vunpack.c.l.b16 %v6294
      %v8735 = vpack.c.b16 %v8734, %v8734
      %v8736 = vshrl.u32 %v8263, 16
      %v8738 = vshll.u32 %v8263, 16
      %v8740 = vrot.slane %v8738, 1
      %v8741 = vor.u32 %v8736, %v8740
      %v8742 = vshll.u32 %v8264, 16
      %v8744 = vrot.slane %v8742, 1
      %v8745 = vsel %vm1598, %v8741, %v8744
      %v8746 = vshrl.u32 %v8264, 16
      %v8748 = vor.u32 %v8746, %v8744
      %v8749 = vshll.u32 %v8265, 16
      %v8751 = vrot.slane %v8749, 1
      %v8752 = vsel %vm1598, %v8748, %v8751
      %v8753 = vshrl.u32 %v8265, 16
      %v8755 = vor.u32 %v8753, %v8751
      %v8756 = vshll.u32 %v8266, 16
      %v8758 = vrot.slane %v8756, 1
      %v8759 = vsel %vm1598, %v8755, %v8758
      %v8760 = vshrl.u32 %v8266, 16
      %v8762 = vor.u32 %v8760, %v8758
      %v8763 = vshll.u32 %v8267, 16
      %v8765 = vrot.slane %v8763, 1
      %v8766 = vsel %vm1598, %v8762, %v8765
      %v8767 = vshrl.u32 %v8267, 16
      %v8769 = vor.u32 %v8767, %v8765
      %v8770 = vshll.u32 %v8268, 16
      %v8772 = vrot.slane %v8770, 1
      %v8773 = vsel %vm1598, %v8769, %v8772
      %v8774 = vshrl.u32 %v8268, 16
      %v8776 = vor.u32 %v8774, %v8772
      %v8777 = vshll.u32 %v8269, 16
      %v8779 = vrot.slane %v8777, 1
      %v8780 = vsel %vm1598, %v8776, %v8779
      %v8781 = vshrl.u32 %v8269, 16
      %v8783 = vor.u32 %v8781, %v8779
      %v8784 = vshll.u32 %v8270, 16
      %v8786 = vrot.slane %v8784, 1
      %v8787 = vsel %vm1598, %v8783, %v8786
      %v8788 = vshrl.u32 %v8270, 16
      %v8790 = vor.u32 %v8788, %v8786
      %v8791 = vshll.u32 %v8271, 16
      %v8793 = vrot.slane %v8791, 1
      %v8794 = vsel %vm1598, %v8790, %v8793
      %v8795 = vshrl.u32 %v8271, 16
      %v8797 = vor.u32 %v8795, %v8793
      %v8798 = vshll.u32 %v8272, 16
      %v8800 = vrot.slane %v8798, 1
      %v8801 = vsel %vm1598, %v8797, %v8800
      %v8802 = vshrl.u32 %v8272, 16
      %v8804 = vor.u32 %v8802, %v8800
      %v8805 = vshll.u32 %v8273, 16
      %v8807 = vrot.slane %v8805, 1
      %v8808 = vsel %vm1598, %v8804, %v8807
      %v8809 = vshrl.u32 %v8273, 16
      %v8811 = vor.u32 %v8809, %v8807
      %v8812 = vshll.u32 %v8274, 16
      %v8814 = vrot.slane %v8812, 1
      %v8815 = vsel %vm1598, %v8811, %v8814
      %v8816 = vshrl.u32 %v8274, 16
      %v8818 = vor.u32 %v8816, %v8814
      %v8819 = vshll.u32 %v8275, 16
      %v8821 = vrot.slane %v8819, 1
      %v8822 = vsel %vm1598, %v8818, %v8821
      %v8823 = vshrl.u32 %v8275, 16
      %v8825 = vor.u32 %v8823, %v8821
      %v8826 = vshll.u32 %v8276, 16
      %v8828 = vrot.slane %v8826, 1
      %v8829 = vsel %vm1598, %v8825, %v8828
      %v8830 = vshrl.u32 %v8276, 16
      %v8832 = vor.u32 %v8830, %v8828
      %v8833 = vshll.u32 %v8277, 16
      %v8835 = vrot.slane %v8833, 1
      %v8836 = vsel %vm1598, %v8832, %v8835
      %v8837 = vshrl.u32 %v8277, 16
      %v8839 = vor.u32 %v8837, %v8835
      %v8840 = vshll.u32 %v8278, 16
      %v8842 = vrot.slane %v8840, 1
      %v8843 = vsel %vm1598, %v8839, %v8842
      %v8844 = vshrl.u32 %v8278, 16
      %v8846 = vor.u32 %v8844, %v8842
      %v8847 = vshll.u32 %v8279, 16
      %v8849 = vrot.slane %v8847, 1
      %v8850 = vsel %vm1598, %v8846, %v8849
      %v8851 = vshrl.u32 %v8279, 16
      %v8853 = vor.u32 %v8851, %v8849
      %v8854 = vshll.u32 %v8280, 16
      %v8856 = vrot.slane %v8854, 1
      %v8857 = vsel %vm1598, %v8853, %v8856
      %v8858 = vshrl.u32 %v8280, 16
      %v8860 = vor.u32 %v8858, %v8856
      %v8861 = vshll.u32 %v8281, 16
      %v8863 = vrot.slane %v8861, 1
      %v8864 = vsel %vm1598, %v8860, %v8863
      %v8865 = vshrl.u32 %v8281, 16
      %v8867 = vor.u32 %v8865, %v8863
      %v8868 = vshll.u32 %v8282, 16
      %v8870 = vrot.slane %v8868, 1
      %v8871 = vsel %vm1598, %v8867, %v8870
      %v8872 = vshrl.u32 %v8282, 16
      %v8874 = vor.u32 %v8872, %v8870
      %v8875 = vshll.u32 %v8283, 16
      %v8877 = vrot.slane %v8875, 1
      %v8878 = vsel %vm1598, %v8874, %v8877
      %v8879 = vshrl.u32 %v8283, 16
      %v8881 = vor.u32 %v8879, %v8877
      %v8882 = vshll.u32 %v8284, 16
      %v8884 = vrot.slane %v8882, 1
      %v8885 = vsel %vm1598, %v8881, %v8884
      %v8886 = vshrl.u32 %v8284, 16
      %v8888 = vor.u32 %v8886, %v8884
      %v8889 = vshll.u32 %v8285, 16
      %v8891 = vrot.slane %v8889, 1
      %v8892 = vsel %vm1598, %v8888, %v8891
      %v8893 = vshrl.u32 %v8285, 16
      %v8895 = vor.u32 %v8893, %v8891
      %v8896 = vshll.u32 %v8286, 16
      %v8898 = vrot.slane %v8896, 1
      %v8899 = vsel %vm1598, %v8895, %v8898
      %v8900 = vshrl.u32 %v8286, 16
      %v8902 = vor.u32 %v8900, %v8898
      %v8904 = vshll.u32 %v8735, 16
      %v8906 = vrot.slane %v8904, 1
      %v8907 = vsel %vm1598, %v8902, %v8906
      %v8909 = vsel %vm1544, %v8745, 0
      %v8912 = vsel %vm1544, %v8752, 0
      %v8915 = vsel %vm1544, %v8759, 0
      %v8918 = vsel %vm1544, %v8766, 0
      %v8921 = vsel %vm1544, %v8773, 0
      %v8924 = vsel %vm1544, %v8780, 0
      %v8927 = vsel %vm1544, %v8787, 0
      %v8930 = vsel %vm1544, %v8794, 0
      %v8933 = vsel %vm1544, %v8801, 0
      %v8936 = vsel %vm1544, %v8808, 0
      %v8939 = vsel %vm1544, %v8815, 0
      %v8942 = vsel %vm1544, %v8822, 0
      %v8945 = vsel %vm1544, %v8829, 0
      %v8948 = vsel %vm1544, %v8836, 0
      %v8951 = vsel %vm1544, %v8843, 0
      %v8954 = vsel %vm1544, %v8850, 0
      %v8957 = vsel %vm1544, %v8857, 0
      %v8960 = vsel %vm1544, %v8864, 0
      %v8963 = vsel %vm1544, %v8871, 0
      %v8966 = vsel %vm1544, %v8878, 0
      %v8969 = vsel %vm1544, %v8885, 0
      %v8972 = vsel %vm1544, %v8892, 0
      %v8975 = vsel %vm1544, %v8899, 0
      %v8978 = vsel %vm1544, %v8907, 0
      %v8981 = vsel %vm6768, %v8732, 0
      %8983 = vmatprep.subr.bf16.mxu0 0
      %8984 = vmatpush1.bf16.msra.mxu0 %v8981
      %8985 = vmatprep.subr.bf16.mxu0 0
      %8986 = vmatpush1.bf16.msra.mxu0 0
      %8987 = vmatprep.subr.bf16.mxu0 0
      %8988 = vmatpush1.bf16.msra.mxu0 0
      %8989 = vmatprep.subr.bf16.mxu0 0
      %8990 = vmatpush1.bf16.msra.mxu0 0
      %8991 = vmatprep.subr.bf16.mxu0 0
      %8992 = vmatpush1.bf16.msra.mxu0 0
      %8993 = vmatprep.subr.bf16.mxu0 0
      %8994 = vmatpush1.bf16.msra.mxu0 0
      %8995 = vmatprep.subr.bf16.mxu0 0
      %8996 = vmatpush1.bf16.msra.mxu0 0
      %8997 = vmatprep.subr.bf16.mxu0 0
      %8998 = vmatpush1.bf16.msra.mxu0 0
      %8999 = vmatprep.subr.bf16.mxu0 0
      %9000 = vmatpush1.bf16.msra.mxu0 0
      %9001 = vmatprep.subr.bf16.mxu0 0
      %9002 = vmatpush1.bf16.msra.mxu0 0
      %9003 = vmatprep.subr.bf16.mxu0 0
      %9004 = vmatpush1.bf16.msra.mxu0 0
      %9005 = vmatprep.subr.bf16.mxu0 0
      %9006 = vmatpush1.bf16.msra.mxu0 0
      %9007 = vmatprep.subr.bf16.mxu0 0
      %9008 = vmatpush1.bf16.msra.mxu0 0
      %9009 = vmatprep.subr.bf16.mxu0 0
      %9010 = vmatpush1.bf16.msra.mxu0 0
      %9011 = vmatprep.subr.bf16.mxu0 0
      %9012 = vmatpush1.bf16.msra.mxu0 0
      %9013 = vmatprep.subr.bf16.mxu0 0
      %9014 = vmatpush1.bf16.msra.mxu0 0
      %9015 = vmatprep.mubr.bf16.mxu0 0
      %9016 = vmatmul.mubr.bf16.gmra.mrb[0].mxu0 %v8909
      %v9017 = vpop.f32.mrb[0].mxu0
      %v9018 = vadd.f32 0.0, %v9017
      %v9019 = vpop.f32.mrb[0].mxu0
      %v9020 = vpop.f32.mrb[0].mxu0
      %v9021 = vadd.f32 0.0, %v9020
      %v9022 = vpop.f32.mrb[0].mxu0
      %9023 = vmatprep.mubr.bf16.mxu0 0
      %9024 = vmatmul.mubr.bf16.gmra.mrb[0].mxu0 %v8912
      %v9025 = vpop.f32.mrb[0].mxu0
      %v9026 = vadd.f32 0.0, %v9025
      %v9027 = vpop.f32.mrb[0].mxu0
      %v9028 = vpop.f32.mrb[0].mxu0
      %v9029 = vadd.f32 0.0, %v9028
      %v9030 = vpop.f32.mrb[0].mxu0
      %9031 = vmatprep.mubr.bf16.mxu0 0
      %9032 = vmatmul.mubr.bf16.gmra.mrb[0].mxu0 %v8915
      %v9033 = vpop.f32.mrb[0].mxu0
      %v9034 = vadd.f32 0.0, %v9033
      %v9035 = vpop.f32.mrb[0].mxu0
      %v9036 = vpop.f32.mrb[0].mxu0
      %v9037 = vadd.f32 0.0, %v9036
      %v9038 = vpop.f32.mrb[0].mxu0
      %9039 = vmatprep.mubr.bf16.mxu0 0
      %9040 = vmatmul.mubr.bf16.gmra.mrb[0].mxu0 %v8918
      %v9041 = vpop.f32.mrb[0].mxu0
      %v9042 = vadd.f32 0.0, %v9041
      %v9043 = vpop.f32.mrb[0].mxu0
      %v9044 = vpop.f32.mrb[0].mxu0
      %v9045 = vadd.f32 0.0, %v9044
      %v9046 = vpop.f32.mrb[0].mxu0
      %9047 = vmatprep.mubr.bf16.mxu0 0
      %9048 = vmatmul.mubr.bf16.gmra.mrb[0].mxu0 %v8921
      %v9049 = vpop.f32.mrb[0].mxu0
      %v9050 = vadd.f32 0.0, %v9049
      %v9051 = vpop.f32.mrb[0].mxu0
      %v9052 = vpop.f32.mrb[0].mxu0
      %v9053 = vadd.f32 0.0, %v9052
      %v9054 = vpop.f32.mrb[0].mxu0
      %9055 = vmatprep.mubr.bf16.mxu0 0
      %9056 = vmatmul.mubr.bf16.gmra.mrb[0].mxu0 %v8924
      %v9057 = vpop.f32.mrb[0].mxu0
      %v9058 = vadd.f32 0.0, %v9057
      %v9059 = vpop.f32.mrb[0].mxu0
      %v9060 = vpop.f32.mrb[0].mxu0
      %v9061 = vadd.f32 0.0, %v9060
      %v9062 = vpop.f32.mrb[0].mxu0
      %9063 = vmatprep.mubr.bf16.mxu0 0
      %9064 = vmatmul.mubr.bf16.gmra.mrb[0].mxu0 %v8927
      %v9065 = vpop.f32.mrb[0].mxu0
      %v9066 = vadd.f32 0.0, %v9065
      %v9067 = vpop.f32.mrb[0].mxu0
      %v9068 = vpop.f32.mrb[0].mxu0
      %v9069 = vadd.f32 0.0, %v9068
      %v9070 = vpop.f32.mrb[0].mxu0
      %9071 = vmatprep.mubr.bf16.mxu0 0
      %9072 = vmatmul.mubr.bf16.gmra.mrb[0].mxu0 %v8930
      %v9073 = vpop.f32.mrb[0].mxu0
      %v9074 = vadd.f32 0.0, %v9073
      %v9075 = vpop.f32.mrb[0].mxu0
      %v9076 = vpop.f32.mrb[0].mxu0
      %v9077 = vadd.f32 0.0, %v9076
      %v9078 = vpop.f32.mrb[0].mxu0
      %9079 = vmatprep.mubr.bf16.mxu0 0
      %9080 = vmatmul.mubr.bf16.gmra.mrb[0].mxu0 %v8933
      %v9081 = vpop.f32.mrb[0].mxu0
      %v9082 = vadd.f32 0.0, %v9081
      %v9083 = vpop.f32.mrb[0].mxu0
      %v9084 = vpop.f32.mrb[0].mxu0
      %v9085 = vadd.f32 0.0, %v9084
      %v9086 = vpop.f32.mrb[0].mxu0
      %9087 = vmatprep.mubr.bf16.mxu0 0
      %9088 = vmatmul.mubr.bf16.gmra.mrb[0].mxu0 %v8936
      %v9089 = vpop.f32.mrb[0].mxu0
      %v9090 = vadd.f32 0.0, %v9089
      %v9091 = vpop.f32.mrb[0].mxu0
      %v9092 = vpop.f32.mrb[0].mxu0
      %v9093 = vadd.f32 0.0, %v9092
      %v9094 = vpop.f32.mrb[0].mxu0
      %9095 = vmatprep.mubr.bf16.mxu0 0
      %9096 = vmatmul.mubr.bf16.gmra.mrb[0].mxu0 %v8939
      %v9097 = vpop.f32.mrb[0].mxu0
      %v9098 = vadd.f32 0.0, %v9097
      %v9099 = vpop.f32.mrb[0].mxu0
      %v9100 = vpop.f32.mrb[0].mxu0
      %v9101 = vadd.f32 0.0, %v9100
      %v9102 = vpop.f32.mrb[0].mxu0
      %9103 = vmatprep.mubr.bf16.mxu0 0
      %9104 = vmatmul.mubr.bf16.gmra.mrb[0].mxu0 %v8942
      %v9105 = vpop.f32.mrb[0].mxu0
      %v9106 = vadd.f32 0.0, %v9105
      %v9107 = vpop.f32.mrb[0].mxu0
      %v9108 = vpop.f32.mrb[0].mxu0
      %v9109 = vadd.f32 0.0, %v9108
      %v9110 = vpop.f32.mrb[0].mxu0
      %9111 = vmatprep.mubr.bf16.mxu0 0
      %9112 = vmatmul.mubr.bf16.gmra.mrb[0].mxu0 %v8945
      %v9113 = vpop.f32.mrb[0].mxu0
      %v9114 = vadd.f32 0.0, %v9113
      %v9115 = vpop.f32.mrb[0].mxu0
      %v9116 = vpop.f32.mrb[0].mxu0
      %v9117 = vadd.f32 0.0, %v9116
      %v9118 = vpop.f32.mrb[0].mxu0
      %9119 = vmatprep.mubr.bf16.mxu0 0
      %9120 = vmatmul.mubr.bf16.gmra.mrb[0].mxu0 %v8948
      %v9121 = vpop.f32.mrb[0].mxu0
      %v9122 = vadd.f32 0.0, %v9121
      %v9123 = vpop.f32.mrb[0].mxu0
      %v9124 = vpop.f32.mrb[0].mxu0
      %v9125 = vadd.f32 0.0, %v9124
      %v9126 = vpop.f32.mrb[0].mxu0
      %9127 = vmatprep.mubr.bf16.mxu0 0
      %9128 = vmatmul.mubr.bf16.gmra.mrb[0].mxu0 %v8951
      %v9129 = vpop.f32.mrb[0].mxu0
      %v9130 = vadd.f32 0.0, %v9129
      %v9131 = vpop.f32.mrb[0].mxu0
      %v9132 = vpop.f32.mrb[0].mxu0
      %v9133 = vadd.f32 0.0, %v9132
      %v9134 = vpop.f32.mrb[0].mxu0
      %9135 = vmatprep.mubr.bf16.mxu0 0
      %9136 = vmatmul.mubr.bf16.gmra.mrb[0].mxu0 %v8954
      %v9137 = vpop.f32.mrb[0].mxu0
      %v9138 = vadd.f32 0.0, %v9137
      %v9139 = vpop.f32.mrb[0].mxu0
      %v9140 = vpop.f32.mrb[0].mxu0
      %v9141 = vadd.f32 0.0, %v9140
      %v9142 = vpop.f32.mrb[0].mxu0
      %9143 = vmatprep.mubr.bf16.mxu0 0
      %9144 = vmatmul.mubr.bf16.gmra.mrb[0].mxu0 %v8957
      %v9145 = vpop.f32.mrb[0].mxu0
      %v9146 = vadd.f32 0.0, %v9145
      %v9147 = vpop.f32.mrb[0].mxu0
      %v9148 = vpop.f32.mrb[0].mxu0
      %v9149 = vadd.f32 0.0, %v9148
      %v9150 = vpop.f32.mrb[0].mxu0
      %9151 = vmatprep.mubr.bf16.mxu0 0
      %9152 = vmatmul.mubr.bf16.gmra.mrb[0].mxu0 %v8960
      %v9153 = vpop.f32.mrb[0].mxu0
      %v9154 = vadd.f32 0.0, %v9153
      %v9155 = vpop.f32.mrb[0].mxu0
      %v9156 = vpop.f32.mrb[0].mxu0
      %v9157 = vadd.f32 0.0, %v9156
      %v9158 = vpop.f32.mrb[0].mxu0
      %9159 = vmatprep.mubr.bf16.mxu0 0
      %9160 = vmatmul.mubr.bf16.gmra.mrb[0].mxu0 %v8963
      %v9161 = vpop.f32.mrb[0].mxu0
      %v9162 = vadd.f32 0.0, %v9161
      %v9163 = vpop.f32.mrb[0].mxu0
      %v9164 = vpop.f32.mrb[0].mxu0
      %v9165 = vadd.f32 0.0, %v9164
      %v9166 = vpop.f32.mrb[0].mxu0
      %9167 = vmatprep.mubr.bf16.mxu0 0
      %9168 = vmatmul.mubr.bf16.gmra.mrb[0].mxu0 %v8966
      %v9169 = vpop.f32.mrb[0].mxu0
      %v9170 = vadd.f32 0.0, %v9169
      %v9171 = vpop.f32.mrb[0].mxu0
      %v9172 = vpop.f32.mrb[0].mxu0
      %v9173 = vadd.f32 0.0, %v9172
      %v9174 = vpop.f32.mrb[0].mxu0
      %9175 = vmatprep.mubr.bf16.mxu0 0
      %9176 = vmatmul.mubr.bf16.gmra.mrb[0].mxu0 %v8969
      %v9177 = vpop.f32.mrb[0].mxu0
      %v9178 = vadd.f32 0.0, %v9177
      %v9179 = vpop.f32.mrb[0].mxu0
      %v9180 = vpop.f32.mrb[0].mxu0
      %v9181 = vadd.f32 0.0, %v9180
      %v9182 = vpop.f32.mrb[0].mxu0
      %9183 = vmatprep.mubr.bf16.mxu0 0
      %9184 = vmatmul.mubr.bf16.gmra.mrb[0].mxu0 %v8972
      %v9185 = vpop.f32.mrb[0].mxu0
      %v9186 = vadd.f32 0.0, %v9185
      %v9187 = vpop.f32.mrb[0].mxu0
      %v9188 = vpop.f32.mrb[0].mxu0
      %v9189 = vadd.f32 0.0, %v9188
      %v9190 = vpop.f32.mrb[0].mxu0
      %9191 = vmatprep.mubr.bf16.mxu0 0
      %9192 = vmatmul.mubr.bf16.gmra.mrb[0].mxu0 %v8975
      %v9193 = vpop.f32.mrb[0].mxu0
      %v9194 = vadd.f32 0.0, %v9193
      %v9195 = vpop.f32.mrb[0].mxu0
      %v9196 = vpop.f32.mrb[0].mxu0
      %v9197 = vadd.f32 0.0, %v9196
      %v9198 = vpop.f32.mrb[0].mxu0
      %9199 = vmatprep.mubr.bf16.mxu0 0
      %9200 = vmatmul.mubr.bf16.gmra.mrb[0].mxu0 %v8978
      %v9201 = vpop.f32.mrb[0].mxu0
      %v9202 = vadd.f32 0.0, %v9201
      %v9203 = vpop.f32.mrb[0].mxu0
      %v9204 = vpop.f32.mrb[0].mxu0
      %v9205 = vadd.f32 0.0, %v9204
      %v9206 = vpop.f32.mrb[0].mxu0
      %9207 = vdwg.mxu0
      %v9208 = vld [vmem:[#allocation5] sm:$0xff]
      %v9209 = vld [vmem:[#allocation5 + $0x8] sm:$0xff]
      %v9210 = vld [vmem:[#allocation5 + $0x10] sm:$0xff]
      %v9211 = vld [vmem:[#allocation5 + $0x18] sm:$0xff]
      %v9212 = vld [vmem:[#allocation5 + $0x20] sm:$0xff]
      %v9213 = vld [vmem:[#allocation5 + $0x28] sm:$0xff]
      %v9214 = vld [vmem:[#allocation5 + $0x30] sm:$0xff]
      %v9215 = vld [vmem:[#allocation5 + $0x38] sm:$0xff]
      %v9216 = vld [vmem:[#allocation5 + $0x40] sm:$0xff]
      %v9217 = vld [vmem:[#allocation5 + $0x48] sm:$0xff]
      %v9218 = vld [vmem:[#allocation5 + $0x50] sm:$0xff]
      %v9219 = vld [vmem:[#allocation5 + $0x58] sm:$0xff]
      %v9220 = vld [vmem:[#allocation5 + $0x60] sm:$0xff]
      %v9221 = vld [vmem:[#allocation5 + $0x68] sm:$0xff]
      %v9222 = vld [vmem:[#allocation5 + $0x70] sm:$0xff]
      %v9223 = vld [vmem:[#allocation5 + $0x78] sm:$0xff]
      %v9224 = vld [vmem:[#allocation5 + $0x80] sm:$0xff]
      %v9225 = vld [vmem:[#allocation5 + $0x88] sm:$0xff]
      %v9226 = vld [vmem:[#allocation5 + $0x90] sm:$0xff]
      %v9227 = vld [vmem:[#allocation5 + $0x98] sm:$0xff]
      %v9228 = vld [vmem:[#allocation5 + $0xa0] sm:$0xff]
      %v9229 = vld [vmem:[#allocation5 + $0xa8] sm:$0xff]
      %v9230 = vld [vmem:[#allocation5 + $0xb0] sm:$0xff]
      %v9231 = vld [vmem:[#allocation5 + $0xb8] sm:$0xff]
      %v9232 = vld [vmem:[#allocation5 + $0xc0] sm:$0xff]
      %v9233 = vld [vmem:[#allocation5 + $0xc8] sm:$0xff]
      %v9234 = vld [vmem:[#allocation5 + $0xd0] sm:$0xff]
      %v9235 = vld [vmem:[#allocation5 + $0xd8] sm:$0xff]
      %v9236 = vld [vmem:[#allocation5 + $0xe0] sm:$0xff]
      %v9237 = vld [vmem:[#allocation5 + $0xe8] sm:$0xff]
      %v9238 = vld [vmem:[#allocation5 + $0xf0] sm:$0xff]
      %v9239 = vld [vmem:[#allocation5 + $0xf8] sm:$0xff]
      %v9240 = vld [vmem:[#allocation5 + $0x100] sm:$0xff]
      %v9241 = vld [vmem:[#allocation5 + $0x108] sm:$0xff]
      %v9242 = vld [vmem:[#allocation5 + $0x110] sm:$0xff]
      %v9243 = vld [vmem:[#allocation5 + $0x118] sm:$0xff]
      %v9244 = vld [vmem:[#allocation5 + $0x120] sm:$0xff]
      %v9245 = vld [vmem:[#allocation5 + $0x128] sm:$0xff]
      %v9246 = vld [vmem:[#allocation5 + $0x130] sm:$0xff]
      %v9247 = vld [vmem:[#allocation5 + $0x138] sm:$0xff]
      %v9248 = vld [vmem:[#allocation5 + $0x140] sm:$0xff]
      %v9249 = vld [vmem:[#allocation5 + $0x148] sm:$0xff]
      %v9250 = vld [vmem:[#allocation5 + $0x150] sm:$0xff]
      %v9251 = vld [vmem:[#allocation5 + $0x158] sm:$0xff]
      %v9252 = vld [vmem:[#allocation5 + $0x160] sm:$0xff]
      %v9253 = vld [vmem:[#allocation5 + $0x168] sm:$0xff]
      %v9254 = vld [vmem:[#allocation5 + $0x170] sm:$0xff]
      %v9255 = vld [vmem:[#allocation5 + $0x178] sm:$0xff]
      %v9256 = vadd.f32 %v9208, %v9018
      %v9257 = vadd.f32 %v9209, %v9021
      %v9258 = vadd.f32 %v9210, %v9026
      %v9259 = vadd.f32 %v9211, %v9029
      %v9260 = vadd.f32 %v9212, %v9034
      %v9261 = vadd.f32 %v9213, %v9037
      %v9262 = vadd.f32 %v9214, %v9042
      %v9263 = vadd.f32 %v9215, %v9045
      %v9264 = vadd.f32 %v9216, %v9050
      %v9265 = vadd.f32 %v9217, %v9053
      %v9266 = vadd.f32 %v9218, %v9058
      %v9267 = vadd.f32 %v9219, %v9061
      %v9268 = vadd.f32 %v9220, %v9066
      %v9269 = vadd.f32 %v9221, %v9069
      %v9270 = vadd.f32 %v9222, %v9074
      %v9271 = vadd.f32 %v9223, %v9077
      %v9272 = vadd.f32 %v9224, %v9082
      %v9273 = vadd.f32 %v9225, %v9085
      %v9274 = vadd.f32 %v9226, %v9090
      %v9275 = vadd.f32 %v9227, %v9093
      %v9276 = vadd.f32 %v9228, %v9098
      %v9277 = vadd.f32 %v9229, %v9101
      %v9278 = vadd.f32 %v9230, %v9106
      %v9279 = vadd.f32 %v9231, %v9109
      %v9280 = vadd.f32 %v9232, %v9114
      %v9281 = vadd.f32 %v9233, %v9117
      %v9282 = vadd.f32 %v9234, %v9122
      %v9283 = vadd.f32 %v9235, %v9125
      %v9284 = vadd.f32 %v9236, %v9130
      %v9285 = vadd.f32 %v9237, %v9133
      %v9286 = vadd.f32 %v9238, %v9138
      %v9287 = vadd.f32 %v9239, %v9141
      %v9288 = vadd.f32 %v9240, %v9146
      %v9289 = vadd.f32 %v9241, %v9149
      %v9290 = vadd.f32 %v9242, %v9154
      %v9291 = vadd.f32 %v9243, %v9157
      %v9292 = vadd.f32 %v9244, %v9162
      %v9293 = vadd.f32 %v9245, %v9165
      %v9294 = vadd.f32 %v9246, %v9170
      %v9295 = vadd.f32 %v9247, %v9173
      %v9296 = vadd.f32 %v9248, %v9178
      %v9297 = vadd.f32 %v9249, %v9181
      %v9298 = vadd.f32 %v9250, %v9186
      %v9299 = vadd.f32 %v9251, %v9189
      %v9300 = vadd.f32 %v9252, %v9194
      %v9301 = vadd.f32 %v9253, %v9197
      %v9302 = vadd.f32 %v9254, %v9202
      %v9303 = vadd.f32 %v9255, %v9205
      %9304 = vst.msk [vmem:[#allocation5] sm:$0xff] %vm1544, %v9256
      %9305 = vst.msk [vmem:[#allocation5 + $0x8] sm:$0xff] %vm1544, %v9257
      %9306 = vst.msk [vmem:[#allocation5 + $0x10] sm:$0xff] %vm1544, %v9258
      %9307 = vst.msk [vmem:[#allocation5 + $0x18] sm:$0xff] %vm1544, %v9259
      %9308 = vst.msk [vmem:[#allocation5 + $0x20] sm:$0xff] %vm1544, %v9260
      %9309 = vst.msk [vmem:[#allocation5 + $0x28] sm:$0xff] %vm1544, %v9261
      %9310 = vst.msk [vmem:[#allocation5 + $0x30] sm:$0xff] %vm1544, %v9262
      %9311 = vst.msk [vmem:[#allocation5 + $0x38] sm:$0xff] %vm1544, %v9263
      %9312 = vst.msk [vmem:[#allocation5 + $0x40] sm:$0xff] %vm1544, %v9264
      %9313 = vst.msk [vmem:[#allocation5 + $0x48] sm:$0xff] %vm1544, %v9265
      %9314 = vst.msk [vmem:[#allocation5 + $0x50] sm:$0xff] %vm1544, %v9266
      %9315 = vst.msk [vmem:[#allocation5 + $0x58] sm:$0xff] %vm1544, %v9267
      %9316 = vst.msk [vmem:[#allocation5 + $0x60] sm:$0xff] %vm1544, %v9268
      %9317 = vst.msk [vmem:[#allocation5 + $0x68] sm:$0xff] %vm1544, %v9269
      %9318 = vst.msk [vmem:[#allocation5 + $0x70] sm:$0xff] %vm1544, %v9270
      %9319 = vst.msk [vmem:[#allocation5 + $0x78] sm:$0xff] %vm1544, %v9271
      %9320 = vst.msk [vmem:[#allocation5 + $0x80] sm:$0xff] %vm1544, %v9272
      %9321 = vst.msk [vmem:[#allocation5 + $0x88] sm:$0xff] %vm1544, %v9273
      %9322 = vst.msk [vmem:[#allocation5 + $0x90] sm:$0xff] %vm1544, %v9274
      %9323 = vst.msk [vmem:[#allocation5 + $0x98] sm:$0xff] %vm1544, %v9275
      %9324 = vst.msk [vmem:[#allocation5 + $0xa0] sm:$0xff] %vm1544, %v9276
      %9325 = vst.msk [vmem:[#allocation5 + $0xa8] sm:$0xff] %vm1544, %v9277
      %9326 = vst.msk [vmem:[#allocation5 + $0xb0] sm:$0xff] %vm1544, %v9278
      %9327 = vst.msk [vmem:[#allocation5 + $0xb8] sm:$0xff] %vm1544, %v9279
      %9328 = vst.msk [vmem:[#allocation5 + $0xc0] sm:$0xff] %vm1544, %v9280
      %9329 = vst.msk [vmem:[#allocation5 + $0xc8] sm:$0xff] %vm1544, %v9281
      %9330 = vst.msk [vmem:[#allocation5 + $0xd0] sm:$0xff] %vm1544, %v9282
      %9331 = vst.msk [vmem:[#allocation5 + $0xd8] sm:$0xff] %vm1544, %v9283
      %9332 = vst.msk [vmem:[#allocation5 + $0xe0] sm:$0xff] %vm1544, %v9284
      %9333 = vst.msk [vmem:[#allocation5 + $0xe8] sm:$0xff] %vm1544, %v9285
      %9334 = vst.msk [vmem:[#allocation5 + $0xf0] sm:$0xff] %vm1544, %v9286
      %9335 = vst.msk [vmem:[#allocation5 + $0xf8] sm:$0xff] %vm1544, %v9287
      %9336 = vst.msk [vmem:[#allocation5 + $0x100] sm:$0xff] %vm1544, %v9288
      %9337 = vst.msk [vmem:[#allocation5 + $0x108] sm:$0xff] %vm1544, %v9289
      %9338 = vst.msk [vmem:[#allocation5 + $0x110] sm:$0xff] %vm1544, %v9290
      %9339 = vst.msk [vmem:[#allocation5 + $0x118] sm:$0xff] %vm1544, %v9291
      %9340 = vst.msk [vmem:[#allocation5 + $0x120] sm:$0xff] %vm1544, %v9292
      %9341 = vst.msk [vmem:[#allocation5 + $0x128] sm:$0xff] %vm1544, %v9293
      %9342 = vst.msk [vmem:[#allocation5 + $0x130] sm:$0xff] %vm1544, %v9294
      %9343 = vst.msk [vmem:[#allocation5 + $0x138] sm:$0xff] %vm1544, %v9295
      %9344 = vst.msk [vmem:[#allocation5 + $0x140] sm:$0xff] %vm1544, %v9296
      %9345 = vst.msk [vmem:[#allocation5 + $0x148] sm:$0xff] %vm1544, %v9297
      %9346 = vst.msk [vmem:[#allocation5 + $0x150] sm:$0xff] %vm1544, %v9298
      %9347 = vst.msk [vmem:[#allocation5 + $0x158] sm:$0xff] %vm1544, %v9299
      %9348 = vst.msk [vmem:[#allocation5 + $0x160] sm:$0xff] %vm1544, %v9300
      %9349 = vst.msk [vmem:[#allocation5 + $0x168] sm:$0xff] %vm1544, %v9301
      %9350 = vst.msk [vmem:[#allocation5 + $0x170] sm:$0xff] %vm1544, %v9302
      %9351 = vst.msk [vmem:[#allocation5 + $0x178] sm:$0xff] %vm1544, %v9303
      %s9352 = scalar_lea.vmem %s5, 20
      %v9353 = vld [vmem:[%s9352] sm:$0xf]
      %v9354 = vrot.slane %v8263, 1
      %v9355 = vrot.slane %v8264, 1
      %v9356 = vsel %vm2217, %v9354, %v9355
      %v9357 = vrot.slane %v8265, 1
      %v9358 = vsel %vm2217, %v9355, %v9357
      %v9359 = vrot.slane %v8266, 1
      %v9360 = vsel %vm2217, %v9357, %v9359
      %v9361 = vrot.slane %v8267, 1
      %v9362 = vsel %vm2217, %v9359, %v9361
      %v9363 = vrot.slane %v8268, 1
      %v9364 = vsel %vm2217, %v9361, %v9363
      %v9365 = vrot.slane %v8269, 1
      %v9366 = vsel %vm2217, %v9363, %v9365
      %v9367 = vrot.slane %v8270, 1
      %v9368 = vsel %vm2217, %v9365, %v9367
      %v9369 = vrot.slane %v8271, 1
      %v9370 = vsel %vm2217, %v9367, %v9369
      %v9371 = vrot.slane %v8272, 1
      %v9372 = vsel %vm2217, %v9369, %v9371
      %v9373 = vrot.slane %v8273, 1
      %v9374 = vsel %vm2217, %v9371, %v9373
      %v9375 = vrot.slane %v8274, 1
      %v9376 = vsel %vm2217, %v9373, %v9375
      %v9377 = vrot.slane %v8275, 1
      %v9378 = vsel %vm2217, %v9375, %v9377
      %v9379 = vrot.slane %v8276, 1
      %v9380 = vsel %vm2217, %v9377, %v9379
      %v9381 = vrot.slane %v8277, 1
      %v9382 = vsel %vm2217, %v9379, %v9381
      %v9383 = vrot.slane %v8278, 1
      %v9384 = vsel %vm2217, %v9381, %v9383
      %v9385 = vrot.slane %v8279, 1
      %v9386 = vsel %vm2217, %v9383, %v9385
      %v9387 = vrot.slane %v8280, 1
      %v9388 = vsel %vm2217, %v9385, %v9387
      %v9389 = vrot.slane %v8281, 1
      %v9390 = vsel %vm2217, %v9387, %v9389
      %v9391 = vrot.slane %v8282, 1
      %v9392 = vsel %vm2217, %v9389, %v9391
      %v9393 = vrot.slane %v8283, 1
      %v9394 = vsel %vm2217, %v9391, %v9393
      %v9395 = vrot.slane %v8284, 1
      %v9396 = vsel %vm2217, %v9393, %v9395
      %v9397 = vrot.slane %v8285, 1
      %v9398 = vsel %vm2217, %v9395, %v9397
      %v9399 = vrot.slane %v8286, 1
      %v9400 = vsel %vm2217, %v9397, %v9399
      %v9401 = vrot.slane %v8735, 1
      %v9402 = vsel %vm2217, %v9399, %v9401
      %v9404 = vsel %vm1544, %v9356, 0
      %v9407 = vsel %vm1544, %v9358, 0
      %v9410 = vsel %vm1544, %v9360, 0
      %v9413 = vsel %vm1544, %v9362, 0
      %v9416 = vsel %vm1544, %v9364, 0
      %v9419 = vsel %vm1544, %v9366, 0
      %v9422 = vsel %vm1544, %v9368, 0
      %v9425 = vsel %vm1544, %v9370, 0
      %v9428 = vsel %vm1544, %v9372, 0
      %v9431 = vsel %vm1544, %v9374, 0
      %v9434 = vsel %vm1544, %v9376, 0
      %v9437 = vsel %vm1544, %v9378, 0
      %v9440 = vsel %vm1544, %v9380, 0
      %v9443 = vsel %vm1544, %v9382, 0
      %v9446 = vsel %vm1544, %v9384, 0
      %v9449 = vsel %vm1544, %v9386, 0
      %v9452 = vsel %vm1544, %v9388, 0
      %v9455 = vsel %vm1544, %v9390, 0
      %v9458 = vsel %vm1544, %v9392, 0
      %v9461 = vsel %vm1544, %v9394, 0
      %v9464 = vsel %vm1544, %v9396, 0
      %v9467 = vsel %vm1544, %v9398, 0
      %v9470 = vsel %vm1544, %v9400, 0
      %v9473 = vsel %vm1544, %v9402, 0
      %v9476 = vsel %vm6768, %v9353, 0
      %9478 = vmatprep.subr.bf16.mxu0 0
      %9479 = vmatpush1.bf16.msra.mxu0 %v9476
      %9480 = vmatprep.subr.bf16.mxu0 0
      %9481 = vmatpush1.bf16.msra.mxu0 0
      %9482 = vmatprep.subr.bf16.mxu0 0
      %9483 = vmatpush1.bf16.msra.mxu0 0
      %9484 = vmatprep.subr.bf16.mxu0 0
      %9485 = vmatpush1.bf16.msra.mxu0 0
      %9486 = vmatprep.subr.bf16.mxu0 0
      %9487 = vmatpush1.bf16.msra.mxu0 0
      %9488 = vmatprep.subr.bf16.mxu0 0
      %9489 = vmatpush1.bf16.msra.mxu0 0
      %9490 = vmatprep.subr.bf16.mxu0 0
      %9491 = vmatpush1.bf16.msra.mxu0 0
      %9492 = vmatprep.subr.bf16.mxu0 0
      %9493 = vmatpush1.bf16.msra.mxu0 0
      %9494 = vmatprep.subr.bf16.mxu0 0
      %9495 = vmatpush1.bf16.msra.mxu0 0
      %9496 = vmatprep.subr.bf16.mxu0 0
      %9497 = vmatpush1.bf16.msra.mxu0 0
      %9498 = vmatprep.subr.bf16.mxu0 0
      %9499 = vmatpush1.bf16.msra.mxu0 0
      %9500 = vmatprep.subr.bf16.mxu0 0
      %9501 = vmatpush1.bf16.msra.mxu0 0
      %9502 = vmatprep.subr.bf16.mxu0 0
      %9503 = vmatpush1.bf16.msra.mxu0 0
      %9504 = vmatprep.subr.bf16.mxu0 0
      %9505 = vmatpush1.bf16.msra.mxu0 0
      %9506 = vmatprep.subr.bf16.mxu0 0
      %9507 = vmatpush1.bf16.msra.mxu0 0
      %9508 = vmatprep.subr.bf16.mxu0 0
      %9509 = vmatpush1.bf16.msra.mxu0 0
      %9510 = vmatprep.mubr.bf16.mxu0 0
      %9511 = vmatmul.mubr.bf16.gmra.mrb[0].mxu0 %v9404
      %v9512 = vpop.f32.mrb[0].mxu0
      %v9513 = vadd.f32 0.0, %v9512
      %v9514 = vpop.f32.mrb[0].mxu0
      %v9515 = vpop.f32.mrb[0].mxu0
      %v9516 = vadd.f32 0.0, %v9515
      %v9517 = vpop.f32.mrb[0].mxu0
      %9518 = vmatprep.mubr.bf16.mxu0 0
      %9519 = vmatmul.mubr.bf16.gmra.mrb[0].mxu0 %v9407
      %v9520 = vpop.f32.mrb[0].mxu0
      %v9521 = vadd.f32 0.0, %v9520
      %v9522 = vpop.f32.mrb[0].mxu0
      %v9523 = vpop.f32.mrb[0].mxu0
      %v9524 = vadd.f32 0.0, %v9523
      %v9525 = vpop.f32.mrb[0].mxu0
      %9526 = vmatprep.mubr.bf16.mxu0 0
      %9527 = vmatmul.mubr.bf16.gmra.mrb[0].mxu0 %v9410
      %v9528 = vpop.f32.mrb[0].mxu0
      %v9529 = vadd.f32 0.0, %v9528
      %v9530 = vpop.f32.mrb[0].mxu0
      %v9531 = vpop.f32.mrb[0].mxu0
      %v9532 = vadd.f32 0.0, %v9531
      %v9533 = vpop.f32.mrb[0].mxu0
      %9534 = vmatprep.mubr.bf16.mxu0 0
      %9535 = vmatmul.mubr.bf16.gmra.mrb[0].mxu0 %v9413
      %v9536 = vpop.f32.mrb[0].mxu0
      %v9537 = vadd.f32 0.0, %v9536
      %v9538 = vpop.f32.mrb[0].mxu0
      %v9539 = vpop.f32.mrb[0].mxu0
      %v9540 = vadd.f32 0.0, %v9539
      %v9541 = vpop.f32.mrb[0].mxu0
      %9542 = vmatprep.mubr.bf16.mxu0 0
      %9543 = vmatmul.mubr.bf16.gmra.mrb[0].mxu0 %v9416
      %v9544 = vpop.f32.mrb[0].mxu0
      %v9545 = vadd.f32 0.0, %v9544
      %v9546 = vpop.f32.mrb[0].mxu0
      %v9547 = vpop.f32.mrb[0].mxu0
      %v9548 = vadd.f32 0.0, %v9547
      %v9549 = vpop.f32.mrb[0].mxu0
      %9550 = vmatprep.mubr.bf16.mxu0 0
      %9551 = vmatmul.mubr.bf16.gmra.mrb[0].mxu0 %v9419
      %v9552 = vpop.f32.mrb[0].mxu0
      %v9553 = vadd.f32 0.0, %v9552
      %v9554 = vpop.f32.mrb[0].mxu0
      %v9555 = vpop.f32.mrb[0].mxu0
      %v9556 = vadd.f32 0.0, %v9555
      %v9557 = vpop.f32.mrb[0].mxu0
      %9558 = vmatprep.mubr.bf16.mxu0 0
      %9559 = vmatmul.mubr.bf16.gmra.mrb[0].mxu0 %v9422
      %v9560 = vpop.f32.mrb[0].mxu0
      %v9561 = vadd.f32 0.0, %v9560
      %v9562 = vpop.f32.mrb[0].mxu0
      %v9563 = vpop.f32.mrb[0].mxu0
      %v9564 = vadd.f32 0.0, %v9563
      %v9565 = vpop.f32.mrb[0].mxu0
      %9566 = vmatprep.mubr.bf16.mxu0 0
      %9567 = vmatmul.mubr.bf16.gmra.mrb[0].mxu0 %v9425
      %v9568 = vpop.f32.mrb[0].mxu0
      %v9569 = vadd.f32 0.0, %v9568
      %v9570 = vpop.f32.mrb[0].mxu0
      %v9571 = vpop.f32.mrb[0].mxu0
      %v9572 = vadd.f32 0.0, %v9571
      %v9573 = vpop.f32.mrb[0].mxu0
      %9574 = vmatprep.mubr.bf16.mxu0 0
      %9575 = vmatmul.mubr.bf16.gmra.mrb[0].mxu0 %v9428
      %v9576 = vpop.f32.mrb[0].mxu0
      %v9577 = vadd.f32 0.0, %v9576
      %v9578 = vpop.f32.mrb[0].mxu0
      %v9579 = vpop.f32.mrb[0].mxu0
      %v9580 = vadd.f32 0.0, %v9579
      %v9581 = vpop.f32.mrb[0].mxu0
      %9582 = vmatprep.mubr.bf16.mxu0 0
      %9583 = vmatmul.mubr.bf16.gmra.mrb[0].mxu0 %v9431
      %v9584 = vpop.f32.mrb[0].mxu0
      %v9585 = vadd.f32 0.0, %v9584
      %v9586 = vpop.f32.mrb[0].mxu0
      %v9587 = vpop.f32.mrb[0].mxu0
      %v9588 = vadd.f32 0.0, %v9587
      %v9589 = vpop.f32.mrb[0].mxu0
      %9590 = vmatprep.mubr.bf16.mxu0 0
      %9591 = vmatmul.mubr.bf16.gmra.mrb[0].mxu0 %v9434
      %v9592 = vpop.f32.mrb[0].mxu0
      %v9593 = vadd.f32 0.0, %v9592
      %v9594 = vpop.f32.mrb[0].mxu0
      %v9595 = vpop.f32.mrb[0].mxu0
      %v9596 = vadd.f32 0.0, %v9595
      %v9597 = vpop.f32.mrb[0].mxu0
      %9598 = vmatprep.mubr.bf16.mxu0 0
      %9599 = vmatmul.mubr.bf16.gmra.mrb[0].mxu0 %v9437
      %v9600 = vpop.f32.mrb[0].mxu0
      %v9601 = vadd.f32 0.0, %v9600
      %v9602 = vpop.f32.mrb[0].mxu0
      %v9603 = vpop.f32.mrb[0].mxu0
      %v9604 = vadd.f32 0.0, %v9603
      %v9605 = vpop.f32.mrb[0].mxu0
      %9606 = vmatprep.mubr.bf16.mxu0 0
      %9607 = vmatmul.mubr.bf16.gmra.mrb[0].mxu0 %v9440
      %v9608 = vpop.f32.mrb[0].mxu0
      %v9609 = vadd.f32 0.0, %v9608
      %v9610 = vpop.f32.mrb[0].mxu0
      %v9611 = vpop.f32.mrb[0].mxu0
      %v9612 = vadd.f32 0.0, %v9611
      %v9613 = vpop.f32.mrb[0].mxu0
      %9614 = vmatprep.mubr.bf16.mxu0 0
      %9615 = vmatmul.mubr.bf16.gmra.mrb[0].mxu0 %v9443
      %v9616 = vpop.f32.mrb[0].mxu0
      %v9617 = vadd.f32 0.0, %v9616
      %v9618 = vpop.f32.mrb[0].mxu0
      %v9619 = vpop.f32.mrb[0].mxu0
      %v9620 = vadd.f32 0.0, %v9619
      %v9621 = vpop.f32.mrb[0].mxu0
      %9622 = vmatprep.mubr.bf16.mxu0 0
      %9623 = vmatmul.mubr.bf16.gmra.mrb[0].mxu0 %v9446
      %v9624 = vpop.f32.mrb[0].mxu0
      %v9625 = vadd.f32 0.0, %v9624
      %v9626 = vpop.f32.mrb[0].mxu0
      %v9627 = vpop.f32.mrb[0].mxu0
      %v9628 = vadd.f32 0.0, %v9627
      %v9629 = vpop.f32.mrb[0].mxu0
      %9630 = vmatprep.mubr.bf16.mxu0 0
      %9631 = vmatmul.mubr.bf16.gmra.mrb[0].mxu0 %v9449
      %v9632 = vpop.f32.mrb[0].mxu0
      %v9633 = vadd.f32 0.0, %v9632
      %v9634 = vpop.f32.mrb[0].mxu0
      %v9635 = vpop.f32.mrb[0].mxu0
      %v9636 = vadd.f32 0.0, %v9635
      %v9637 = vpop.f32.mrb[0].mxu0
      %9638 = vmatprep.mubr.bf16.mxu0 0
      %9639 = vmatmul.mubr.bf16.gmra.mrb[0].mxu0 %v9452
      %v9640 = vpop.f32.mrb[0].mxu0
      %v9641 = vadd.f32 0.0, %v9640
      %v9642 = vpop.f32.mrb[0].mxu0
      %v9643 = vpop.f32.mrb[0].mxu0
      %v9644 = vadd.f32 0.0, %v9643
      %v9645 = vpop.f32.mrb[0].mxu0
      %9646 = vmatprep.mubr.bf16.mxu0 0
      %9647 = vmatmul.mubr.bf16.gmra.mrb[0].mxu0 %v9455
      %v9648 = vpop.f32.mrb[0].mxu0
      %v9649 = vadd.f32 0.0, %v9648
      %v9650 = vpop.f32.mrb[0].mxu0
      %v9651 = vpop.f32.mrb[0].mxu0
      %v9652 = vadd.f32 0.0, %v9651
      %v9653 = vpop.f32.mrb[0].mxu0
      %9654 = vmatprep.mubr.bf16.mxu0 0
      %9655 = vmatmul.mubr.bf16.gmra.mrb[0].mxu0 %v9458
      %v9656 = vpop.f32.mrb[0].mxu0
      %v9657 = vadd.f32 0.0, %v9656
      %v9658 = vpop.f32.mrb[0].mxu0
      %v9659 = vpop.f32.mrb[0].mxu0
      %v9660 = vadd.f32 0.0, %v9659
      %v9661 = vpop.f32.mrb[0].mxu0
      %9662 = vmatprep.mubr.bf16.mxu0 0
      %9663 = vmatmul.mubr.bf16.gmra.mrb[0].mxu0 %v9461
      %v9664 = vpop.f32.mrb[0].mxu0
      %v9665 = vadd.f32 0.0, %v9664
      %v9666 = vpop.f32.mrb[0].mxu0
      %v9667 = vpop.f32.mrb[0].mxu0
      %v9668 = vadd.f32 0.0, %v9667
      %v9669 = vpop.f32.mrb[0].mxu0
      %9670 = vmatprep.mubr.bf16.mxu0 0
      %9671 = vmatmul.mubr.bf16.gmra.mrb[0].mxu0 %v9464
      %v9672 = vpop.f32.mrb[0].mxu0
      %v9673 = vadd.f32 0.0, %v9672
      %v9674 = vpop.f32.mrb[0].mxu0
      %v9675 = vpop.f32.mrb[0].mxu0
      %v9676 = vadd.f32 0.0, %v9675
      %v9677 = vpop.f32.mrb[0].mxu0
      %9678 = vmatprep.mubr.bf16.mxu0 0
      %9679 = vmatmul.mubr.bf16.gmra.mrb[0].mxu0 %v9467
      %v9680 = vpop.f32.mrb[0].mxu0
      %v9681 = vadd.f32 0.0, %v9680
      %v9682 = vpop.f32.mrb[0].mxu0
      %v9683 = vpop.f32.mrb[0].mxu0
      %v9684 = vadd.f32 0.0, %v9683
      %v9685 = vpop.f32.mrb[0].mxu0
      %9686 = vmatprep.mubr.bf16.mxu0 0
      %9687 = vmatmul.mubr.bf16.gmra.mrb[0].mxu0 %v9470
      %v9688 = vpop.f32.mrb[0].mxu0
      %v9689 = vadd.f32 0.0, %v9688
      %v9690 = vpop.f32.mrb[0].mxu0
      %v9691 = vpop.f32.mrb[0].mxu0
      %v9692 = vadd.f32 0.0, %v9691
      %v9693 = vpop.f32.mrb[0].mxu0
      %9694 = vmatprep.mubr.bf16.mxu0 0
      %9695 = vmatmul.mubr.bf16.gmra.mrb[0].mxu0 %v9473
      %v9696 = vpop.f32.mrb[0].mxu0
      %v9697 = vadd.f32 0.0, %v9696
      %v9698 = vpop.f32.mrb[0].mxu0
      %v9699 = vpop.f32.mrb[0].mxu0
      %v9700 = vadd.f32 0.0, %v9699
      %v9701 = vpop.f32.mrb[0].mxu0
      %9702 = vdwg.mxu0
      %v9703 = vld [vmem:[#allocation5] sm:$0xff]
      %v9704 = vld [vmem:[#allocation5 + $0x8] sm:$0xff]
      %v9705 = vld [vmem:[#allocation5 + $0x10] sm:$0xff]
      %v9706 = vld [vmem:[#allocation5 + $0x18] sm:$0xff]
      %v9707 = vld [vmem:[#allocation5 + $0x20] sm:$0xff]
      %v9708 = vld [vmem:[#allocation5 + $0x28] sm:$0xff]
      %v9709 = vld [vmem:[#allocation5 + $0x30] sm:$0xff]
      %v9710 = vld [vmem:[#allocation5 + $0x38] sm:$0xff]
      %v9711 = vld [vmem:[#allocation5 + $0x40] sm:$0xff]
      %v9712 = vld [vmem:[#allocation5 + $0x48] sm:$0xff]
      %v9713 = vld [vmem:[#allocation5 + $0x50] sm:$0xff]
      %v9714 = vld [vmem:[#allocation5 + $0x58] sm:$0xff]
      %v9715 = vld [vmem:[#allocation5 + $0x60] sm:$0xff]
      %v9716 = vld [vmem:[#allocation5 + $0x68] sm:$0xff]
      %v9717 = vld [vmem:[#allocation5 + $0x70] sm:$0xff]
      %v9718 = vld [vmem:[#allocation5 + $0x78] sm:$0xff]
      %v9719 = vld [vmem:[#allocation5 + $0x80] sm:$0xff]
      %v9720 = vld [vmem:[#allocation5 + $0x88] sm:$0xff]
      %v9721 = vld [vmem:[#allocation5 + $0x90] sm:$0xff]
      %v9722 = vld [vmem:[#allocation5 + $0x98] sm:$0xff]
      %v9723 = vld [vmem:[#allocation5 + $0xa0] sm:$0xff]
      %v9724 = vld [vmem:[#allocation5 + $0xa8] sm:$0xff]
      %v9725 = vld [vmem:[#allocation5 + $0xb0] sm:$0xff]
      %v9726 = vld [vmem:[#allocation5 + $0xb8] sm:$0xff]
      %v9727 = vld [vmem:[#allocation5 + $0xc0] sm:$0xff]
      %v9728 = vld [vmem:[#allocation5 + $0xc8] sm:$0xff]
      %v9729 = vld [vmem:[#allocation5 + $0xd0] sm:$0xff]
      %v9730 = vld [vmem:[#allocation5 + $0xd8] sm:$0xff]
      %v9731 = vld [vmem:[#allocation5 + $0xe0] sm:$0xff]
      %v9732 = vld [vmem:[#allocation5 + $0xe8] sm:$0xff]
      %v9733 = vld [vmem:[#allocation5 + $0xf0] sm:$0xff]
      %v9734 = vld [vmem:[#allocation5 + $0xf8] sm:$0xff]
      %v9735 = vld [vmem:[#allocation5 + $0x100] sm:$0xff]
      %v9736 = vld [vmem:[#allocation5 + $0x108] sm:$0xff]
      %v9737 = vld [vmem:[#allocation5 + $0x110] sm:$0xff]
      %v9738 = vld [vmem:[#allocation5 + $0x118] sm:$0xff]
      %v9739 = vld [vmem:[#allocation5 + $0x120] sm:$0xff]
      %v9740 = vld [vmem:[#allocation5 + $0x128] sm:$0xff]
      %v9741 = vld [vmem:[#allocation5 + $0x130] sm:$0xff]
      %v9742 = vld [vmem:[#allocation5 + $0x138] sm:$0xff]
      %v9743 = vld [vmem:[#allocation5 + $0x140] sm:$0xff]
      %v9744 = vld [vmem:[#allocation5 + $0x148] sm:$0xff]
      %v9745 = vld [vmem:[#allocation5 + $0x150] sm:$0xff]
      %v9746 = vld [vmem:[#allocation5 + $0x158] sm:$0xff]
      %v9747 = vld [vmem:[#allocation5 + $0x160] sm:$0xff]
      %v9748 = vld [vmem:[#allocation5 + $0x168] sm:$0xff]
      %v9749 = vld [vmem:[#allocation5 + $0x170] sm:$0xff]
      %v9750 = vld [vmem:[#allocation5 + $0x178] sm:$0xff]
      %v9751 = vadd.f32 %v9703, %v9513
      %v9752 = vadd.f32 %v9704, %v9516
      %v9753 = vadd.f32 %v9705, %v9521
      %v9754 = vadd.f32 %v9706, %v9524
      %v9755 = vadd.f32 %v9707, %v9529
      %v9756 = vadd.f32 %v9708, %v9532
      %v9757 = vadd.f32 %v9709, %v9537
      %v9758 = vadd.f32 %v9710, %v9540
      %v9759 = vadd.f32 %v9711, %v9545
      %v9760 = vadd.f32 %v9712, %v9548
      %v9761 = vadd.f32 %v9713, %v9553
      %v9762 = vadd.f32 %v9714, %v9556
      %v9763 = vadd.f32 %v9715, %v9561
      %v9764 = vadd.f32 %v9716, %v9564
      %v9765 = vadd.f32 %v9717, %v9569
      %v9766 = vadd.f32 %v9718, %v9572
      %v9767 = vadd.f32 %v9719, %v9577
      %v9768 = vadd.f32 %v9720, %v9580
      %v9769 = vadd.f32 %v9721, %v9585
      %v9770 = vadd.f32 %v9722, %v9588
      %v9771 = vadd.f32 %v9723, %v9593
      %v9772 = vadd.f32 %v9724, %v9596
      %v9773 = vadd.f32 %v9725, %v9601
      %v9774 = vadd.f32 %v9726, %v9604
      %v9775 = vadd.f32 %v9727, %v9609
      %v9776 = vadd.f32 %v9728, %v9612
      %v9777 = vadd.f32 %v9729, %v9617
      %v9778 = vadd.f32 %v9730, %v9620
      %v9779 = vadd.f32 %v9731, %v9625
      %v9780 = vadd.f32 %v9732, %v9628
      %v9781 = vadd.f32 %v9733, %v9633
      %v9782 = vadd.f32 %v9734, %v9636
      %v9783 = vadd.f32 %v9735, %v9641
      %v9784 = vadd.f32 %v9736, %v9644
      %v9785 = vadd.f32 %v9737, %v9649
      %v9786 = vadd.f32 %v9738, %v9652
      %v9787 = vadd.f32 %v9739, %v9657
      %v9788 = vadd.f32 %v9740, %v9660
      %v9789 = vadd.f32 %v9741, %v9665
      %v9790 = vadd.f32 %v9742, %v9668
      %v9791 = vadd.f32 %v9743, %v9673
      %v9792 = vadd.f32 %v9744, %v9676
      %v9793 = vadd.f32 %v9745, %v9681
      %v9794 = vadd.f32 %v9746, %v9684
      %v9795 = vadd.f32 %v9747, %v9689
      %v9796 = vadd.f32 %v9748, %v9692
      %v9797 = vadd.f32 %v9749, %v9697
      %v9798 = vadd.f32 %v9750, %v9700
      %9799 = vst.msk [vmem:[#allocation5] sm:$0xff] %vm1544, %v9751
      %9800 = vst.msk [vmem:[#allocation5 + $0x8] sm:$0xff] %vm1544, %v9752
      %9801 = vst.msk [vmem:[#allocation5 + $0x10] sm:$0xff] %vm1544, %v9753
      %9802 = vst.msk [vmem:[#allocation5 + $0x18] sm:$0xff] %vm1544, %v9754
      %9803 = vst.msk [vmem:[#allocation5 + $0x20] sm:$0xff] %vm1544, %v9755
      %9804 = vst.msk [vmem:[#allocation5 + $0x28] sm:$0xff] %vm1544, %v9756
      %9805 = vst.msk [vmem:[#allocation5 + $0x30] sm:$0xff] %vm1544, %v9757
      %9806 = vst.msk [vmem:[#allocation5 + $0x38] sm:$0xff] %vm1544, %v9758
      %9807 = vst.msk [vmem:[#allocation5 + $0x40] sm:$0xff] %vm1544, %v9759
      %9808 = vst.msk [vmem:[#allocation5 + $0x48] sm:$0xff] %vm1544, %v9760
      %9809 = vst.msk [vmem:[#allocation5 + $0x50] sm:$0xff] %vm1544, %v9761
      %9810 = vst.msk [vmem:[#allocation5 + $0x58] sm:$0xff] %vm1544, %v9762
      %9811 = vst.msk [vmem:[#allocation5 + $0x60] sm:$0xff] %vm1544, %v9763
      %9812 = vst.msk [vmem:[#allocation5 + $0x68] sm:$0xff] %vm1544, %v9764
      %9813 = vst.msk [vmem:[#allocation5 + $0x70] sm:$0xff] %vm1544, %v9765
      %9814 = vst.msk [vmem:[#allocation5 + $0x78] sm:$0xff] %vm1544, %v9766
      %9815 = vst.msk [vmem:[#allocation5 + $0x80] sm:$0xff] %vm1544, %v9767
      %9816 = vst.msk [vmem:[#allocation5 + $0x88] sm:$0xff] %vm1544, %v9768
      %9817 = vst.msk [vmem:[#allocation5 + $0x90] sm:$0xff] %vm1544, %v9769
      %9818 = vst.msk [vmem:[#allocation5 + $0x98] sm:$0xff] %vm1544, %v9770
      %9819 = vst.msk [vmem:[#allocation5 + $0xa0] sm:$0xff] %vm1544, %v9771
      %9820 = vst.msk [vmem:[#allocation5 + $0xa8] sm:$0xff] %vm1544, %v9772
      %9821 = vst.msk [vmem:[#allocation5 + $0xb0] sm:$0xff] %vm1544, %v9773
      %9822 = vst.msk [vmem:[#allocation5 + $0xb8] sm:$0xff] %vm1544, %v9774
      %9823 = vst.msk [vmem:[#allocation5 + $0xc0] sm:$0xff] %vm1544, %v9775
      %9824 = vst.msk [vmem:[#allocation5 + $0xc8] sm:$0xff] %vm1544, %v9776
      %9825 = vst.msk [vmem:[#allocation5 + $0xd0] sm:$0xff] %vm1544, %v9777
      %9826 = vst.msk [vmem:[#allocation5 + $0xd8] sm:$0xff] %vm1544, %v9778
      %9827 = vst.msk [vmem:[#allocation5 + $0xe0] sm:$0xff] %vm1544, %v9779
      %9828 = vst.msk [vmem:[#allocation5 + $0xe8] sm:$0xff] %vm1544, %v9780
      %9829 = vst.msk [vmem:[#allocation5 + $0xf0] sm:$0xff] %vm1544, %v9781
      %9830 = vst.msk [vmem:[#allocation5 + $0xf8] sm:$0xff] %vm1544, %v9782
      %9831 = vst.msk [vmem:[#allocation5 + $0x100] sm:$0xff] %vm1544, %v9783
      %9832 = vst.msk [vmem:[#allocation5 + $0x108] sm:$0xff] %vm1544, %v9784
      %9833 = vst.msk [vmem:[#allocation5 + $0x110] sm:$0xff] %vm1544, %v9785
      %9834 = vst.msk [vmem:[#allocation5 + $0x118] sm:$0xff] %vm1544, %v9786
      %9835 = vst.msk [vmem:[#allocation5 + $0x120] sm:$0xff] %vm1544, %v9787
      %9836 = vst.msk [vmem:[#allocation5 + $0x128] sm:$0xff] %vm1544, %v9788
      %9837 = vst.msk [vmem:[#allocation5 + $0x130] sm:$0xff] %vm1544, %v9789
      %9838 = vst.msk [vmem:[#allocation5 + $0x138] sm:$0xff] %vm1544, %v9790
      %9839 = vst.msk [vmem:[#allocation5 + $0x140] sm:$0xff] %vm1544, %v9791
      %9840 = vst.msk [vmem:[#allocation5 + $0x148] sm:$0xff] %vm1544, %v9792
      %9841 = vst.msk [vmem:[#allocation5 + $0x150] sm:$0xff] %vm1544, %v9793
      %9842 = vst.msk [vmem:[#allocation5 + $0x158] sm:$0xff] %vm1544, %v9794
      %9843 = vst.msk [vmem:[#allocation5 + $0x160] sm:$0xff] %vm1544, %v9795
      %9844 = vst.msk [vmem:[#allocation5 + $0x168] sm:$0xff] %vm1544, %v9796
      %9845 = vst.msk [vmem:[#allocation5 + $0x170] sm:$0xff] %vm1544, %v9797
      %9846 = vst.msk [vmem:[#allocation5 + $0x178] sm:$0xff] %vm1544, %v9798
      %s9847 = scalar_lea.vmem %s5, 24
      %v9848 = vld [vmem:[%s9847] sm:$0xf]
      %v9851 = vunpack.c.l.b16 %v6295
      %v9852 = vunpack.c.l.b16 %v6296
      %v9853 = vpack.c.b16 %v8261, %v7144
      %v9854 = vpack.c.b16 %v8734, %v8262
      %v9855 = vpack.c.b16 %v9852, %v9851
      %v9857 = vsel %vm1544, %v9853, 0
      %v9860 = vsel %vm1544, %v9854, 0
      %v9863 = vsel %vm1544, %v9855, 0
      %v9866 = vsel %vm6768, %v9848, 0
      %9868 = vmatprep.subr.bf16.mxu0 0
      %9869 = vmatpush1.bf16.msra.mxu0 %v9866
      %9870 = vmatprep.subr.bf16.mxu0 0
      %9871 = vmatpush1.bf16.msra.mxu0 0
      %9872 = vmatprep.subr.bf16.mxu0 0
      %9873 = vmatpush1.bf16.msra.mxu0 0
      %9874 = vmatprep.subr.bf16.mxu0 0
      %9875 = vmatpush1.bf16.msra.mxu0 0
      %9876 = vmatprep.subr.bf16.mxu0 0
      %9877 = vmatpush1.bf16.msra.mxu0 0
      %9878 = vmatprep.subr.bf16.mxu0 0
      %9879 = vmatpush1.bf16.msra.mxu0 0
      %9880 = vmatprep.subr.bf16.mxu0 0
      %9881 = vmatpush1.bf16.msra.mxu0 0
      %9882 = vmatprep.subr.bf16.mxu0 0
      %9883 = vmatpush1.bf16.msra.mxu0 0
      %9884 = vmatprep.subr.bf16.mxu0 0
      %9885 = vmatpush1.bf16.msra.mxu0 0
      %9886 = vmatprep.subr.bf16.mxu0 0
      %9887 = vmatpush1.bf16.msra.mxu0 0
      %9888 = vmatprep.subr.bf16.mxu0 0
      %9889 = vmatpush1.bf16.msra.mxu0 0
      %9890 = vmatprep.subr.bf16.mxu0 0
      %9891 = vmatpush1.bf16.msra.mxu0 0
      %9892 = vmatprep.subr.bf16.mxu0 0
      %9893 = vmatpush1.bf16.msra.mxu0 0
      %9894 = vmatprep.subr.bf16.mxu0 0
      %9895 = vmatpush1.bf16.msra.mxu0 0
      %9896 = vmatprep.subr.bf16.mxu0 0
      %9897 = vmatpush1.bf16.msra.mxu0 0
      %9898 = vmatprep.subr.bf16.mxu0 0
      %9899 = vmatpush1.bf16.msra.mxu0 0
      %9900 = vmatprep.mubr.bf16.mxu0 0
      %9901 = vmatmul.mubr.bf16.gmra.mrb[0].mxu0 %v6706
      %v9902 = vpop.f32.mrb[0].mxu0
      %v9903 = vadd.f32 0.0, %v9902
      %v9904 = vpop.f32.mrb[0].mxu0
      %v9905 = vpop.f32.mrb[0].mxu0
      %v9906 = vadd.f32 0.0, %v9905
      %v9907 = vpop.f32.mrb[0].mxu0
      %9908 = vmatprep.mubr.bf16.mxu0 0
      %9909 = vmatmul.mubr.bf16.gmra.mrb[0].mxu0 %v6709
      %v9910 = vpop.f32.mrb[0].mxu0
      %v9911 = vadd.f32 0.0, %v9910
      %v9912 = vpop.f32.mrb[0].mxu0
      %v9913 = vpop.f32.mrb[0].mxu0
      %v9914 = vadd.f32 0.0, %v9913
      %v9915 = vpop.f32.mrb[0].mxu0
      %9916 = vmatprep.mubr.bf16.mxu0 0
      %9917 = vmatmul.mubr.bf16.gmra.mrb[0].mxu0 %v6712
      %v9918 = vpop.f32.mrb[0].mxu0
      %v9919 = vadd.f32 0.0, %v9918
      %v9920 = vpop.f32.mrb[0].mxu0
      %v9921 = vpop.f32.mrb[0].mxu0
      %v9922 = vadd.f32 0.0, %v9921
      %v9923 = vpop.f32.mrb[0].mxu0
      %9924 = vmatprep.mubr.bf16.mxu0 0
      %9925 = vmatmul.mubr.bf16.gmra.mrb[0].mxu0 %v6715
      %v9926 = vpop.f32.mrb[0].mxu0
      %v9927 = vadd.f32 0.0, %v9926
      %v9928 = vpop.f32.mrb[0].mxu0
      %v9929 = vpop.f32.mrb[0].mxu0
      %v9930 = vadd.f32 0.0, %v9929
      %v9931 = vpop.f32.mrb[0].mxu0
      %9932 = vmatprep.mubr.bf16.mxu0 0
      %9933 = vmatmul.mubr.bf16.gmra.mrb[0].mxu0 %v6718
      %v9934 = vpop.f32.mrb[0].mxu0
      %v9935 = vadd.f32 0.0, %v9934
      %v9936 = vpop.f32.mrb[0].mxu0
      %v9937 = vpop.f32.mrb[0].mxu0
      %v9938 = vadd.f32 0.0, %v9937
      %v9939 = vpop.f32.mrb[0].mxu0
      %9940 = vmatprep.mubr.bf16.mxu0 0
      %9941 = vmatmul.mubr.bf16.gmra.mrb[0].mxu0 %v6721
      %v9942 = vpop.f32.mrb[0].mxu0
      %v9943 = vadd.f32 0.0, %v9942
      %v9944 = vpop.f32.mrb[0].mxu0
      %v9945 = vpop.f32.mrb[0].mxu0
      %v9946 = vadd.f32 0.0, %v9945
      %v9947 = vpop.f32.mrb[0].mxu0
      %9948 = vmatprep.mubr.bf16.mxu0 0
      %9949 = vmatmul.mubr.bf16.gmra.mrb[0].mxu0 %v6724
      %v9950 = vpop.f32.mrb[0].mxu0
      %v9951 = vadd.f32 0.0, %v9950
      %v9952 = vpop.f32.mrb[0].mxu0
      %v9953 = vpop.f32.mrb[0].mxu0
      %v9954 = vadd.f32 0.0, %v9953
      %v9955 = vpop.f32.mrb[0].mxu0
      %9956 = vmatprep.mubr.bf16.mxu0 0
      %9957 = vmatmul.mubr.bf16.gmra.mrb[0].mxu0 %v6727
      %v9958 = vpop.f32.mrb[0].mxu0
      %v9959 = vadd.f32 0.0, %v9958
      %v9960 = vpop.f32.mrb[0].mxu0
      %v9961 = vpop.f32.mrb[0].mxu0
      %v9962 = vadd.f32 0.0, %v9961
      %v9963 = vpop.f32.mrb[0].mxu0
      %9964 = vmatprep.mubr.bf16.mxu0 0
      %9965 = vmatmul.mubr.bf16.gmra.mrb[0].mxu0 %v6730
      %v9966 = vpop.f32.mrb[0].mxu0
      %v9967 = vadd.f32 0.0, %v9966
      %v9968 = vpop.f32.mrb[0].mxu0
      %v9969 = vpop.f32.mrb[0].mxu0
      %v9970 = vadd.f32 0.0, %v9969
      %v9971 = vpop.f32.mrb[0].mxu0
      %9972 = vmatprep.mubr.bf16.mxu0 0
      %9973 = vmatmul.mubr.bf16.gmra.mrb[0].mxu0 %v6733
      %v9974 = vpop.f32.mrb[0].mxu0
      %v9975 = vadd.f32 0.0, %v9974
      %v9976 = vpop.f32.mrb[0].mxu0
      %v9977 = vpop.f32.mrb[0].mxu0
      %v9978 = vadd.f32 0.0, %v9977
      %v9979 = vpop.f32.mrb[0].mxu0
      %9980 = vmatprep.mubr.bf16.mxu0 0
      %9981 = vmatmul.mubr.bf16.gmra.mrb[0].mxu0 %v6736
      %v9982 = vpop.f32.mrb[0].mxu0
      %v9983 = vadd.f32 0.0, %v9982
      %v9984 = vpop.f32.mrb[0].mxu0
      %v9985 = vpop.f32.mrb[0].mxu0
      %v9986 = vadd.f32 0.0, %v9985
      %v9987 = vpop.f32.mrb[0].mxu0
      %9988 = vmatprep.mubr.bf16.mxu0 0
      %9989 = vmatmul.mubr.bf16.gmra.mrb[0].mxu0 %v6739
      %v9990 = vpop.f32.mrb[0].mxu0
      %v9991 = vadd.f32 0.0, %v9990
      %v9992 = vpop.f32.mrb[0].mxu0
      %v9993 = vpop.f32.mrb[0].mxu0
      %v9994 = vadd.f32 0.0, %v9993
      %v9995 = vpop.f32.mrb[0].mxu0
      %9996 = vmatprep.mubr.bf16.mxu0 0
      %9997 = vmatmul.mubr.bf16.gmra.mrb[0].mxu0 %v6742
      %v9998 = vpop.f32.mrb[0].mxu0
      %v9999 = vadd.f32 0.0, %v9998
      %v10000 = vpop.f32.mrb[0].mxu0
      %v10001 = vpop.f32.mrb[0].mxu0
      %v10002 = vadd.f32 0.0, %v10001
      %v10003 = vpop.f32.mrb[0].mxu0
      %10004 = vmatprep.mubr.bf16.mxu0 0
      %10005 = vmatmul.mubr.bf16.gmra.mrb[0].mxu0 %v6745
      %v10006 = vpop.f32.mrb[0].mxu0
      %v10007 = vadd.f32 0.0, %v10006
      %v10008 = vpop.f32.mrb[0].mxu0
      %v10009 = vpop.f32.mrb[0].mxu0
      %v10010 = vadd.f32 0.0, %v10009
      %v10011 = vpop.f32.mrb[0].mxu0
      %10012 = vmatprep.mubr.bf16.mxu0 0
      %10013 = vmatmul.mubr.bf16.gmra.mrb[0].mxu0 %v6748
      %v10014 = vpop.f32.mrb[0].mxu0
      %v10015 = vadd.f32 0.0, %v10014
      %v10016 = vpop.f32.mrb[0].mxu0
      %v10017 = vpop.f32.mrb[0].mxu0
      %v10018 = vadd.f32 0.0, %v10017
      %v10019 = vpop.f32.mrb[0].mxu0
      %10020 = vmatprep.mubr.bf16.mxu0 0
      %10021 = vmatmul.mubr.bf16.gmra.mrb[0].mxu0 %v6751
      %v10022 = vpop.f32.mrb[0].mxu0
      %v10023 = vadd.f32 0.0, %v10022
      %v10024 = vpop.f32.mrb[0].mxu0
      %v10025 = vpop.f32.mrb[0].mxu0
      %v10026 = vadd.f32 0.0, %v10025
      %v10027 = vpop.f32.mrb[0].mxu0
      %10028 = vmatprep.mubr.bf16.mxu0 0
      %10029 = vmatmul.mubr.bf16.gmra.mrb[0].mxu0 %v6754
      %v10030 = vpop.f32.mrb[0].mxu0
      %v10031 = vadd.f32 0.0, %v10030
      %v10032 = vpop.f32.mrb[0].mxu0
      %v10033 = vpop.f32.mrb[0].mxu0
      %v10034 = vadd.f32 0.0, %v10033
      %v10035 = vpop.f32.mrb[0].mxu0
      %10036 = vmatprep.mubr.bf16.mxu0 0
      %10037 = vmatmul.mubr.bf16.gmra.mrb[0].mxu0 %v6757
      %v10038 = vpop.f32.mrb[0].mxu0
      %v10039 = vadd.f32 0.0, %v10038
      %v10040 = vpop.f32.mrb[0].mxu0
      %v10041 = vpop.f32.mrb[0].mxu0
      %v10042 = vadd.f32 0.0, %v10041
      %v10043 = vpop.f32.mrb[0].mxu0
      %10044 = vmatprep.mubr.bf16.mxu0 0
      %10045 = vmatmul.mubr.bf16.gmra.mrb[0].mxu0 %v6760
      %v10046 = vpop.f32.mrb[0].mxu0
      %v10047 = vadd.f32 0.0, %v10046
      %v10048 = vpop.f32.mrb[0].mxu0
      %v10049 = vpop.f32.mrb[0].mxu0
      %v10050 = vadd.f32 0.0, %v10049
      %v10051 = vpop.f32.mrb[0].mxu0
      %10052 = vmatprep.mubr.bf16.mxu0 0
      %10053 = vmatmul.mubr.bf16.gmra.mrb[0].mxu0 %v6763
      %v10054 = vpop.f32.mrb[0].mxu0
      %v10055 = vadd.f32 0.0, %v10054
      %v10056 = vpop.f32.mrb[0].mxu0
      %v10057 = vpop.f32.mrb[0].mxu0
      %v10058 = vadd.f32 0.0, %v10057
      %v10059 = vpop.f32.mrb[0].mxu0
      %10060 = vmatprep.mubr.bf16.mxu0 0
      %10061 = vmatmul.mubr.bf16.gmra.mrb[0].mxu0 %v6766
      %v10062 = vpop.f32.mrb[0].mxu0
      %v10063 = vadd.f32 0.0, %v10062
      %v10064 = vpop.f32.mrb[0].mxu0
      %v10065 = vpop.f32.mrb[0].mxu0
      %v10066 = vadd.f32 0.0, %v10065
      %v10067 = vpop.f32.mrb[0].mxu0
      %10068 = vmatprep.mubr.bf16.mxu0 0
      %10069 = vmatmul.mubr.bf16.gmra.mrb[0].mxu0 %v9857
      %v10070 = vpop.f32.mrb[0].mxu0
      %v10071 = vadd.f32 0.0, %v10070
      %v10072 = vpop.f32.mrb[0].mxu0
      %v10073 = vpop.f32.mrb[0].mxu0
      %v10074 = vadd.f32 0.0, %v10073
      %v10075 = vpop.f32.mrb[0].mxu0
      %10076 = vmatprep.mubr.bf16.mxu0 0
      %10077 = vmatmul.mubr.bf16.gmra.mrb[0].mxu0 %v9860
      %v10078 = vpop.f32.mrb[0].mxu0
      %v10079 = vadd.f32 0.0, %v10078
      %v10080 = vpop.f32.mrb[0].mxu0
      %v10081 = vpop.f32.mrb[0].mxu0
      %v10082 = vadd.f32 0.0, %v10081
      %v10083 = vpop.f32.mrb[0].mxu0
      %10084 = vmatprep.mubr.bf16.mxu0 0
      %10085 = vmatmul.mubr.bf16.gmra.mrb[0].mxu0 %v9863
      %v10086 = vpop.f32.mrb[0].mxu0
      %v10087 = vadd.f32 0.0, %v10086
      %v10088 = vpop.f32.mrb[0].mxu0
      %v10089 = vpop.f32.mrb[0].mxu0
      %v10090 = vadd.f32 0.0, %v10089
      %v10091 = vpop.f32.mrb[0].mxu0
      %10092 = vdwg.mxu0
      %v10093 = vld [vmem:[#allocation5] sm:$0xff]
      %v10094 = vld [vmem:[#allocation5 + $0x8] sm:$0xff]
      %v10095 = vld [vmem:[#allocation5 + $0x10] sm:$0xff]
      %v10096 = vld [vmem:[#allocation5 + $0x18] sm:$0xff]
      %v10097 = vld [vmem:[#allocation5 + $0x20] sm:$0xff]
      %v10098 = vld [vmem:[#allocation5 + $0x28] sm:$0xff]
      %v10099 = vld [vmem:[#allocation5 + $0x30] sm:$0xff]
      %v10100 = vld [vmem:[#allocation5 + $0x38] sm:$0xff]
      %v10101 = vld [vmem:[#allocation5 + $0x40] sm:$0xff]
      %v10102 = vld [vmem:[#allocation5 + $0x48] sm:$0xff]
      %v10103 = vld [vmem:[#allocation5 + $0x50] sm:$0xff]
      %v10104 = vld [vmem:[#allocation5 + $0x58] sm:$0xff]
      %v10105 = vld [vmem:[#allocation5 + $0x60] sm:$0xff]
      %v10106 = vld [vmem:[#allocation5 + $0x68] sm:$0xff]
      %v10107 = vld [vmem:[#allocation5 + $0x70] sm:$0xff]
      %v10108 = vld [vmem:[#allocation5 + $0x78] sm:$0xff]
      %v10109 = vld [vmem:[#allocation5 + $0x80] sm:$0xff]
      %v10110 = vld [vmem:[#allocation5 + $0x88] sm:$0xff]
      %v10111 = vld [vmem:[#allocation5 + $0x90] sm:$0xff]
      %v10112 = vld [vmem:[#allocation5 + $0x98] sm:$0xff]
      %v10113 = vld [vmem:[#allocation5 + $0xa0] sm:$0xff]
      %v10114 = vld [vmem:[#allocation5 + $0xa8] sm:$0xff]
      %v10115 = vld [vmem:[#allocation5 + $0xb0] sm:$0xff]
      %v10116 = vld [vmem:[#allocation5 + $0xb8] sm:$0xff]
      %v10117 = vld [vmem:[#allocation5 + $0xc0] sm:$0xff]
      %v10118 = vld [vmem:[#allocation5 + $0xc8] sm:$0xff]
      %v10119 = vld [vmem:[#allocation5 + $0xd0] sm:$0xff]
      %v10120 = vld [vmem:[#allocation5 + $0xd8] sm:$0xff]
      %v10121 = vld [vmem:[#allocation5 + $0xe0] sm:$0xff]
      %v10122 = vld [vmem:[#allocation5 + $0xe8] sm:$0xff]
      %v10123 = vld [vmem:[#allocation5 + $0xf0] sm:$0xff]
      %v10124 = vld [vmem:[#allocation5 + $0xf8] sm:$0xff]
      %v10125 = vld [vmem:[#allocation5 + $0x100] sm:$0xff]
      %v10126 = vld [vmem:[#allocation5 + $0x108] sm:$0xff]
      %v10127 = vld [vmem:[#allocation5 + $0x110] sm:$0xff]
      %v10128 = vld [vmem:[#allocation5 + $0x118] sm:$0xff]
      %v10129 = vld [vmem:[#allocation5 + $0x120] sm:$0xff]
      %v10130 = vld [vmem:[#allocation5 + $0x128] sm:$0xff]
      %v10131 = vld [vmem:[#allocation5 + $0x130] sm:$0xff]
      %v10132 = vld [vmem:[#allocation5 + $0x138] sm:$0xff]
      %v10133 = vld [vmem:[#allocation5 + $0x140] sm:$0xff]
      %v10134 = vld [vmem:[#allocation5 + $0x148] sm:$0xff]
      %v10135 = vld [vmem:[#allocation5 + $0x150] sm:$0xff]
      %v10136 = vld [vmem:[#allocation5 + $0x158] sm:$0xff]
      %v10137 = vld [vmem:[#allocation5 + $0x160] sm:$0xff]
      %v10138 = vld [vmem:[#allocation5 + $0x168] sm:$0xff]
      %v10139 = vld [vmem:[#allocation5 + $0x170] sm:$0xff]
      %v10140 = vld [vmem:[#allocation5 + $0x178] sm:$0xff]
      %v10141 = vadd.f32 %v10093, %v9903
      %v10142 = vadd.f32 %v10094, %v9906
      %v10143 = vadd.f32 %v10095, %v9911
      %v10144 = vadd.f32 %v10096, %v9914
      %v10145 = vadd.f32 %v10097, %v9919
      %v10146 = vadd.f32 %v10098, %v9922
      %v10147 = vadd.f32 %v10099, %v9927
      %v10148 = vadd.f32 %v10100, %v9930
      %v10149 = vadd.f32 %v10101, %v9935
      %v10150 = vadd.f32 %v10102, %v9938
      %v10151 = vadd.f32 %v10103, %v9943
      %v10152 = vadd.f32 %v10104, %v9946
      %v10153 = vadd.f32 %v10105, %v9951
      %v10154 = vadd.f32 %v10106, %v9954
      %v10155 = vadd.f32 %v10107, %v9959
      %v10156 = vadd.f32 %v10108, %v9962
      %v10157 = vadd.f32 %v10109, %v9967
      %v10158 = vadd.f32 %v10110, %v9970
      %v10159 = vadd.f32 %v10111, %v9975
      %v10160 = vadd.f32 %v10112, %v9978
      %v10161 = vadd.f32 %v10113, %v9983
      %v10162 = vadd.f32 %v10114, %v9986
      %v10163 = vadd.f32 %v10115, %v9991
      %v10164 = vadd.f32 %v10116, %v9994
      %v10165 = vadd.f32 %v10117, %v9999
      %v10166 = vadd.f32 %v10118, %v10002
      %v10167 = vadd.f32 %v10119, %v10007
      %v10168 = vadd.f32 %v10120, %v10010
      %v10169 = vadd.f32 %v10121, %v10015
      %v10170 = vadd.f32 %v10122, %v10018
      %v10171 = vadd.f32 %v10123, %v10023
      %v10172 = vadd.f32 %v10124, %v10026
      %v10173 = vadd.f32 %v10125, %v10031
      %v10174 = vadd.f32 %v10126, %v10034
      %v10175 = vadd.f32 %v10127, %v10039
      %v10176 = vadd.f32 %v10128, %v10042
      %v10177 = vadd.f32 %v10129, %v10047
      %v10178 = vadd.f32 %v10130, %v10050
      %v10179 = vadd.f32 %v10131, %v10055
      %v10180 = vadd.f32 %v10132, %v10058
      %v10181 = vadd.f32 %v10133, %v10063
      %v10182 = vadd.f32 %v10134, %v10066
      %v10183 = vadd.f32 %v10135, %v10071
      %v10184 = vadd.f32 %v10136, %v10074
      %v10185 = vadd.f32 %v10137, %v10079
      %v10186 = vadd.f32 %v10138, %v10082
      %v10187 = vadd.f32 %v10139, %v10087
      %v10188 = vadd.f32 %v10140, %v10090
      %10189 = vst.msk [vmem:[#allocation5] sm:$0xff] %vm1544, %v10141
      %10190 = vst.msk [vmem:[#allocation5 + $0x8] sm:$0xff] %vm1544, %v10142
      %10191 = vst.msk [vmem:[#allocation5 + $0x10] sm:$0xff] %vm1544, %v10143
      %10192 = vst.msk [vmem:[#allocation5 + $0x18] sm:$0xff] %vm1544, %v10144
      %10193 = vst.msk [vmem:[#allocation5 + $0x20] sm:$0xff] %vm1544, %v10145
      %10194 = vst.msk [vmem:[#allocation5 + $0x28] sm:$0xff] %vm1544, %v10146
      %10195 = vst.msk [vmem:[#allocation5 + $0x30] sm:$0xff] %vm1544, %v10147
      %10196 = vst.msk [vmem:[#allocation5 + $0x38] sm:$0xff] %vm1544, %v10148
      %10197 = vst.msk [vmem:[#allocation5 + $0x40] sm:$0xff] %vm1544, %v10149
      %10198 = vst.msk [vmem:[#allocation5 + $0x48] sm:$0xff] %vm1544, %v10150
      %10199 = vst.msk [vmem:[#allocation5 + $0x50] sm:$0xff] %vm1544, %v10151
      %10200 = vst.msk [vmem:[#allocation5 + $0x58] sm:$0xff] %vm1544, %v10152
      %10201 = vst.msk [vmem:[#allocation5 + $0x60] sm:$0xff] %vm1544, %v10153
      %10202 = vst.msk [vmem:[#allocation5 + $0x68] sm:$0xff] %vm1544, %v10154
      %10203 = vst.msk [vmem:[#allocation5 + $0x70] sm:$0xff] %vm1544, %v10155
      %10204 = vst.msk [vmem:[#allocation5 + $0x78] sm:$0xff] %vm1544, %v10156
      %10205 = vst.msk [vmem:[#allocation5 + $0x80] sm:$0xff] %vm1544, %v10157
      %10206 = vst.msk [vmem:[#allocation5 + $0x88] sm:$0xff] %vm1544, %v10158
      %10207 = vst.msk [vmem:[#allocation5 + $0x90] sm:$0xff] %vm1544, %v10159
      %10208 = vst.msk [vmem:[#allocation5 + $0x98] sm:$0xff] %vm1544, %v10160
      %10209 = vst.msk [vmem:[#allocation5 + $0xa0] sm:$0xff] %vm1544, %v10161
      %10210 = vst.msk [vmem:[#allocation5 + $0xa8] sm:$0xff] %vm1544, %v10162
      %10211 = vst.msk [vmem:[#allocation5 + $0xb0] sm:$0xff] %vm1544, %v10163
      %10212 = vst.msk [vmem:[#allocation5 + $0xb8] sm:$0xff] %vm1544, %v10164
      %10213 = vst.msk [vmem:[#allocation5 + $0xc0] sm:$0xff] %vm1544, %v10165
      %10214 = vst.msk [vmem:[#allocation5 + $0xc8] sm:$0xff] %vm1544, %v10166
      %10215 = vst.msk [vmem:[#allocation5 + $0xd0] sm:$0xff] %vm1544, %v10167
      %10216 = vst.msk [vmem:[#allocation5 + $0xd8] sm:$0xff] %vm1544, %v10168
      %10217 = vst.msk [vmem:[#allocation5 + $0xe0] sm:$0xff] %vm1544, %v10169
      %10218 = vst.msk [vmem:[#allocation5 + $0xe8] sm:$0xff] %vm1544, %v10170
      %10219 = vst.msk [vmem:[#allocation5 + $0xf0] sm:$0xff] %vm1544, %v10171
      %10220 = vst.msk [vmem:[#allocation5 + $0xf8] sm:$0xff] %vm1544, %v10172
      %10221 = vst.msk [vmem:[#allocation5 + $0x100] sm:$0xff] %vm1544, %v10173
      %10222 = vst.msk [vmem:[#allocation5 + $0x108] sm:$0xff] %vm1544, %v10174
      %10223 = vst.msk [vmem:[#allocation5 + $0x110] sm:$0xff] %vm1544, %v10175
      %10224 = vst.msk [vmem:[#allocation5 + $0x118] sm:$0xff] %vm1544, %v10176
      %10225 = vst.msk [vmem:[#allocation5 + $0x120] sm:$0xff] %vm1544, %v10177
      %10226 = vst.msk [vmem:[#allocation5 + $0x128] sm:$0xff] %vm1544, %v10178
      %10227 = vst.msk [vmem:[#allocation5 + $0x130] sm:$0xff] %vm1544, %v10179
      %10228 = vst.msk [vmem:[#allocation5 + $0x138] sm:$0xff] %vm1544, %v10180
      %10229 = vst.msk [vmem:[#allocation5 + $0x140] sm:$0xff] %vm1544, %v10181
      %10230 = vst.msk [vmem:[#allocation5 + $0x148] sm:$0xff] %vm1544, %v10182
      %10231 = vst.msk [vmem:[#allocation5 + $0x150] sm:$0xff] %vm1544, %v10183
      %10232 = vst.msk [vmem:[#allocation5 + $0x158] sm:$0xff] %vm1544, %v10184
      %10233 = vst.msk [vmem:[#allocation5 + $0x160] sm:$0xff] %vm1544, %v10185
      %10234 = vst.msk [vmem:[#allocation5 + $0x168] sm:$0xff] %vm1544, %v10186
      %10235 = vst.msk [vmem:[#allocation5 + $0x170] sm:$0xff] %vm1544, %v10187
      %10236 = vst.msk [vmem:[#allocation5 + $0x178] sm:$0xff] %vm1544, %v10188
      %s10237 = scalar_lea.vmem %s5, 28
      %v10238 = vld [vmem:[%s10237] sm:$0xf]
      %v10240 = vunpack.c.l.b16 %v6297
      %v10241 = vpack.c.b16 %v10240, %v10240
      %v10242 = vshll.u32 %v9853, 16
      %v10244 = vrot.slane %v10242, 1
      %v10245 = vsel %vm1598, %v7312, %v10244
      %v10246 = vshrl.u32 %v9853, 16
      %v10248 = vor.u32 %v10246, %v10244
      %v10249 = vshll.u32 %v9854, 16
      %v10251 = vrot.slane %v10249, 1
      %v10252 = vsel %vm1598, %v10248, %v10251
      %v10253 = vshrl.u32 %v9854, 16
      %v10255 = vor.u32 %v10253, %v10251
      %v10256 = vshll.u32 %v9855, 16
      %v10258 = vrot.slane %v10256, 1
      %v10259 = vsel %vm1598, %v10255, %v10258
      %v10260 = vshrl.u32 %v9855, 16
      %v10262 = vor.u32 %v10260, %v10258
      %v10264 = vshll.u32 %v10241, 16
      %v10266 = vrot.slane %v10264, 1
      %v10267 = vsel %vm1598, %v10262, %v10266
      %v10269 = vsel %vm1544, %v10245, 0
      %v10272 = vsel %vm1544, %v10252, 0
      %v10275 = vsel %vm1544, %v10259, 0
      %v10278 = vsel %vm1544, %v10267, 0
      %v10281 = vsel %vm6768, %v10238, 0
      %10283 = vmatprep.subr.bf16.mxu0 0
      %10284 = vmatpush1.bf16.msra.mxu0 %v10281
      %10285 = vmatprep.subr.bf16.mxu0 0
      %10286 = vmatpush1.bf16.msra.mxu0 0
      %10287 = vmatprep.subr.bf16.mxu0 0
      %10288 = vmatpush1.bf16.msra.mxu0 0
      %10289 = vmatprep.subr.bf16.mxu0 0
      %10290 = vmatpush1.bf16.msra.mxu0 0
      %10291 = vmatprep.subr.bf16.mxu0 0
      %10292 = vmatpush1.bf16.msra.mxu0 0
      %10293 = vmatprep.subr.bf16.mxu0 0
      %10294 = vmatpush1.bf16.msra.mxu0 0
      %10295 = vmatprep.subr.bf16.mxu0 0
      %10296 = vmatpush1.bf16.msra.mxu0 0
      %10297 = vmatprep.subr.bf16.mxu0 0
      %10298 = vmatpush1.bf16.msra.mxu0 0
      %10299 = vmatprep.subr.bf16.mxu0 0
      %10300 = vmatpush1.bf16.msra.mxu0 0
      %10301 = vmatprep.subr.bf16.mxu0 0
      %10302 = vmatpush1.bf16.msra.mxu0 0
      %10303 = vmatprep.subr.bf16.mxu0 0
      %10304 = vmatpush1.bf16.msra.mxu0 0
      %10305 = vmatprep.subr.bf16.mxu0 0
      %10306 = vmatpush1.bf16.msra.mxu0 0
      %10307 = vmatprep.subr.bf16.mxu0 0
      %10308 = vmatpush1.bf16.msra.mxu0 0
      %10309 = vmatprep.subr.bf16.mxu0 0
      %10310 = vmatpush1.bf16.msra.mxu0 0
      %10311 = vmatprep.subr.bf16.mxu0 0
      %10312 = vmatpush1.bf16.msra.mxu0 0
      %10313 = vmatprep.subr.bf16.mxu0 0
      %10314 = vmatpush1.bf16.msra.mxu0 0
      %10315 = vmatprep.mubr.bf16.mxu0 0
      %10316 = vmatmul.mubr.bf16.gmra.mrb[0].mxu0 %v7328
      %v10317 = vpop.f32.mrb[0].mxu0
      %v10318 = vadd.f32 0.0, %v10317
      %v10319 = vpop.f32.mrb[0].mxu0
      %v10320 = vpop.f32.mrb[0].mxu0
      %v10321 = vadd.f32 0.0, %v10320
      %v10322 = vpop.f32.mrb[0].mxu0
      %10323 = vmatprep.mubr.bf16.mxu0 0
      %10324 = vmatmul.mubr.bf16.gmra.mrb[0].mxu0 %v7331
      %v10325 = vpop.f32.mrb[0].mxu0
      %v10326 = vadd.f32 0.0, %v10325
      %v10327 = vpop.f32.mrb[0].mxu0
      %v10328 = vpop.f32.mrb[0].mxu0
      %v10329 = vadd.f32 0.0, %v10328
      %v10330 = vpop.f32.mrb[0].mxu0
      %10331 = vmatprep.mubr.bf16.mxu0 0
      %10332 = vmatmul.mubr.bf16.gmra.mrb[0].mxu0 %v7334
      %v10333 = vpop.f32.mrb[0].mxu0
      %v10334 = vadd.f32 0.0, %v10333
      %v10335 = vpop.f32.mrb[0].mxu0
      %v10336 = vpop.f32.mrb[0].mxu0
      %v10337 = vadd.f32 0.0, %v10336
      %v10338 = vpop.f32.mrb[0].mxu0
      %10339 = vmatprep.mubr.bf16.mxu0 0
      %10340 = vmatmul.mubr.bf16.gmra.mrb[0].mxu0 %v7337
      %v10341 = vpop.f32.mrb[0].mxu0
      %v10342 = vadd.f32 0.0, %v10341
      %v10343 = vpop.f32.mrb[0].mxu0
      %v10344 = vpop.f32.mrb[0].mxu0
      %v10345 = vadd.f32 0.0, %v10344
      %v10346 = vpop.f32.mrb[0].mxu0
      %10347 = vmatprep.mubr.bf16.mxu0 0
      %10348 = vmatmul.mubr.bf16.gmra.mrb[0].mxu0 %v7340
      %v10349 = vpop.f32.mrb[0].mxu0
      %v10350 = vadd.f32 0.0, %v10349
      %v10351 = vpop.f32.mrb[0].mxu0
      %v10352 = vpop.f32.mrb[0].mxu0
      %v10353 = vadd.f32 0.0, %v10352
      %v10354 = vpop.f32.mrb[0].mxu0
      %10355 = vmatprep.mubr.bf16.mxu0 0
      %10356 = vmatmul.mubr.bf16.gmra.mrb[0].mxu0 %v7343
      %v10357 = vpop.f32.mrb[0].mxu0
      %v10358 = vadd.f32 0.0, %v10357
      %v10359 = vpop.f32.mrb[0].mxu0
      %v10360 = vpop.f32.mrb[0].mxu0
      %v10361 = vadd.f32 0.0, %v10360
      %v10362 = vpop.f32.mrb[0].mxu0
      %10363 = vmatprep.mubr.bf16.mxu0 0
      %10364 = vmatmul.mubr.bf16.gmra.mrb[0].mxu0 %v7346
      %v10365 = vpop.f32.mrb[0].mxu0
      %v10366 = vadd.f32 0.0, %v10365
      %v10367 = vpop.f32.mrb[0].mxu0
      %v10368 = vpop.f32.mrb[0].mxu0
      %v10369 = vadd.f32 0.0, %v10368
      %v10370 = vpop.f32.mrb[0].mxu0
      %10371 = vmatprep.mubr.bf16.mxu0 0
      %10372 = vmatmul.mubr.bf16.gmra.mrb[0].mxu0 %v7349
      %v10373 = vpop.f32.mrb[0].mxu0
      %v10374 = vadd.f32 0.0, %v10373
      %v10375 = vpop.f32.mrb[0].mxu0
      %v10376 = vpop.f32.mrb[0].mxu0
      %v10377 = vadd.f32 0.0, %v10376
      %v10378 = vpop.f32.mrb[0].mxu0
      %10379 = vmatprep.mubr.bf16.mxu0 0
      %10380 = vmatmul.mubr.bf16.gmra.mrb[0].mxu0 %v7352
      %v10381 = vpop.f32.mrb[0].mxu0
      %v10382 = vadd.f32 0.0, %v10381
      %v10383 = vpop.f32.mrb[0].mxu0
      %v10384 = vpop.f32.mrb[0].mxu0
      %v10385 = vadd.f32 0.0, %v10384
      %v10386 = vpop.f32.mrb[0].mxu0
      %10387 = vmatprep.mubr.bf16.mxu0 0
      %10388 = vmatmul.mubr.bf16.gmra.mrb[0].mxu0 %v7355
      %v10389 = vpop.f32.mrb[0].mxu0
      %v10390 = vadd.f32 0.0, %v10389
      %v10391 = vpop.f32.mrb[0].mxu0
      %v10392 = vpop.f32.mrb[0].mxu0
      %v10393 = vadd.f32 0.0, %v10392
      %v10394 = vpop.f32.mrb[0].mxu0
      %10395 = vmatprep.mubr.bf16.mxu0 0
      %10396 = vmatmul.mubr.bf16.gmra.mrb[0].mxu0 %v7358
      %v10397 = vpop.f32.mrb[0].mxu0
      %v10398 = vadd.f32 0.0, %v10397
      %v10399 = vpop.f32.mrb[0].mxu0
      %v10400 = vpop.f32.mrb[0].mxu0
      %v10401 = vadd.f32 0.0, %v10400
      %v10402 = vpop.f32.mrb[0].mxu0
      %10403 = vmatprep.mubr.bf16.mxu0 0
      %10404 = vmatmul.mubr.bf16.gmra.mrb[0].mxu0 %v7361
      %v10405 = vpop.f32.mrb[0].mxu0
      %v10406 = vadd.f32 0.0, %v10405
      %v10407 = vpop.f32.mrb[0].mxu0
      %v10408 = vpop.f32.mrb[0].mxu0
      %v10409 = vadd.f32 0.0, %v10408
      %v10410 = vpop.f32.mrb[0].mxu0
      %10411 = vmatprep.mubr.bf16.mxu0 0
      %10412 = vmatmul.mubr.bf16.gmra.mrb[0].mxu0 %v7364
      %v10413 = vpop.f32.mrb[0].mxu0
      %v10414 = vadd.f32 0.0, %v10413
      %v10415 = vpop.f32.mrb[0].mxu0
      %v10416 = vpop.f32.mrb[0].mxu0
      %v10417 = vadd.f32 0.0, %v10416
      %v10418 = vpop.f32.mrb[0].mxu0
      %10419 = vmatprep.mubr.bf16.mxu0 0
      %10420 = vmatmul.mubr.bf16.gmra.mrb[0].mxu0 %v7367
      %v10421 = vpop.f32.mrb[0].mxu0
      %v10422 = vadd.f32 0.0, %v10421
      %v10423 = vpop.f32.mrb[0].mxu0
      %v10424 = vpop.f32.mrb[0].mxu0
      %v10425 = vadd.f32 0.0, %v10424
      %v10426 = vpop.f32.mrb[0].mxu0
      %10427 = vmatprep.mubr.bf16.mxu0 0
      %10428 = vmatmul.mubr.bf16.gmra.mrb[0].mxu0 %v7370
      %v10429 = vpop.f32.mrb[0].mxu0
      %v10430 = vadd.f32 0.0, %v10429
      %v10431 = vpop.f32.mrb[0].mxu0
      %v10432 = vpop.f32.mrb[0].mxu0
      %v10433 = vadd.f32 0.0, %v10432
      %v10434 = vpop.f32.mrb[0].mxu0
      %10435 = vmatprep.mubr.bf16.mxu0 0
      %10436 = vmatmul.mubr.bf16.gmra.mrb[0].mxu0 %v7373
      %v10437 = vpop.f32.mrb[0].mxu0
      %v10438 = vadd.f32 0.0, %v10437
      %v10439 = vpop.f32.mrb[0].mxu0
      %v10440 = vpop.f32.mrb[0].mxu0
      %v10441 = vadd.f32 0.0, %v10440
      %v10442 = vpop.f32.mrb[0].mxu0
      %10443 = vmatprep.mubr.bf16.mxu0 0
      %10444 = vmatmul.mubr.bf16.gmra.mrb[0].mxu0 %v7376
      %v10445 = vpop.f32.mrb[0].mxu0
      %v10446 = vadd.f32 0.0, %v10445
      %v10447 = vpop.f32.mrb[0].mxu0
      %v10448 = vpop.f32.mrb[0].mxu0
      %v10449 = vadd.f32 0.0, %v10448
      %v10450 = vpop.f32.mrb[0].mxu0
      %10451 = vmatprep.mubr.bf16.mxu0 0
      %10452 = vmatmul.mubr.bf16.gmra.mrb[0].mxu0 %v7379
      %v10453 = vpop.f32.mrb[0].mxu0
      %v10454 = vadd.f32 0.0, %v10453
      %v10455 = vpop.f32.mrb[0].mxu0
      %v10456 = vpop.f32.mrb[0].mxu0
      %v10457 = vadd.f32 0.0, %v10456
      %v10458 = vpop.f32.mrb[0].mxu0
      %10459 = vmatprep.mubr.bf16.mxu0 0
      %10460 = vmatmul.mubr.bf16.gmra.mrb[0].mxu0 %v7382
      %v10461 = vpop.f32.mrb[0].mxu0
      %v10462 = vadd.f32 0.0, %v10461
      %v10463 = vpop.f32.mrb[0].mxu0
      %v10464 = vpop.f32.mrb[0].mxu0
      %v10465 = vadd.f32 0.0, %v10464
      %v10466 = vpop.f32.mrb[0].mxu0
      %10467 = vmatprep.mubr.bf16.mxu0 0
      %10468 = vmatmul.mubr.bf16.gmra.mrb[0].mxu0 %v7385
      %v10469 = vpop.f32.mrb[0].mxu0
      %v10470 = vadd.f32 0.0, %v10469
      %v10471 = vpop.f32.mrb[0].mxu0
      %v10472 = vpop.f32.mrb[0].mxu0
      %v10473 = vadd.f32 0.0, %v10472
      %v10474 = vpop.f32.mrb[0].mxu0
      %10475 = vmatprep.mubr.bf16.mxu0 0
      %10476 = vmatmul.mubr.bf16.gmra.mrb[0].mxu0 %v10269
      %v10477 = vpop.f32.mrb[0].mxu0
      %v10478 = vadd.f32 0.0, %v10477
      %v10479 = vpop.f32.mrb[0].mxu0
      %v10480 = vpop.f32.mrb[0].mxu0
      %v10481 = vadd.f32 0.0, %v10480
      %v10482 = vpop.f32.mrb[0].mxu0
      %10483 = vmatprep.mubr.bf16.mxu0 0
      %10484 = vmatmul.mubr.bf16.gmra.mrb[0].mxu0 %v10272
      %v10485 = vpop.f32.mrb[0].mxu0
      %v10486 = vadd.f32 0.0, %v10485
      %v10487 = vpop.f32.mrb[0].mxu0
      %v10488 = vpop.f32.mrb[0].mxu0
      %v10489 = vadd.f32 0.0, %v10488
      %v10490 = vpop.f32.mrb[0].mxu0
      %10491 = vmatprep.mubr.bf16.mxu0 0
      %10492 = vmatmul.mubr.bf16.gmra.mrb[0].mxu0 %v10275
      %v10493 = vpop.f32.mrb[0].mxu0
      %v10494 = vadd.f32 0.0, %v10493
      %v10495 = vpop.f32.mrb[0].mxu0
      %v10496 = vpop.f32.mrb[0].mxu0
      %v10497 = vadd.f32 0.0, %v10496
      %v10498 = vpop.f32.mrb[0].mxu0
      %10499 = vmatprep.mubr.bf16.mxu0 0
      %10500 = vmatmul.mubr.bf16.gmra.mrb[0].mxu0 %v10278
      %v10501 = vpop.f32.mrb[0].mxu0
      %v10502 = vadd.f32 0.0, %v10501
      %v10503 = vpop.f32.mrb[0].mxu0
      %v10504 = vpop.f32.mrb[0].mxu0
      %v10505 = vadd.f32 0.0, %v10504
      %v10506 = vpop.f32.mrb[0].mxu0
      %10507 = vdwg.mxu0
      %v10508 = vld [vmem:[#allocation5] sm:$0xff]
      %v10509 = vld [vmem:[#allocation5 + $0x8] sm:$0xff]
      %v10510 = vld [vmem:[#allocation5 + $0x10] sm:$0xff]
      %v10511 = vld [vmem:[#allocation5 + $0x18] sm:$0xff]
      %v10512 = vld [vmem:[#allocation5 + $0x20] sm:$0xff]
      %v10513 = vld [vmem:[#allocation5 + $0x28] sm:$0xff]
      %v10514 = vld [vmem:[#allocation5 + $0x30] sm:$0xff]
      %v10515 = vld [vmem:[#allocation5 + $0x38] sm:$0xff]
      %v10516 = vld [vmem:[#allocation5 + $0x40] sm:$0xff]
      %v10517 = vld [vmem:[#allocation5 + $0x48] sm:$0xff]
      %v10518 = vld [vmem:[#allocation5 + $0x50] sm:$0xff]
      %v10519 = vld [vmem:[#allocation5 + $0x58] sm:$0xff]
      %v10520 = vld [vmem:[#allocation5 + $0x60] sm:$0xff]
      %v10521 = vld [vmem:[#allocation5 + $0x68] sm:$0xff]
      %v10522 = vld [vmem:[#allocation5 + $0x70] sm:$0xff]
      %v10523 = vld [vmem:[#allocation5 + $0x78] sm:$0xff]
      %v10524 = vld [vmem:[#allocation5 + $0x80] sm:$0xff]
      %v10525 = vld [vmem:[#allocation5 + $0x88] sm:$0xff]
      %v10526 = vld [vmem:[#allocation5 + $0x90] sm:$0xff]
      %v10527 = vld [vmem:[#allocation5 + $0x98] sm:$0xff]
      %v10528 = vld [vmem:[#allocation5 + $0xa0] sm:$0xff]
      %v10529 = vld [vmem:[#allocation5 + $0xa8] sm:$0xff]
      %v10530 = vld [vmem:[#allocation5 + $0xb0] sm:$0xff]
      %v10531 = vld [vmem:[#allocation5 + $0xb8] sm:$0xff]
      %v10532 = vld [vmem:[#allocation5 + $0xc0] sm:$0xff]
      %v10533 = vld [vmem:[#allocation5 + $0xc8] sm:$0xff]
      %v10534 = vld [vmem:[#allocation5 + $0xd0] sm:$0xff]
      %v10535 = vld [vmem:[#allocation5 + $0xd8] sm:$0xff]
      %v10536 = vld [vmem:[#allocation5 + $0xe0] sm:$0xff]
      %v10537 = vld [vmem:[#allocation5 + $0xe8] sm:$0xff]
      %v10538 = vld [vmem:[#allocation5 + $0xf0] sm:$0xff]
      %v10539 = vld [vmem:[#allocation5 + $0xf8] sm:$0xff]
      %v10540 = vld [vmem:[#allocation5 + $0x100] sm:$0xff]
      %v10541 = vld [vmem:[#allocation5 + $0x108] sm:$0xff]
      %v10542 = vld [vmem:[#allocation5 + $0x110] sm:$0xff]
      %v10543 = vld [vmem:[#allocation5 + $0x118] sm:$0xff]
      %v10544 = vld [vmem:[#allocation5 + $0x120] sm:$0xff]
      %v10545 = vld [vmem:[#allocation5 + $0x128] sm:$0xff]
      %v10546 = vld [vmem:[#allocation5 + $0x130] sm:$0xff]
      %v10547 = vld [vmem:[#allocation5 + $0x138] sm:$0xff]
      %v10548 = vld [vmem:[#allocation5 + $0x140] sm:$0xff]
      %v10549 = vld [vmem:[#allocation5 + $0x148] sm:$0xff]
      %v10550 = vld [vmem:[#allocation5 + $0x150] sm:$0xff]
      %v10551 = vld [vmem:[#allocation5 + $0x158] sm:$0xff]
      %v10552 = vld [vmem:[#allocation5 + $0x160] sm:$0xff]
      %v10553 = vld [vmem:[#allocation5 + $0x168] sm:$0xff]
      %v10554 = vld [vmem:[#allocation5 + $0x170] sm:$0xff]
      %v10555 = vld [vmem:[#allocation5 + $0x178] sm:$0xff]
      %v10556 = vadd.f32 %v10508, %v10318
      %v10557 = vadd.f32 %v10509, %v10321
      %v10558 = vadd.f32 %v10510, %v10326
      %v10559 = vadd.f32 %v10511, %v10329
      %v10560 = vadd.f32 %v10512, %v10334
      %v10561 = vadd.f32 %v10513, %v10337
      %v10562 = vadd.f32 %v10514, %v10342
      %v10563 = vadd.f32 %v10515, %v10345
      %v10564 = vadd.f32 %v10516, %v10350
      %v10565 = vadd.f32 %v10517, %v10353
      %v10566 = vadd.f32 %v10518, %v10358
      %v10567 = vadd.f32 %v10519, %v10361
      %v10568 = vadd.f32 %v10520, %v10366
      %v10569 = vadd.f32 %v10521, %v10369
      %v10570 = vadd.f32 %v10522, %v10374
      %v10571 = vadd.f32 %v10523, %v10377
      %v10572 = vadd.f32 %v10524, %v10382
      %v10573 = vadd.f32 %v10525, %v10385
      %v10574 = vadd.f32 %v10526, %v10390
      %v10575 = vadd.f32 %v10527, %v10393
      %v10576 = vadd.f32 %v10528, %v10398
      %v10577 = vadd.f32 %v10529, %v10401
      %v10578 = vadd.f32 %v10530, %v10406
      %v10579 = vadd.f32 %v10531, %v10409
      %v10580 = vadd.f32 %v10532, %v10414
      %v10581 = vadd.f32 %v10533, %v10417
      %v10582 = vadd.f32 %v10534, %v10422
      %v10583 = vadd.f32 %v10535, %v10425
      %v10584 = vadd.f32 %v10536, %v10430
      %v10585 = vadd.f32 %v10537, %v10433
      %v10586 = vadd.f32 %v10538, %v10438
      %v10587 = vadd.f32 %v10539, %v10441
      %v10588 = vadd.f32 %v10540, %v10446
      %v10589 = vadd.f32 %v10541, %v10449
      %v10590 = vadd.f32 %v10542, %v10454
      %v10591 = vadd.f32 %v10543, %v10457
      %v10592 = vadd.f32 %v10544, %v10462
      %v10593 = vadd.f32 %v10545, %v10465
      %v10594 = vadd.f32 %v10546, %v10470
      %v10595 = vadd.f32 %v10547, %v10473
      %v10596 = vadd.f32 %v10548, %v10478
      %v10597 = vadd.f32 %v10549, %v10481
      %v10598 = vadd.f32 %v10550, %v10486
      %v10599 = vadd.f32 %v10551, %v10489
      %v10600 = vadd.f32 %v10552, %v10494
      %v10601 = vadd.f32 %v10553, %v10497
      %v10602 = vadd.f32 %v10554, %v10502
      %v10603 = vadd.f32 %v10555, %v10505
      %10604 = vst.msk [vmem:[#allocation5] sm:$0xff] %vm1544, %v10556
      %10605 = vst.msk [vmem:[#allocation5 + $0x8] sm:$0xff] %vm1544, %v10557
      %10606 = vst.msk [vmem:[#allocation5 + $0x10] sm:$0xff] %vm1544, %v10558
      %10607 = vst.msk [vmem:[#allocation5 + $0x18] sm:$0xff] %vm1544, %v10559
      %10608 = vst.msk [vmem:[#allocation5 + $0x20] sm:$0xff] %vm1544, %v10560
      %10609 = vst.msk [vmem:[#allocation5 + $0x28] sm:$0xff] %vm1544, %v10561
      %10610 = vst.msk [vmem:[#allocation5 + $0x30] sm:$0xff] %vm1544, %v10562
      %10611 = vst.msk [vmem:[#allocation5 + $0x38] sm:$0xff] %vm1544, %v10563
      %10612 = vst.msk [vmem:[#allocation5 + $0x40] sm:$0xff] %vm1544, %v10564
      %10613 = vst.msk [vmem:[#allocation5 + $0x48] sm:$0xff] %vm1544, %v10565
      %10614 = vst.msk [vmem:[#allocation5 + $0x50] sm:$0xff] %vm1544, %v10566
      %10615 = vst.msk [vmem:[#allocation5 + $0x58] sm:$0xff] %vm1544, %v10567
      %10616 = vst.msk [vmem:[#allocation5 + $0x60] sm:$0xff] %vm1544, %v10568
      %10617 = vst.msk [vmem:[#allocation5 + $0x68] sm:$0xff] %vm1544, %v10569
      %10618 = vst.msk [vmem:[#allocation5 + $0x70] sm:$0xff] %vm1544, %v10570
      %10619 = vst.msk [vmem:[#allocation5 + $0x78] sm:$0xff] %vm1544, %v10571
      %10620 = vst.msk [vmem:[#allocation5 + $0x80] sm:$0xff] %vm1544, %v10572
      %10621 = vst.msk [vmem:[#allocation5 + $0x88] sm:$0xff] %vm1544, %v10573
      %10622 = vst.msk [vmem:[#allocation5 + $0x90] sm:$0xff] %vm1544, %v10574
      %10623 = vst.msk [vmem:[#allocation5 + $0x98] sm:$0xff] %vm1544, %v10575
      %10624 = vst.msk [vmem:[#allocation5 + $0xa0] sm:$0xff] %vm1544, %v10576
      %10625 = vst.msk [vmem:[#allocation5 + $0xa8] sm:$0xff] %vm1544, %v10577
      %10626 = vst.msk [vmem:[#allocation5 + $0xb0] sm:$0xff] %vm1544, %v10578
      %10627 = vst.msk [vmem:[#allocation5 + $0xb8] sm:$0xff] %vm1544, %v10579
      %10628 = vst.msk [vmem:[#allocation5 + $0xc0] sm:$0xff] %vm1544, %v10580
      %10629 = vst.msk [vmem:[#allocation5 + $0xc8] sm:$0xff] %vm1544, %v10581
      %10630 = vst.msk [vmem:[#allocation5 + $0xd0] sm:$0xff] %vm1544, %v10582
      %10631 = vst.msk [vmem:[#allocation5 + $0xd8] sm:$0xff] %vm1544, %v10583
      %10632 = vst.msk [vmem:[#allocation5 + $0xe0] sm:$0xff] %vm1544, %v10584
      %10633 = vst.msk [vmem:[#allocation5 + $0xe8] sm:$0xff] %vm1544, %v10585
      %10634 = vst.msk [vmem:[#allocation5 + $0xf0] sm:$0xff] %vm1544, %v10586
      %10635 = vst.msk [vmem:[#allocation5 + $0xf8] sm:$0xff] %vm1544, %v10587
      %10636 = vst.msk [vmem:[#allocation5 + $0x100] sm:$0xff] %vm1544, %v10588
      %10637 = vst.msk [vmem:[#allocation5 + $0x108] sm:$0xff] %vm1544, %v10589
      %10638 = vst.msk [vmem:[#allocation5 + $0x110] sm:$0xff] %vm1544, %v10590
      %10639 = vst.msk [vmem:[#allocation5 + $0x118] sm:$0xff] %vm1544, %v10591
      %10640 = vst.msk [vmem:[#allocation5 + $0x120] sm:$0xff] %vm1544, %v10592
      %10641 = vst.msk [vmem:[#allocation5 + $0x128] sm:$0xff] %vm1544, %v10593
      %10642 = vst.msk [vmem:[#allocation5 + $0x130] sm:$0xff] %vm1544, %v10594
      %10643 = vst.msk [vmem:[#allocation5 + $0x138] sm:$0xff] %vm1544, %v10595
      %10644 = vst.msk [vmem:[#allocation5 + $0x140] sm:$0xff] %vm1544, %v10596
      %10645 = vst.msk [vmem:[#allocation5 + $0x148] sm:$0xff] %vm1544, %v10597
      %10646 = vst.msk [vmem:[#allocation5 + $0x150] sm:$0xff] %vm1544, %v10598
      %10647 = vst.msk [vmem:[#allocation5 + $0x158] sm:$0xff] %vm1544, %v10599
      %10648 = vst.msk [vmem:[#allocation5 + $0x160] sm:$0xff] %vm1544, %v10600
      %10649 = vst.msk [vmem:[#allocation5 + $0x168] sm:$0xff] %vm1544, %v10601
      %10650 = vst.msk [vmem:[#allocation5 + $0x170] sm:$0xff] %vm1544, %v10602
      %10651 = vst.msk [vmem:[#allocation5 + $0x178] sm:$0xff] %vm1544, %v10603
      %s10652 = scalar_lea.vmem %s5, 32
      %v10653 = vld [vmem:[%s10652] sm:$0xf]
      %v10654 = vrot.slane %v9853, 1
      %v10655 = vsel %vm2217, %v7809, %v10654
      %v10656 = vrot.slane %v9854, 1
      %v10657 = vsel %vm2217, %v10654, %v10656
      %v10658 = vrot.slane %v9855, 1
      %v10659 = vsel %vm2217, %v10656, %v10658
      %v10660 = vrot.slane %v10241, 1
      %v10661 = vsel %vm2217, %v10658, %v10660
      %v10663 = vsel %vm1544, %v10655, 0
      %v10666 = vsel %vm1544, %v10657, 0
      %v10669 = vsel %vm1544, %v10659, 0
      %v10672 = vsel %vm1544, %v10661, 0
      %v10675 = vsel %vm6768, %v10653, 0
      %10677 = vmatprep.subr.bf16.mxu0 0
      %10678 = vmatpush1.bf16.msra.mxu0 %v10675
      %10679 = vmatprep.subr.bf16.mxu0 0
      %10680 = vmatpush1.bf16.msra.mxu0 0
      %10681 = vmatprep.subr.bf16.mxu0 0
      %10682 = vmatpush1.bf16.msra.mxu0 0
      %10683 = vmatprep.subr.bf16.mxu0 0
      %10684 = vmatpush1.bf16.msra.mxu0 0
      %10685 = vmatprep.subr.bf16.mxu0 0
      %10686 = vmatpush1.bf16.msra.mxu0 0
      %10687 = vmatprep.subr.bf16.mxu0 0
      %10688 = vmatpush1.bf16.msra.mxu0 0
      %10689 = vmatprep.subr.bf16.mxu0 0
      %10690 = vmatpush1.bf16.msra.mxu0 0
      %10691 = vmatprep.subr.bf16.mxu0 0
      %10692 = vmatpush1.bf16.msra.mxu0 0
      %10693 = vmatprep.subr.bf16.mxu0 0
      %10694 = vmatpush1.bf16.msra.mxu0 0
      %10695 = vmatprep.subr.bf16.mxu0 0
      %10696 = vmatpush1.bf16.msra.mxu0 0
      %10697 = vmatprep.subr.bf16.mxu0 0
      %10698 = vmatpush1.bf16.msra.mxu0 0
      %10699 = vmatprep.subr.bf16.mxu0 0
      %10700 = vmatpush1.bf16.msra.mxu0 0
      %10701 = vmatprep.subr.bf16.mxu0 0
      %10702 = vmatpush1.bf16.msra.mxu0 0
      %10703 = vmatprep.subr.bf16.mxu0 0
      %10704 = vmatpush1.bf16.msra.mxu0 0
      %10705 = vmatprep.subr.bf16.mxu0 0
      %10706 = vmatpush1.bf16.msra.mxu0 0
      %10707 = vmatprep.subr.bf16.mxu0 0
      %10708 = vmatpush1.bf16.msra.mxu0 0
      %10709 = vmatprep.mubr.bf16.mxu0 0
      %10710 = vmatmul.mubr.bf16.gmra.mrb[0].mxu0 %v7823
      %v10711 = vpop.f32.mrb[0].mxu0
      %v10712 = vadd.f32 0.0, %v10711
      %v10713 = vpop.f32.mrb[0].mxu0
      %v10714 = vpop.f32.mrb[0].mxu0
      %v10715 = vadd.f32 0.0, %v10714
      %v10716 = vpop.f32.mrb[0].mxu0
      %10717 = vmatprep.mubr.bf16.mxu0 0
      %10718 = vmatmul.mubr.bf16.gmra.mrb[0].mxu0 %v7826
      %v10719 = vpop.f32.mrb[0].mxu0
      %v10720 = vadd.f32 0.0, %v10719
      %v10721 = vpop.f32.mrb[0].mxu0
      %v10722 = vpop.f32.mrb[0].mxu0
      %v10723 = vadd.f32 0.0, %v10722
      %v10724 = vpop.f32.mrb[0].mxu0
      %10725 = vmatprep.mubr.bf16.mxu0 0
      %10726 = vmatmul.mubr.bf16.gmra.mrb[0].mxu0 %v7829
      %v10727 = vpop.f32.mrb[0].mxu0
      %v10728 = vadd.f32 0.0, %v10727
      %v10729 = vpop.f32.mrb[0].mxu0
      %v10730 = vpop.f32.mrb[0].mxu0
      %v10731 = vadd.f32 0.0, %v10730
      %v10732 = vpop.f32.mrb[0].mxu0
      %10733 = vmatprep.mubr.bf16.mxu0 0
      %10734 = vmatmul.mubr.bf16.gmra.mrb[0].mxu0 %v7832
      %v10735 = vpop.f32.mrb[0].mxu0
      %v10736 = vadd.f32 0.0, %v10735
      %v10737 = vpop.f32.mrb[0].mxu0
      %v10738 = vpop.f32.mrb[0].mxu0
      %v10739 = vadd.f32 0.0, %v10738
      %v10740 = vpop.f32.mrb[0].mxu0
      %10741 = vmatprep.mubr.bf16.mxu0 0
      %10742 = vmatmul.mubr.bf16.gmra.mrb[0].mxu0 %v7835
      %v10743 = vpop.f32.mrb[0].mxu0
      %v10744 = vadd.f32 0.0, %v10743
      %v10745 = vpop.f32.mrb[0].mxu0
      %v10746 = vpop.f32.mrb[0].mxu0
      %v10747 = vadd.f32 0.0, %v10746
      %v10748 = vpop.f32.mrb[0].mxu0
      %10749 = vmatprep.mubr.bf16.mxu0 0
      %10750 = vmatmul.mubr.bf16.gmra.mrb[0].mxu0 %v7838
      %v10751 = vpop.f32.mrb[0].mxu0
      %v10752 = vadd.f32 0.0, %v10751
      %v10753 = vpop.f32.mrb[0].mxu0
      %v10754 = vpop.f32.mrb[0].mxu0
      %v10755 = vadd.f32 0.0, %v10754
      %v10756 = vpop.f32.mrb[0].mxu0
      %10757 = vmatprep.mubr.bf16.mxu0 0
      %10758 = vmatmul.mubr.bf16.gmra.mrb[0].mxu0 %v7841
      %v10759 = vpop.f32.mrb[0].mxu0
      %v10760 = vadd.f32 0.0, %v10759
      %v10761 = vpop.f32.mrb[0].mxu0
      %v10762 = vpop.f32.mrb[0].mxu0
      %v10763 = vadd.f32 0.0, %v10762
      %v10764 = vpop.f32.mrb[0].mxu0
      %10765 = vmatprep.mubr.bf16.mxu0 0
      %10766 = vmatmul.mubr.bf16.gmra.mrb[0].mxu0 %v7844
      %v10767 = vpop.f32.mrb[0].mxu0
      %v10768 = vadd.f32 0.0, %v10767
      %v10769 = vpop.f32.mrb[0].mxu0
      %v10770 = vpop.f32.mrb[0].mxu0
      %v10771 = vadd.f32 0.0, %v10770
      %v10772 = vpop.f32.mrb[0].mxu0
      %10773 = vmatprep.mubr.bf16.mxu0 0
      %10774 = vmatmul.mubr.bf16.gmra.mrb[0].mxu0 %v7847
      %v10775 = vpop.f32.mrb[0].mxu0
      %v10776 = vadd.f32 0.0, %v10775
      %v10777 = vpop.f32.mrb[0].mxu0
      %v10778 = vpop.f32.mrb[0].mxu0
      %v10779 = vadd.f32 0.0, %v10778
      %v10780 = vpop.f32.mrb[0].mxu0
      %10781 = vmatprep.mubr.bf16.mxu0 0
      %10782 = vmatmul.mubr.bf16.gmra.mrb[0].mxu0 %v7850
      %v10783 = vpop.f32.mrb[0].mxu0
      %v10784 = vadd.f32 0.0, %v10783
      %v10785 = vpop.f32.mrb[0].mxu0
      %v10786 = vpop.f32.mrb[0].mxu0
      %v10787 = vadd.f32 0.0, %v10786
      %v10788 = vpop.f32.mrb[0].mxu0
      %10789 = vmatprep.mubr.bf16.mxu0 0
      %10790 = vmatmul.mubr.bf16.gmra.mrb[0].mxu0 %v7853
      %v10791 = vpop.f32.mrb[0].mxu0
      %v10792 = vadd.f32 0.0, %v10791
      %v10793 = vpop.f32.mrb[0].mxu0
      %v10794 = vpop.f32.mrb[0].mxu0
      %v10795 = vadd.f32 0.0, %v10794
      %v10796 = vpop.f32.mrb[0].mxu0
      %10797 = vmatprep.mubr.bf16.mxu0 0
      %10798 = vmatmul.mubr.bf16.gmra.mrb[0].mxu0 %v7856
      %v10799 = vpop.f32.mrb[0].mxu0
      %v10800 = vadd.f32 0.0, %v10799
      %v10801 = vpop.f32.mrb[0].mxu0
      %v10802 = vpop.f32.mrb[0].mxu0
      %v10803 = vadd.f32 0.0, %v10802
      %v10804 = vpop.f32.mrb[0].mxu0
      %10805 = vmatprep.mubr.bf16.mxu0 0
      %10806 = vmatmul.mubr.bf16.gmra.mrb[0].mxu0 %v7859
      %v10807 = vpop.f32.mrb[0].mxu0
      %v10808 = vadd.f32 0.0, %v10807
      %v10809 = vpop.f32.mrb[0].mxu0
      %v10810 = vpop.f32.mrb[0].mxu0
      %v10811 = vadd.f32 0.0, %v10810
      %v10812 = vpop.f32.mrb[0].mxu0
      %10813 = vmatprep.mubr.bf16.mxu0 0
      %10814 = vmatmul.mubr.bf16.gmra.mrb[0].mxu0 %v7862
      %v10815 = vpop.f32.mrb[0].mxu0
      %v10816 = vadd.f32 0.0, %v10815
      %v10817 = vpop.f32.mrb[0].mxu0
      %v10818 = vpop.f32.mrb[0].mxu0
      %v10819 = vadd.f32 0.0, %v10818
      %v10820 = vpop.f32.mrb[0].mxu0
      %10821 = vmatprep.mubr.bf16.mxu0 0
      %10822 = vmatmul.mubr.bf16.gmra.mrb[0].mxu0 %v7865
      %v10823 = vpop.f32.mrb[0].mxu0
      %v10824 = vadd.f32 0.0, %v10823
      %v10825 = vpop.f32.mrb[0].mxu0
      %v10826 = vpop.f32.mrb[0].mxu0
      %v10827 = vadd.f32 0.0, %v10826
      %v10828 = vpop.f32.mrb[0].mxu0
      %10829 = vmatprep.mubr.bf16.mxu0 0
      %10830 = vmatmul.mubr.bf16.gmra.mrb[0].mxu0 %v7868
      %v10831 = vpop.f32.mrb[0].mxu0
      %v10832 = vadd.f32 0.0, %v10831
      %v10833 = vpop.f32.mrb[0].mxu0
      %v10834 = vpop.f32.mrb[0].mxu0
      %v10835 = vadd.f32 0.0, %v10834
      %v10836 = vpop.f32.mrb[0].mxu0
      %10837 = vmatprep.mubr.bf16.mxu0 0
      %10838 = vmatmul.mubr.bf16.gmra.mrb[0].mxu0 %v7871
      %v10839 = vpop.f32.mrb[0].mxu0
      %v10840 = vadd.f32 0.0, %v10839
      %v10841 = vpop.f32.mrb[0].mxu0
      %v10842 = vpop.f32.mrb[0].mxu0
      %v10843 = vadd.f32 0.0, %v10842
      %v10844 = vpop.f32.mrb[0].mxu0
      %10845 = vmatprep.mubr.bf16.mxu0 0
      %10846 = vmatmul.mubr.bf16.gmra.mrb[0].mxu0 %v7874
      %v10847 = vpop.f32.mrb[0].mxu0
      %v10848 = vadd.f32 0.0, %v10847
      %v10849 = vpop.f32.mrb[0].mxu0
      %v10850 = vpop.f32.mrb[0].mxu0
      %v10851 = vadd.f32 0.0, %v10850
      %v10852 = vpop.f32.mrb[0].mxu0
      %10853 = vmatprep.mubr.bf16.mxu0 0
      %10854 = vmatmul.mubr.bf16.gmra.mrb[0].mxu0 %v7877
      %v10855 = vpop.f32.mrb[0].mxu0
      %v10856 = vadd.f32 0.0, %v10855
      %v10857 = vpop.f32.mrb[0].mxu0
      %v10858 = vpop.f32.mrb[0].mxu0
      %v10859 = vadd.f32 0.0, %v10858
      %v10860 = vpop.f32.mrb[0].mxu0
      %10861 = vmatprep.mubr.bf16.mxu0 0
      %10862 = vmatmul.mubr.bf16.gmra.mrb[0].mxu0 %v7880
      %v10863 = vpop.f32.mrb[0].mxu0
      %v10864 = vadd.f32 0.0, %v10863
      %v10865 = vpop.f32.mrb[0].mxu0
      %v10866 = vpop.f32.mrb[0].mxu0
      %v10867 = vadd.f32 0.0, %v10866
      %v10868 = vpop.f32.mrb[0].mxu0
      %10869 = vmatprep.mubr.bf16.mxu0 0
      %10870 = vmatmul.mubr.bf16.gmra.mrb[0].mxu0 %v10663
      %v10871 = vpop.f32.mrb[0].mxu0
      %v10872 = vadd.f32 0.0, %v10871
      %v10873 = vpop.f32.mrb[0].mxu0
      %v10874 = vpop.f32.mrb[0].mxu0
      %v10875 = vadd.f32 0.0, %v10874
      %v10876 = vpop.f32.mrb[0].mxu0
      %10877 = vmatprep.mubr.bf16.mxu0 0
      %10878 = vmatmul.mubr.bf16.gmra.mrb[0].mxu0 %v10666
      %v10879 = vpop.f32.mrb[0].mxu0
      %v10880 = vadd.f32 0.0, %v10879
      %v10881 = vpop.f32.mrb[0].mxu0
      %v10882 = vpop.f32.mrb[0].mxu0
      %v10883 = vadd.f32 0.0, %v10882
      %v10884 = vpop.f32.mrb[0].mxu0
      %10885 = vmatprep.mubr.bf16.mxu0 0
      %10886 = vmatmul.mubr.bf16.gmra.mrb[0].mxu0 %v10669
      %v10887 = vpop.f32.mrb[0].mxu0
      %v10888 = vadd.f32 0.0, %v10887
      %v10889 = vpop.f32.mrb[0].mxu0
      %v10890 = vpop.f32.mrb[0].mxu0
      %v10891 = vadd.f32 0.0, %v10890
      %v10892 = vpop.f32.mrb[0].mxu0
      %10893 = vmatprep.mubr.bf16.mxu0 0
      %10894 = vmatmul.mubr.bf16.gmra.mrb[0].mxu0 %v10672
      %v10895 = vpop.f32.mrb[0].mxu0
      %v10896 = vadd.f32 0.0, %v10895
      %v10897 = vpop.f32.mrb[0].mxu0
      %v10898 = vpop.f32.mrb[0].mxu0
      %v10899 = vadd.f32 0.0, %v10898
      %v10900 = vpop.f32.mrb[0].mxu0
      %10901 = vdwg.mxu0
      %v10902 = vld [vmem:[#allocation5] sm:$0xff]
      %v10903 = vld [vmem:[#allocation5 + $0x8] sm:$0xff]
      %v10904 = vld [vmem:[#allocation5 + $0x10] sm:$0xff]
      %v10905 = vld [vmem:[#allocation5 + $0x18] sm:$0xff]
      %v10906 = vld [vmem:[#allocation5 + $0x20] sm:$0xff]
      %v10907 = vld [vmem:[#allocation5 + $0x28] sm:$0xff]
      %v10908 = vld [vmem:[#allocation5 + $0x30] sm:$0xff]
      %v10909 = vld [vmem:[#allocation5 + $0x38] sm:$0xff]
      %v10910 = vld [vmem:[#allocation5 + $0x40] sm:$0xff]
      %v10911 = vld [vmem:[#allocation5 + $0x48] sm:$0xff]
      %v10912 = vld [vmem:[#allocation5 + $0x50] sm:$0xff]
      %v10913 = vld [vmem:[#allocation5 + $0x58] sm:$0xff]
      %v10914 = vld [vmem:[#allocation5 + $0x60] sm:$0xff]
      %v10915 = vld [vmem:[#allocation5 + $0x68] sm:$0xff]
      %v10916 = vld [vmem:[#allocation5 + $0x70] sm:$0xff]
      %v10917 = vld [vmem:[#allocation5 + $0x78] sm:$0xff]
      %v10918 = vld [vmem:[#allocation5 + $0x80] sm:$0xff]
      %v10919 = vld [vmem:[#allocation5 + $0x88] sm:$0xff]
      %v10920 = vld [vmem:[#allocation5 + $0x90] sm:$0xff]
      %v10921 = vld [vmem:[#allocation5 + $0x98] sm:$0xff]
      %v10922 = vld [vmem:[#allocation5 + $0xa0] sm:$0xff]
      %v10923 = vld [vmem:[#allocation5 + $0xa8] sm:$0xff]
      %v10924 = vld [vmem:[#allocation5 + $0xb0] sm:$0xff]
      %v10925 = vld [vmem:[#allocation5 + $0xb8] sm:$0xff]
      %v10926 = vld [vmem:[#allocation5 + $0xc0] sm:$0xff]
      %v10927 = vld [vmem:[#allocation5 + $0xc8] sm:$0xff]
      %v10928 = vld [vmem:[#allocation5 + $0xd0] sm:$0xff]
      %v10929 = vld [vmem:[#allocation5 + $0xd8] sm:$0xff]
      %v10930 = vld [vmem:[#allocation5 + $0xe0] sm:$0xff]
      %v10931 = vld [vmem:[#allocation5 + $0xe8] sm:$0xff]
      %v10932 = vld [vmem:[#allocation5 + $0xf0] sm:$0xff]
      %v10933 = vld [vmem:[#allocation5 + $0xf8] sm:$0xff]
      %v10934 = vld [vmem:[#allocation5 + $0x100] sm:$0xff]
      %v10935 = vld [vmem:[#allocation5 + $0x108] sm:$0xff]
      %v10936 = vld [vmem:[#allocation5 + $0x110] sm:$0xff]
      %v10937 = vld [vmem:[#allocation5 + $0x118] sm:$0xff]
      %v10938 = vld [vmem:[#allocation5 + $0x120] sm:$0xff]
      %v10939 = vld [vmem:[#allocation5 + $0x128] sm:$0xff]
      %v10940 = vld [vmem:[#allocation5 + $0x130] sm:$0xff]
      %v10941 = vld [vmem:[#allocation5 + $0x138] sm:$0xff]
      %v10942 = vld [vmem:[#allocation5 + $0x140] sm:$0xff]
      %v10943 = vld [vmem:[#allocation5 + $0x148] sm:$0xff]
      %v10944 = vld [vmem:[#allocation5 + $0x150] sm:$0xff]
      %v10945 = vld [vmem:[#allocation5 + $0x158] sm:$0xff]
      %v10946 = vld [vmem:[#allocation5 + $0x160] sm:$0xff]
      %v10947 = vld [vmem:[#allocation5 + $0x168] sm:$0xff]
      %v10948 = vld [vmem:[#allocation5 + $0x170] sm:$0xff]
      %v10949 = vld [vmem:[#allocation5 + $0x178] sm:$0xff]
      %v10950 = vadd.f32 %v10902, %v10712
      %v10951 = vadd.f32 %v10903, %v10715
      %v10952 = vadd.f32 %v10904, %v10720
      %v10953 = vadd.f32 %v10905, %v10723
      %v10954 = vadd.f32 %v10906, %v10728
      %v10955 = vadd.f32 %v10907, %v10731
      %v10956 = vadd.f32 %v10908, %v10736
      %v10957 = vadd.f32 %v10909, %v10739
      %v10958 = vadd.f32 %v10910, %v10744
      %v10959 = vadd.f32 %v10911, %v10747
      %v10960 = vadd.f32 %v10912, %v10752
      %v10961 = vadd.f32 %v10913, %v10755
      %v10962 = vadd.f32 %v10914, %v10760
      %v10963 = vadd.f32 %v10915, %v10763
      %v10964 = vadd.f32 %v10916, %v10768
      %v10965 = vadd.f32 %v10917, %v10771
      %v10966 = vadd.f32 %v10918, %v10776
      %v10967 = vadd.f32 %v10919, %v10779
      %v10968 = vadd.f32 %v10920, %v10784
      %v10969 = vadd.f32 %v10921, %v10787
      %v10970 = vadd.f32 %v10922, %v10792
      %v10971 = vadd.f32 %v10923, %v10795
      %v10972 = vadd.f32 %v10924, %v10800
      %v10973 = vadd.f32 %v10925, %v10803
      %v10974 = vadd.f32 %v10926, %v10808
      %v10975 = vadd.f32 %v10927, %v10811
      %v10976 = vadd.f32 %v10928, %v10816
      %v10977 = vadd.f32 %v10929, %v10819
      %v10978 = vadd.f32 %v10930, %v10824
      %v10979 = vadd.f32 %v10931, %v10827
      %v10980 = vadd.f32 %v10932, %v10832
      %v10981 = vadd.f32 %v10933, %v10835
      %v10982 = vadd.f32 %v10934, %v10840
      %v10983 = vadd.f32 %v10935, %v10843
      %v10984 = vadd.f32 %v10936, %v10848
      %v10985 = vadd.f32 %v10937, %v10851
      %v10986 = vadd.f32 %v10938, %v10856
      %v10987 = vadd.f32 %v10939, %v10859
      %v10988 = vadd.f32 %v10940, %v10864
      %v10989 = vadd.f32 %v10941, %v10867
      %v10990 = vadd.f32 %v10942, %v10872
      %v10991 = vadd.f32 %v10943, %v10875
      %v10992 = vadd.f32 %v10944, %v10880
      %v10993 = vadd.f32 %v10945, %v10883
      %v10994 = vadd.f32 %v10946, %v10888
      %v10995 = vadd.f32 %v10947, %v10891
      %v10996 = vadd.f32 %v10948, %v10896
      %v10997 = vadd.f32 %v10949, %v10899
      %10998 = vst.msk [vmem:[#allocation5] sm:$0xff] %vm1544, %v10950
      %10999 = vst.msk [vmem:[#allocation5 + $0x8] sm:$0xff] %vm1544, %v10951
      %11000 = vst.msk [vmem:[#allocation5 + $0x10] sm:$0xff] %vm1544, %v10952
      %11001 = vst.msk [vmem:[#allocation5 + $0x18] sm:$0xff] %vm1544, %v10953
      %11002 = vst.msk [vmem:[#allocation5 + $0x20] sm:$0xff] %vm1544, %v10954
      %11003 = vst.msk [vmem:[#allocation5 + $0x28] sm:$0xff] %vm1544, %v10955
      %11004 = vst.msk [vmem:[#allocation5 + $0x30] sm:$0xff] %vm1544, %v10956
      %11005 = vst.msk [vmem:[#allocation5 + $0x38] sm:$0xff] %vm1544, %v10957
      %11006 = vst.msk [vmem:[#allocation5 + $0x40] sm:$0xff] %vm1544, %v10958
      %11007 = vst.msk [vmem:[#allocation5 + $0x48] sm:$0xff] %vm1544, %v10959
      %11008 = vst.msk [vmem:[#allocation5 + $0x50] sm:$0xff] %vm1544, %v10960
      %11009 = vst.msk [vmem:[#allocation5 + $0x58] sm:$0xff] %vm1544, %v10961
      %11010 = vst.msk [vmem:[#allocation5 + $0x60] sm:$0xff] %vm1544, %v10962
      %11011 = vst.msk [vmem:[#allocation5 + $0x68] sm:$0xff] %vm1544, %v10963
      %11012 = vst.msk [vmem:[#allocation5 + $0x70] sm:$0xff] %vm1544, %v10964
      %11013 = vst.msk [vmem:[#allocation5 + $0x78] sm:$0xff] %vm1544, %v10965
      %11014 = vst.msk [vmem:[#allocation5 + $0x80] sm:$0xff] %vm1544, %v10966
      %11015 = vst.msk [vmem:[#allocation5 + $0x88] sm:$0xff] %vm1544, %v10967
      %11016 = vst.msk [vmem:[#allocation5 + $0x90] sm:$0xff] %vm1544, %v10968
      %11017 = vst.msk [vmem:[#allocation5 + $0x98] sm:$0xff] %vm1544, %v10969
      %11018 = vst.msk [vmem:[#allocation5 + $0xa0] sm:$0xff] %vm1544, %v10970
      %11019 = vst.msk [vmem:[#allocation5 + $0xa8] sm:$0xff] %vm1544, %v10971
      %11020 = vst.msk [vmem:[#allocation5 + $0xb0] sm:$0xff] %vm1544, %v10972
      %11021 = vst.msk [vmem:[#allocation5 + $0xb8] sm:$0xff] %vm1544, %v10973
      %11022 = vst.msk [vmem:[#allocation5 + $0xc0] sm:$0xff] %vm1544, %v10974
      %11023 = vst.msk [vmem:[#allocation5 + $0xc8] sm:$0xff] %vm1544, %v10975
      %11024 = vst.msk [vmem:[#allocation5 + $0xd0] sm:$0xff] %vm1544, %v10976
      %11025 = vst.msk [vmem:[#allocation5 + $0xd8] sm:$0xff] %vm1544, %v10977
      %11026 = vst.msk [vmem:[#allocation5 + $0xe0] sm:$0xff] %vm1544, %v10978
      %11027 = vst.msk [vmem:[#allocation5 + $0xe8] sm:$0xff] %vm1544, %v10979
      %11028 = vst.msk [vmem:[#allocation5 + $0xf0] sm:$0xff] %vm1544, %v10980
      %11029 = vst.msk [vmem:[#allocation5 + $0xf8] sm:$0xff] %vm1544, %v10981
      %11030 = vst.msk [vmem:[#allocation5 + $0x100] sm:$0xff] %vm1544, %v10982
      %11031 = vst.msk [vmem:[#allocation5 + $0x108] sm:$0xff] %vm1544, %v10983
      %11032 = vst.msk [vmem:[#allocation5 + $0x110] sm:$0xff] %vm1544, %v10984
      %11033 = vst.msk [vmem:[#allocation5 + $0x118] sm:$0xff] %vm1544, %v10985
      %11034 = vst.msk [vmem:[#allocation5 + $0x120] sm:$0xff] %vm1544, %v10986
      %11035 = vst.msk [vmem:[#allocation5 + $0x128] sm:$0xff] %vm1544, %v10987
      %11036 = vst.msk [vmem:[#allocation5 + $0x130] sm:$0xff] %vm1544, %v10988
      %11037 = vst.msk [vmem:[#allocation5 + $0x138] sm:$0xff] %vm1544, %v10989
      %11038 = vst.msk [vmem:[#allocation5 + $0x140] sm:$0xff] %vm1544, %v10990
      %11039 = vst.msk [vmem:[#allocation5 + $0x148] sm:$0xff] %vm1544, %v10991
      %11040 = vst.msk [vmem:[#allocation5 + $0x150] sm:$0xff] %vm1544, %v10992
      %11041 = vst.msk [vmem:[#allocation5 + $0x158] sm:$0xff] %vm1544, %v10993
      %11042 = vst.msk [vmem:[#allocation5 + $0x160] sm:$0xff] %vm1544, %v10994
      %11043 = vst.msk [vmem:[#allocation5 + $0x168] sm:$0xff] %vm1544, %v10995
      %11044 = vst.msk [vmem:[#allocation5 + $0x170] sm:$0xff] %vm1544, %v10996
      %11045 = vst.msk [vmem:[#allocation5 + $0x178] sm:$0xff] %vm1544, %v10997
      %v11046 = vld [vmem:[#allocation5] sm:$0xff]
      %v11047 = vld [vmem:[#allocation5 + $0x8] sm:$0xff]
      %v11048 = vld [vmem:[#allocation5 + $0x18] sm:$0xff]
      %v11049 = vld [vmem:[#allocation5 + $0x20] sm:$0xff]
      %v11050 = vld [vmem:[#allocation5 + $0x30] sm:$0xff]
      %v11051 = vld [vmem:[#allocation5 + $0x38] sm:$0xff]
      %v11052 = vld [vmem:[#allocation5 + $0x48] sm:$0xff]
      %v11053 = vld [vmem:[#allocation5 + $0x50] sm:$0xff]
      %v11054 = vld [vmem:[#allocation5 + $0x60] sm:$0xff]
      %v11055 = vld [vmem:[#allocation5 + $0x68] sm:$0xff]
      %v11056 = vld [vmem:[#allocation5 + $0x78] sm:$0xff]
      %v11057 = vld [vmem:[#allocation5 + $0x80] sm:$0xff]
      %v11058 = vld [vmem:[#allocation5 + $0x90] sm:$0xff]
      %v11059 = vld [vmem:[#allocation5 + $0x98] sm:$0xff]
      %v11060 = vld [vmem:[#allocation5 + $0xa8] sm:$0xff]
      %v11061 = vld [vmem:[#allocation5 + $0xb0] sm:$0xff]
      %v11062 = vld [vmem:[#allocation5 + $0xc0] sm:$0xff]
      %v11063 = vld [vmem:[#allocation5 + $0xc8] sm:$0xff]
      %v11064 = vld [vmem:[#allocation5 + $0xd8] sm:$0xff]
      %v11065 = vld [vmem:[#allocation5 + $0xe0] sm:$0xff]
      %v11066 = vld [vmem:[#allocation5 + $0xf0] sm:$0xff]
      %v11067 = vld [vmem:[#allocation5 + $0xf8] sm:$0xff]
      %v11068 = vld [vmem:[#allocation5 + $0x108] sm:$0xff]
      %v11069 = vld [vmem:[#allocation5 + $0x110] sm:$0xff]
      %v11070 = vld [vmem:[#allocation5 + $0x120] sm:$0xff]
      %v11071 = vld [vmem:[#allocation5 + $0x128] sm:$0xff]
      %v11072 = vld [vmem:[#allocation5 + $0x138] sm:$0xff]
      %v11073 = vld [vmem:[#allocation5 + $0x140] sm:$0xff]
      %v11074 = vld [vmem:[#allocation5 + $0x150] sm:$0xff]
      %v11075 = vld [vmem:[#allocation5 + $0x158] sm:$0xff]
      %v11076 = vld [vmem:[#allocation5 + $0x168] sm:$0xff]
      %v11077 = vld [vmem:[#allocation5 + $0x170] sm:$0xff]
      %11078 = vst.msk [vmem:[%s278] sm:$0xff] %vm1544, %v11046
      %11079 = vst.msk [vmem:[%s278 + $0x8] sm:$0xff] %vm1544, %v11047
      %11080 = vst.msk [vmem:[%s278 + $0x10] sm:$0xff] %vm1544, %v11048
      %11081 = vst.msk [vmem:[%s278 + $0x18] sm:$0xff] %vm1544, %v11049
      %11082 = vst.msk [vmem:[%s278 + $0x20] sm:$0xff] %vm1544, %v11050
      %11083 = vst.msk [vmem:[%s278 + $0x28] sm:$0xff] %vm1544, %v11051
      %11084 = vst.msk [vmem:[%s278 + $0x30] sm:$0xff] %vm1544, %v11052
      %11085 = vst.msk [vmem:[%s278 + $0x38] sm:$0xff] %vm1544, %v11053
      %11086 = vst.msk [vmem:[%s278 + $0x40] sm:$0xff] %vm1544, %v11054
      %11087 = vst.msk [vmem:[%s278 + $0x48] sm:$0xff] %vm1544, %v11055
      %11088 = vst.msk [vmem:[%s278 + $0x50] sm:$0xff] %vm1544, %v11056
      %11089 = vst.msk [vmem:[%s278 + $0x58] sm:$0xff] %vm1544, %v11057
      %11090 = vst.msk [vmem:[%s278 + $0x60] sm:$0xff] %vm1544, %v11058
      %11091 = vst.msk [vmem:[%s278 + $0x68] sm:$0xff] %vm1544, %v11059
      %11092 = vst.msk [vmem:[%s278 + $0x70] sm:$0xff] %vm1544, %v11060
      %11093 = vst.msk [vmem:[%s278 + $0x78] sm:$0xff] %vm1544, %v11061
      %11094 = vst.msk [vmem:[%s278 + $0x80] sm:$0xff] %vm1544, %v11062
      %11095 = vst.msk [vmem:[%s278 + $0x88] sm:$0xff] %vm1544, %v11063
      %11096 = vst.msk [vmem:[%s278 + $0x90] sm:$0xff] %vm1544, %v11064
      %11097 = vst.msk [vmem:[%s278 + $0x98] sm:$0xff] %vm1544, %v11065
      %11098 = vst.msk [vmem:[%s278 + $0xa0] sm:$0xff] %vm1544, %v11066
      %11099 = vst.msk [vmem:[%s278 + $0xa8] sm:$0xff] %vm1544, %v11067
      %11100 = vst.msk [vmem:[%s278 + $0xb0] sm:$0xff] %vm1544, %v11068
      %11101 = vst.msk [vmem:[%s278 + $0xb8] sm:$0xff] %vm1544, %v11069
      %11102 = vst.msk [vmem:[%s278 + $0xc0] sm:$0xff] %vm1544, %v11070
      %11103 = vst.msk [vmem:[%s278 + $0xc8] sm:$0xff] %vm1544, %v11071
      %11104 = vst.msk [vmem:[%s278 + $0xd0] sm:$0xff] %vm1544, %v11072
      %11105 = vst.msk [vmem:[%s278 + $0xd8] sm:$0xff] %vm1544, %v11073
      %11106 = vst.msk [vmem:[%s278 + $0xe0] sm:$0xff] %vm1544, %v11074
      %11107 = vst.msk [vmem:[%s278 + $0xe8] sm:$0xff] %vm1544, %v11075
      %11108 = vst.msk [vmem:[%s278 + $0xf0] sm:$0xff] %vm1544, %v11076
      %11109 = vst.msk [vmem:[%s278 + $0xf8] sm:$0xff] %vm1544, %v11077
      %p11110 = scmp.lt.s32.totalorder %s18, 1
      %s11111 = scalar_select %p11110, %s18, 1
      %s11112 = smul.addr %s11111, 32
      %s11113 = smul.addr %s11112, 8
      %s11114 = scalar_lea.vmem %s7, %s11113
      // Predicated region
      $region49: #{tpu_custom_call.1} parent=47 // pred_check
        %p11115 = pneg %p188
      $region50: #{tpu_custom_call.1} parent=47 // pred_check_branch
        %11117 = sbr.rel (%p11115) target = $region52
      $region51: #{tpu_custom_call.1} parent=47 // pred_region
        _
      $region52: #{tpu_custom_call.1} parent=47 // pred_fallthru
        _
    $region48: #{tpu_custom_call.1} parent=5 // pred_fallthru
      _
    %p11118 = scmp.le.s32.totalorder 2, %s13
    // Predicated region
    $region53: #{tpu_custom_call.1} parent=5 // pred_check
      %p11119 = pneg %p11118
    $region54: #{tpu_custom_call.1} parent=5 // pred_check_branch
      %11121 = sbr.rel (%p11119) target = $region56
    $region55: #{tpu_custom_call.1} parent=5 // pred_region
      %s11122 = ssub.s32 %s13, 2
      // Predicated region
      $region57: #{tpu_custom_call.1} parent=55 // pred_check
        %p11123 = pneg %p194
      $region58: #{tpu_custom_call.1} parent=55 // pred_check_branch
        %11125 = sbr.rel (%p11123) target = $region60
      $region59: #{tpu_custom_call.1} parent=55 // pred_region
        %p11126 = scmp.lt.s32.totalorder %s19, 1
        %s11127 = scalar_select %p11126, %s19, 1
        %s11128 = smul.addr %s11127, 32
        %s11129 = smul.addr %s11128, 8
        %s11130 = scalar_lea.vmem %s7, %s11129
      $region60: #{tpu_custom_call.1} parent=55 // pred_fallthru
        _
    $region56: #{tpu_custom_call.1} parent=5 // pred_fallthru
      _
  $region6: #{tpu_custom_call.1} parent=0 // loop_footer
    %s17 = sadd.s32 1, %s13
  $region7: #{tpu_custom_call.1} parent=0 // loop_footer_branch
    %12 = sbr.rel target = $region3
  $region8: #{tpu_custom_call.1} parent=0 // loop_exit
    _

</llo_original>
